<compile_context>
chip_gen: v7x
topology: tpu7x:2x2x1
jax: 0.10.0
libtpu: 0.0.40
codegen_flags: <defaults>
</compile_context>

<pallas_src>
import functools

import jax
import jax.numpy as jnp
from jax.experimental import pallas as pl
from jax.experimental.pallas import tpu as pltpu


# ----------------------------------------------------------------------------
# Fused kernel: one grid step = NB samples.
# Per-sample activation layouts (rows = height, lanes = channel*width):
#   x slab      : (32, 96)   lane = w*3 + cin
#   conv1 e/o   : (28, 84)   lane = co*14 + pw        (even / odd columns)
#   pool1       : (14, 84)   lane = co*14 + pw        (dense)
#   conv2 e/o   : (10, 80)   lane = co*5  + q
#   pool2       : (5,  80)   lane = co*5  + q         (dense)
# ----------------------------------------------------------------------------
def _lenet_kernel(x_ref, t1e_ref, t1o_ref, b1_ref, t2e_ref, t2o_ref, b2_ref,
                  w1_ref, fb1_ref, w2_ref, fb2_ref, w3_ref, fb3_ref,
                  o_ref, cm1_ref, p1_ref, cm2_ref, p2_ref):
    f32 = jnp.float32
    bf16 = jnp.bfloat16
    nb = x_ref.shape[0]                     # samples per grid step (static)

    for s in range(nb):
        # ---- conv1: K-concat the 5 row-shifted slices -> one dot per parity.
        a1 = jnp.concatenate(
            [x_ref[s, pl.ds(kh, 28), :] for kh in range(5)],
            axis=1).astype(bf16)                                   # (28, 480)
        c1e = jnp.dot(a1, t1e_ref[...], preferred_element_type=f32)  # even cols
        c1o = jnp.dot(a1, t1o_ref[...], preferred_element_type=f32)  # odd cols
        # column-pair max is just max(even, odd); bias + ReLU in f32.
        cm1_ref[...] = jnp.maximum(jnp.maximum(c1e, c1o) + b1_ref[...], 0.0)
        # row-pair max via stride-2 sublane reads (VPU max, no MXU).
        p1_ref[...] = jnp.maximum(cm1_ref[pl.ds(0, 14, 2), :],
                                  cm1_ref[pl.ds(1, 14, 2), :])     # (14, 84)

        # ---- conv2: same Toeplitz K-concat + parity trick on the pooled slab.
        a2 = jnp.concatenate(
            [p1_ref[pl.ds(kh, 10), :] for kh in range(5)],
            axis=1).astype(bf16)                                   # (10, 420)
        c2e = jnp.dot(a2, t2e_ref[...], preferred_element_type=f32)
        c2o = jnp.dot(a2, t2o_ref[...], preferred_element_type=f32)
        cm2_ref[...] = jnp.maximum(jnp.maximum(c2e, c2o) + b2_ref[...], 0.0)
        p2_ref[s] = jnp.maximum(cm2_ref[pl.ds(0, 5, 2), :],
                                cm2_ref[pl.ds(1, 5, 2), :])        # (5, 80)

    # ---- FC head, batched over the NB samples of this step.
    # A[s, h*80 + co*5 + q] = pool2_s[co, h, q]; flatten order folded in w1.
    a_fc = jnp.concatenate(
        [p2_ref[:, h, :] for h in range(5)], axis=1).astype(bf16)  # (NB, 400)
    y = jnp.dot(a_fc, w1_ref[...], preferred_element_type=f32)
    y = jnp.maximum(y + fb1_ref[...], 0.0)                         # (NB, 120)
    y = jnp.dot(y.astype(bf16), w2_ref[...], preferred_element_type=f32)
    y = jnp.maximum(y + fb2_ref[...], 0.0)                         # (NB, 84)
    y = jnp.dot(y.astype(bf16), w3_ref[...], preferred_element_type=f32)
    o_ref[0] = y + fb3_ref[...]                                    # (NB, 10)


# ----------------------------------------------------------------------------
# One-time parameter preparation (pure JAX, tiny arrays):
#  * K-concatenated width-Toeplitz conv weights, split into even/odd output
#    columns so the 2x2 pool's column max becomes a plain elementwise max.
#  * fc1 weight with the torch (C,H,W) flatten remapped to the kernel layout.
# ----------------------------------------------------------------------------
def prepare_params(p):
    f32, bf16 = jnp.float32, jnp.bfloat16
    w1 = p["conv1_w"].astype(f32)    # (6, 3, 5, 5)   (cout, cin, kh, kw)
    w2 = p["conv2_w"].astype(f32)    # (16, 6, 5, 5)

    def shift_sel(in_len, out_len, offset):
        # S[w, q] = 1  iff  w == 2*q + offset
        q = jnp.arange(out_len)
        return jnp.zeros((in_len, out_len), f32).at[2 * q + offset, q].set(1.0)

    # conv1:  a1[ho, kh*96 + w*3 + c] = input[c, ho+kh, w]
    #         (a1 @ t1e)[ho, co*14+pw] = conv1[co, ho, 2*pw]   (t1o -> 2*pw+1)
    s1e = jnp.stack([shift_sel(32, 14, kw) for kw in range(5)])      # (5,32,14)
    s1o = jnp.stack([shift_sel(32, 14, kw + 1) for kw in range(5)])
    t1e = jnp.einsum("kwp,ochk->hwcop", s1e, w1).reshape(480, 84)
    t1o = jnp.einsum("kwp,ochk->hwcop", s1o, w1).reshape(480, 84)

    # conv2:  a2[ho2, kh*84 + ci*14 + p] = pool1[ci, ho2+kh, p]
    #         (a2 @ t2e)[ho2, co*5+q] = conv2[co, ho2, 2*q]    (t2o -> 2*q+1)
    s2e = jnp.stack([shift_sel(14, 5, kw) for kw in range(5)])       # (5,14,5)
    s2o = jnp.stack([shift_sel(14, 5, kw + 1) for kw in range(5)])
    t2e = jnp.einsum("kpq,ochk->hcpoq", s2e, w2).reshape(420, 80)
    t2o = jnp.einsum("kpq,ochk->hcpoq", s2o, w2).reshape(420, 80)

    # fc1 with torch's (C,H,W) flatten reordered to the kernel's (H,C,W) lanes:
    # w1f[h*80 + co*5 + q, j] = fc1_w[co*25 + h*5 + q, j]
    w1f = jnp.transpose(p["fc1_w"].reshape(16, 5, 5, 120),
                        (1, 0, 2, 3)).reshape(400, 120)

    return {
        "t1e": t1e.astype(bf16), "t1o": t1o.astype(bf16),
        "b1": jnp.repeat(p["conv1_b"], 14)[None, :].astype(f32),    # (1, 84)
        "t2e": t2e.astype(bf16), "t2o": t2o.astype(bf16),
        "b2": jnp.repeat(p["conv2_b"], 5)[None, :].astype(f32),     # (1, 80)
        "w1f": w1f.astype(bf16),
        "fb1": p["fc1_b"][None, :].astype(f32),
        "w2": p["fc2_w"].astype(bf16),
        "fb2": p["fc2_b"][None, :].astype(f32),
        "w3": p["fc3_w"].astype(bf16),
        "fb3": p["fc3_b"][None, :].astype(f32),
    }


# ----------------------------------------------------------------------------
# Forward pass: single fused pallas_call, NB samples per grid step.
# ----------------------------------------------------------------------------
@functools.partial(jax.jit, static_argnames=("nb",))
def net_forward(x_nchw, pp, nb=8):
    B = x_nchw.shape[0]
    g = (B + nb - 1) // nb
    bp = g * nb

    # NCHW -> per-sample slab: (B, 32, 96), row = h, lane = w*3 + c (f32).
    x = jnp.transpose(x_nchw, (0, 2, 3, 1)).reshape(B, 32, 96)
    x = x.astype(jnp.float32)
    if bp != B:
        x = jnp.pad(x, ((0, bp - B), (0, 0), (0, 0)))

    const2 = lambda i: (0, 0)
    out = pl.pallas_call(
        _lenet_kernel,
        out_shape=jax.ShapeDtypeStruct((g, nb, 10), jnp.float32),
        grid=(g,),
        in_specs=[
            pl.BlockSpec((nb, 32, 96), lambda i: (i, 0, 0)),   # x (NB samples)
            pl.BlockSpec((480, 84), const2),                   # t1 even cols
            pl.BlockSpec((480, 84), const2),                   # t1 odd cols
            pl.BlockSpec((1, 84), const2),                     # conv1 bias
            pl.BlockSpec((420, 80), const2),                   # t2 even cols
            pl.BlockSpec((420, 80), const2),                   # t2 odd cols
            pl.BlockSpec((1, 80), const2),                     # conv2 bias
            pl.BlockSpec((400, 120), const2),                  # fc1 (flat folded)
            pl.BlockSpec((1, 120), const2),                    # fc1 bias
            pl.BlockSpec((120, 84), const2),                   # fc2
            pl.BlockSpec((1, 84), const2),                     # fc2 bias
            pl.BlockSpec((84, 10), const2),                    # fc3
            pl.BlockSpec((1, 10), const2),                     # fc3 bias
        ],
        out_specs=pl.BlockSpec((1, nb, 10), lambda i: (i, 0, 0)),
        scratch_shapes=[
            pltpu.VMEM((28, 84), jnp.float32),    # conv1 col-maxed (pre row-pool)
            pltpu.VMEM((14, 84), jnp.float32),    # pool1
            pltpu.VMEM((10, 80), jnp.float32),    # conv2 col-maxed
            pltpu.VMEM((nb, 5, 80), jnp.float32), # pool2, all NB samples
        ],
        compiler_params=pltpu.CompilerParams(
            dimension_semantics=("parallel",)),
    )(x, pp["t1e"], pp["t1o"], pp["b1"], pp["t2e"], pp["t2o"], pp["b2"],
      pp["w1f"], pp["fb1"], pp["w2"], pp["fb2"], pp["w3"], pp["fb3"])

    return out.reshape(bp, 10)[:B]


# ----------------------------------------------------------------------------
# Parameters (deterministic, PyTorch-like uniform(-1/sqrt(fan_in), +))
# ----------------------------------------------------------------------------
def init_params(key):
    def uniform(k, shape, fan_in):
        bound = 1.0 / jnp.sqrt(jnp.float32(fan_in))
        return jax.random.uniform(k, shape, jnp.float32, -bound, bound)

    ks = jax.random.split(key, 10)
    return {
        "conv1_w": uniform(ks[0], (6, 3, 5, 5), 3 * 5 * 5),
        "conv1_b": uniform(ks[1], (6,), 3 * 5 * 5),
        "conv2_w": uniform(ks[2], (16, 6, 5, 5), 6 * 5 * 5),
        "conv2_b": uniform(ks[3], (16,), 6 * 5 * 5),
        "fc1_w": uniform(ks[4], (400, 120), 400),   # stored (in, out)
        "fc1_b": uniform(ks[5], (120,), 400),
        "fc2_w": uniform(ks[6], (120, 84), 120),
        "fc2_b": uniform(ks[7], (84,), 120),
        "fc3_w": uniform(ks[8], (84, 10), 84),
        "fc3_b": uniform(ks[9], (10,), 84),
    }


# ----------------------------------------------------------------------------
# Pure-JAX reference (f32) for a correctness check
# ----------------------------------------------------------------------------
def net_forward_reference(x_nchw, p):
    dn = ("NCHW", "OIHW", "NCHW")
    y = jax.lax.conv_general_dilated(x_nchw.astype(jnp.float32), p["conv1_w"],
                                     (1, 1), "VALID", dimension_numbers=dn)
    y = jax.nn.relu(y + p["conv1_b"][None, :, None, None])
    y = jax.lax.reduce_window(y, -jnp.inf, jax.lax.max,
                              (1, 1, 2, 2), (1, 1, 2, 2), "VALID")
    y = jax.lax.conv_general_dilated(y, p["conv2_w"], (1, 1), "VALID",
                                     dimension_numbers=dn)
    y = jax.nn.relu(y + p["conv2_b"][None, :, None, None])
    y = jax.lax.reduce_window(y, -jnp.inf, jax.lax.max,
                              (1, 1, 2, 2), (1, 1, 2, 2), "VALID")
    y = y.reshape(y.shape[0], -1)                       # C,H,W flatten order
    y = jax.nn.relu(y @ p["fc1_w"] + p["fc1_b"])
    y = jax.nn.relu(y @ p["fc2_w"] + p["fc2_b"])
    return y @ p["fc3_w"] + p["fc3_b"]


if __name__ == "__main__":
    key = jax.random.PRNGKey(0)
    k_params, k_x = jax.random.split(key)
    params = init_params(k_params)
    prepared = prepare_params(params)

    # Net's fc1 (16*5*5) implies 3x32x32 input; B=8, NB=4 -> grid of 2 steps
    # (keeps both v7x TensorCores busy while still batching the step).
    x = jax.random.normal(k_x, (8, 3, 32, 32), dtype=jnp.float32)

    out = jax.block_until_ready(net_forward(x, prepared, nb=4))
    assert out.shape == (8, 10), out.shape
    assert out.dtype == jnp.float32

    ref = jax.block_until_ready(net_forward_reference(x, params))
    err = float(jnp.max(jnp.abs(out - ref)))
    assert err < 5e-2, f"mismatch vs f32 reference: max abs err = {err}"

    print("KERNEL_OK")
</pallas_src>

<mosaic_0001>
module attributes {stable_mosaic.version = 11 : i64} {
  func.func @_lenet_kernel(%arg0: i32, %arg1: memref<4x32x96xf32, #tpu.memory_space<vmem>>, %arg2: memref<480x84xbf16, #tpu.memory_space<vmem>>, %arg3: memref<480x84xbf16, #tpu.memory_space<vmem>>, %arg4: memref<1x84xf32, #tpu.memory_space<vmem>>, %arg5: memref<420x80xbf16, #tpu.memory_space<vmem>>, %arg6: memref<420x80xbf16, #tpu.memory_space<vmem>>, %arg7: memref<1x80xf32, #tpu.memory_space<vmem>>, %arg8: memref<400x120xbf16, #tpu.memory_space<vmem>>, %arg9: memref<1x120xf32, #tpu.memory_space<vmem>>, %arg10: memref<120x84xbf16, #tpu.memory_space<vmem>>, %arg11: memref<1x84xf32, #tpu.memory_space<vmem>>, %arg12: memref<84x10xbf16, #tpu.memory_space<vmem>>, %arg13: memref<1x10xf32, #tpu.memory_space<vmem>>, %arg14: memref<1x4x10xf32, #tpu.memory_space<vmem>>, %arg15: memref<28x84xf32, #tpu.memory_space<vmem>>, %arg16: memref<14x84xf32, #tpu.memory_space<vmem>>, %arg17: memref<10x80xf32, #tpu.memory_space<vmem>>, %arg18: memref<4x5x80xf32, #tpu.memory_space<vmem>>) attributes {dimension_semantics = [#tpu.dimension_semantics<parallel>], iteration_bounds = array<i64: 2>, scalar_prefetch = 0 : i64, scratch_operands = 4 : i64, tpu.core_type = #tpu.core_type<tc>, window_params = [{transform_indices = @transform_0, window_bounds = array<i64: 4, 32, 96>}, {pipeline_mode = #tpu.pipeline_mode<synchronous>, transform_indices = @transform_1, window_bounds = array<i64: 480, 84>}, {pipeline_mode = #tpu.pipeline_mode<synchronous>, transform_indices = @transform_2, window_bounds = array<i64: 480, 84>}, {pipeline_mode = #tpu.pipeline_mode<synchronous>, transform_indices = @transform_3, window_bounds = array<i64: 1, 84>}, {pipeline_mode = #tpu.pipeline_mode<synchronous>, transform_indices = @transform_4, window_bounds = array<i64: 420, 80>}, {pipeline_mode = #tpu.pipeline_mode<synchronous>, transform_indices = @transform_5, window_bounds = array<i64: 420, 80>}, {pipeline_mode = #tpu.pipeline_mode<synchronous>, transform_indices = @transform_6, window_bounds = array<i64: 1, 80>}, {pipeline_mode = #tpu.pipeline_mode<synchronous>, transform_indices = @transform_7, window_bounds = array<i64: 400, 120>}, {pipeline_mode = #tpu.pipeline_mode<synchronous>, transform_indices = @transform_8, window_bounds = array<i64: 1, 120>}, {pipeline_mode = #tpu.pipeline_mode<synchronous>, transform_indices = @transform_9, window_bounds = array<i64: 120, 84>}, {pipeline_mode = #tpu.pipeline_mode<synchronous>, transform_indices = @transform_10, window_bounds = array<i64: 1, 84>}, {pipeline_mode = #tpu.pipeline_mode<synchronous>, transform_indices = @transform_11, window_bounds = array<i64: 84, 10>}, {pipeline_mode = #tpu.pipeline_mode<synchronous>, transform_indices = @transform_12, window_bounds = array<i64: 1, 10>}, {transform_indices = @transform_13, window_bounds = array<i64: 1, 4, 10>}]} {
    %c0 = arith.constant 0 : index
    %c0_0 = arith.constant 0 : index
    %c0_1 = arith.constant 0 : index
    %0 = vector.load %arg1[%c0, %c0_0, %c0_1] : memref<4x32x96xf32, #tpu.memory_space<vmem>>, vector<1x28x96xf32>
    %1 = vector.shape_cast %0 : vector<1x28x96xf32> to vector<28x96xf32>
    %c0_2 = arith.constant 0 : index
    %c1 = arith.constant 1 : index
    %c0_3 = arith.constant 0 : index
    %2 = vector.load %arg1[%c0_2, %c1, %c0_3] : memref<4x32x96xf32, #tpu.memory_space<vmem>>, vector<1x28x96xf32>
    %3 = vector.shape_cast %2 : vector<1x28x96xf32> to vector<28x96xf32>
    %c0_4 = arith.constant 0 : index
    %c2 = arith.constant 2 : index
    %c0_5 = arith.constant 0 : index
    %4 = vector.load %arg1[%c0_4, %c2, %c0_5] : memref<4x32x96xf32, #tpu.memory_space<vmem>>, vector<1x28x96xf32>
    %5 = vector.shape_cast %4 : vector<1x28x96xf32> to vector<28x96xf32>
    %c0_6 = arith.constant 0 : index
    %c3 = arith.constant 3 : index
    %c0_7 = arith.constant 0 : index
    %6 = vector.load %arg1[%c0_6, %c3, %c0_7] : memref<4x32x96xf32, #tpu.memory_space<vmem>>, vector<1x28x96xf32>
    %7 = vector.shape_cast %6 : vector<1x28x96xf32> to vector<28x96xf32>
    %c0_8 = arith.constant 0 : index
    %c4 = arith.constant 4 : index
    %c0_9 = arith.constant 0 : index
    %8 = vector.load %arg1[%c0_8, %c4, %c0_9] : memref<4x32x96xf32, #tpu.memory_space<vmem>>, vector<1x28x96xf32>
    %9 = vector.shape_cast %8 : vector<1x28x96xf32> to vector<28x96xf32>
    %10 = tpu.concatenate %1, %3, %5, %7, %9 in 1 : vector<28x96xf32>, vector<28x96xf32>, vector<28x96xf32>, vector<28x96xf32>, vector<28x96xf32> -> vector<28x480xf32>
    %11 = arith.truncf %10 : vector<28x480xf32> to vector<28x480xbf16>
    %c0_10 = arith.constant 0 : index
    %c0_11 = arith.constant 0 : index
    %12 = vector.load %arg2[%c0_10, %c0_11] : memref<480x84xbf16, #tpu.memory_space<vmem>>, vector<480x84xbf16>
    %cst = arith.constant dense<0.000000e+00> : vector<28x84xf32>
    %13 = tpu.matmul %11, %12, %cst {dimension_numbers = #tpu.dot_dimension_numbers<[1], [0], [0], [1], [0, 0, 1, 1], [], []>} : vector<28x480xbf16>, vector<480x84xbf16>, vector<28x84xf32> -> vector<28x84xf32>
    %c0_12 = arith.constant 0 : index
    %c0_13 = arith.constant 0 : index
    %14 = vector.load %arg3[%c0_12, %c0_13] : memref<480x84xbf16, #tpu.memory_space<vmem>>, vector<480x84xbf16>
    %cst_14 = arith.constant dense<0.000000e+00> : vector<28x84xf32>
    %15 = tpu.matmul %11, %14, %cst_14 {dimension_numbers = #tpu.dot_dimension_numbers<[1], [0], [0], [1], [0, 0, 1, 1], [], []>} : vector<28x480xbf16>, vector<480x84xbf16>, vector<28x84xf32> -> vector<28x84xf32>
    %16 = arith.maximumf %13, %15 : vector<28x84xf32>
    %c0_15 = arith.constant 0 : index
    %c0_16 = arith.constant 0 : index
    %17 = vector.load %arg4[%c0_15, %c0_16] : memref<1x84xf32, #tpu.memory_space<vmem>>, vector<1x84xf32>
    %18 = vector.broadcast %17 : vector<1x84xf32> to vector<28x84xf32>
    %19 = arith.addf %16, %18 : vector<28x84xf32>
    %cst_17 = arith.constant 0.000000e+00 : f32
    %20 = vector.broadcast %cst_17 : f32 to vector<28x84xf32>
    %21 = arith.maximumf %19, %20 : vector<28x84xf32>
    %c0_18 = arith.constant 0 : index
    %c0_19 = arith.constant 0 : index
    %22 = vector.load %arg15[%c0_18, %c0_19] : memref<28x84xf32, #tpu.memory_space<vmem>>, vector<28x84xf32>
    tpu.vector_store %arg15[%c0_18, %c0_19], %21 {strides = array<i32>} : memref<28x84xf32, #tpu.memory_space<vmem>>, vector<28x84xf32>,
    %c0_20 = arith.constant 0 : index
    %c0_21 = arith.constant 0 : index
    %23 = tpu.strided_load %arg15[%c0_20, %c0_21] {strides = array<i32: 2, 1>} : memref<28x84xf32, #tpu.memory_space<vmem>>, vector<14x84xf32>
    %c1_22 = arith.constant 1 : index
    %c0_23 = arith.constant 0 : index
    %24 = tpu.strided_load %arg15[%c1_22, %c0_23] {strides = array<i32: 2, 1>} : memref<28x84xf32, #tpu.memory_space<vmem>>, vector<14x84xf32>
    %25 = arith.maximumf %23, %24 : vector<14x84xf32>
    %c0_24 = arith.constant 0 : index
    %c0_25 = arith.constant 0 : index
    %26 = vector.load %arg16[%c0_24, %c0_25] : memref<14x84xf32, #tpu.memory_space<vmem>>, vector<14x84xf32>
    tpu.vector_store %arg16[%c0_24, %c0_25], %25 {strides = array<i32>} : memref<14x84xf32, #tpu.memory_space<vmem>>, vector<14x84xf32>,
    %c0_26 = arith.constant 0 : index
    %c0_27 = arith.constant 0 : index
    %27 = vector.load %arg16[%c0_26, %c0_27] : memref<14x84xf32, #tpu.memory_space<vmem>>, vector<10x84xf32>
    %c1_28 = arith.constant 1 : index
    %c0_29 = arith.constant 0 : index
    %28 = vector.load %arg16[%c1_28, %c0_29] : memref<14x84xf32, #tpu.memory_space<vmem>>, vector<10x84xf32>
    %c2_30 = arith.constant 2 : index
    %c0_31 = arith.constant 0 : index
    %29 = vector.load %arg16[%c2_30, %c0_31] : memref<14x84xf32, #tpu.memory_space<vmem>>, vector<10x84xf32>
    %c3_32 = arith.constant 3 : index
    %c0_33 = arith.constant 0 : index
    %30 = vector.load %arg16[%c3_32, %c0_33] : memref<14x84xf32, #tpu.memory_space<vmem>>, vector<10x84xf32>
    %c4_34 = arith.constant 4 : index
    %c0_35 = arith.constant 0 : index
    %31 = vector.load %arg16[%c4_34, %c0_35] : memref<14x84xf32, #tpu.memory_space<vmem>>, vector<10x84xf32>
    %32 = tpu.concatenate %27, %28, %29, %30, %31 in 1 : vector<10x84xf32>, vector<10x84xf32>, vector<10x84xf32>, vector<10x84xf32>, vector<10x84xf32> -> vector<10x420xf32>
    %33 = arith.truncf %32 : vector<10x420xf32> to vector<10x420xbf16>
    %c0_36 = arith.constant 0 : index
    %c0_37 = arith.constant 0 : index
    %34 = vector.load %arg5[%c0_36, %c0_37] : memref<420x80xbf16, #tpu.memory_space<vmem>>, vector<420x80xbf16>
    %cst_38 = arith.constant dense<0.000000e+00> : vector<10x80xf32>
    %35 = tpu.matmul %33, %34, %cst_38 {dimension_numbers = #tpu.dot_dimension_numbers<[1], [0], [0], [1], [0, 0, 1, 1], [], []>} : vector<10x420xbf16>, vector<420x80xbf16>, vector<10x80xf32> -> vector<10x80xf32>
    %c0_39 = arith.constant 0 : index
    %c0_40 = arith.constant 0 : index
    %36 = vector.load %arg6[%c0_39, %c0_40] : memref<420x80xbf16, #tpu.memory_space<vmem>>, vector<420x80xbf16>
    %cst_41 = arith.constant dense<0.000000e+00> : vector<10x80xf32>
    %37 = tpu.matmul %33, %36, %cst_41 {dimension_numbers = #tpu.dot_dimension_numbers<[1], [0], [0], [1], [0, 0, 1, 1], [], []>} : vector<10x420xbf16>, vector<420x80xbf16>, vector<10x80xf32> -> vector<10x80xf32>
    %38 = arith.maximumf %35, %37 : vector<10x80xf32>
    %c0_42 = arith.constant 0 : index
    %c0_43 = arith.constant 0 : index
    %39 = vector.load %arg7[%c0_42, %c0_43] : memref<1x80xf32, #tpu.memory_space<vmem>>, vector<1x80xf32>
    %40 = vector.broadcast %39 : vector<1x80xf32> to vector<10x80xf32>
    %41 = arith.addf %38, %40 : vector<10x80xf32>
    %cst_44 = arith.constant 0.000000e+00 : f32
    %42 = vector.broadcast %cst_44 : f32 to vector<10x80xf32>
    %43 = arith.maximumf %41, %42 : vector<10x80xf32>
    %c0_45 = arith.constant 0 : index
    %c0_46 = arith.constant 0 : index
    %44 = vector.load %arg17[%c0_45, %c0_46] : memref<10x80xf32, #tpu.memory_space<vmem>>, vector<10x80xf32>
    tpu.vector_store %arg17[%c0_45, %c0_46], %43 {strides = array<i32>} : memref<10x80xf32, #tpu.memory_space<vmem>>, vector<10x80xf32>,
    %c0_47 = arith.constant 0 : index
    %c0_48 = arith.constant 0 : index
    %45 = tpu.strided_load %arg17[%c0_47, %c0_48] {strides = array<i32: 2, 1>} : memref<10x80xf32, #tpu.memory_space<vmem>>, vector<5x80xf32>
    %c1_49 = arith.constant 1 : index
    %c0_50 = arith.constant 0 : index
    %46 = tpu.strided_load %arg17[%c1_49, %c0_50] {strides = array<i32: 2, 1>} : memref<10x80xf32, #tpu.memory_space<vmem>>, vector<5x80xf32>
    %47 = arith.maximumf %45, %46 : vector<5x80xf32>
    %c0_51 = arith.constant 0 : index
    %c0_52 = arith.constant 0 : index
    %c0_53 = arith.constant 0 : index
    %48 = vector.load %arg18[%c0_51, %c0_52, %c0_53] : memref<4x5x80xf32, #tpu.memory_space<vmem>>, vector<1x5x80xf32>
    %49 = vector.shape_cast %48 : vector<1x5x80xf32> to vector<5x80xf32>
    %50 = vector.shape_cast %47 : vector<5x80xf32> to vector<1x5x80xf32>
    tpu.vector_store %arg18[%c0_51, %c0_52, %c0_53], %50 {strides = array<i32>} : memref<4x5x80xf32, #tpu.memory_space<vmem>>, vector<1x5x80xf32>,
    %c1_54 = arith.constant 1 : index
    %c0_55 = arith.constant 0 : index
    %c0_56 = arith.constant 0 : index
    %51 = vector.load %arg1[%c1_54, %c0_55, %c0_56] : memref<4x32x96xf32, #tpu.memory_space<vmem>>, vector<1x28x96xf32>
    %52 = vector.shape_cast %51 : vector<1x28x96xf32> to vector<28x96xf32>
    %c1_57 = arith.constant 1 : index
    %c1_58 = arith.constant 1 : index
    %c0_59 = arith.constant 0 : index
    %53 = vector.load %arg1[%c1_57, %c1_58, %c0_59] : memref<4x32x96xf32, #tpu.memory_space<vmem>>, vector<1x28x96xf32>
    %54 = vector.shape_cast %53 : vector<1x28x96xf32> to vector<28x96xf32>
    %c1_60 = arith.constant 1 : index
    %c2_61 = arith.constant 2 : index
    %c0_62 = arith.constant 0 : index
    %55 = vector.load %arg1[%c1_60, %c2_61, %c0_62] : memref<4x32x96xf32, #tpu.memory_space<vmem>>, vector<1x28x96xf32>
    %56 = vector.shape_cast %55 : vector<1x28x96xf32> to vector<28x96xf32>
    %c1_63 = arith.constant 1 : index
    %c3_64 = arith.constant 3 : index
    %c0_65 = arith.constant 0 : index
    %57 = vector.load %arg1[%c1_63, %c3_64, %c0_65] : memref<4x32x96xf32, #tpu.memory_space<vmem>>, vector<1x28x96xf32>
    %58 = vector.shape_cast %57 : vector<1x28x96xf32> to vector<28x96xf32>
    %c1_66 = arith.constant 1 : index
    %c4_67 = arith.constant 4 : index
    %c0_68 = arith.constant 0 : index
    %59 = vector.load %arg1[%c1_66, %c4_67, %c0_68] : memref<4x32x96xf32, #tpu.memory_space<vmem>>, vector<1x28x96xf32>
    %60 = vector.shape_cast %59 : vector<1x28x96xf32> to vector<28x96xf32>
    %61 = tpu.concatenate %52, %54, %56, %58, %60 in 1 : vector<28x96xf32>, vector<28x96xf32>, vector<28x96xf32>, vector<28x96xf32>, vector<28x96xf32> -> vector<28x480xf32>
    %62 = arith.truncf %61 : vector<28x480xf32> to vector<28x480xbf16>
    %c0_69 = arith.constant 0 : index
    %c0_70 = arith.constant 0 : index
    %63 = vector.load %arg2[%c0_69, %c0_70] : memref<480x84xbf16, #tpu.memory_space<vmem>>, vector<480x84xbf16>
    %cst_71 = arith.constant dense<0.000000e+00> : vector<28x84xf32>
    %64 = tpu.matmul %62, %63, %cst_71 {dimension_numbers = #tpu.dot_dimension_numbers<[1], [0], [0], [1], [0, 0, 1, 1], [], []>} : vector<28x480xbf16>, vector<480x84xbf16>, vector<28x84xf32> -> vector<28x84xf32>
    %c0_72 = arith.constant 0 : index
    %c0_73 = arith.constant 0 : index
    %65 = vector.load %arg3[%c0_72, %c0_73] : memref<480x84xbf16, #tpu.memory_space<vmem>>, vector<480x84xbf16>
    %cst_74 = arith.constant dense<0.000000e+00> : vector<28x84xf32>
    %66 = tpu.matmul %62, %65, %cst_74 {dimension_numbers = #tpu.dot_dimension_numbers<[1], [0], [0], [1], [0, 0, 1, 1], [], []>} : vector<28x480xbf16>, vector<480x84xbf16>, vector<28x84xf32> -> vector<28x84xf32>
    %67 = arith.maximumf %64, %66 : vector<28x84xf32>
    %c0_75 = arith.constant 0 : index
    %c0_76 = arith.constant 0 : index
    %68 = vector.load %arg4[%c0_75, %c0_76] : memref<1x84xf32, #tpu.memory_space<vmem>>, vector<1x84xf32>
    %69 = vector.broadcast %68 : vector<1x84xf32> to vector<28x84xf32>
    %70 = arith.addf %67, %69 : vector<28x84xf32>
    %cst_77 = arith.constant 0.000000e+00 : f32
    %71 = vector.broadcast %cst_77 : f32 to vector<28x84xf32>
    %72 = arith.maximumf %70, %71 : vector<28x84xf32>
    %c0_78 = arith.constant 0 : index
    %c0_79 = arith.constant 0 : index
    %73 = vector.load %arg15[%c0_78, %c0_79] : memref<28x84xf32, #tpu.memory_space<vmem>>, vector<28x84xf32>
    tpu.vector_store %arg15[%c0_78, %c0_79], %72 {strides = array<i32>} : memref<28x84xf32, #tpu.memory_space<vmem>>, vector<28x84xf32>,
    %c0_80 = arith.constant 0 : index
    %c0_81 = arith.constant 0 : index
    %74 = tpu.strided_load %arg15[%c0_80, %c0_81] {strides = array<i32: 2, 1>} : memref<28x84xf32, #tpu.memory_space<vmem>>, vector<14x84xf32>
    %c1_82 = arith.constant 1 : index
    %c0_83 = arith.constant 0 : index
    %75 = tpu.strided_load %arg15[%c1_82, %c0_83] {strides = array<i32: 2, 1>} : memref<28x84xf32, #tpu.memory_space<vmem>>, vector<14x84xf32>
    %76 = arith.maximumf %74, %75 : vector<14x84xf32>
    %c0_84 = arith.constant 0 : index
    %c0_85 = arith.constant 0 : index
    %77 = vector.load %arg16[%c0_84, %c0_85] : memref<14x84xf32, #tpu.memory_space<vmem>>, vector<14x84xf32>
    tpu.vector_store %arg16[%c0_84, %c0_85], %76 {strides = array<i32>} : memref<14x84xf32, #tpu.memory_space<vmem>>, vector<14x84xf32>,
    %c0_86 = arith.constant 0 : index
    %c0_87 = arith.constant 0 : index
    %78 = vector.load %arg16[%c0_86, %c0_87] : memref<14x84xf32, #tpu.memory_space<vmem>>, vector<10x84xf32>
    %c1_88 = arith.constant 1 : index
    %c0_89 = arith.constant 0 : index
    %79 = vector.load %arg16[%c1_88, %c0_89] : memref<14x84xf32, #tpu.memory_space<vmem>>, vector<10x84xf32>
    %c2_90 = arith.constant 2 : index
    %c0_91 = arith.constant 0 : index
    %80 = vector.load %arg16[%c2_90, %c0_91] : memref<14x84xf32, #tpu.memory_space<vmem>>, vector<10x84xf32>
    %c3_92 = arith.constant 3 : index
    %c0_93 = arith.constant 0 : index
    %81 = vector.load %arg16[%c3_92, %c0_93] : memref<14x84xf32, #tpu.memory_space<vmem>>, vector<10x84xf32>
    %c4_94 = arith.constant 4 : index
    %c0_95 = arith.constant 0 : index
    %82 = vector.load %arg16[%c4_94, %c0_95] : memref<14x84xf32, #tpu.memory_space<vmem>>, vector<10x84xf32>
    %83 = tpu.concatenate %78, %79, %80, %81, %82 in 1 : vector<10x84xf32>, vector<10x84xf32>, vector<10x84xf32>, vector<10x84xf32>, vector<10x84xf32> -> vector<10x420xf32>
    %84 = arith.truncf %83 : vector<10x420xf32> to vector<10x420xbf16>
    %c0_96 = arith.constant 0 : index
    %c0_97 = arith.constant 0 : index
    %85 = vector.load %arg5[%c0_96, %c0_97] : memref<420x80xbf16, #tpu.memory_space<vmem>>, vector<420x80xbf16>
    %cst_98 = arith.constant dense<0.000000e+00> : vector<10x80xf32>
    %86 = tpu.matmul %84, %85, %cst_98 {dimension_numbers = #tpu.dot_dimension_numbers<[1], [0], [0], [1], [0, 0, 1, 1], [], []>} : vector<10x420xbf16>, vector<420x80xbf16>, vector<10x80xf32> -> vector<10x80xf32>
    %c0_99 = arith.constant 0 : index
    %c0_100 = arith.constant 0 : index
    %87 = vector.load %arg6[%c0_99, %c0_100] : memref<420x80xbf16, #tpu.memory_space<vmem>>, vector<420x80xbf16>
    %cst_101 = arith.constant dense<0.000000e+00> : vector<10x80xf32>
    %88 = tpu.matmul %84, %87, %cst_101 {dimension_numbers = #tpu.dot_dimension_numbers<[1], [0], [0], [1], [0, 0, 1, 1], [], []>} : vector<10x420xbf16>, vector<420x80xbf16>, vector<10x80xf32> -> vector<10x80xf32>
    %89 = arith.maximumf %86, %88 : vector<10x80xf32>
    %c0_102 = arith.constant 0 : index
    %c0_103 = arith.constant 0 : index
    %90 = vector.load %arg7[%c0_102, %c0_103] : memref<1x80xf32, #tpu.memory_space<vmem>>, vector<1x80xf32>
    %91 = vector.broadcast %90 : vector<1x80xf32> to vector<10x80xf32>
    %92 = arith.addf %89, %91 : vector<10x80xf32>
    %cst_104 = arith.constant 0.000000e+00 : f32
    %93 = vector.broadcast %cst_104 : f32 to vector<10x80xf32>
    %94 = arith.maximumf %92, %93 : vector<10x80xf32>
    %c0_105 = arith.constant 0 : index
    %c0_106 = arith.constant 0 : index
    %95 = vector.load %arg17[%c0_105, %c0_106] : memref<10x80xf32, #tpu.memory_space<vmem>>, vector<10x80xf32>
    tpu.vector_store %arg17[%c0_105, %c0_106], %94 {strides = array<i32>} : memref<10x80xf32, #tpu.memory_space<vmem>>, vector<10x80xf32>,
    %c0_107 = arith.constant 0 : index
    %c0_108 = arith.constant 0 : index
    %96 = tpu.strided_load %arg17[%c0_107, %c0_108] {strides = array<i32: 2, 1>} : memref<10x80xf32, #tpu.memory_space<vmem>>, vector<5x80xf32>
    %c1_109 = arith.constant 1 : index
    %c0_110 = arith.constant 0 : index
    %97 = tpu.strided_load %arg17[%c1_109, %c0_110] {strides = array<i32: 2, 1>} : memref<10x80xf32, #tpu.memory_space<vmem>>, vector<5x80xf32>
    %98 = arith.maximumf %96, %97 : vector<5x80xf32>
    %c1_111 = arith.constant 1 : index
    %c0_112 = arith.constant 0 : index
    %c0_113 = arith.constant 0 : index
    %99 = vector.load %arg18[%c1_111, %c0_112, %c0_113] : memref<4x5x80xf32, #tpu.memory_space<vmem>>, vector<1x5x80xf32>
    %100 = vector.shape_cast %99 : vector<1x5x80xf32> to vector<5x80xf32>
    %101 = vector.shape_cast %98 : vector<5x80xf32> to vector<1x5x80xf32>
    tpu.vector_store %arg18[%c1_111, %c0_112, %c0_113], %101 {strides = array<i32>} : memref<4x5x80xf32, #tpu.memory_space<vmem>>, vector<1x5x80xf32>,
    %c2_114 = arith.constant 2 : index
    %c0_115 = arith.constant 0 : index
    %c0_116 = arith.constant 0 : index
    %102 = vector.load %arg1[%c2_114, %c0_115, %c0_116] : memref<4x32x96xf32, #tpu.memory_space<vmem>>, vector<1x28x96xf32>
    %103 = vector.shape_cast %102 : vector<1x28x96xf32> to vector<28x96xf32>
    %c2_117 = arith.constant 2 : index
    %c1_118 = arith.constant 1 : index
    %c0_119 = arith.constant 0 : index
    %104 = vector.load %arg1[%c2_117, %c1_118, %c0_119] : memref<4x32x96xf32, #tpu.memory_space<vmem>>, vector<1x28x96xf32>
    %105 = vector.shape_cast %104 : vector<1x28x96xf32> to vector<28x96xf32>
    %c2_120 = arith.constant 2 : index
    %c2_121 = arith.constant 2 : index
    %c0_122 = arith.constant 0 : index
    %106 = vector.load %arg1[%c2_120, %c2_121, %c0_122] : memref<4x32x96xf32, #tpu.memory_space<vmem>>, vector<1x28x96xf32>
    %107 = vector.shape_cast %106 : vector<1x28x96xf32> to vector<28x96xf32>
    %c2_123 = arith.constant 2 : index
    %c3_124 = arith.constant 3 : index
    %c0_125 = arith.constant 0 : index
    %108 = vector.load %arg1[%c2_123, %c3_124, %c0_125] : memref<4x32x96xf32, #tpu.memory_space<vmem>>, vector<1x28x96xf32>
    %109 = vector.shape_cast %108 : vector<1x28x96xf32> to vector<28x96xf32>
    %c2_126 = arith.constant 2 : index
    %c4_127 = arith.constant 4 : index
    %c0_128 = arith.constant 0 : index
    %110 = vector.load %arg1[%c2_126, %c4_127, %c0_128] : memref<4x32x96xf32, #tpu.memory_space<vmem>>, vector<1x28x96xf32>
    %111 = vector.shape_cast %110 : vector<1x28x96xf32> to vector<28x96xf32>
    %112 = tpu.concatenate %103, %105, %107, %109, %111 in 1 : vector<28x96xf32>, vector<28x96xf32>, vector<28x96xf32>, vector<28x96xf32>, vector<28x96xf32> -> vector<28x480xf32>
    %113 = arith.truncf %112 : vector<28x480xf32> to vector<28x480xbf16>
    %c0_129 = arith.constant 0 : index
    %c0_130 = arith.constant 0 : index
    %114 = vector.load %arg2[%c0_129, %c0_130] : memref<480x84xbf16, #tpu.memory_space<vmem>>, vector<480x84xbf16>
    %cst_131 = arith.constant dense<0.000000e+00> : vector<28x84xf32>
    %115 = tpu.matmul %113, %114, %cst_131 {dimension_numbers = #tpu.dot_dimension_numbers<[1], [0], [0], [1], [0, 0, 1, 1], [], []>} : vector<28x480xbf16>, vector<480x84xbf16>, vector<28x84xf32> -> vector<28x84xf32>
    %c0_132 = arith.constant 0 : index
    %c0_133 = arith.constant 0 : index
    %116 = vector.load %arg3[%c0_132, %c0_133] : memref<480x84xbf16, #tpu.memory_space<vmem>>, vector<480x84xbf16>
    %cst_134 = arith.constant dense<0.000000e+00> : vector<28x84xf32>
    %117 = tpu.matmul %113, %116, %cst_134 {dimension_numbers = #tpu.dot_dimension_numbers<[1], [0], [0], [1], [0, 0, 1, 1], [], []>} : vector<28x480xbf16>, vector<480x84xbf16>, vector<28x84xf32> -> vector<28x84xf32>
    %118 = arith.maximumf %115, %117 : vector<28x84xf32>
    %c0_135 = arith.constant 0 : index
    %c0_136 = arith.constant 0 : index
    %119 = vector.load %arg4[%c0_135, %c0_136] : memref<1x84xf32, #tpu.memory_space<vmem>>, vector<1x84xf32>
    %120 = vector.broadcast %119 : vector<1x84xf32> to vector<28x84xf32>
    %121 = arith.addf %118, %120 : vector<28x84xf32>
    %cst_137 = arith.constant 0.000000e+00 : f32
    %122 = vector.broadcast %cst_137 : f32 to vector<28x84xf32>
    %123 = arith.maximumf %121, %122 : vector<28x84xf32>
    %c0_138 = arith.constant 0 : index
    %c0_139 = arith.constant 0 : index
    %124 = vector.load %arg15[%c0_138, %c0_139] : memref<28x84xf32, #tpu.memory_space<vmem>>, vector<28x84xf32>
    tpu.vector_store %arg15[%c0_138, %c0_139], %123 {strides = array<i32>} : memref<28x84xf32, #tpu.memory_space<vmem>>, vector<28x84xf32>,
    %c0_140 = arith.constant 0 : index
    %c0_141 = arith.constant 0 : index
    %125 = tpu.strided_load %arg15[%c0_140, %c0_141] {strides = array<i32: 2, 1>} : memref<28x84xf32, #tpu.memory_space<vmem>>, vector<14x84xf32>
    %c1_142 = arith.constant 1 : index
    %c0_143 = arith.constant 0 : index
    %126 = tpu.strided_load %arg15[%c1_142, %c0_143] {strides = array<i32: 2, 1>} : memref<28x84xf32, #tpu.memory_space<vmem>>, vector<14x84xf32>
    %127 = arith.maximumf %125, %126 : vector<14x84xf32>
    %c0_144 = arith.constant 0 : index
    %c0_145 = arith.constant 0 : index
    %128 = vector.load %arg16[%c0_144, %c0_145] : memref<14x84xf32, #tpu.memory_space<vmem>>, vector<14x84xf32>
    tpu.vector_store %arg16[%c0_144, %c0_145], %127 {strides = array<i32>} : memref<14x84xf32, #tpu.memory_space<vmem>>, vector<14x84xf32>,
    %c0_146 = arith.constant 0 : index
    %c0_147 = arith.constant 0 : index
    %129 = vector.load %arg16[%c0_146, %c0_147] : memref<14x84xf32, #tpu.memory_space<vmem>>, vector<10x84xf32>
    %c1_148 = arith.constant 1 : index
    %c0_149 = arith.constant 0 : index
    %130 = vector.load %arg16[%c1_148, %c0_149] : memref<14x84xf32, #tpu.memory_space<vmem>>, vector<10x84xf32>
    %c2_150 = arith.constant 2 : index
    %c0_151 = arith.constant 0 : index
    %131 = vector.load %arg16[%c2_150, %c0_151] : memref<14x84xf32, #tpu.memory_space<vmem>>, vector<10x84xf32>
    %c3_152 = arith.constant 3 : index
    %c0_153 = arith.constant 0 : index
    %132 = vector.load %arg16[%c3_152, %c0_153] : memref<14x84xf32, #tpu.memory_space<vmem>>, vector<10x84xf32>
    %c4_154 = arith.constant 4 : index
    %c0_155 = arith.constant 0 : index
    %133 = vector.load %arg16[%c4_154, %c0_155] : memref<14x84xf32, #tpu.memory_space<vmem>>, vector<10x84xf32>
    %134 = tpu.concatenate %129, %130, %131, %132, %133 in 1 : vector<10x84xf32>, vector<10x84xf32>, vector<10x84xf32>, vector<10x84xf32>, vector<10x84xf32> -> vector<10x420xf32>
    %135 = arith.truncf %134 : vector<10x420xf32> to vector<10x420xbf16>
    %c0_156 = arith.constant 0 : index
    %c0_157 = arith.constant 0 : index
    %136 = vector.load %arg5[%c0_156, %c0_157] : memref<420x80xbf16, #tpu.memory_space<vmem>>, vector<420x80xbf16>
    %cst_158 = arith.constant dense<0.000000e+00> : vector<10x80xf32>
    %137 = tpu.matmul %135, %136, %cst_158 {dimension_numbers = #tpu.dot_dimension_numbers<[1], [0], [0], [1], [0, 0, 1, 1], [], []>} : vector<10x420xbf16>, vector<420x80xbf16>, vector<10x80xf32> -> vector<10x80xf32>
    %c0_159 = arith.constant 0 : index
    %c0_160 = arith.constant 0 : index
    %138 = vector.load %arg6[%c0_159, %c0_160] : memref<420x80xbf16, #tpu.memory_space<vmem>>, vector<420x80xbf16>
    %cst_161 = arith.constant dense<0.000000e+00> : vector<10x80xf32>
    %139 = tpu.matmul %135, %138, %cst_161 {dimension_numbers = #tpu.dot_dimension_numbers<[1], [0], [0], [1], [0, 0, 1, 1], [], []>} : vector<10x420xbf16>, vector<420x80xbf16>, vector<10x80xf32> -> vector<10x80xf32>
    %140 = arith.maximumf %137, %139 : vector<10x80xf32>
    %c0_162 = arith.constant 0 : index
    %c0_163 = arith.constant 0 : index
    %141 = vector.load %arg7[%c0_162, %c0_163] : memref<1x80xf32, #tpu.memory_space<vmem>>, vector<1x80xf32>
    %142 = vector.broadcast %141 : vector<1x80xf32> to vector<10x80xf32>
    %143 = arith.addf %140, %142 : vector<10x80xf32>
    %cst_164 = arith.constant 0.000000e+00 : f32
    %144 = vector.broadcast %cst_164 : f32 to vector<10x80xf32>
    %145 = arith.maximumf %143, %144 : vector<10x80xf32>
    %c0_165 = arith.constant 0 : index
    %c0_166 = arith.constant 0 : index
    %146 = vector.load %arg17[%c0_165, %c0_166] : memref<10x80xf32, #tpu.memory_space<vmem>>, vector<10x80xf32>
    tpu.vector_store %arg17[%c0_165, %c0_166], %145 {strides = array<i32>} : memref<10x80xf32, #tpu.memory_space<vmem>>, vector<10x80xf32>,
    %c0_167 = arith.constant 0 : index
    %c0_168 = arith.constant 0 : index
    %147 = tpu.strided_load %arg17[%c0_167, %c0_168] {strides = array<i32: 2, 1>} : memref<10x80xf32, #tpu.memory_space<vmem>>, vector<5x80xf32>
    %c1_169 = arith.constant 1 : index
    %c0_170 = arith.constant 0 : index
    %148 = tpu.strided_load %arg17[%c1_169, %c0_170] {strides = array<i32: 2, 1>} : memref<10x80xf32, #tpu.memory_space<vmem>>, vector<5x80xf32>
    %149 = arith.maximumf %147, %148 : vector<5x80xf32>
    %c2_171 = arith.constant 2 : index
    %c0_172 = arith.constant 0 : index
    %c0_173 = arith.constant 0 : index
    %150 = vector.load %arg18[%c2_171, %c0_172, %c0_173] : memref<4x5x80xf32, #tpu.memory_space<vmem>>, vector<1x5x80xf32>
    %151 = vector.shape_cast %150 : vector<1x5x80xf32> to vector<5x80xf32>
    %152 = vector.shape_cast %149 : vector<5x80xf32> to vector<1x5x80xf32>
    tpu.vector_store %arg18[%c2_171, %c0_172, %c0_173], %152 {strides = array<i32>} : memref<4x5x80xf32, #tpu.memory_space<vmem>>, vector<1x5x80xf32>,
    %c3_174 = arith.constant 3 : index
    %c0_175 = arith.constant 0 : index
    %c0_176 = arith.constant 0 : index
    %153 = vector.load %arg1[%c3_174, %c0_175, %c0_176] : memref<4x32x96xf32, #tpu.memory_space<vmem>>, vector<1x28x96xf32>
    %154 = vector.shape_cast %153 : vector<1x28x96xf32> to vector<28x96xf32>
    %c3_177 = arith.constant 3 : index
    %c1_178 = arith.constant 1 : index
    %c0_179 = arith.constant 0 : index
    %155 = vector.load %arg1[%c3_177, %c1_178, %c0_179] : memref<4x32x96xf32, #tpu.memory_space<vmem>>, vector<1x28x96xf32>
    %156 = vector.shape_cast %155 : vector<1x28x96xf32> to vector<28x96xf32>
    %c3_180 = arith.constant 3 : index
    %c2_181 = arith.constant 2 : index
    %c0_182 = arith.constant 0 : index
    %157 = vector.load %arg1[%c3_180, %c2_181, %c0_182] : memref<4x32x96xf32, #tpu.memory_space<vmem>>, vector<1x28x96xf32>
    %158 = vector.shape_cast %157 : vector<1x28x96xf32> to vector<28x96xf32>
    %c3_183 = arith.constant 3 : index
    %c3_184 = arith.constant 3 : index
    %c0_185 = arith.constant 0 : index
    %159 = vector.load %arg1[%c3_183, %c3_184, %c0_185] : memref<4x32x96xf32, #tpu.memory_space<vmem>>, vector<1x28x96xf32>
    %160 = vector.shape_cast %159 : vector<1x28x96xf32> to vector<28x96xf32>
    %c3_186 = arith.constant 3 : index
    %c4_187 = arith.constant 4 : index
    %c0_188 = arith.constant 0 : index
    %161 = vector.load %arg1[%c3_186, %c4_187, %c0_188] : memref<4x32x96xf32, #tpu.memory_space<vmem>>, vector<1x28x96xf32>
    %162 = vector.shape_cast %161 : vector<1x28x96xf32> to vector<28x96xf32>
    %163 = tpu.concatenate %154, %156, %158, %160, %162 in 1 : vector<28x96xf32>, vector<28x96xf32>, vector<28x96xf32>, vector<28x96xf32>, vector<28x96xf32> -> vector<28x480xf32>
    %164 = arith.truncf %163 : vector<28x480xf32> to vector<28x480xbf16>
    %c0_189 = arith.constant 0 : index
    %c0_190 = arith.constant 0 : index
    %165 = vector.load %arg2[%c0_189, %c0_190] : memref<480x84xbf16, #tpu.memory_space<vmem>>, vector<480x84xbf16>
    %cst_191 = arith.constant dense<0.000000e+00> : vector<28x84xf32>
    %166 = tpu.matmul %164, %165, %cst_191 {dimension_numbers = #tpu.dot_dimension_numbers<[1], [0], [0], [1], [0, 0, 1, 1], [], []>} : vector<28x480xbf16>, vector<480x84xbf16>, vector<28x84xf32> -> vector<28x84xf32>
    %c0_192 = arith.constant 0 : index
    %c0_193 = arith.constant 0 : index
    %167 = vector.load %arg3[%c0_192, %c0_193] : memref<480x84xbf16, #tpu.memory_space<vmem>>, vector<480x84xbf16>
    %cst_194 = arith.constant dense<0.000000e+00> : vector<28x84xf32>
    %168 = tpu.matmul %164, %167, %cst_194 {dimension_numbers = #tpu.dot_dimension_numbers<[1], [0], [0], [1], [0, 0, 1, 1], [], []>} : vector<28x480xbf16>, vector<480x84xbf16>, vector<28x84xf32> -> vector<28x84xf32>
    %169 = arith.maximumf %166, %168 : vector<28x84xf32>
    %c0_195 = arith.constant 0 : index
    %c0_196 = arith.constant 0 : index
    %170 = vector.load %arg4[%c0_195, %c0_196] : memref<1x84xf32, #tpu.memory_space<vmem>>, vector<1x84xf32>
    %171 = vector.broadcast %170 : vector<1x84xf32> to vector<28x84xf32>
    %172 = arith.addf %169, %171 : vector<28x84xf32>
    %cst_197 = arith.constant 0.000000e+00 : f32
    %173 = vector.broadcast %cst_197 : f32 to vector<28x84xf32>
    %174 = arith.maximumf %172, %173 : vector<28x84xf32>
    %c0_198 = arith.constant 0 : index
    %c0_199 = arith.constant 0 : index
    %175 = vector.load %arg15[%c0_198, %c0_199] : memref<28x84xf32, #tpu.memory_space<vmem>>, vector<28x84xf32>
    tpu.vector_store %arg15[%c0_198, %c0_199], %174 {strides = array<i32>} : memref<28x84xf32, #tpu.memory_space<vmem>>, vector<28x84xf32>,
    %c0_200 = arith.constant 0 : index
    %c0_201 = arith.constant 0 : index
    %176 = tpu.strided_load %arg15[%c0_200, %c0_201] {strides = array<i32: 2, 1>} : memref<28x84xf32, #tpu.memory_space<vmem>>, vector<14x84xf32>
    %c1_202 = arith.constant 1 : index
    %c0_203 = arith.constant 0 : index
    %177 = tpu.strided_load %arg15[%c1_202, %c0_203] {strides = array<i32: 2, 1>} : memref<28x84xf32, #tpu.memory_space<vmem>>, vector<14x84xf32>
    %178 = arith.maximumf %176, %177 : vector<14x84xf32>
    %c0_204 = arith.constant 0 : index
    %c0_205 = arith.constant 0 : index
    %179 = vector.load %arg16[%c0_204, %c0_205] : memref<14x84xf32, #tpu.memory_space<vmem>>, vector<14x84xf32>
    tpu.vector_store %arg16[%c0_204, %c0_205], %178 {strides = array<i32>} : memref<14x84xf32, #tpu.memory_space<vmem>>, vector<14x84xf32>,
    %c0_206 = arith.constant 0 : index
    %c0_207 = arith.constant 0 : index
    %180 = vector.load %arg16[%c0_206, %c0_207] : memref<14x84xf32, #tpu.memory_space<vmem>>, vector<10x84xf32>
    %c1_208 = arith.constant 1 : index
    %c0_209 = arith.constant 0 : index
    %181 = vector.load %arg16[%c1_208, %c0_209] : memref<14x84xf32, #tpu.memory_space<vmem>>, vector<10x84xf32>
    %c2_210 = arith.constant 2 : index
    %c0_211 = arith.constant 0 : index
    %182 = vector.load %arg16[%c2_210, %c0_211] : memref<14x84xf32, #tpu.memory_space<vmem>>, vector<10x84xf32>
    %c3_212 = arith.constant 3 : index
    %c0_213 = arith.constant 0 : index
    %183 = vector.load %arg16[%c3_212, %c0_213] : memref<14x84xf32, #tpu.memory_space<vmem>>, vector<10x84xf32>
    %c4_214 = arith.constant 4 : index
    %c0_215 = arith.constant 0 : index
    %184 = vector.load %arg16[%c4_214, %c0_215] : memref<14x84xf32, #tpu.memory_space<vmem>>, vector<10x84xf32>
    %185 = tpu.concatenate %180, %181, %182, %183, %184 in 1 : vector<10x84xf32>, vector<10x84xf32>, vector<10x84xf32>, vector<10x84xf32>, vector<10x84xf32> -> vector<10x420xf32>
    %186 = arith.truncf %185 : vector<10x420xf32> to vector<10x420xbf16>
    %c0_216 = arith.constant 0 : index
    %c0_217 = arith.constant 0 : index
    %187 = vector.load %arg5[%c0_216, %c0_217] : memref<420x80xbf16, #tpu.memory_space<vmem>>, vector<420x80xbf16>
    %cst_218 = arith.constant dense<0.000000e+00> : vector<10x80xf32>
    %188 = tpu.matmul %186, %187, %cst_218 {dimension_numbers = #tpu.dot_dimension_numbers<[1], [0], [0], [1], [0, 0, 1, 1], [], []>} : vector<10x420xbf16>, vector<420x80xbf16>, vector<10x80xf32> -> vector<10x80xf32>
    %c0_219 = arith.constant 0 : index
    %c0_220 = arith.constant 0 : index
    %189 = vector.load %arg6[%c0_219, %c0_220] : memref<420x80xbf16, #tpu.memory_space<vmem>>, vector<420x80xbf16>
    %cst_221 = arith.constant dense<0.000000e+00> : vector<10x80xf32>
    %190 = tpu.matmul %186, %189, %cst_221 {dimension_numbers = #tpu.dot_dimension_numbers<[1], [0], [0], [1], [0, 0, 1, 1], [], []>} : vector<10x420xbf16>, vector<420x80xbf16>, vector<10x80xf32> -> vector<10x80xf32>
    %191 = arith.maximumf %188, %190 : vector<10x80xf32>
    %c0_222 = arith.constant 0 : index
    %c0_223 = arith.constant 0 : index
    %192 = vector.load %arg7[%c0_222, %c0_223] : memref<1x80xf32, #tpu.memory_space<vmem>>, vector<1x80xf32>
    %193 = vector.broadcast %192 : vector<1x80xf32> to vector<10x80xf32>
    %194 = arith.addf %191, %193 : vector<10x80xf32>
    %cst_224 = arith.constant 0.000000e+00 : f32
    %195 = vector.broadcast %cst_224 : f32 to vector<10x80xf32>
    %196 = arith.maximumf %194, %195 : vector<10x80xf32>
    %c0_225 = arith.constant 0 : index
    %c0_226 = arith.constant 0 : index
    %197 = vector.load %arg17[%c0_225, %c0_226] : memref<10x80xf32, #tpu.memory_space<vmem>>, vector<10x80xf32>
    tpu.vector_store %arg17[%c0_225, %c0_226], %196 {strides = array<i32>} : memref<10x80xf32, #tpu.memory_space<vmem>>, vector<10x80xf32>,
    %c0_227 = arith.constant 0 : index
    %c0_228 = arith.constant 0 : index
    %198 = tpu.strided_load %arg17[%c0_227, %c0_228] {strides = array<i32: 2, 1>} : memref<10x80xf32, #tpu.memory_space<vmem>>, vector<5x80xf32>
    %c1_229 = arith.constant 1 : index
    %c0_230 = arith.constant 0 : index
    %199 = tpu.strided_load %arg17[%c1_229, %c0_230] {strides = array<i32: 2, 1>} : memref<10x80xf32, #tpu.memory_space<vmem>>, vector<5x80xf32>
    %200 = arith.maximumf %198, %199 : vector<5x80xf32>
    %c3_231 = arith.constant 3 : index
    %c0_232 = arith.constant 0 : index
    %c0_233 = arith.constant 0 : index
    %201 = vector.load %arg18[%c3_231, %c0_232, %c0_233] : memref<4x5x80xf32, #tpu.memory_space<vmem>>, vector<1x5x80xf32>
    %202 = vector.shape_cast %201 : vector<1x5x80xf32> to vector<5x80xf32>
    %203 = vector.shape_cast %200 : vector<5x80xf32> to vector<1x5x80xf32>
    tpu.vector_store %arg18[%c3_231, %c0_232, %c0_233], %203 {strides = array<i32>} : memref<4x5x80xf32, #tpu.memory_space<vmem>>, vector<1x5x80xf32>,
    %c0_234 = arith.constant 0 : index
    %c0_235 = arith.constant 0 : index
    %c0_236 = arith.constant 0 : index
    %204 = vector.load %arg18[%c0_234, %c0_235, %c0_236] : memref<4x5x80xf32, #tpu.memory_space<vmem>>, vector<4x1x80xf32>
    %205 = vector.shape_cast %204 : vector<4x1x80xf32> to vector<4x80xf32>
    %c0_237 = arith.constant 0 : index
    %c1_238 = arith.constant 1 : index
    %c0_239 = arith.constant 0 : index
    %206 = vector.load %arg18[%c0_237, %c1_238, %c0_239] : memref<4x5x80xf32, #tpu.memory_space<vmem>>, vector<4x1x80xf32>
    %207 = vector.shape_cast %206 : vector<4x1x80xf32> to vector<4x80xf32>
    %c0_240 = arith.constant 0 : index
    %c2_241 = arith.constant 2 : index
    %c0_242 = arith.constant 0 : index
    %208 = vector.load %arg18[%c0_240, %c2_241, %c0_242] : memref<4x5x80xf32, #tpu.memory_space<vmem>>, vector<4x1x80xf32>
    %209 = vector.shape_cast %208 : vector<4x1x80xf32> to vector<4x80xf32>
    %c0_243 = arith.constant 0 : index
    %c3_244 = arith.constant 3 : index
    %c0_245 = arith.constant 0 : index
    %210 = vector.load %arg18[%c0_243, %c3_244, %c0_245] : memref<4x5x80xf32, #tpu.memory_space<vmem>>, vector<4x1x80xf32>
    %211 = vector.shape_cast %210 : vector<4x1x80xf32> to vector<4x80xf32>
    %c0_246 = arith.constant 0 : index
    %c4_247 = arith.constant 4 : index
    %c0_248 = arith.constant 0 : index
    %212 = vector.load %arg18[%c0_246, %c4_247, %c0_248] : memref<4x5x80xf32, #tpu.memory_space<vmem>>, vector<4x1x80xf32>
    %213 = vector.shape_cast %212 : vector<4x1x80xf32> to vector<4x80xf32>
    %214 = tpu.concatenate %205, %207, %209, %211, %213 in 1 : vector<4x80xf32>, vector<4x80xf32>, vector<4x80xf32>, vector<4x80xf32>, vector<4x80xf32> -> vector<4x400xf32>
    %215 = arith.truncf %214 : vector<4x400xf32> to vector<4x400xbf16>
    %c0_249 = arith.constant 0 : index
    %c0_250 = arith.constant 0 : index
    %216 = vector.load %arg8[%c0_249, %c0_250] : memref<400x120xbf16, #tpu.memory_space<vmem>>, vector<400x120xbf16>
    %cst_251 = arith.constant dense<0.000000e+00> : vector<4x120xf32>
    %217 = tpu.matmul %215, %216, %cst_251 {dimension_numbers = #tpu.dot_dimension_numbers<[1], [0], [0], [1], [0, 0, 1, 1], [], []>} : vector<4x400xbf16>, vector<400x120xbf16>, vector<4x120xf32> -> vector<4x120xf32>
    %c0_252 = arith.constant 0 : index
    %c0_253 = arith.constant 0 : index
    %218 = vector.load %arg9[%c0_252, %c0_253] : memref<1x120xf32, #tpu.memory_space<vmem>>, vector<1x120xf32>
    %219 = vector.broadcast %218 : vector<1x120xf32> to vector<4x120xf32>
    %220 = arith.addf %217, %219 : vector<4x120xf32>
    %cst_254 = arith.constant 0.000000e+00 : f32
    %221 = vector.broadcast %cst_254 : f32 to vector<4x120xf32>
    %222 = arith.maximumf %220, %221 : vector<4x120xf32>
    %223 = arith.truncf %222 : vector<4x120xf32> to vector<4x120xbf16>
    %c0_255 = arith.constant 0 : index
    %c0_256 = arith.constant 0 : index
    %224 = vector.load %arg10[%c0_255, %c0_256] : memref<120x84xbf16, #tpu.memory_space<vmem>>, vector<120x84xbf16>
    %cst_257 = arith.constant dense<0.000000e+00> : vector<4x84xf32>
    %225 = tpu.matmul %223, %224, %cst_257 {dimension_numbers = #tpu.dot_dimension_numbers<[1], [0], [0], [1], [0, 0, 1, 1], [], []>} : vector<4x120xbf16>, vector<120x84xbf16>, vector<4x84xf32> -> vector<4x84xf32>
    %c0_258 = arith.constant 0 : index
    %c0_259 = arith.constant 0 : index
    %226 = vector.load %arg11[%c0_258, %c0_259] : memref<1x84xf32, #tpu.memory_space<vmem>>, vector<1x84xf32>
    %227 = vector.broadcast %226 : vector<1x84xf32> to vector<4x84xf32>
    %228 = arith.addf %225, %227 : vector<4x84xf32>
    %cst_260 = arith.constant 0.000000e+00 : f32
    %229 = vector.broadcast %cst_260 : f32 to vector<4x84xf32>
    %230 = arith.maximumf %228, %229 : vector<4x84xf32>
    %231 = arith.truncf %230 : vector<4x84xf32> to vector<4x84xbf16>
    %c0_261 = arith.constant 0 : index
    %c0_262 = arith.constant 0 : index
    %232 = vector.load %arg12[%c0_261, %c0_262] : memref<84x10xbf16, #tpu.memory_space<vmem>>, vector<84x10xbf16>
    %cst_263 = arith.constant dense<0.000000e+00> : vector<4x10xf32>
    %233 = tpu.matmul %231, %232, %cst_263 {dimension_numbers = #tpu.dot_dimension_numbers<[1], [0], [0], [1], [0, 0, 1, 1], [], []>} : vector<4x84xbf16>, vector<84x10xbf16>, vector<4x10xf32> -> vector<4x10xf32>
    %c0_264 = arith.constant 0 : index
    %c0_265 = arith.constant 0 : index
    %234 = vector.load %arg13[%c0_264, %c0_265] : memref<1x10xf32, #tpu.memory_space<vmem>>, vector<1x10xf32>
    %235 = vector.broadcast %234 : vector<1x10xf32> to vector<4x10xf32>
    %236 = arith.addf %233, %235 : vector<4x10xf32>
    %c0_266 = arith.constant 0 : index
    %c0_267 = arith.constant 0 : index
    %c0_268 = arith.constant 0 : index
    %237 = vector.load %arg14[%c0_266, %c0_267, %c0_268] : memref<1x4x10xf32, #tpu.memory_space<vmem>>, vector<1x4x10xf32>
    %238 = vector.shape_cast %237 : vector<1x4x10xf32> to vector<4x10xf32>
    %239 = vector.shape_cast %236 : vector<4x10xf32> to vector<1x4x10xf32>
    tpu.vector_store %arg14[%c0_266, %c0_267, %c0_268], %239 {strides = array<i32>} : memref<1x4x10xf32, #tpu.memory_space<vmem>>, vector<1x4x10xf32>,
    return
  }
  func.func @transform_0(%arg0: i32) -> (i32, i32, i32) {
    %c0_i32 = arith.constant 0 : i32
    %c0_i32_0 = arith.constant 0 : i32
    %c0_i32_1 = arith.constant 0 : i32
    return %arg0, %c0_i32, %c0_i32_0 : i32, i32, i32
  }
  func.func @transform_1(%arg0: i32) -> (i32, i32) {
    %c0_i32 = arith.constant 0 : i32
    %c0_i32_0 = arith.constant 0 : i32
    %c0_i32_1 = arith.constant 0 : i32
    return %c0_i32, %c0_i32_0 : i32, i32
  }
  func.func @transform_2(%arg0: i32) -> (i32, i32) {
    %c0_i32 = arith.constant 0 : i32
    %c0_i32_0 = arith.constant 0 : i32
    %c0_i32_1 = arith.constant 0 : i32
    return %c0_i32, %c0_i32_0 : i32, i32
  }
  func.func @transform_3(%arg0: i32) -> (i32, i32) {
    %c0_i32 = arith.constant 0 : i32
    %c0_i32_0 = arith.constant 0 : i32
    %c0_i32_1 = arith.constant 0 : i32
    return %c0_i32, %c0_i32_0 : i32, i32
  }
  func.func @transform_4(%arg0: i32) -> (i32, i32) {
    %c0_i32 = arith.constant 0 : i32
    %c0_i32_0 = arith.constant 0 : i32
    %c0_i32_1 = arith.constant 0 : i32
    return %c0_i32, %c0_i32_0 : i32, i32
  }
  func.func @transform_5(%arg0: i32) -> (i32, i32) {
    %c0_i32 = arith.constant 0 : i32
    %c0_i32_0 = arith.constant 0 : i32
    %c0_i32_1 = arith.constant 0 : i32
    return %c0_i32, %c0_i32_0 : i32, i32
  }
  func.func @transform_6(%arg0: i32) -> (i32, i32) {
    %c0_i32 = arith.constant 0 : i32
    %c0_i32_0 = arith.constant 0 : i32
    %c0_i32_1 = arith.constant 0 : i32
    return %c0_i32, %c0_i32_0 : i32, i32
  }
  func.func @transform_7(%arg0: i32) -> (i32, i32) {
    %c0_i32 = arith.constant 0 : i32
    %c0_i32_0 = arith.constant 0 : i32
    %c0_i32_1 = arith.constant 0 : i32
    return %c0_i32, %c0_i32_0 : i32, i32
  }
  func.func @transform_8(%arg0: i32) -> (i32, i32) {
    %c0_i32 = arith.constant 0 : i32
    %c0_i32_0 = arith.constant 0 : i32
    %c0_i32_1 = arith.constant 0 : i32
    return %c0_i32, %c0_i32_0 : i32, i32
  }
  func.func @transform_9(%arg0: i32) -> (i32, i32) {
    %c0_i32 = arith.constant 0 : i32
    %c0_i32_0 = arith.constant 0 : i32
    %c0_i32_1 = arith.constant 0 : i32
    return %c0_i32, %c0_i32_0 : i32, i32
  }
  func.func @transform_10(%arg0: i32) -> (i32, i32) {
    %c0_i32 = arith.constant 0 : i32
    %c0_i32_0 = arith.constant 0 : i32
    %c0_i32_1 = arith.constant 0 : i32
    return %c0_i32, %c0_i32_0 : i32, i32
  }
  func.func @transform_11(%arg0: i32) -> (i32, i32) {
    %c0_i32 = arith.constant 0 : i32
    %c0_i32_0 = arith.constant 0 : i32
    %c0_i32_1 = arith.constant 0 : i32
    return %c0_i32, %c0_i32_0 : i32, i32
  }
  func.func @transform_12(%arg0: i32) -> (i32, i32) {
    %c0_i32 = arith.constant 0 : i32
    %c0_i32_0 = arith.constant 0 : i32
    %c0_i32_1 = arith.constant 0 : i32
    return %c0_i32, %c0_i32_0 : i32, i32
  }
  func.func @transform_13(%arg0: i32) -> (i32, i32, i32) {
    %c0_i32 = arith.constant 0 : i32
    %c0_i32_0 = arith.constant 0 : i32
    %c0_i32_1 = arith.constant 0 : i32
    return %arg0, %c0_i32, %c0_i32_0 : i32, i32, i32
  }
}

</mosaic_0001>

<llo_original>
// kernel: net_forward.1
$region0: #{net_forward.1}
  #allocation0 [shape = 'u32[]', space=smem, size = 0x4, offset = 0x4, fixed_abs, tag = 'smem constant byte address 0x4 - core index']
  #allocation1 [shape = 'u32[144,128]{1,0:T(1,128)}', space=vmem, size = 0x12000, scoped, tag = 'internal scratch']
  #allocation2 [shape = 'f32[28,84]{1,0:T(8,128)}', space=vmem, size = 0x4000, scoped, tag = 'scratch operand']
  #allocation3 [shape = 'f32[14,84]{1,0:T(8,128)}', space=vmem, size = 0x2000, scoped, tag = 'scratch operand']
  #allocation4 [shape = 'f32[10,80]{1,0:T(8,128)}', space=vmem, size = 0x2000, scoped, tag = 'scratch operand']
  #allocation5 [shape = 'f32[4,5,80]{2,1,0:T(8,128)}', space=vmem, size = 0x4000, scoped, tag = 'scratch operand']
  %s0 = inlined_call_operand.vmem [shape: f32[8,32,96], index: 0, kind: input, shape index: {}]
  %s1 = inlined_call_operand.vmem [shape: bf16[480,84], index: 1, kind: input, shape index: {}]
  %s2 = inlined_call_operand.vmem [shape: bf16[480,84], index: 2, kind: input, shape index: {}]
  %s3 = inlined_call_operand.vmem [shape: f32[1,84], index: 3, kind: input, shape index: {}]
  %s4 = inlined_call_operand.vmem [shape: bf16[420,80], index: 4, kind: input, shape index: {}]
  %s5 = inlined_call_operand.vmem [shape: bf16[420,80], index: 5, kind: input, shape index: {}]
  %s6 = inlined_call_operand.vmem [shape: f32[1,80], index: 6, kind: input, shape index: {}]
  %s7 = inlined_call_operand.vmem [shape: bf16[400,120], index: 7, kind: input, shape index: {}]
  %s8 = inlined_call_operand.vmem [shape: f32[1,120], index: 8, kind: input, shape index: {}]
  %s9 = inlined_call_operand.vmem [shape: bf16[120,84], index: 9, kind: input, shape index: {}]
  %s10 = inlined_call_operand.vmem [shape: f32[1,84], index: 10, kind: input, shape index: {}]
  %s11 = inlined_call_operand.vmem [shape: bf16[84,10], index: 11, kind: input, shape index: {}]
  %s12 = inlined_call_operand.vmem [shape: f32[1,10], index: 12, kind: input, shape index: {}]
  %s13 = inlined_call_operand.hbm [shape: f32[2,4,10], index: 13, kind: output, shape index: {}]
  %s14 = sld [smem:[#allocation0]]
  $region85: #{net_forward.1} parent=0
    _
  %s16 = ssub.s32 1, %s14
  %s17 = scalar_select 0, %s16, %s14
  $region1: #{net_forward.1} parent=0
    #allocation6 [shape = 'u8[4096]{0}', space=vmem, size = 0x1000, scoped, tag = 'output window, operand 0']
    #allocation7 [shape = 's32[2]{0}', space=sflag, size = 0x8, scoped, tag = 'scoped memory for net_forward.1']
    %18 = vsyncpa [#allocation7], 0
    %s19 = scalar_lea.sflag [#allocation7], 1
    %20 = vsyncpa %s19, 0
    loop: start=0, step=1, limit=4
    $region2: #{net_forward.1} parent=1 // loop_pre_header
      _
    $region3: #{net_forward.1} parent=1 // loop_header
      %s22 = sphi 0, %s26
      %p23 = scmp.ge.s32.totalorder %s22, 4
      %s32 = sphi 0, %s34
      %s35 = sphi 0, %s32
      %s36 = sphi 0, %s35
      %s52 = sphi 0, %s36
      %s56 = sphi 0, %s56
      %s58 = sphi 0, %s56
      %s59 = sphi 0, %s58
      %s73 = sphi 0, %s59
      %s77 = sphi 0, %s77
      %s79 = sphi 0, %s77
      %s80 = sphi 0, %s79
      %s94 = sphi 0, %s80
      %s98 = sphi 0, %s98
      %s100 = sphi 0, %s98
      %s101 = sphi 0, %s100
      %s115 = sphi 0, %s101
      %s119 = sphi 0, %s119
      %s121 = sphi 0, %s119
      %s122 = sphi 0, %s121
      %s136 = sphi 0, %s122
      %s140 = sphi 0, %s140
      %s142 = sphi 0, %s140
      %s143 = sphi 0, %s142
      %s157 = sphi 0, %s143
      %s161 = sphi 0, %s161
      %s163 = sphi 0, %s161
      %s164 = sphi 0, %s163
      %s178 = sphi 0, %s164
      %s182 = sphi 0, %s182
      %s184 = sphi 0, %s182
      %s185 = sphi 0, %s184
      %s199 = sphi 0, %s185
      %s203 = sphi 0, %s203
      %s205 = sphi 0, %s203
      %s206 = sphi 0, %s205
      %s220 = sphi 0, %s206
      %s224 = sphi 0, %s224
      %s226 = sphi 0, %s224
      %s227 = sphi 0, %s226
      %s241 = sphi 0, %s227
      %s245 = sphi 0, %s245
      %s247 = sphi 0, %s245
      %s248 = sphi 0, %s247
      %s262 = sphi 0, %s248
      %s266 = sphi 0, %s266
      %s268 = sphi 0, %s266
      %s269 = sphi 0, %s268
      %s283 = sphi 0, %s269
      %s287 = sphi 0, %s287
      %s289 = sphi 0, %s287
      %s290 = sphi 0, %s289
      %s304 = sphi 0, %s290
      %s310 = sphi 0, %s312
      %s313 = sphi 0, %s310
      %s314 = sphi 0, %s313
      %s330 = sphi 0, %s314
    $region4: #{net_forward.1} parent=1 // loop_header_branch
      %25 = sbr.rel (%p23) target = $region8
    $region5: #{net_forward.1} parent=1 // loop_body
      %s27 = ssub.s32 %s22, 1
      %s28 = ssub.s32 %s22, 2
      %s29 = sadd.s32 %s22, 1
      %s30 = ssub.s32 %s22, %s29
      %p31 = scmp.eq.s32.totalorder %s30, 0
      %s33 = sadd.s32 %s32, 1
      %s34 = scalar_select %p31, %s32, %s33
      %p37 = pneg %p31
      %p38 = scmp.eq.s32.totalorder %s22, 1
      %p39 = por %p37, %p38
      %p40 = scmp.ne.s32.totalorder %s32, %s35
      %p41 = scmp.eq.s32.totalorder %s22, 0
      %p42 = por %p40, %p41
      %p43 = scmp.ne.s32.totalorder %s32, %s35
      %p44 = scmp.eq.s32.totalorder %s27, 1
      %p45 = por %p43, %p44
      %p46 = scmp.ne.s32.totalorder %s35, %s36
      %p47 = scmp.eq.s32.totalorder %s27, 0
      %p48 = por %p46, %p47
      %p49 = scmp.ne.s32.totalorder %s35, %s36
      %p50 = scmp.eq.s32.totalorder %s28, 1
      %p51 = por %p49, %p50
      %p53 = scmp.ne.s32.totalorder %s36, %s52
      %p54 = scmp.eq.s32.totalorder %s28, 0
      %p55 = por %p53, %p54
      %s57 = sadd.s32 %s56, 1
      %p60 = scmp.eq.s32.totalorder %s22, 1
      %p61 = scmp.ne.s32.totalorder %s56, %s58
      %p62 = scmp.eq.s32.totalorder %s22, 0
      %p63 = por %p61, %p62
      %p64 = scmp.ne.s32.totalorder %s56, %s58
      %p65 = scmp.eq.s32.totalorder %s27, 1
      %p66 = por %p64, %p65
      %p67 = scmp.ne.s32.totalorder %s58, %s59
      %p68 = scmp.eq.s32.totalorder %s27, 0
      %p69 = por %p67, %p68
      %p70 = scmp.ne.s32.totalorder %s58, %s59
      %p71 = scmp.eq.s32.totalorder %s28, 1
      %p72 = por %p70, %p71
      %p74 = scmp.ne.s32.totalorder %s59, %s73
      %p75 = scmp.eq.s32.totalorder %s28, 0
      %p76 = por %p74, %p75
      %s78 = sadd.s32 %s77, 1
      %p81 = scmp.eq.s32.totalorder %s22, 1
      %p82 = scmp.ne.s32.totalorder %s77, %s79
      %p83 = scmp.eq.s32.totalorder %s22, 0
      %p84 = por %p82, %p83
      %p85 = scmp.ne.s32.totalorder %s77, %s79
      %p86 = scmp.eq.s32.totalorder %s27, 1
      %p87 = por %p85, %p86
      %p88 = scmp.ne.s32.totalorder %s79, %s80
      %p89 = scmp.eq.s32.totalorder %s27, 0
      %p90 = por %p88, %p89
      %p91 = scmp.ne.s32.totalorder %s79, %s80
      %p92 = scmp.eq.s32.totalorder %s28, 1
      %p93 = por %p91, %p92
      %p95 = scmp.ne.s32.totalorder %s80, %s94
      %p96 = scmp.eq.s32.totalorder %s28, 0
      %p97 = por %p95, %p96
      %s99 = sadd.s32 %s98, 1
      %p102 = scmp.eq.s32.totalorder %s22, 1
      %p103 = scmp.ne.s32.totalorder %s98, %s100
      %p104 = scmp.eq.s32.totalorder %s22, 0
      %p105 = por %p103, %p104
      %p106 = scmp.ne.s32.totalorder %s98, %s100
      %p107 = scmp.eq.s32.totalorder %s27, 1
      %p108 = por %p106, %p107
      %p109 = scmp.ne.s32.totalorder %s100, %s101
      %p110 = scmp.eq.s32.totalorder %s27, 0
      %p111 = por %p109, %p110
      %p112 = scmp.ne.s32.totalorder %s100, %s101
      %p113 = scmp.eq.s32.totalorder %s28, 1
      %p114 = por %p112, %p113
      %p116 = scmp.ne.s32.totalorder %s101, %s115
      %p117 = scmp.eq.s32.totalorder %s28, 0
      %p118 = por %p116, %p117
      %s120 = sadd.s32 %s119, 1
      %p123 = scmp.eq.s32.totalorder %s22, 1
      %p124 = scmp.ne.s32.totalorder %s119, %s121
      %p125 = scmp.eq.s32.totalorder %s22, 0
      %p126 = por %p124, %p125
      %p127 = scmp.ne.s32.totalorder %s119, %s121
      %p128 = scmp.eq.s32.totalorder %s27, 1
      %p129 = por %p127, %p128
      %p130 = scmp.ne.s32.totalorder %s121, %s122
      %p131 = scmp.eq.s32.totalorder %s27, 0
      %p132 = por %p130, %p131
      %p133 = scmp.ne.s32.totalorder %s121, %s122
      %p134 = scmp.eq.s32.totalorder %s28, 1
      %p135 = por %p133, %p134
      %p137 = scmp.ne.s32.totalorder %s122, %s136
      %p138 = scmp.eq.s32.totalorder %s28, 0
      %p139 = por %p137, %p138
      %s141 = sadd.s32 %s140, 1
      %p144 = scmp.eq.s32.totalorder %s22, 1
      %p145 = scmp.ne.s32.totalorder %s140, %s142
      %p146 = scmp.eq.s32.totalorder %s22, 0
      %p147 = por %p145, %p146
      %p148 = scmp.ne.s32.totalorder %s140, %s142
      %p149 = scmp.eq.s32.totalorder %s27, 1
      %p150 = por %p148, %p149
      %p151 = scmp.ne.s32.totalorder %s142, %s143
      %p152 = scmp.eq.s32.totalorder %s27, 0
      %p153 = por %p151, %p152
      %p154 = scmp.ne.s32.totalorder %s142, %s143
      %p155 = scmp.eq.s32.totalorder %s28, 1
      %p156 = por %p154, %p155
      %p158 = scmp.ne.s32.totalorder %s143, %s157
      %p159 = scmp.eq.s32.totalorder %s28, 0
      %p160 = por %p158, %p159
      %s162 = sadd.s32 %s161, 1
      %p165 = scmp.eq.s32.totalorder %s22, 1
      %p166 = scmp.ne.s32.totalorder %s161, %s163
      %p167 = scmp.eq.s32.totalorder %s22, 0
      %p168 = por %p166, %p167
      %p169 = scmp.ne.s32.totalorder %s161, %s163
      %p170 = scmp.eq.s32.totalorder %s27, 1
      %p171 = por %p169, %p170
      %p172 = scmp.ne.s32.totalorder %s163, %s164
      %p173 = scmp.eq.s32.totalorder %s27, 0
      %p174 = por %p172, %p173
      %p175 = scmp.ne.s32.totalorder %s163, %s164
      %p176 = scmp.eq.s32.totalorder %s28, 1
      %p177 = por %p175, %p176
      %p179 = scmp.ne.s32.totalorder %s164, %s178
      %p180 = scmp.eq.s32.totalorder %s28, 0
      %p181 = por %p179, %p180
      %s183 = sadd.s32 %s182, 1
      %p186 = scmp.eq.s32.totalorder %s22, 1
      %p187 = scmp.ne.s32.totalorder %s182, %s184
      %p188 = scmp.eq.s32.totalorder %s22, 0
      %p189 = por %p187, %p188
      %p190 = scmp.ne.s32.totalorder %s182, %s184
      %p191 = scmp.eq.s32.totalorder %s27, 1
      %p192 = por %p190, %p191
      %p193 = scmp.ne.s32.totalorder %s184, %s185
      %p194 = scmp.eq.s32.totalorder %s27, 0
      %p195 = por %p193, %p194
      %p196 = scmp.ne.s32.totalorder %s184, %s185
      %p197 = scmp.eq.s32.totalorder %s28, 1
      %p198 = por %p196, %p197
      %p200 = scmp.ne.s32.totalorder %s185, %s199
      %p201 = scmp.eq.s32.totalorder %s28, 0
      %p202 = por %p200, %p201
      %s204 = sadd.s32 %s203, 1
      %p207 = scmp.eq.s32.totalorder %s22, 1
      %p208 = scmp.ne.s32.totalorder %s203, %s205
      %p209 = scmp.eq.s32.totalorder %s22, 0
      %p210 = por %p208, %p209
      %p211 = scmp.ne.s32.totalorder %s203, %s205
      %p212 = scmp.eq.s32.totalorder %s27, 1
      %p213 = por %p211, %p212
      %p214 = scmp.ne.s32.totalorder %s205, %s206
      %p215 = scmp.eq.s32.totalorder %s27, 0
      %p216 = por %p214, %p215
      %p217 = scmp.ne.s32.totalorder %s205, %s206
      %p218 = scmp.eq.s32.totalorder %s28, 1
      %p219 = por %p217, %p218
      %p221 = scmp.ne.s32.totalorder %s206, %s220
      %p222 = scmp.eq.s32.totalorder %s28, 0
      %p223 = por %p221, %p222
      %s225 = sadd.s32 %s224, 1
      %p228 = scmp.eq.s32.totalorder %s22, 1
      %p229 = scmp.ne.s32.totalorder %s224, %s226
      %p230 = scmp.eq.s32.totalorder %s22, 0
      %p231 = por %p229, %p230
      %p232 = scmp.ne.s32.totalorder %s224, %s226
      %p233 = scmp.eq.s32.totalorder %s27, 1
      %p234 = por %p232, %p233
      %p235 = scmp.ne.s32.totalorder %s226, %s227
      %p236 = scmp.eq.s32.totalorder %s27, 0
      %p237 = por %p235, %p236
      %p238 = scmp.ne.s32.totalorder %s226, %s227
      %p239 = scmp.eq.s32.totalorder %s28, 1
      %p240 = por %p238, %p239
      %p242 = scmp.ne.s32.totalorder %s227, %s241
      %p243 = scmp.eq.s32.totalorder %s28, 0
      %p244 = por %p242, %p243
      %s246 = sadd.s32 %s245, 1
      %p249 = scmp.eq.s32.totalorder %s22, 1
      %p250 = scmp.ne.s32.totalorder %s245, %s247
      %p251 = scmp.eq.s32.totalorder %s22, 0
      %p252 = por %p250, %p251
      %p253 = scmp.ne.s32.totalorder %s245, %s247
      %p254 = scmp.eq.s32.totalorder %s27, 1
      %p255 = por %p253, %p254
      %p256 = scmp.ne.s32.totalorder %s247, %s248
      %p257 = scmp.eq.s32.totalorder %s27, 0
      %p258 = por %p256, %p257
      %p259 = scmp.ne.s32.totalorder %s247, %s248
      %p260 = scmp.eq.s32.totalorder %s28, 1
      %p261 = por %p259, %p260
      %p263 = scmp.ne.s32.totalorder %s248, %s262
      %p264 = scmp.eq.s32.totalorder %s28, 0
      %p265 = por %p263, %p264
      %s267 = sadd.s32 %s266, 1
      %p270 = scmp.eq.s32.totalorder %s22, 1
      %p271 = scmp.ne.s32.totalorder %s266, %s268
      %p272 = scmp.eq.s32.totalorder %s22, 0
      %p273 = por %p271, %p272
      %p274 = scmp.ne.s32.totalorder %s266, %s268
      %p275 = scmp.eq.s32.totalorder %s27, 1
      %p276 = por %p274, %p275
      %p277 = scmp.ne.s32.totalorder %s268, %s269
      %p278 = scmp.eq.s32.totalorder %s27, 0
      %p279 = por %p277, %p278
      %p280 = scmp.ne.s32.totalorder %s268, %s269
      %p281 = scmp.eq.s32.totalorder %s28, 1
      %p282 = por %p280, %p281
      %p284 = scmp.ne.s32.totalorder %s269, %s283
      %p285 = scmp.eq.s32.totalorder %s28, 0
      %p286 = por %p284, %p285
      %s288 = sadd.s32 %s287, 1
      %p291 = scmp.eq.s32.totalorder %s22, 1
      %p292 = scmp.ne.s32.totalorder %s287, %s289
      %p293 = scmp.eq.s32.totalorder %s22, 0
      %p294 = por %p292, %p293
      %p295 = scmp.ne.s32.totalorder %s287, %s289
      %p296 = scmp.eq.s32.totalorder %s27, 1
      %p297 = por %p295, %p296
      %p298 = scmp.ne.s32.totalorder %s289, %s290
      %p299 = scmp.eq.s32.totalorder %s27, 0
      %p300 = por %p298, %p299
      %p301 = scmp.ne.s32.totalorder %s289, %s290
      %p302 = scmp.eq.s32.totalorder %s28, 1
      %p303 = por %p301, %p302
      %p305 = scmp.ne.s32.totalorder %s290, %s304
      %p306 = scmp.eq.s32.totalorder %s28, 0
      %p307 = por %p305, %p306
      %s308 = ssub.s32 %s22, %s29
      %p309 = scmp.eq.s32.totalorder %s308, 0
      %s311 = sadd.s32 %s310, 1
      %s312 = scalar_select %p309, %s310, %s311
      %p315 = pneg %p309
      %p316 = scmp.eq.s32.totalorder %s22, 1
      %p317 = por %p315, %p316
      %p318 = scmp.ne.s32.totalorder %s310, %s313
      %p319 = scmp.eq.s32.totalorder %s22, 0
      %p320 = por %p318, %p319
      %p321 = scmp.ne.s32.totalorder %s310, %s313
      %p322 = scmp.eq.s32.totalorder %s27, 1
      %p323 = por %p321, %p322
      %p324 = scmp.ne.s32.totalorder %s313, %s314
      %p325 = scmp.eq.s32.totalorder %s27, 0
      %p326 = por %p324, %p325
      %p327 = scmp.ne.s32.totalorder %s313, %s314
      %p328 = scmp.eq.s32.totalorder %s28, 1
      %p329 = por %p327, %p328
      %p331 = scmp.ne.s32.totalorder %s314, %s330
      %p332 = scmp.eq.s32.totalorder %s28, 0
      %p333 = por %p331, %p332
      %p334 = scmp.le.s32.totalorder 1, %s22
      %p335 = scmp.lt.s32.totalorder %s22, 3
      %p336 = pnand %p334, %p335
      %p337 = pneg %p336
      // Predicated region
      $region9: #{net_forward.1} parent=5 // pred_check
        _
      $region10: #{net_forward.1} parent=5 // pred_check_branch
        %339 = sbr.rel (%p336) target = $region12
      $region11: #{net_forward.1} parent=5 // pred_region
        %s340 = ssub.s32 %s22, 1
        // Predicated region
        $region13: #{net_forward.1} parent=11 // pred_check
          %p341 = pneg %p69
        $region14: #{net_forward.1} parent=11 // pred_check_branch
          %343 = sbr.rel (%p341) target = $region16
        $region15: #{net_forward.1} parent=11 // pred_region
          _
        $region16: #{net_forward.1} parent=11 // pred_fallthru
          _
        // Predicated region
        $region17: #{net_forward.1} parent=11 // pred_check
          %p344 = pneg %p90
        $region18: #{net_forward.1} parent=11 // pred_check_branch
          %346 = sbr.rel (%p344) target = $region20
        $region19: #{net_forward.1} parent=11 // pred_region
          _
        $region20: #{net_forward.1} parent=11 // pred_fallthru
          _
        // Predicated region
        $region21: #{net_forward.1} parent=11 // pred_check
          %p347 = pneg %p111
        $region22: #{net_forward.1} parent=11 // pred_check_branch
          %349 = sbr.rel (%p347) target = $region24
        $region23: #{net_forward.1} parent=11 // pred_region
          _
        $region24: #{net_forward.1} parent=11 // pred_fallthru
          _
        // Predicated region
        $region25: #{net_forward.1} parent=11 // pred_check
          %p350 = pneg %p132
        $region26: #{net_forward.1} parent=11 // pred_check_branch
          %352 = sbr.rel (%p350) target = $region28
        $region27: #{net_forward.1} parent=11 // pred_region
          _
        $region28: #{net_forward.1} parent=11 // pred_fallthru
          _
        // Predicated region
        $region29: #{net_forward.1} parent=11 // pred_check
          %p353 = pneg %p153
        $region30: #{net_forward.1} parent=11 // pred_check_branch
          %355 = sbr.rel (%p353) target = $region32
        $region31: #{net_forward.1} parent=11 // pred_region
          _
        $region32: #{net_forward.1} parent=11 // pred_fallthru
          _
        // Predicated region
        $region33: #{net_forward.1} parent=11 // pred_check
          %p356 = pneg %p174
        $region34: #{net_forward.1} parent=11 // pred_check_branch
          %358 = sbr.rel (%p356) target = $region36
        $region35: #{net_forward.1} parent=11 // pred_region
          _
        $region36: #{net_forward.1} parent=11 // pred_fallthru
          _
        // Predicated region
        $region37: #{net_forward.1} parent=11 // pred_check
          %p359 = pneg %p195
        $region38: #{net_forward.1} parent=11 // pred_check_branch
          %361 = sbr.rel (%p359) target = $region40
        $region39: #{net_forward.1} parent=11 // pred_region
          _
        $region40: #{net_forward.1} parent=11 // pred_fallthru
          _
        // Predicated region
        $region41: #{net_forward.1} parent=11 // pred_check
          %p362 = pneg %p216
        $region42: #{net_forward.1} parent=11 // pred_check_branch
          %364 = sbr.rel (%p362) target = $region44
        $region43: #{net_forward.1} parent=11 // pred_region
          _
        $region44: #{net_forward.1} parent=11 // pred_fallthru
          _
        // Predicated region
        $region45: #{net_forward.1} parent=11 // pred_check
          %p365 = pneg %p237
        $region46: #{net_forward.1} parent=11 // pred_check_branch
          %367 = sbr.rel (%p365) target = $region48
        $region47: #{net_forward.1} parent=11 // pred_region
          _
        $region48: #{net_forward.1} parent=11 // pred_fallthru
          _
        // Predicated region
        $region49: #{net_forward.1} parent=11 // pred_check
          %p368 = pneg %p258
        $region50: #{net_forward.1} parent=11 // pred_check_branch
          %370 = sbr.rel (%p368) target = $region52
        $region51: #{net_forward.1} parent=11 // pred_region
          _
        $region52: #{net_forward.1} parent=11 // pred_fallthru
          _
        // Predicated region
        $region53: #{net_forward.1} parent=11 // pred_check
          %p371 = pneg %p279
        $region54: #{net_forward.1} parent=11 // pred_check_branch
          %373 = sbr.rel (%p371) target = $region56
        $region55: #{net_forward.1} parent=11 // pred_region
          _
        $region56: #{net_forward.1} parent=11 // pred_fallthru
          _
        // Predicated region
        $region57: #{net_forward.1} parent=11 // pred_check
          %p374 = pneg %p300
        $region58: #{net_forward.1} parent=11 // pred_check_branch
          %376 = sbr.rel (%p374) target = $region60
        $region59: #{net_forward.1} parent=11 // pred_region
          _
        $region60: #{net_forward.1} parent=11 // pred_fallthru
          _
      $region12: #{net_forward.1} parent=5 // pred_fallthru
        _
      %p377 = scmp.lt.s32.totalorder %s22, 2
      // Predicated region
      $region61: #{net_forward.1} parent=5 // pred_check
        %p378 = pneg %p377
      $region62: #{net_forward.1} parent=5 // pred_check_branch
        %380 = sbr.rel (%p378) target = $region64
      $region63: #{net_forward.1} parent=5 // pred_region
        // Predicated region
        $region65: #{net_forward.1} parent=63 // pred_check
          %p381 = pneg %p42
        $region66: #{net_forward.1} parent=63 // pred_check_branch
          %383 = sbr.rel (%p381) target = $region68
        $region67: #{net_forward.1} parent=63 // pred_region
          %s384 = smul.u32 4, %s22
          %p385 = scmp.lt.s32.totalorder %s384, 7
          %s386 = scalar_select %p385, %s384, 7
          %s387 = smul.addr %s386, 4
          %s388 = smul.addr %s387, 8
          %s389 = scalar_lea.vmem %s0, %s388
          %s390 = smul.u32 4, %s22
        $region68: #{net_forward.1} parent=63 // pred_fallthru
          _
      $region64: #{net_forward.1} parent=5 // pred_fallthru
        _
      %p391 = scmp.le.s32.totalorder 1, %s22
      %p392 = scmp.lt.s32.totalorder %s22, 3
      %p393 = pnand %p391, %p392
      %p394 = pneg %p393
      // Predicated region
      $region69: #{net_forward.1} parent=5 // pred_check
        _
      $region70: #{net_forward.1} parent=5 // pred_check_branch
        %396 = sbr.rel (%p393) target = $region72
      $region71: #{net_forward.1} parent=5 // pred_region
        %s397 = ssub.s32 %s22, 1
        %s398 = smul.u32 4, %s27
        %p399 = scmp.lt.s32.totalorder %s398, 7
        %s400 = scalar_select %p399, %s398, 7
        %s401 = smul.addr %s400, 4
        %s402 = smul.addr %s401, 8
        %s403 = scalar_lea.vmem %s0, %s402
        %p404 = pneg %p48
        %p405 = pneg %p45
        %p406 = pneg %p69
        %p407 = pneg %p66
        %p408 = pneg %p90
        %p409 = pneg %p87
        %p410 = pneg %p111
        %p411 = pneg %p108
        %p412 = pneg %p132
        %p413 = pneg %p129
        %p414 = pneg %p153
        %p415 = pneg %p150
        %p416 = pneg %p174
        %p417 = pneg %p171
        %p418 = pneg %p195
        %p419 = pneg %p192
        %p420 = pneg %p216
        %p421 = pneg %p213
        %p422 = pneg %p237
        %p423 = pneg %p234
        %p424 = pneg %p258
        %p425 = pneg %p255
        %p426 = pneg %p279
        %p427 = pneg %p276
        %p428 = pneg %p300
        %p429 = pneg %p297
        %p430 = pneg %p326
        %p431 = pneg %p323
        %s432 = sand.u32 %s313, 1
        %s433 = scalar_lea.sflag [#allocation7], %s432
        %s434 = sand.u32 %s313, 1
        %s435 = smul.addr %s434, 4
        %s436 = scalar_lea.vmem [#allocation6], %s435
        %s437 = smul.u32 4, %s27
        %p438 = scmp.lt.s32.totalorder %s437, 7
        %s439 = scalar_select %p438, %s437, 7
        %s440 = smul.addr %s439, 4
        %s441 = smul.addr %s440, 8
        %s442 = scalar_lea.vmem %s0, %s441
        %s443 = smul.u32 4, %s27
        %v445 = vld [vmem:[%s442] sm:$0xff]
        %v446 = vld [vmem:[%s442 + $0x8] sm:$0xff]
        %v447 = vld [vmem:[%s442 + $0x10] sm:$0xff]
        %v448 = vld [vmem:[%s442 + $0x18] sm:$0xf]
        %v449 = vld [vmem:[%s442 + $0x1] sm:$0xff]
        %v450 = vld [vmem:[%s442 + $0x9] sm:$0xff]
        %v451 = vld [vmem:[%s442 + $0x11] sm:$0xff]
        %v452 = vld [vmem:[%s442 + $0x19] sm:$0xf]
        %v453 = vld [vmem:[%s442 + $0x2] sm:$0xff]
        %v454 = vld [vmem:[%s442 + $0xa] sm:$0xff]
        %v455 = vld [vmem:[%s442 + $0x12] sm:$0xff]
        %v456 = vld [vmem:[%s442 + $0x1a] sm:$0xf]
        %v457 = vld [vmem:[%s442 + $0x3] sm:$0xff]
        %v458 = vld [vmem:[%s442 + $0xb] sm:$0xff]
        %v459 = vld [vmem:[%s442 + $0x13] sm:$0xff]
        %v460 = vld [vmem:[%s442 + $0x1b] sm:$0xf]
        %v461 = vld [vmem:[%s442 + $0x4] sm:$0xff]
        %v462 = vld [vmem:[%s442 + $0xc] sm:$0xff]
        %v463 = vld [vmem:[%s442 + $0x14] sm:$0xff]
        %v464 = vld [vmem:[%s442 + $0x1c] sm:$0xf]
        %469 = vrot.lane.b32.xlu0 %v449, 96
        %v470 = vpop.permute.xlu0 %469
        %471 = vrot.lane.b32.xlu0 %v450, 96
        %v472 = vpop.permute.xlu0 %471
        %473 = vrot.lane.b32.xlu0 %v451, 96
        %v474 = vpop.permute.xlu0 %473
        %475 = vrot.lane.b32.xlu0 %v452, 96
        %v476 = vpop.permute.xlu0 %475
        %485 = vrot.lane.b32.xlu0 %v453, 64
        %v486 = vpop.permute.xlu0 %485
        %487 = vrot.lane.b32.xlu0 %v454, 64
        %v488 = vpop.permute.xlu0 %487
        %489 = vrot.lane.b32.xlu0 %v455, 64
        %v490 = vpop.permute.xlu0 %489
        %491 = vrot.lane.b32.xlu0 %v456, 64
        %v492 = vpop.permute.xlu0 %491
        %501 = vrot.lane.b32.xlu0 %v457, 32
        %v502 = vpop.permute.xlu0 %501
        %503 = vrot.lane.b32.xlu0 %v458, 32
        %v504 = vpop.permute.xlu0 %503
        %505 = vrot.lane.b32.xlu0 %v459, 32
        %v506 = vpop.permute.xlu0 %505
        %507 = vrot.lane.b32.xlu0 %v460, 32
        %v508 = vpop.permute.xlu0 %507
        %vm513 = vcmask 785408
        %v514 = vsel %vm513, %v445, %v470
        %v515 = vsel %vm513, %v446, %v472
        %v516 = vsel %vm513, %v447, %v474
        %v517 = vsel %vm513, %v448, %v476
        %vm518 = vcmask 523264
        %v519 = vsel %vm518, %v470, %v486
        %v520 = vsel %vm518, %v472, %v488
        %v521 = vsel %vm518, %v474, %v490
        %v522 = vsel %vm518, %v476, %v492
        %vm523 = vcmask 261120
        %v524 = vsel %vm523, %v486, %v502
        %v525 = vsel %vm523, %v488, %v504
        %v526 = vsel %vm523, %v490, %v506
        %v527 = vsel %vm523, %v492, %v508
        %v528 = vpack.c.bf16 %v515, %v514
        %v529 = vpack.c.bf16 %v520, %v519
        %v530 = vpack.c.bf16 %v525, %v524
        %v531 = vpack.c.bf16 %v462, %v461
        %v532 = vpack.c.bf16 %v517, %v516
        %v533 = vpack.c.bf16 %v522, %v521
        %v534 = vpack.c.bf16 %v527, %v526
        %v535 = vpack.c.bf16 %v464, %v463
        %v536 = vld [vmem:[%s1] sm:$0xf]
        %v537 = vld [vmem:[%s1 + $0x4] sm:$0xf]
        %v538 = vld [vmem:[%s1 + $0x8] sm:$0xf]
        %v539 = vld [vmem:[%s1 + $0xc] sm:$0xf]
        %v540 = vld [vmem:[%s1 + $0x10] sm:$0xf]
        %v541 = vld [vmem:[%s1 + $0x14] sm:$0xf]
        %v542 = vld [vmem:[%s1 + $0x18] sm:$0xf]
        %v543 = vld [vmem:[%s1 + $0x1c] sm:$0xf]
        %v544 = vld [vmem:[%s1 + $0x20] sm:$0xf]
        %v545 = vld [vmem:[%s1 + $0x24] sm:$0xf]
        %v546 = vld [vmem:[%s1 + $0x28] sm:$0xf]
        %v547 = vld [vmem:[%s1 + $0x2c] sm:$0xf]
        %v548 = vld [vmem:[%s1 + $0x30] sm:$0xf]
        %v549 = vld [vmem:[%s1 + $0x34] sm:$0xf]
        %v550 = vld [vmem:[%s1 + $0x38] sm:$0xf]
        %v551 = vld [vmem:[%s1 + $0x3c] sm:$0xf]
        %v552 = vld [vmem:[%s1 + $0x40] sm:$0xf]
        %v553 = vld [vmem:[%s1 + $0x44] sm:$0xf]
        %v554 = vld [vmem:[%s1 + $0x48] sm:$0xf]
        %v555 = vld [vmem:[%s1 + $0x4c] sm:$0xf]
        %v556 = vld [vmem:[%s1 + $0x50] sm:$0xf]
        %v557 = vld [vmem:[%s1 + $0x54] sm:$0xf]
        %v558 = vld [vmem:[%s1 + $0x58] sm:$0xf]
        %v559 = vld [vmem:[%s1 + $0x5c] sm:$0xf]
        %v560 = vld [vmem:[%s1 + $0x60] sm:$0xf]
        %v561 = vld [vmem:[%s1 + $0x64] sm:$0xf]
        %v562 = vld [vmem:[%s1 + $0x68] sm:$0xf]
        %v563 = vld [vmem:[%s1 + $0x6c] sm:$0xf]
        %v564 = vld [vmem:[%s1 + $0x70] sm:$0xf]
        %v565 = vld [vmem:[%s1 + $0x74] sm:$0xf]
        %v566 = vld [vmem:[%s1 + $0x78] sm:$0xf]
        %v567 = vld [vmem:[%s1 + $0x7c] sm:$0xf]
        %v568 = vld [vmem:[%s1 + $0x80] sm:$0xf]
        %v569 = vld [vmem:[%s1 + $0x84] sm:$0xf]
        %v570 = vld [vmem:[%s1 + $0x88] sm:$0xf]
        %v571 = vld [vmem:[%s1 + $0x8c] sm:$0xf]
        %v572 = vld [vmem:[%s1 + $0x90] sm:$0xf]
        %v573 = vld [vmem:[%s1 + $0x94] sm:$0xf]
        %v574 = vld [vmem:[%s1 + $0x98] sm:$0xf]
        %v575 = vld [vmem:[%s1 + $0x9c] sm:$0xf]
        %v576 = vld [vmem:[%s1 + $0xa0] sm:$0xf]
        %v577 = vld [vmem:[%s1 + $0xa4] sm:$0xf]
        %v578 = vld [vmem:[%s1 + $0xa8] sm:$0xf]
        %v579 = vld [vmem:[%s1 + $0xac] sm:$0xf]
        %v580 = vld [vmem:[%s1 + $0xb0] sm:$0xf]
        %v581 = vld [vmem:[%s1 + $0xb4] sm:$0xf]
        %v582 = vld [vmem:[%s1 + $0xb8] sm:$0xf]
        %v583 = vld [vmem:[%s1 + $0xbc] sm:$0xf]
        %v584 = vld [vmem:[%s1 + $0xc0] sm:$0xf]
        %v585 = vld [vmem:[%s1 + $0xc4] sm:$0xf]
        %v586 = vld [vmem:[%s1 + $0xc8] sm:$0xf]
        %v587 = vld [vmem:[%s1 + $0xcc] sm:$0xf]
        %v588 = vld [vmem:[%s1 + $0xd0] sm:$0xf]
        %v589 = vld [vmem:[%s1 + $0xd4] sm:$0xf]
        %v590 = vld [vmem:[%s1 + $0xd8] sm:$0xf]
        %v591 = vld [vmem:[%s1 + $0xdc] sm:$0xf]
        %v592 = vld [vmem:[%s1 + $0xe0] sm:$0xf]
        %v593 = vld [vmem:[%s1 + $0xe4] sm:$0xf]
        %v594 = vld [vmem:[%s1 + $0xe8] sm:$0xf]
        %v595 = vld [vmem:[%s1 + $0xec] sm:$0xf]
        %v656 = vunpack.c.l.b16 %v536
        %v657 = vunpack.c.l.b16 %v537
        %v658 = vunpack.c.l.b16 %v538
        %v659 = vunpack.c.l.b16 %v539
        %v660 = vunpack.c.l.b16 %v540
        %v661 = vunpack.c.l.b16 %v541
        %v662 = vunpack.c.l.b16 %v542
        %v663 = vunpack.c.l.b16 %v543
        %v664 = vunpack.c.l.b16 %v544
        %v665 = vunpack.c.l.b16 %v545
        %v666 = vunpack.c.l.b16 %v546
        %v667 = vunpack.c.l.b16 %v547
        %v668 = vunpack.c.l.b16 %v548
        %v669 = vunpack.c.l.b16 %v549
        %v670 = vunpack.c.l.b16 %v550
        %v671 = vunpack.c.l.b16 %v551
        %v672 = vunpack.c.l.b16 %v552
        %v673 = vunpack.c.l.b16 %v553
        %v674 = vunpack.c.l.b16 %v554
        %v675 = vunpack.c.l.b16 %v555
        %v676 = vunpack.c.l.b16 %v556
        %v677 = vunpack.c.l.b16 %v557
        %v678 = vunpack.c.l.b16 %v558
        %v679 = vunpack.c.l.b16 %v559
        %v680 = vunpack.c.l.b16 %v560
        %v681 = vunpack.c.l.b16 %v561
        %v682 = vunpack.c.l.b16 %v562
        %v683 = vunpack.c.l.b16 %v563
        %v684 = vunpack.c.l.b16 %v564
        %v685 = vunpack.c.l.b16 %v565
        %v686 = vunpack.c.l.b16 %v566
        %v687 = vunpack.c.l.b16 %v567
        %v688 = vunpack.c.l.b16 %v568
        %v689 = vunpack.c.l.b16 %v569
        %v690 = vunpack.c.l.b16 %v570
        %v691 = vunpack.c.l.b16 %v571
        %v692 = vunpack.c.l.b16 %v572
        %v693 = vunpack.c.l.b16 %v573
        %v694 = vunpack.c.l.b16 %v574
        %v695 = vunpack.c.l.b16 %v575
        %v696 = vunpack.c.l.b16 %v576
        %v697 = vunpack.c.l.b16 %v577
        %v698 = vunpack.c.l.b16 %v578
        %v699 = vunpack.c.l.b16 %v579
        %v700 = vunpack.c.l.b16 %v580
        %v701 = vunpack.c.l.b16 %v581
        %v702 = vunpack.c.l.b16 %v582
        %v703 = vunpack.c.l.b16 %v583
        %v704 = vunpack.c.l.b16 %v584
        %v705 = vunpack.c.l.b16 %v585
        %v706 = vunpack.c.l.b16 %v586
        %v707 = vunpack.c.l.b16 %v587
        %v708 = vunpack.c.l.b16 %v588
        %v709 = vunpack.c.l.b16 %v589
        %v710 = vunpack.c.l.b16 %v590
        %v711 = vunpack.c.l.b16 %v591
        %v712 = vunpack.c.l.b16 %v592
        %v713 = vunpack.c.l.b16 %v593
        %v714 = vunpack.c.l.b16 %v594
        %v715 = vunpack.c.l.b16 %v595
        %v716 = vpack.c.b16 %v657, %v656
        %v717 = vpack.c.b16 %v659, %v658
        %v718 = vpack.c.b16 %v661, %v660
        %v719 = vpack.c.b16 %v663, %v662
        %v720 = vpack.c.b16 %v665, %v664
        %v721 = vpack.c.b16 %v667, %v666
        %v722 = vpack.c.b16 %v669, %v668
        %v723 = vpack.c.b16 %v671, %v670
        %v724 = vpack.c.b16 %v673, %v672
        %v725 = vpack.c.b16 %v675, %v674
        %v726 = vpack.c.b16 %v677, %v676
        %v727 = vpack.c.b16 %v679, %v678
        %v728 = vpack.c.b16 %v681, %v680
        %v729 = vpack.c.b16 %v683, %v682
        %v730 = vpack.c.b16 %v685, %v684
        %v731 = vpack.c.b16 %v687, %v686
        %v732 = vpack.c.b16 %v689, %v688
        %v733 = vpack.c.b16 %v691, %v690
        %v734 = vpack.c.b16 %v693, %v692
        %v735 = vpack.c.b16 %v695, %v694
        %v736 = vpack.c.b16 %v697, %v696
        %v737 = vpack.c.b16 %v699, %v698
        %v738 = vpack.c.b16 %v701, %v700
        %v739 = vpack.c.b16 %v703, %v702
        %v740 = vpack.c.b16 %v705, %v704
        %v741 = vpack.c.b16 %v707, %v706
        %v742 = vpack.c.b16 %v709, %v708
        %v743 = vpack.c.b16 %v711, %v710
        %v744 = vpack.c.b16 %v713, %v712
        %v745 = vpack.c.b16 %v715, %v714
        %v777 = vsel %vm513, %v531, 0
        %v780 = vsel %vm513, %v535, 0
        %782 = vmatprep.subr.bf16.mxu0 0
        %783 = vmatpush1.bf16.msra.mxu0 %v716
        %784 = vmatprep.subr.bf16.mxu0 0
        %785 = vmatpush1.bf16.msra.mxu0 %v717
        %786 = vmatprep.subr.bf16.mxu0 0
        %787 = vmatpush1.bf16.msra.mxu0 %v718
        %788 = vmatprep.subr.bf16.mxu0 0
        %789 = vmatpush1.bf16.msra.mxu0 %v719
        %790 = vmatprep.subr.bf16.mxu0 0
        %791 = vmatpush1.bf16.msra.mxu0 %v720
        %792 = vmatprep.subr.bf16.mxu0 0
        %793 = vmatpush1.bf16.msra.mxu0 %v721
        %794 = vmatprep.subr.bf16.mxu0 0
        %795 = vmatpush1.bf16.msra.mxu0 %v722
        %796 = vmatprep.subr.bf16.mxu0 0
        %797 = vmatpush1.bf16.msra.mxu0 %v723
        %798 = vmatprep.subr.bf16.mxu0 0
        %799 = vmatpush1.bf16.msra.mxu0 %v724
        %800 = vmatprep.subr.bf16.mxu0 0
        %801 = vmatpush1.bf16.msra.mxu0 %v725
        %802 = vmatprep.subr.bf16.mxu0 0
        %803 = vmatpush1.bf16.msra.mxu0 %v726
        %804 = vmatprep.subr.bf16.mxu0 0
        %805 = vmatpush1.bf16.msra.mxu0 %v727
        %806 = vmatprep.subr.bf16.mxu0 0
        %807 = vmatpush1.bf16.msra.mxu0 %v728
        %808 = vmatprep.subr.bf16.mxu0 0
        %809 = vmatpush1.bf16.msra.mxu0 %v729
        %810 = vmatprep.subr.bf16.mxu0 0
        %811 = vmatpush1.bf16.msra.mxu0 %v730
        %812 = vmatprep.subr.bf16.mxu0 0
        %813 = vmatpush1.bf16.msra.mxu0 %v731
        %814 = vmatprep.mubr.bf16.mxu0 %v529
        %815 = vmatmul.mubr.bf16.gmra.mrb[0].mxu0 %v528
        %v816 = vpop.f32.mrb[0].mxu0
        %v817 = vadd.f32 0.0, %v816
        %v818 = vpop.f32.mrb[0].mxu0
        %v819 = vpop.f32.mrb[0].mxu0
        %v820 = vadd.f32 0.0, %v819
        %v821 = vpop.f32.mrb[0].mxu0
        %822 = vmatprep.mubr.bf16.mxu0 %v533
        %823 = vmatmul.mubr.bf16.gmra.mrb[0].mxu0 %v532
        %v824 = vpop.f32.mrb[0].mxu0
        %v825 = vadd.f32 0.0, %v824
        %v826 = vpop.f32.mrb[0].mxu0
        %v827 = vpop.f32.mrb[0].mxu0
        %v828 = vadd.f32 0.0, %v827
        %v829 = vpop.f32.mrb[0].mxu0
        %830 = vdwg.mxu0
        %831 = vmatprep.subr.bf16.mxu0 0
        %832 = vmatpush1.bf16.msra.mxu0 %v732
        %833 = vmatprep.subr.bf16.mxu0 0
        %834 = vmatpush1.bf16.msra.mxu0 %v733
        %835 = vmatprep.subr.bf16.mxu0 0
        %836 = vmatpush1.bf16.msra.mxu0 %v734
        %837 = vmatprep.subr.bf16.mxu0 0
        %838 = vmatpush1.bf16.msra.mxu0 %v735
        %839 = vmatprep.subr.bf16.mxu0 0
        %840 = vmatpush1.bf16.msra.mxu0 %v736
        %841 = vmatprep.subr.bf16.mxu0 0
        %842 = vmatpush1.bf16.msra.mxu0 %v737
        %843 = vmatprep.subr.bf16.mxu0 0
        %844 = vmatpush1.bf16.msra.mxu0 %v738
        %845 = vmatprep.subr.bf16.mxu0 0
        %846 = vmatpush1.bf16.msra.mxu0 %v739
        %847 = vmatprep.subr.bf16.mxu0 0
        %848 = vmatpush1.bf16.msra.mxu0 %v740
        %849 = vmatprep.subr.bf16.mxu0 0
        %850 = vmatpush1.bf16.msra.mxu0 %v741
        %851 = vmatprep.subr.bf16.mxu0 0
        %852 = vmatpush1.bf16.msra.mxu0 %v742
        %853 = vmatprep.subr.bf16.mxu0 0
        %854 = vmatpush1.bf16.msra.mxu0 %v743
        %855 = vmatprep.subr.bf16.mxu0 0
        %856 = vmatpush1.bf16.msra.mxu0 %v744
        %857 = vmatprep.subr.bf16.mxu0 0
        %858 = vmatpush1.bf16.msra.mxu0 %v745
        %859 = vmatprep.subr.bf16.mxu0 0
        %860 = vmatpush1.bf16.msra.mxu0 0
        %861 = vmatprep.subr.bf16.mxu0 0
        %862 = vmatpush1.bf16.msra.mxu0 0
        %863 = vmatprep.mubr.bf16.mxu0 %v777
        %864 = vmatmul.mubr.bf16.gmra.mrb[0].mxu0 %v530
        %v865 = vpop.f32.mrb[0].mxu0
        %v866 = vadd.f32 %v817, %v865
        %v867 = vpop.f32.mrb[0].mxu0
        %v868 = vpop.f32.mrb[0].mxu0
        %v869 = vadd.f32 %v820, %v868
        %v870 = vpop.f32.mrb[0].mxu0
        %871 = vmatprep.mubr.bf16.mxu0 %v780
        %872 = vmatmul.mubr.bf16.gmra.mrb[0].mxu0 %v534
        %v873 = vpop.f32.mrb[0].mxu0
        %v874 = vadd.f32 %v825, %v873
        %v875 = vpop.f32.mrb[0].mxu0
        %v876 = vpop.f32.mrb[0].mxu0
        %v877 = vadd.f32 %v828, %v876
        %v878 = vpop.f32.mrb[0].mxu0
        %879 = vdwg.mxu0
        %v880 = vld [vmem:[%s2] sm:$0xf]
        %v881 = vld [vmem:[%s2 + $0x4] sm:$0xf]
        %v882 = vld [vmem:[%s2 + $0x8] sm:$0xf]
        %v883 = vld [vmem:[%s2 + $0xc] sm:$0xf]
        %v884 = vld [vmem:[%s2 + $0x10] sm:$0xf]
        %v885 = vld [vmem:[%s2 + $0x14] sm:$0xf]
        %v886 = vld [vmem:[%s2 + $0x18] sm:$0xf]
        %v887 = vld [vmem:[%s2 + $0x1c] sm:$0xf]
        %v888 = vld [vmem:[%s2 + $0x20] sm:$0xf]
        %v889 = vld [vmem:[%s2 + $0x24] sm:$0xf]
        %v890 = vld [vmem:[%s2 + $0x28] sm:$0xf]
        %v891 = vld [vmem:[%s2 + $0x2c] sm:$0xf]
        %v892 = vld [vmem:[%s2 + $0x30] sm:$0xf]
        %v893 = vld [vmem:[%s2 + $0x34] sm:$0xf]
        %v894 = vld [vmem:[%s2 + $0x38] sm:$0xf]
        %v895 = vld [vmem:[%s2 + $0x3c] sm:$0xf]
        %v896 = vld [vmem:[%s2 + $0x40] sm:$0xf]
        %v897 = vld [vmem:[%s2 + $0x44] sm:$0xf]
        %v898 = vld [vmem:[%s2 + $0x48] sm:$0xf]
        %v899 = vld [vmem:[%s2 + $0x4c] sm:$0xf]
        %v900 = vld [vmem:[%s2 + $0x50] sm:$0xf]
        %v901 = vld [vmem:[%s2 + $0x54] sm:$0xf]
        %v902 = vld [vmem:[%s2 + $0x58] sm:$0xf]
        %v903 = vld [vmem:[%s2 + $0x5c] sm:$0xf]
        %v904 = vld [vmem:[%s2 + $0x60] sm:$0xf]
        %v905 = vld [vmem:[%s2 + $0x64] sm:$0xf]
        %v906 = vld [vmem:[%s2 + $0x68] sm:$0xf]
        %v907 = vld [vmem:[%s2 + $0x6c] sm:$0xf]
        %v908 = vld [vmem:[%s2 + $0x70] sm:$0xf]
        %v909 = vld [vmem:[%s2 + $0x74] sm:$0xf]
        %v910 = vld [vmem:[%s2 + $0x78] sm:$0xf]
        %v911 = vld [vmem:[%s2 + $0x7c] sm:$0xf]
        %v912 = vld [vmem:[%s2 + $0x80] sm:$0xf]
        %v913 = vld [vmem:[%s2 + $0x84] sm:$0xf]
        %v914 = vld [vmem:[%s2 + $0x88] sm:$0xf]
        %v915 = vld [vmem:[%s2 + $0x8c] sm:$0xf]
        %v916 = vld [vmem:[%s2 + $0x90] sm:$0xf]
        %v917 = vld [vmem:[%s2 + $0x94] sm:$0xf]
        %v918 = vld [vmem:[%s2 + $0x98] sm:$0xf]
        %v919 = vld [vmem:[%s2 + $0x9c] sm:$0xf]
        %v920 = vld [vmem:[%s2 + $0xa0] sm:$0xf]
        %v921 = vld [vmem:[%s2 + $0xa4] sm:$0xf]
        %v922 = vld [vmem:[%s2 + $0xa8] sm:$0xf]
        %v923 = vld [vmem:[%s2 + $0xac] sm:$0xf]
        %v924 = vld [vmem:[%s2 + $0xb0] sm:$0xf]
        %v925 = vld [vmem:[%s2 + $0xb4] sm:$0xf]
        %v926 = vld [vmem:[%s2 + $0xb8] sm:$0xf]
        %v927 = vld [vmem:[%s2 + $0xbc] sm:$0xf]
        %v928 = vld [vmem:[%s2 + $0xc0] sm:$0xf]
        %v929 = vld [vmem:[%s2 + $0xc4] sm:$0xf]
        %v930 = vld [vmem:[%s2 + $0xc8] sm:$0xf]
        %v931 = vld [vmem:[%s2 + $0xcc] sm:$0xf]
        %v932 = vld [vmem:[%s2 + $0xd0] sm:$0xf]
        %v933 = vld [vmem:[%s2 + $0xd4] sm:$0xf]
        %v934 = vld [vmem:[%s2 + $0xd8] sm:$0xf]
        %v935 = vld [vmem:[%s2 + $0xdc] sm:$0xf]
        %v936 = vld [vmem:[%s2 + $0xe0] sm:$0xf]
        %v937 = vld [vmem:[%s2 + $0xe4] sm:$0xf]
        %v938 = vld [vmem:[%s2 + $0xe8] sm:$0xf]
        %v939 = vld [vmem:[%s2 + $0xec] sm:$0xf]
        %v1000 = vunpack.c.l.b16 %v880
        %v1001 = vunpack.c.l.b16 %v881
        %v1002 = vunpack.c.l.b16 %v882
        %v1003 = vunpack.c.l.b16 %v883
        %v1004 = vunpack.c.l.b16 %v884
        %v1005 = vunpack.c.l.b16 %v885
        %v1006 = vunpack.c.l.b16 %v886
        %v1007 = vunpack.c.l.b16 %v887
        %v1008 = vunpack.c.l.b16 %v888
        %v1009 = vunpack.c.l.b16 %v889
        %v1010 = vunpack.c.l.b16 %v890
        %v1011 = vunpack.c.l.b16 %v891
        %v1012 = vunpack.c.l.b16 %v892
        %v1013 = vunpack.c.l.b16 %v893
        %v1014 = vunpack.c.l.b16 %v894
        %v1015 = vunpack.c.l.b16 %v895
        %v1016 = vunpack.c.l.b16 %v896
        %v1017 = vunpack.c.l.b16 %v897
        %v1018 = vunpack.c.l.b16 %v898
        %v1019 = vunpack.c.l.b16 %v899
        %v1020 = vunpack.c.l.b16 %v900
        %v1021 = vunpack.c.l.b16 %v901
        %v1022 = vunpack.c.l.b16 %v902
        %v1023 = vunpack.c.l.b16 %v903
        %v1024 = vunpack.c.l.b16 %v904
        %v1025 = vunpack.c.l.b16 %v905
        %v1026 = vunpack.c.l.b16 %v906
        %v1027 = vunpack.c.l.b16 %v907
        %v1028 = vunpack.c.l.b16 %v908
        %v1029 = vunpack.c.l.b16 %v909
        %v1030 = vunpack.c.l.b16 %v910
        %v1031 = vunpack.c.l.b16 %v911
        %v1032 = vunpack.c.l.b16 %v912
        %v1033 = vunpack.c.l.b16 %v913
        %v1034 = vunpack.c.l.b16 %v914
        %v1035 = vunpack.c.l.b16 %v915
        %v1036 = vunpack.c.l.b16 %v916
        %v1037 = vunpack.c.l.b16 %v917
        %v1038 = vunpack.c.l.b16 %v918
        %v1039 = vunpack.c.l.b16 %v919
        %v1040 = vunpack.c.l.b16 %v920
        %v1041 = vunpack.c.l.b16 %v921
        %v1042 = vunpack.c.l.b16 %v922
        %v1043 = vunpack.c.l.b16 %v923
        %v1044 = vunpack.c.l.b16 %v924
        %v1045 = vunpack.c.l.b16 %v925
        %v1046 = vunpack.c.l.b16 %v926
        %v1047 = vunpack.c.l.b16 %v927
        %v1048 = vunpack.c.l.b16 %v928
        %v1049 = vunpack.c.l.b16 %v929
        %v1050 = vunpack.c.l.b16 %v930
        %v1051 = vunpack.c.l.b16 %v931
        %v1052 = vunpack.c.l.b16 %v932
        %v1053 = vunpack.c.l.b16 %v933
        %v1054 = vunpack.c.l.b16 %v934
        %v1055 = vunpack.c.l.b16 %v935
        %v1056 = vunpack.c.l.b16 %v936
        %v1057 = vunpack.c.l.b16 %v937
        %v1058 = vunpack.c.l.b16 %v938
        %v1059 = vunpack.c.l.b16 %v939
        %v1060 = vpack.c.b16 %v1001, %v1000
        %v1061 = vpack.c.b16 %v1003, %v1002
        %v1062 = vpack.c.b16 %v1005, %v1004
        %v1063 = vpack.c.b16 %v1007, %v1006
        %v1064 = vpack.c.b16 %v1009, %v1008
        %v1065 = vpack.c.b16 %v1011, %v1010
        %v1066 = vpack.c.b16 %v1013, %v1012
        %v1067 = vpack.c.b16 %v1015, %v1014
        %v1068 = vpack.c.b16 %v1017, %v1016
        %v1069 = vpack.c.b16 %v1019, %v1018
        %v1070 = vpack.c.b16 %v1021, %v1020
        %v1071 = vpack.c.b16 %v1023, %v1022
        %v1072 = vpack.c.b16 %v1025, %v1024
        %v1073 = vpack.c.b16 %v1027, %v1026
        %v1074 = vpack.c.b16 %v1029, %v1028
        %v1075 = vpack.c.b16 %v1031, %v1030
        %v1076 = vpack.c.b16 %v1033, %v1032
        %v1077 = vpack.c.b16 %v1035, %v1034
        %v1078 = vpack.c.b16 %v1037, %v1036
        %v1079 = vpack.c.b16 %v1039, %v1038
        %v1080 = vpack.c.b16 %v1041, %v1040
        %v1081 = vpack.c.b16 %v1043, %v1042
        %v1082 = vpack.c.b16 %v1045, %v1044
        %v1083 = vpack.c.b16 %v1047, %v1046
        %v1084 = vpack.c.b16 %v1049, %v1048
        %v1085 = vpack.c.b16 %v1051, %v1050
        %v1086 = vpack.c.b16 %v1053, %v1052
        %v1087 = vpack.c.b16 %v1055, %v1054
        %v1088 = vpack.c.b16 %v1057, %v1056
        %v1089 = vpack.c.b16 %v1059, %v1058
        %1120 = vmatprep.subr.bf16.mxu0 0
        %1121 = vmatpush1.bf16.msra.mxu0 %v1060
        %1122 = vmatprep.subr.bf16.mxu0 0
        %1123 = vmatpush1.bf16.msra.mxu0 %v1061
        %1124 = vmatprep.subr.bf16.mxu0 0
        %1125 = vmatpush1.bf16.msra.mxu0 %v1062
        %1126 = vmatprep.subr.bf16.mxu0 0
        %1127 = vmatpush1.bf16.msra.mxu0 %v1063
        %1128 = vmatprep.subr.bf16.mxu0 0
        %1129 = vmatpush1.bf16.msra.mxu0 %v1064
        %1130 = vmatprep.subr.bf16.mxu0 0
        %1131 = vmatpush1.bf16.msra.mxu0 %v1065
        %1132 = vmatprep.subr.bf16.mxu0 0
        %1133 = vmatpush1.bf16.msra.mxu0 %v1066
        %1134 = vmatprep.subr.bf16.mxu0 0
        %1135 = vmatpush1.bf16.msra.mxu0 %v1067
        %1136 = vmatprep.subr.bf16.mxu0 0
        %1137 = vmatpush1.bf16.msra.mxu0 %v1068
        %1138 = vmatprep.subr.bf16.mxu0 0
        %1139 = vmatpush1.bf16.msra.mxu0 %v1069
        %1140 = vmatprep.subr.bf16.mxu0 0
        %1141 = vmatpush1.bf16.msra.mxu0 %v1070
        %1142 = vmatprep.subr.bf16.mxu0 0
        %1143 = vmatpush1.bf16.msra.mxu0 %v1071
        %1144 = vmatprep.subr.bf16.mxu0 0
        %1145 = vmatpush1.bf16.msra.mxu0 %v1072
        %1146 = vmatprep.subr.bf16.mxu0 0
        %1147 = vmatpush1.bf16.msra.mxu0 %v1073
        %1148 = vmatprep.subr.bf16.mxu0 0
        %1149 = vmatpush1.bf16.msra.mxu0 %v1074
        %1150 = vmatprep.subr.bf16.mxu0 0
        %1151 = vmatpush1.bf16.msra.mxu0 %v1075
        %1152 = vmatprep.mubr.bf16.mxu0 %v529
        %1153 = vmatmul.mubr.bf16.gmra.mrb[0].mxu0 %v528
        %v1154 = vpop.f32.mrb[0].mxu0
        %v1155 = vadd.f32 0.0, %v1154
        %v1156 = vpop.f32.mrb[0].mxu0
        %v1157 = vpop.f32.mrb[0].mxu0
        %v1158 = vadd.f32 0.0, %v1157
        %v1159 = vpop.f32.mrb[0].mxu0
        %1160 = vmatprep.mubr.bf16.mxu0 %v533
        %1161 = vmatmul.mubr.bf16.gmra.mrb[0].mxu0 %v532
        %v1162 = vpop.f32.mrb[0].mxu0
        %v1163 = vadd.f32 0.0, %v1162
        %v1164 = vpop.f32.mrb[0].mxu0
        %v1165 = vpop.f32.mrb[0].mxu0
        %v1166 = vadd.f32 0.0, %v1165
        %v1167 = vpop.f32.mrb[0].mxu0
        %1168 = vdwg.mxu0
        %1169 = vmatprep.subr.bf16.mxu0 0
        %1170 = vmatpush1.bf16.msra.mxu0 %v1076
        %1171 = vmatprep.subr.bf16.mxu0 0
        %1172 = vmatpush1.bf16.msra.mxu0 %v1077
        %1173 = vmatprep.subr.bf16.mxu0 0
        %1174 = vmatpush1.bf16.msra.mxu0 %v1078
        %1175 = vmatprep.subr.bf16.mxu0 0
        %1176 = vmatpush1.bf16.msra.mxu0 %v1079
        %1177 = vmatprep.subr.bf16.mxu0 0
        %1178 = vmatpush1.bf16.msra.mxu0 %v1080
        %1179 = vmatprep.subr.bf16.mxu0 0
        %1180 = vmatpush1.bf16.msra.mxu0 %v1081
        %1181 = vmatprep.subr.bf16.mxu0 0
        %1182 = vmatpush1.bf16.msra.mxu0 %v1082
        %1183 = vmatprep.subr.bf16.mxu0 0
        %1184 = vmatpush1.bf16.msra.mxu0 %v1083
        %1185 = vmatprep.subr.bf16.mxu0 0
        %1186 = vmatpush1.bf16.msra.mxu0 %v1084
        %1187 = vmatprep.subr.bf16.mxu0 0
        %1188 = vmatpush1.bf16.msra.mxu0 %v1085
        %1189 = vmatprep.subr.bf16.mxu0 0
        %1190 = vmatpush1.bf16.msra.mxu0 %v1086
        %1191 = vmatprep.subr.bf16.mxu0 0
        %1192 = vmatpush1.bf16.msra.mxu0 %v1087
        %1193 = vmatprep.subr.bf16.mxu0 0
        %1194 = vmatpush1.bf16.msra.mxu0 %v1088
        %1195 = vmatprep.subr.bf16.mxu0 0
        %1196 = vmatpush1.bf16.msra.mxu0 %v1089
        %1197 = vmatprep.subr.bf16.mxu0 0
        %1198 = vmatpush1.bf16.msra.mxu0 0
        %1199 = vmatprep.subr.bf16.mxu0 0
        %1200 = vmatpush1.bf16.msra.mxu0 0
        %1201 = vmatprep.mubr.bf16.mxu0 %v777
        %1202 = vmatmul.mubr.bf16.gmra.mrb[0].mxu0 %v530
        %v1203 = vpop.f32.mrb[0].mxu0
        %v1204 = vadd.f32 %v1155, %v1203
        %v1205 = vpop.f32.mrb[0].mxu0
        %v1206 = vpop.f32.mrb[0].mxu0
        %v1207 = vadd.f32 %v1158, %v1206
        %v1208 = vpop.f32.mrb[0].mxu0
        %1209 = vmatprep.mubr.bf16.mxu0 %v780
        %1210 = vmatmul.mubr.bf16.gmra.mrb[0].mxu0 %v534
        %v1211 = vpop.f32.mrb[0].mxu0
        %v1212 = vadd.f32 %v1163, %v1211
        %v1213 = vpop.f32.mrb[0].mxu0
        %v1214 = vpop.f32.mrb[0].mxu0
        %v1215 = vadd.f32 %v1166, %v1214
        %v1216 = vpop.f32.mrb[0].mxu0
        %1217 = vdwg.mxu0
        %v1218 = vmax.f32 %v866, %v1204
        %v1219 = vmax.f32 %v869, %v1207
        %v1220 = vmax.f32 %v874, %v1212
        %v1221 = vmax.f32 %v877, %v1215
        %v1222 = vld [vmem:[%s3] sm:$0x1]
        %v1224 = vlaneseq
        %v1225 = vshrl.u32 %v1224, 7
        %v1226 = vsub.s32 0, %v1225
        %v1227 = vrot.slane %v1222, %v1226
        %v1229 = vadd.f32 %v1218, %v1227
        %v1230 = vadd.f32 %v1219, %v1227
        %v1231 = vadd.f32 %v1220, %v1227
        %v1232 = vadd.f32 %v1221, %v1227
        %v1233 = vmax.f32 %v1229, 0.0
        %v1234 = vmax.f32 %v1230, 0.0
        %v1235 = vmax.f32 %v1231, 0.0
        %v1236 = vmax.f32 %v1232, 0.0
        %vm1237 = vcmask 687104
        %1238 = vst.msk [vmem:[#allocation2] sm:$0xff] %vm1237, %v1233
        %1239 = vst.msk [vmem:[#allocation2 + $0x8] sm:$0xff] %vm1237, %v1234
        %1240 = vst.msk [vmem:[#allocation2 + $0x10] sm:$0xff] %vm1237, %v1235
        %vm1241 = vcmask 683008
        %1242 = vst.msk [vmem:[#allocation2 + $0x18] sm:$0xf] %vm1241, %v1236
        %v1243 = vld [vmem:[#allocation2] ss:$2 sm:$0xff]
        %s1244 = scalar_lea.vmem [#allocation2], 16
        %v1245 = vld [vmem:[%s1244] ss:$2 sm:$0x3f]
        %s1246 = scalar_lea.vmem [#allocation2], 1
        %v1247 = vld [vmem:[%s1246] ss:$2 sm:$0xff]
        %s1248 = scalar_lea.vmem [#allocation2], 17
        %v1249 = vld [vmem:[%s1248] ss:$2 sm:$0x3f]
        %v1250 = vmax.f32 %v1243, %v1247
        %v1251 = vmax.f32 %v1245, %v1249
        %1252 = vst.msk [vmem:[#allocation3] sm:$0xff] %vm1237, %v1250
        %vm1253 = vcmask 685056
        %1254 = vst.msk [vmem:[#allocation3 + $0x8] sm:$0x3f] %vm1253, %v1251
        %v1255 = vld [vmem:[#allocation3] sm:$0xff]
        %v1256 = vld [vmem:[#allocation3 + $0x8] sm:$0x3]
        %v1257 = vld [vmem:[#allocation3 + $0x1] sm:$0xff]
        %v1258 = vld [vmem:[#allocation3 + $0x9] sm:$0x3]
        %v1259 = vld [vmem:[#allocation3 + $0x2] sm:$0xff]
        %v1260 = vld [vmem:[#allocation3 + $0xa] sm:$0x3]
        %v1261 = vld [vmem:[#allocation3 + $0x3] sm:$0xff]
        %v1262 = vld [vmem:[#allocation3 + $0xb] sm:$0x3]
        %v1263 = vld [vmem:[#allocation3 + $0x4] sm:$0xff]
        %v1264 = vld [vmem:[#allocation3 + $0xc] sm:$0x3]
        %1267 = vrot.lane.b32.xlu0 %v1257, 84
        %v1268 = vpop.permute.xlu0 %1267
        %1269 = vrot.lane.b32.xlu0 %v1258, 84
        %v1270 = vpop.permute.xlu0 %1269
        %1275 = vrot.lane.b32.xlu0 %v1259, 40
        %v1276 = vpop.permute.xlu0 %1275
        %1277 = vrot.lane.b32.xlu0 %v1260, 40
        %v1278 = vpop.permute.xlu0 %1277
        %1283 = vrot.lane.b32.xlu0 %v1261, 124
        %v1284 = vpop.permute.xlu0 %1283
        %1285 = vrot.lane.b32.xlu0 %v1262, 124
        %v1286 = vpop.permute.xlu0 %1285
        %1291 = vrot.lane.b32.xlu0 %v1263, 80
        %v1292 = vpop.permute.xlu0 %1291
        %1293 = vrot.lane.b32.xlu0 %v1264, 80
        %v1294 = vpop.permute.xlu0 %1293
        %v1297 = vsel %vm1237, %v1255, %v1268
        %v1298 = vsel %vm1237, %v1256, %v1270
        %vm1299 = vcmask 326656
        %v1300 = vsel %vm1299, %v1268, %v1276
        %v1301 = vsel %vm1299, %v1270, %v1278
        %vm1302 = vcmask 1014784
        %v1303 = vsel %vm1302, %v1300, %v1284
        %v1304 = vsel %vm1302, %v1301, %v1286
        %vm1305 = vcmask 654336
        %v1306 = vsel %vm1305, %v1284, %v1292
        %v1307 = vsel %vm1305, %v1286, %v1294
        %v1308 = vpack.c.bf16 %v1298, %v1297
        %v1309 = vpack.c.bf16 %v1304, %v1303
        %v1310 = vpack.c.bf16 %v1307, %v1306
        %v1311 = vpack.c.bf16 %v1294, %v1292
        %v1312 = vld [vmem:[%s4] sm:$0xf]
        %v1313 = vld [vmem:[%s4 + $0x4] sm:$0xf]
        %v1314 = vld [vmem:[%s4 + $0x8] sm:$0xf]
        %v1315 = vld [vmem:[%s4 + $0xc] sm:$0xf]
        %v1316 = vld [vmem:[%s4 + $0x10] sm:$0xf]
        %v1317 = vld [vmem:[%s4 + $0x14] sm:$0xf]
        %v1318 = vld [vmem:[%s4 + $0x18] sm:$0xf]
        %v1319 = vld [vmem:[%s4 + $0x1c] sm:$0xf]
        %v1320 = vld [vmem:[%s4 + $0x20] sm:$0xf]
        %v1321 = vld [vmem:[%s4 + $0x24] sm:$0xf]
        %v1322 = vld [vmem:[%s4 + $0x28] sm:$0xf]
        %v1323 = vld [vmem:[%s4 + $0x2c] sm:$0xf]
        %v1324 = vld [vmem:[%s4 + $0x30] sm:$0xf]
        %v1325 = vld [vmem:[%s4 + $0x34] sm:$0xf]
        %v1326 = vld [vmem:[%s4 + $0x38] sm:$0xf]
        %v1327 = vld [vmem:[%s4 + $0x3c] sm:$0xf]
        %v1328 = vld [vmem:[%s4 + $0x40] sm:$0xf]
        %v1329 = vld [vmem:[%s4 + $0x44] sm:$0xf]
        %v1330 = vld [vmem:[%s4 + $0x48] sm:$0xf]
        %v1331 = vld [vmem:[%s4 + $0x4c] sm:$0xf]
        %v1332 = vld [vmem:[%s4 + $0x50] sm:$0xf]
        %v1333 = vld [vmem:[%s4 + $0x54] sm:$0xf]
        %v1334 = vld [vmem:[%s4 + $0x58] sm:$0xf]
        %v1335 = vld [vmem:[%s4 + $0x5c] sm:$0xf]
        %v1336 = vld [vmem:[%s4 + $0x60] sm:$0xf]
        %v1337 = vld [vmem:[%s4 + $0x64] sm:$0xf]
        %v1338 = vld [vmem:[%s4 + $0x68] sm:$0xf]
        %v1339 = vld [vmem:[%s4 + $0x6c] sm:$0xf]
        %v1340 = vld [vmem:[%s4 + $0x70] sm:$0xf]
        %v1341 = vld [vmem:[%s4 + $0x74] sm:$0xf]
        %v1342 = vld [vmem:[%s4 + $0x78] sm:$0xf]
        %v1343 = vld [vmem:[%s4 + $0x7c] sm:$0xf]
        %v1344 = vld [vmem:[%s4 + $0x80] sm:$0xf]
        %v1345 = vld [vmem:[%s4 + $0x84] sm:$0xf]
        %v1346 = vld [vmem:[%s4 + $0x88] sm:$0xf]
        %v1347 = vld [vmem:[%s4 + $0x8c] sm:$0xf]
        %v1348 = vld [vmem:[%s4 + $0x90] sm:$0xf]
        %v1349 = vld [vmem:[%s4 + $0x94] sm:$0xf]
        %v1350 = vld [vmem:[%s4 + $0x98] sm:$0xf]
        %v1351 = vld [vmem:[%s4 + $0x9c] sm:$0xf]
        %v1352 = vld [vmem:[%s4 + $0xa0] sm:$0xf]
        %v1353 = vld [vmem:[%s4 + $0xa4] sm:$0xf]
        %v1354 = vld [vmem:[%s4 + $0xa8] sm:$0xf]
        %v1355 = vld [vmem:[%s4 + $0xac] sm:$0xf]
        %v1356 = vld [vmem:[%s4 + $0xb0] sm:$0xf]
        %v1357 = vld [vmem:[%s4 + $0xb4] sm:$0xf]
        %v1358 = vld [vmem:[%s4 + $0xb8] sm:$0xf]
        %v1359 = vld [vmem:[%s4 + $0xbc] sm:$0xf]
        %v1360 = vld [vmem:[%s4 + $0xc0] sm:$0xf]
        %v1361 = vld [vmem:[%s4 + $0xc4] sm:$0xf]
        %v1362 = vld [vmem:[%s4 + $0xc8] sm:$0xf]
        %v1363 = vld [vmem:[%s4 + $0xcc] sm:$0xf]
        %v1364 = vld [vmem:[%s4 + $0xd0] sm:$0x3]
        %v1418 = vunpack.c.l.b16 %v1312
        %v1419 = vunpack.c.l.b16 %v1313
        %v1420 = vunpack.c.l.b16 %v1314
        %v1421 = vunpack.c.l.b16 %v1315
        %v1422 = vunpack.c.l.b16 %v1316
        %v1423 = vunpack.c.l.b16 %v1317
        %v1424 = vunpack.c.l.b16 %v1318
        %v1425 = vunpack.c.l.b16 %v1319
        %v1426 = vunpack.c.l.b16 %v1320
        %v1427 = vunpack.c.l.b16 %v1321
        %v1428 = vunpack.c.l.b16 %v1322
        %v1429 = vunpack.c.l.b16 %v1323
        %v1430 = vunpack.c.l.b16 %v1324
        %v1431 = vunpack.c.l.b16 %v1325
        %v1432 = vunpack.c.l.b16 %v1326
        %v1433 = vunpack.c.l.b16 %v1327
        %v1434 = vunpack.c.l.b16 %v1328
        %v1435 = vunpack.c.l.b16 %v1329
        %v1436 = vunpack.c.l.b16 %v1330
        %v1437 = vunpack.c.l.b16 %v1331
        %v1438 = vunpack.c.l.b16 %v1332
        %v1439 = vunpack.c.l.b16 %v1333
        %v1440 = vunpack.c.l.b16 %v1334
        %v1441 = vunpack.c.l.b16 %v1335
        %v1442 = vunpack.c.l.b16 %v1336
        %v1443 = vunpack.c.l.b16 %v1337
        %v1444 = vunpack.c.l.b16 %v1338
        %v1445 = vunpack.c.l.b16 %v1339
        %v1446 = vunpack.c.l.b16 %v1340
        %v1447 = vunpack.c.l.b16 %v1341
        %v1448 = vunpack.c.l.b16 %v1342
        %v1449 = vunpack.c.l.b16 %v1343
        %v1450 = vunpack.c.l.b16 %v1344
        %v1451 = vunpack.c.l.b16 %v1345
        %v1452 = vunpack.c.l.b16 %v1346
        %v1453 = vunpack.c.l.b16 %v1347
        %v1454 = vunpack.c.l.b16 %v1348
        %v1455 = vunpack.c.l.b16 %v1349
        %v1456 = vunpack.c.l.b16 %v1350
        %v1457 = vunpack.c.l.b16 %v1351
        %v1458 = vunpack.c.l.b16 %v1352
        %v1459 = vunpack.c.l.b16 %v1353
        %v1460 = vunpack.c.l.b16 %v1354
        %v1461 = vunpack.c.l.b16 %v1355
        %v1462 = vunpack.c.l.b16 %v1356
        %v1463 = vunpack.c.l.b16 %v1357
        %v1464 = vunpack.c.l.b16 %v1358
        %v1465 = vunpack.c.l.b16 %v1359
        %v1466 = vunpack.c.l.b16 %v1360
        %v1467 = vunpack.c.l.b16 %v1361
        %v1468 = vunpack.c.l.b16 %v1362
        %v1469 = vunpack.c.l.b16 %v1363
        %v1470 = vunpack.c.l.b16 %v1364
        %v1471 = vpack.c.b16 %v1419, %v1418
        %v1472 = vpack.c.b16 %v1421, %v1420
        %v1473 = vpack.c.b16 %v1423, %v1422
        %v1474 = vpack.c.b16 %v1425, %v1424
        %v1475 = vpack.c.b16 %v1427, %v1426
        %v1476 = vpack.c.b16 %v1429, %v1428
        %v1477 = vpack.c.b16 %v1431, %v1430
        %v1478 = vpack.c.b16 %v1433, %v1432
        %v1479 = vpack.c.b16 %v1435, %v1434
        %v1480 = vpack.c.b16 %v1437, %v1436
        %v1481 = vpack.c.b16 %v1439, %v1438
        %v1482 = vpack.c.b16 %v1441, %v1440
        %v1483 = vpack.c.b16 %v1443, %v1442
        %v1484 = vpack.c.b16 %v1445, %v1444
        %v1485 = vpack.c.b16 %v1447, %v1446
        %v1486 = vpack.c.b16 %v1449, %v1448
        %v1487 = vpack.c.b16 %v1451, %v1450
        %v1488 = vpack.c.b16 %v1453, %v1452
        %v1489 = vpack.c.b16 %v1455, %v1454
        %v1490 = vpack.c.b16 %v1457, %v1456
        %v1491 = vpack.c.b16 %v1459, %v1458
        %v1492 = vpack.c.b16 %v1461, %v1460
        %v1493 = vpack.c.b16 %v1463, %v1462
        %v1494 = vpack.c.b16 %v1465, %v1464
        %v1495 = vpack.c.b16 %v1467, %v1466
        %v1496 = vpack.c.b16 %v1469, %v1468
        %v1497 = vpack.c.b16 %v1470, %v1470
        %vm1524 = vcmask 293888
        %v1526 = vsel %vm1524, %v1311, 0
        %vm1528 = vcmask 1041408
        %v1530 = vsel %vm1528, %v1497, 0
        %1532 = vmatprep.subr.bf16.mxu0 0
        %1533 = vmatpush1.bf16.msra.mxu0 %v1471
        %1534 = vmatprep.subr.bf16.mxu0 0
        %1535 = vmatpush1.bf16.msra.mxu0 %v1472
        %1536 = vmatprep.subr.bf16.mxu0 0
        %1537 = vmatpush1.bf16.msra.mxu0 %v1473
        %1538 = vmatprep.subr.bf16.mxu0 0
        %1539 = vmatpush1.bf16.msra.mxu0 %v1474
        %1540 = vmatprep.subr.bf16.mxu0 0
        %1541 = vmatpush1.bf16.msra.mxu0 %v1475
        %1542 = vmatprep.subr.bf16.mxu0 0
        %1543 = vmatpush1.bf16.msra.mxu0 %v1476
        %1544 = vmatprep.subr.bf16.mxu0 0
        %1545 = vmatpush1.bf16.msra.mxu0 %v1477
        %1546 = vmatprep.subr.bf16.mxu0 0
        %1547 = vmatpush1.bf16.msra.mxu0 %v1478
        %1548 = vmatprep.subr.bf16.mxu0 0
        %1549 = vmatpush1.bf16.msra.mxu0 %v1479
        %1550 = vmatprep.subr.bf16.mxu0 0
        %1551 = vmatpush1.bf16.msra.mxu0 %v1480
        %1552 = vmatprep.subr.bf16.mxu0 0
        %1553 = vmatpush1.bf16.msra.mxu0 %v1481
        %1554 = vmatprep.subr.bf16.mxu0 0
        %1555 = vmatpush1.bf16.msra.mxu0 %v1482
        %1556 = vmatprep.subr.bf16.mxu0 0
        %1557 = vmatpush1.bf16.msra.mxu0 %v1483
        %1558 = vmatprep.subr.bf16.mxu0 0
        %1559 = vmatpush1.bf16.msra.mxu0 %v1484
        %1560 = vmatprep.subr.bf16.mxu0 0
        %1561 = vmatpush1.bf16.msra.mxu0 %v1485
        %1562 = vmatprep.subr.bf16.mxu0 0
        %1563 = vmatpush1.bf16.msra.mxu0 %v1486
        %1564 = vmatprep.mubr.bf16.mxu0 %v1309
        %1565 = vmatmul.mubr.bf16.gmra.mrb[0].mxu0 %v1308
        %v1566 = vpop.f32.mrb[0].mxu0
        %v1567 = vadd.f32 0.0, %v1566
        %v1568 = vpop.f32.mrb[0].mxu0
        %v1569 = vpop.f32.mrb[0].mxu0
        %v1570 = vadd.f32 0.0, %v1569
        %v1571 = vpop.f32.mrb[0].mxu0
        %1572 = vdwg.mxu0
        %1573 = vmatprep.subr.bf16.mxu0 0
        %1574 = vmatpush1.bf16.msra.mxu0 %v1487
        %1575 = vmatprep.subr.bf16.mxu0 0
        %1576 = vmatpush1.bf16.msra.mxu0 %v1488
        %1577 = vmatprep.subr.bf16.mxu0 0
        %1578 = vmatpush1.bf16.msra.mxu0 %v1489
        %1579 = vmatprep.subr.bf16.mxu0 0
        %1580 = vmatpush1.bf16.msra.mxu0 %v1490
        %1581 = vmatprep.subr.bf16.mxu0 0
        %1582 = vmatpush1.bf16.msra.mxu0 %v1491
        %1583 = vmatprep.subr.bf16.mxu0 0
        %1584 = vmatpush1.bf16.msra.mxu0 %v1492
        %1585 = vmatprep.subr.bf16.mxu0 0
        %1586 = vmatpush1.bf16.msra.mxu0 %v1493
        %1587 = vmatprep.subr.bf16.mxu0 0
        %1588 = vmatpush1.bf16.msra.mxu0 %v1494
        %1589 = vmatprep.subr.bf16.mxu0 0
        %1590 = vmatpush1.bf16.msra.mxu0 %v1495
        %1591 = vmatprep.subr.bf16.mxu0 0
        %1592 = vmatpush1.bf16.msra.mxu0 %v1496
        %1593 = vmatprep.subr.bf16.mxu0 0
        %1594 = vmatpush1.bf16.msra.mxu0 %v1530
        %1595 = vmatprep.subr.bf16.mxu0 0
        %1596 = vmatpush1.bf16.msra.mxu0 0
        %1597 = vmatprep.subr.bf16.mxu0 0
        %1598 = vmatpush1.bf16.msra.mxu0 0
        %1599 = vmatprep.subr.bf16.mxu0 0
        %1600 = vmatpush1.bf16.msra.mxu0 0
        %1601 = vmatprep.subr.bf16.mxu0 0
        %1602 = vmatpush1.bf16.msra.mxu0 0
        %1603 = vmatprep.subr.bf16.mxu0 0
        %1604 = vmatpush1.bf16.msra.mxu0 0
        %1605 = vmatprep.mubr.bf16.mxu0 %v1526
        %1606 = vmatmul.mubr.bf16.gmra.mrb[0].mxu0 %v1310
        %v1607 = vpop.f32.mrb[0].mxu0
        %v1608 = vadd.f32 %v1567, %v1607
        %v1609 = vpop.f32.mrb[0].mxu0
        %v1610 = vpop.f32.mrb[0].mxu0
        %v1611 = vadd.f32 %v1570, %v1610
        %v1612 = vpop.f32.mrb[0].mxu0
        %1613 = vdwg.mxu0
        %v1614 = vld [vmem:[%s5] sm:$0xf]
        %v1615 = vld [vmem:[%s5 + $0x4] sm:$0xf]
        %v1616 = vld [vmem:[%s5 + $0x8] sm:$0xf]
        %v1617 = vld [vmem:[%s5 + $0xc] sm:$0xf]
        %v1618 = vld [vmem:[%s5 + $0x10] sm:$0xf]
        %v1619 = vld [vmem:[%s5 + $0x14] sm:$0xf]
        %v1620 = vld [vmem:[%s5 + $0x18] sm:$0xf]
        %v1621 = vld [vmem:[%s5 + $0x1c] sm:$0xf]
        %v1622 = vld [vmem:[%s5 + $0x20] sm:$0xf]
        %v1623 = vld [vmem:[%s5 + $0x24] sm:$0xf]
        %v1624 = vld [vmem:[%s5 + $0x28] sm:$0xf]
        %v1625 = vld [vmem:[%s5 + $0x2c] sm:$0xf]
        %v1626 = vld [vmem:[%s5 + $0x30] sm:$0xf]
        %v1627 = vld [vmem:[%s5 + $0x34] sm:$0xf]
        %v1628 = vld [vmem:[%s5 + $0x38] sm:$0xf]
        %v1629 = vld [vmem:[%s5 + $0x3c] sm:$0xf]
        %v1630 = vld [vmem:[%s5 + $0x40] sm:$0xf]
        %v1631 = vld [vmem:[%s5 + $0x44] sm:$0xf]
        %v1632 = vld [vmem:[%s5 + $0x48] sm:$0xf]
        %v1633 = vld [vmem:[%s5 + $0x4c] sm:$0xf]
        %v1634 = vld [vmem:[%s5 + $0x50] sm:$0xf]
        %v1635 = vld [vmem:[%s5 + $0x54] sm:$0xf]
        %v1636 = vld [vmem:[%s5 + $0x58] sm:$0xf]
        %v1637 = vld [vmem:[%s5 + $0x5c] sm:$0xf]
        %v1638 = vld [vmem:[%s5 + $0x60] sm:$0xf]
        %v1639 = vld [vmem:[%s5 + $0x64] sm:$0xf]
        %v1640 = vld [vmem:[%s5 + $0x68] sm:$0xf]
        %v1641 = vld [vmem:[%s5 + $0x6c] sm:$0xf]
        %v1642 = vld [vmem:[%s5 + $0x70] sm:$0xf]
        %v1643 = vld [vmem:[%s5 + $0x74] sm:$0xf]
        %v1644 = vld [vmem:[%s5 + $0x78] sm:$0xf]
        %v1645 = vld [vmem:[%s5 + $0x7c] sm:$0xf]
        %v1646 = vld [vmem:[%s5 + $0x80] sm:$0xf]
        %v1647 = vld [vmem:[%s5 + $0x84] sm:$0xf]
        %v1648 = vld [vmem:[%s5 + $0x88] sm:$0xf]
        %v1649 = vld [vmem:[%s5 + $0x8c] sm:$0xf]
        %v1650 = vld [vmem:[%s5 + $0x90] sm:$0xf]
        %v1651 = vld [vmem:[%s5 + $0x94] sm:$0xf]
        %v1652 = vld [vmem:[%s5 + $0x98] sm:$0xf]
        %v1653 = vld [vmem:[%s5 + $0x9c] sm:$0xf]
        %v1654 = vld [vmem:[%s5 + $0xa0] sm:$0xf]
        %v1655 = vld [vmem:[%s5 + $0xa4] sm:$0xf]
        %v1656 = vld [vmem:[%s5 + $0xa8] sm:$0xf]
        %v1657 = vld [vmem:[%s5 + $0xac] sm:$0xf]
        %v1658 = vld [vmem:[%s5 + $0xb0] sm:$0xf]
        %v1659 = vld [vmem:[%s5 + $0xb4] sm:$0xf]
        %v1660 = vld [vmem:[%s5 + $0xb8] sm:$0xf]
        %v1661 = vld [vmem:[%s5 + $0xbc] sm:$0xf]
        %v1662 = vld [vmem:[%s5 + $0xc0] sm:$0xf]
        %v1663 = vld [vmem:[%s5 + $0xc4] sm:$0xf]
        %v1664 = vld [vmem:[%s5 + $0xc8] sm:$0xf]
        %v1665 = vld [vmem:[%s5 + $0xcc] sm:$0xf]
        %v1666 = vld [vmem:[%s5 + $0xd0] sm:$0x3]
        %v1720 = vunpack.c.l.b16 %v1614
        %v1721 = vunpack.c.l.b16 %v1615
        %v1722 = vunpack.c.l.b16 %v1616
        %v1723 = vunpack.c.l.b16 %v1617
        %v1724 = vunpack.c.l.b16 %v1618
        %v1725 = vunpack.c.l.b16 %v1619
        %v1726 = vunpack.c.l.b16 %v1620
        %v1727 = vunpack.c.l.b16 %v1621
        %v1728 = vunpack.c.l.b16 %v1622
        %v1729 = vunpack.c.l.b16 %v1623
        %v1730 = vunpack.c.l.b16 %v1624
        %v1731 = vunpack.c.l.b16 %v1625
        %v1732 = vunpack.c.l.b16 %v1626
        %v1733 = vunpack.c.l.b16 %v1627
        %v1734 = vunpack.c.l.b16 %v1628
        %v1735 = vunpack.c.l.b16 %v1629
        %v1736 = vunpack.c.l.b16 %v1630
        %v1737 = vunpack.c.l.b16 %v1631
        %v1738 = vunpack.c.l.b16 %v1632
        %v1739 = vunpack.c.l.b16 %v1633
        %v1740 = vunpack.c.l.b16 %v1634
        %v1741 = vunpack.c.l.b16 %v1635
        %v1742 = vunpack.c.l.b16 %v1636
        %v1743 = vunpack.c.l.b16 %v1637
        %v1744 = vunpack.c.l.b16 %v1638
        %v1745 = vunpack.c.l.b16 %v1639
        %v1746 = vunpack.c.l.b16 %v1640
        %v1747 = vunpack.c.l.b16 %v1641
        %v1748 = vunpack.c.l.b16 %v1642
        %v1749 = vunpack.c.l.b16 %v1643
        %v1750 = vunpack.c.l.b16 %v1644
        %v1751 = vunpack.c.l.b16 %v1645
        %v1752 = vunpack.c.l.b16 %v1646
        %v1753 = vunpack.c.l.b16 %v1647
        %v1754 = vunpack.c.l.b16 %v1648
        %v1755 = vunpack.c.l.b16 %v1649
        %v1756 = vunpack.c.l.b16 %v1650
        %v1757 = vunpack.c.l.b16 %v1651
        %v1758 = vunpack.c.l.b16 %v1652
        %v1759 = vunpack.c.l.b16 %v1653
        %v1760 = vunpack.c.l.b16 %v1654
        %v1761 = vunpack.c.l.b16 %v1655
        %v1762 = vunpack.c.l.b16 %v1656
        %v1763 = vunpack.c.l.b16 %v1657
        %v1764 = vunpack.c.l.b16 %v1658
        %v1765 = vunpack.c.l.b16 %v1659
        %v1766 = vunpack.c.l.b16 %v1660
        %v1767 = vunpack.c.l.b16 %v1661
        %v1768 = vunpack.c.l.b16 %v1662
        %v1769 = vunpack.c.l.b16 %v1663
        %v1770 = vunpack.c.l.b16 %v1664
        %v1771 = vunpack.c.l.b16 %v1665
        %v1772 = vunpack.c.l.b16 %v1666
        %v1773 = vpack.c.b16 %v1721, %v1720
        %v1774 = vpack.c.b16 %v1723, %v1722
        %v1775 = vpack.c.b16 %v1725, %v1724
        %v1776 = vpack.c.b16 %v1727, %v1726
        %v1777 = vpack.c.b16 %v1729, %v1728
        %v1778 = vpack.c.b16 %v1731, %v1730
        %v1779 = vpack.c.b16 %v1733, %v1732
        %v1780 = vpack.c.b16 %v1735, %v1734
        %v1781 = vpack.c.b16 %v1737, %v1736
        %v1782 = vpack.c.b16 %v1739, %v1738
        %v1783 = vpack.c.b16 %v1741, %v1740
        %v1784 = vpack.c.b16 %v1743, %v1742
        %v1785 = vpack.c.b16 %v1745, %v1744
        %v1786 = vpack.c.b16 %v1747, %v1746
        %v1787 = vpack.c.b16 %v1749, %v1748
        %v1788 = vpack.c.b16 %v1751, %v1750
        %v1789 = vpack.c.b16 %v1753, %v1752
        %v1790 = vpack.c.b16 %v1755, %v1754
        %v1791 = vpack.c.b16 %v1757, %v1756
        %v1792 = vpack.c.b16 %v1759, %v1758
        %v1793 = vpack.c.b16 %v1761, %v1760
        %v1794 = vpack.c.b16 %v1763, %v1762
        %v1795 = vpack.c.b16 %v1765, %v1764
        %v1796 = vpack.c.b16 %v1767, %v1766
        %v1797 = vpack.c.b16 %v1769, %v1768
        %v1798 = vpack.c.b16 %v1771, %v1770
        %v1799 = vpack.c.b16 %v1772, %v1772
        %v1827 = vsel %vm1528, %v1799, 0
        %1829 = vmatprep.subr.bf16.mxu0 0
        %1830 = vmatpush1.bf16.msra.mxu0 %v1773
        %1831 = vmatprep.subr.bf16.mxu0 0
        %1832 = vmatpush1.bf16.msra.mxu0 %v1774
        %1833 = vmatprep.subr.bf16.mxu0 0
        %1834 = vmatpush1.bf16.msra.mxu0 %v1775
        %1835 = vmatprep.subr.bf16.mxu0 0
        %1836 = vmatpush1.bf16.msra.mxu0 %v1776
        %1837 = vmatprep.subr.bf16.mxu0 0
        %1838 = vmatpush1.bf16.msra.mxu0 %v1777
        %1839 = vmatprep.subr.bf16.mxu0 0
        %1840 = vmatpush1.bf16.msra.mxu0 %v1778
        %1841 = vmatprep.subr.bf16.mxu0 0
        %1842 = vmatpush1.bf16.msra.mxu0 %v1779
        %1843 = vmatprep.subr.bf16.mxu0 0
        %1844 = vmatpush1.bf16.msra.mxu0 %v1780
        %1845 = vmatprep.subr.bf16.mxu0 0
        %1846 = vmatpush1.bf16.msra.mxu0 %v1781
        %1847 = vmatprep.subr.bf16.mxu0 0
        %1848 = vmatpush1.bf16.msra.mxu0 %v1782
        %1849 = vmatprep.subr.bf16.mxu0 0
        %1850 = vmatpush1.bf16.msra.mxu0 %v1783
        %1851 = vmatprep.subr.bf16.mxu0 0
        %1852 = vmatpush1.bf16.msra.mxu0 %v1784
        %1853 = vmatprep.subr.bf16.mxu0 0
        %1854 = vmatpush1.bf16.msra.mxu0 %v1785
        %1855 = vmatprep.subr.bf16.mxu0 0
        %1856 = vmatpush1.bf16.msra.mxu0 %v1786
        %1857 = vmatprep.subr.bf16.mxu0 0
        %1858 = vmatpush1.bf16.msra.mxu0 %v1787
        %1859 = vmatprep.subr.bf16.mxu0 0
        %1860 = vmatpush1.bf16.msra.mxu0 %v1788
        %1861 = vmatprep.mubr.bf16.mxu0 %v1309
        %1862 = vmatmul.mubr.bf16.gmra.mrb[0].mxu0 %v1308
        %v1863 = vpop.f32.mrb[0].mxu0
        %v1864 = vadd.f32 0.0, %v1863
        %v1865 = vpop.f32.mrb[0].mxu0
        %v1866 = vpop.f32.mrb[0].mxu0
        %v1867 = vadd.f32 0.0, %v1866
        %v1868 = vpop.f32.mrb[0].mxu0
        %1869 = vdwg.mxu0
        %1870 = vmatprep.subr.bf16.mxu0 0
        %1871 = vmatpush1.bf16.msra.mxu0 %v1789
        %1872 = vmatprep.subr.bf16.mxu0 0
        %1873 = vmatpush1.bf16.msra.mxu0 %v1790
        %1874 = vmatprep.subr.bf16.mxu0 0
        %1875 = vmatpush1.bf16.msra.mxu0 %v1791
        %1876 = vmatprep.subr.bf16.mxu0 0
        %1877 = vmatpush1.bf16.msra.mxu0 %v1792
        %1878 = vmatprep.subr.bf16.mxu0 0
        %1879 = vmatpush1.bf16.msra.mxu0 %v1793
        %1880 = vmatprep.subr.bf16.mxu0 0
        %1881 = vmatpush1.bf16.msra.mxu0 %v1794
        %1882 = vmatprep.subr.bf16.mxu0 0
        %1883 = vmatpush1.bf16.msra.mxu0 %v1795
        %1884 = vmatprep.subr.bf16.mxu0 0
        %1885 = vmatpush1.bf16.msra.mxu0 %v1796
        %1886 = vmatprep.subr.bf16.mxu0 0
        %1887 = vmatpush1.bf16.msra.mxu0 %v1797
        %1888 = vmatprep.subr.bf16.mxu0 0
        %1889 = vmatpush1.bf16.msra.mxu0 %v1798
        %1890 = vmatprep.subr.bf16.mxu0 0
        %1891 = vmatpush1.bf16.msra.mxu0 %v1827
        %1892 = vmatprep.subr.bf16.mxu0 0
        %1893 = vmatpush1.bf16.msra.mxu0 0
        %1894 = vmatprep.subr.bf16.mxu0 0
        %1895 = vmatpush1.bf16.msra.mxu0 0
        %1896 = vmatprep.subr.bf16.mxu0 0
        %1897 = vmatpush1.bf16.msra.mxu0 0
        %1898 = vmatprep.subr.bf16.mxu0 0
        %1899 = vmatpush1.bf16.msra.mxu0 0
        %1900 = vmatprep.subr.bf16.mxu0 0
        %1901 = vmatpush1.bf16.msra.mxu0 0
        %1902 = vmatprep.mubr.bf16.mxu0 %v1526
        %1903 = vmatmul.mubr.bf16.gmra.mrb[0].mxu0 %v1310
        %v1904 = vpop.f32.mrb[0].mxu0
        %v1905 = vadd.f32 %v1864, %v1904
        %v1906 = vpop.f32.mrb[0].mxu0
        %v1907 = vpop.f32.mrb[0].mxu0
        %v1908 = vadd.f32 %v1867, %v1907
        %v1909 = vpop.f32.mrb[0].mxu0
        %1910 = vdwg.mxu0
        %v1911 = vmax.f32 %v1608, %v1905
        %v1912 = vmax.f32 %v1611, %v1908
        %v1913 = vld [vmem:[%s6] sm:$0x1]
        %v1915 = vlaneseq
        %v1916 = vshrl.u32 %v1915, 7
        %v1917 = vsub.s32 0, %v1916
        %v1918 = vrot.slane %v1913, %v1917
        %v1920 = vadd.f32 %v1911, %v1918
        %v1921 = vadd.f32 %v1912, %v1918
        %v1922 = vmax.f32 %v1920, 0.0
        %v1923 = vmax.f32 %v1921, 0.0
        %1924 = vst.msk [vmem:[#allocation4] sm:$0xff] %vm1305, %v1922
        %vm1925 = vcmask 648192
        %1926 = vst.msk [vmem:[#allocation4 + $0x8] sm:$0x3] %vm1925, %v1923
        %v1927 = vld [vmem:[#allocation4] ss:$2 sm:$0x1f]
        %s1928 = scalar_lea.vmem [#allocation4], 1
        %v1929 = vld [vmem:[%s1928] ss:$2 sm:$0x1f]
        %v1930 = vmax.f32 %v1927, %v1929
        %vm1931 = vcmask 651264
        %1932 = vst.msk [vmem:[#allocation5] sm:$0x1f] %vm1931, %v1930
        %s1933 = scalar_lea.vmem %s442, 32
        %v1934 = vld [vmem:[%s1933] sm:$0xff]
        %v1935 = vld [vmem:[%s1933 + $0x8] sm:$0xff]
        %v1936 = vld [vmem:[%s1933 + $0x10] sm:$0xff]
        %v1937 = vld [vmem:[%s1933 + $0x18] sm:$0xf]
        %v1938 = vld [vmem:[%s1933 + $0x1] sm:$0xff]
        %v1939 = vld [vmem:[%s1933 + $0x9] sm:$0xff]
        %v1940 = vld [vmem:[%s1933 + $0x11] sm:$0xff]
        %v1941 = vld [vmem:[%s1933 + $0x19] sm:$0xf]
        %v1942 = vld [vmem:[%s1933 + $0x2] sm:$0xff]
        %v1943 = vld [vmem:[%s1933 + $0xa] sm:$0xff]
        %v1944 = vld [vmem:[%s1933 + $0x12] sm:$0xff]
        %v1945 = vld [vmem:[%s1933 + $0x1a] sm:$0xf]
        %v1946 = vld [vmem:[%s1933 + $0x3] sm:$0xff]
        %v1947 = vld [vmem:[%s1933 + $0xb] sm:$0xff]
        %v1948 = vld [vmem:[%s1933 + $0x13] sm:$0xff]
        %v1949 = vld [vmem:[%s1933 + $0x1b] sm:$0xf]
        %v1950 = vld [vmem:[%s1933 + $0x4] sm:$0xff]
        %v1951 = vld [vmem:[%s1933 + $0xc] sm:$0xff]
        %v1952 = vld [vmem:[%s1933 + $0x14] sm:$0xff]
        %v1953 = vld [vmem:[%s1933 + $0x1c] sm:$0xf]
        %1958 = vrot.lane.b32.xlu0 %v1938, 96
        %v1959 = vpop.permute.xlu0 %1958
        %1960 = vrot.lane.b32.xlu0 %v1939, 96
        %v1961 = vpop.permute.xlu0 %1960
        %1962 = vrot.lane.b32.xlu0 %v1940, 96
        %v1963 = vpop.permute.xlu0 %1962
        %1964 = vrot.lane.b32.xlu0 %v1941, 96
        %v1965 = vpop.permute.xlu0 %1964
        %1974 = vrot.lane.b32.xlu0 %v1942, 64
        %v1975 = vpop.permute.xlu0 %1974
        %1976 = vrot.lane.b32.xlu0 %v1943, 64
        %v1977 = vpop.permute.xlu0 %1976
        %1978 = vrot.lane.b32.xlu0 %v1944, 64
        %v1979 = vpop.permute.xlu0 %1978
        %1980 = vrot.lane.b32.xlu0 %v1945, 64
        %v1981 = vpop.permute.xlu0 %1980
        %1990 = vrot.lane.b32.xlu0 %v1946, 32
        %v1991 = vpop.permute.xlu0 %1990
        %1992 = vrot.lane.b32.xlu0 %v1947, 32
        %v1993 = vpop.permute.xlu0 %1992
        %1994 = vrot.lane.b32.xlu0 %v1948, 32
        %v1995 = vpop.permute.xlu0 %1994
        %1996 = vrot.lane.b32.xlu0 %v1949, 32
        %v1997 = vpop.permute.xlu0 %1996
        %v2002 = vsel %vm513, %v1934, %v1959
        %v2003 = vsel %vm513, %v1935, %v1961
        %v2004 = vsel %vm513, %v1936, %v1963
        %v2005 = vsel %vm513, %v1937, %v1965
        %v2006 = vsel %vm518, %v1959, %v1975
        %v2007 = vsel %vm518, %v1961, %v1977
        %v2008 = vsel %vm518, %v1963, %v1979
        %v2009 = vsel %vm518, %v1965, %v1981
        %v2010 = vsel %vm523, %v1975, %v1991
        %v2011 = vsel %vm523, %v1977, %v1993
        %v2012 = vsel %vm523, %v1979, %v1995
        %v2013 = vsel %vm523, %v1981, %v1997
        %v2014 = vpack.c.bf16 %v2003, %v2002
        %v2015 = vpack.c.bf16 %v2007, %v2006
        %v2016 = vpack.c.bf16 %v2011, %v2010
        %v2017 = vpack.c.bf16 %v1951, %v1950
        %v2018 = vpack.c.bf16 %v2005, %v2004
        %v2019 = vpack.c.bf16 %v2009, %v2008
        %v2020 = vpack.c.bf16 %v2013, %v2012
        %v2021 = vpack.c.bf16 %v1953, %v1952
        %v2022 = vld [vmem:[%s1] sm:$0xf]
        %v2023 = vld [vmem:[%s1 + $0x4] sm:$0xf]
        %v2024 = vld [vmem:[%s1 + $0x8] sm:$0xf]
        %v2025 = vld [vmem:[%s1 + $0xc] sm:$0xf]
        %v2026 = vld [vmem:[%s1 + $0x10] sm:$0xf]
        %v2027 = vld [vmem:[%s1 + $0x14] sm:$0xf]
        %v2028 = vld [vmem:[%s1 + $0x18] sm:$0xf]
        %v2029 = vld [vmem:[%s1 + $0x1c] sm:$0xf]
        %v2030 = vld [vmem:[%s1 + $0x20] sm:$0xf]
        %v2031 = vld [vmem:[%s1 + $0x24] sm:$0xf]
        %v2032 = vld [vmem:[%s1 + $0x28] sm:$0xf]
        %v2033 = vld [vmem:[%s1 + $0x2c] sm:$0xf]
        %v2034 = vld [vmem:[%s1 + $0x30] sm:$0xf]
        %v2035 = vld [vmem:[%s1 + $0x34] sm:$0xf]
        %v2036 = vld [vmem:[%s1 + $0x38] sm:$0xf]
        %v2037 = vld [vmem:[%s1 + $0x3c] sm:$0xf]
        %v2038 = vld [vmem:[%s1 + $0x40] sm:$0xf]
        %v2039 = vld [vmem:[%s1 + $0x44] sm:$0xf]
        %v2040 = vld [vmem:[%s1 + $0x48] sm:$0xf]
        %v2041 = vld [vmem:[%s1 + $0x4c] sm:$0xf]
        %v2042 = vld [vmem:[%s1 + $0x50] sm:$0xf]
        %v2043 = vld [vmem:[%s1 + $0x54] sm:$0xf]
        %v2044 = vld [vmem:[%s1 + $0x58] sm:$0xf]
        %v2045 = vld [vmem:[%s1 + $0x5c] sm:$0xf]
        %v2046 = vld [vmem:[%s1 + $0x60] sm:$0xf]
        %v2047 = vld [vmem:[%s1 + $0x64] sm:$0xf]
        %v2048 = vld [vmem:[%s1 + $0x68] sm:$0xf]
        %v2049 = vld [vmem:[%s1 + $0x6c] sm:$0xf]
        %v2050 = vld [vmem:[%s1 + $0x70] sm:$0xf]
        %v2051 = vld [vmem:[%s1 + $0x74] sm:$0xf]
        %v2052 = vld [vmem:[%s1 + $0x78] sm:$0xf]
        %v2053 = vld [vmem:[%s1 + $0x7c] sm:$0xf]
        %v2054 = vld [vmem:[%s1 + $0x80] sm:$0xf]
        %v2055 = vld [vmem:[%s1 + $0x84] sm:$0xf]
        %v2056 = vld [vmem:[%s1 + $0x88] sm:$0xf]
        %v2057 = vld [vmem:[%s1 + $0x8c] sm:$0xf]
        %v2058 = vld [vmem:[%s1 + $0x90] sm:$0xf]
        %v2059 = vld [vmem:[%s1 + $0x94] sm:$0xf]
        %v2060 = vld [vmem:[%s1 + $0x98] sm:$0xf]
        %v2061 = vld [vmem:[%s1 + $0x9c] sm:$0xf]
        %v2062 = vld [vmem:[%s1 + $0xa0] sm:$0xf]
        %v2063 = vld [vmem:[%s1 + $0xa4] sm:$0xf]
        %v2064 = vld [vmem:[%s1 + $0xa8] sm:$0xf]
        %v2065 = vld [vmem:[%s1 + $0xac] sm:$0xf]
        %v2066 = vld [vmem:[%s1 + $0xb0] sm:$0xf]
        %v2067 = vld [vmem:[%s1 + $0xb4] sm:$0xf]
        %v2068 = vld [vmem:[%s1 + $0xb8] sm:$0xf]
        %v2069 = vld [vmem:[%s1 + $0xbc] sm:$0xf]
        %v2070 = vld [vmem:[%s1 + $0xc0] sm:$0xf]
        %v2071 = vld [vmem:[%s1 + $0xc4] sm:$0xf]
        %v2072 = vld [vmem:[%s1 + $0xc8] sm:$0xf]
        %v2073 = vld [vmem:[%s1 + $0xcc] sm:$0xf]
        %v2074 = vld [vmem:[%s1 + $0xd0] sm:$0xf]
        %v2075 = vld [vmem:[%s1 + $0xd4] sm:$0xf]
        %v2076 = vld [vmem:[%s1 + $0xd8] sm:$0xf]
        %v2077 = vld [vmem:[%s1 + $0xdc] sm:$0xf]
        %v2078 = vld [vmem:[%s1 + $0xe0] sm:$0xf]
        %v2079 = vld [vmem:[%s1 + $0xe4] sm:$0xf]
        %v2080 = vld [vmem:[%s1 + $0xe8] sm:$0xf]
        %v2081 = vld [vmem:[%s1 + $0xec] sm:$0xf]
        %v2142 = vunpack.c.l.b16 %v2022
        %v2143 = vunpack.c.l.b16 %v2023
        %v2144 = vunpack.c.l.b16 %v2024
        %v2145 = vunpack.c.l.b16 %v2025
        %v2146 = vunpack.c.l.b16 %v2026
        %v2147 = vunpack.c.l.b16 %v2027
        %v2148 = vunpack.c.l.b16 %v2028
        %v2149 = vunpack.c.l.b16 %v2029
        %v2150 = vunpack.c.l.b16 %v2030
        %v2151 = vunpack.c.l.b16 %v2031
        %v2152 = vunpack.c.l.b16 %v2032
        %v2153 = vunpack.c.l.b16 %v2033
        %v2154 = vunpack.c.l.b16 %v2034
        %v2155 = vunpack.c.l.b16 %v2035
        %v2156 = vunpack.c.l.b16 %v2036
        %v2157 = vunpack.c.l.b16 %v2037
        %v2158 = vunpack.c.l.b16 %v2038
        %v2159 = vunpack.c.l.b16 %v2039
        %v2160 = vunpack.c.l.b16 %v2040
        %v2161 = vunpack.c.l.b16 %v2041
        %v2162 = vunpack.c.l.b16 %v2042
        %v2163 = vunpack.c.l.b16 %v2043
        %v2164 = vunpack.c.l.b16 %v2044
        %v2165 = vunpack.c.l.b16 %v2045
        %v2166 = vunpack.c.l.b16 %v2046
        %v2167 = vunpack.c.l.b16 %v2047
        %v2168 = vunpack.c.l.b16 %v2048
        %v2169 = vunpack.c.l.b16 %v2049
        %v2170 = vunpack.c.l.b16 %v2050
        %v2171 = vunpack.c.l.b16 %v2051
        %v2172 = vunpack.c.l.b16 %v2052
        %v2173 = vunpack.c.l.b16 %v2053
        %v2174 = vunpack.c.l.b16 %v2054
        %v2175 = vunpack.c.l.b16 %v2055
        %v2176 = vunpack.c.l.b16 %v2056
        %v2177 = vunpack.c.l.b16 %v2057
        %v2178 = vunpack.c.l.b16 %v2058
        %v2179 = vunpack.c.l.b16 %v2059
        %v2180 = vunpack.c.l.b16 %v2060
        %v2181 = vunpack.c.l.b16 %v2061
        %v2182 = vunpack.c.l.b16 %v2062
        %v2183 = vunpack.c.l.b16 %v2063
        %v2184 = vunpack.c.l.b16 %v2064
        %v2185 = vunpack.c.l.b16 %v2065
        %v2186 = vunpack.c.l.b16 %v2066
        %v2187 = vunpack.c.l.b16 %v2067
        %v2188 = vunpack.c.l.b16 %v2068
        %v2189 = vunpack.c.l.b16 %v2069
        %v2190 = vunpack.c.l.b16 %v2070
        %v2191 = vunpack.c.l.b16 %v2071
        %v2192 = vunpack.c.l.b16 %v2072
        %v2193 = vunpack.c.l.b16 %v2073
        %v2194 = vunpack.c.l.b16 %v2074
        %v2195 = vunpack.c.l.b16 %v2075
        %v2196 = vunpack.c.l.b16 %v2076
        %v2197 = vunpack.c.l.b16 %v2077
        %v2198 = vunpack.c.l.b16 %v2078
        %v2199 = vunpack.c.l.b16 %v2079
        %v2200 = vunpack.c.l.b16 %v2080
        %v2201 = vunpack.c.l.b16 %v2081
        %v2202 = vpack.c.b16 %v2143, %v2142
        %v2203 = vpack.c.b16 %v2145, %v2144
        %v2204 = vpack.c.b16 %v2147, %v2146
        %v2205 = vpack.c.b16 %v2149, %v2148
        %v2206 = vpack.c.b16 %v2151, %v2150
        %v2207 = vpack.c.b16 %v2153, %v2152
        %v2208 = vpack.c.b16 %v2155, %v2154
        %v2209 = vpack.c.b16 %v2157, %v2156
        %v2210 = vpack.c.b16 %v2159, %v2158
        %v2211 = vpack.c.b16 %v2161, %v2160
        %v2212 = vpack.c.b16 %v2163, %v2162
        %v2213 = vpack.c.b16 %v2165, %v2164
        %v2214 = vpack.c.b16 %v2167, %v2166
        %v2215 = vpack.c.b16 %v2169, %v2168
        %v2216 = vpack.c.b16 %v2171, %v2170
        %v2217 = vpack.c.b16 %v2173, %v2172
        %v2218 = vpack.c.b16 %v2175, %v2174
        %v2219 = vpack.c.b16 %v2177, %v2176
        %v2220 = vpack.c.b16 %v2179, %v2178
        %v2221 = vpack.c.b16 %v2181, %v2180
        %v2222 = vpack.c.b16 %v2183, %v2182
        %v2223 = vpack.c.b16 %v2185, %v2184
        %v2224 = vpack.c.b16 %v2187, %v2186
        %v2225 = vpack.c.b16 %v2189, %v2188
        %v2226 = vpack.c.b16 %v2191, %v2190
        %v2227 = vpack.c.b16 %v2193, %v2192
        %v2228 = vpack.c.b16 %v2195, %v2194
        %v2229 = vpack.c.b16 %v2197, %v2196
        %v2230 = vpack.c.b16 %v2199, %v2198
        %v2231 = vpack.c.b16 %v2201, %v2200
        %v2263 = vsel %vm513, %v2017, 0
        %v2266 = vsel %vm513, %v2021, 0
        %2268 = vmatprep.subr.bf16.mxu0 0
        %2269 = vmatpush1.bf16.msra.mxu0 %v2202
        %2270 = vmatprep.subr.bf16.mxu0 0
        %2271 = vmatpush1.bf16.msra.mxu0 %v2203
        %2272 = vmatprep.subr.bf16.mxu0 0
        %2273 = vmatpush1.bf16.msra.mxu0 %v2204
        %2274 = vmatprep.subr.bf16.mxu0 0
        %2275 = vmatpush1.bf16.msra.mxu0 %v2205
        %2276 = vmatprep.subr.bf16.mxu0 0
        %2277 = vmatpush1.bf16.msra.mxu0 %v2206
        %2278 = vmatprep.subr.bf16.mxu0 0
        %2279 = vmatpush1.bf16.msra.mxu0 %v2207
        %2280 = vmatprep.subr.bf16.mxu0 0
        %2281 = vmatpush1.bf16.msra.mxu0 %v2208
        %2282 = vmatprep.subr.bf16.mxu0 0
        %2283 = vmatpush1.bf16.msra.mxu0 %v2209
        %2284 = vmatprep.subr.bf16.mxu0 0
        %2285 = vmatpush1.bf16.msra.mxu0 %v2210
        %2286 = vmatprep.subr.bf16.mxu0 0
        %2287 = vmatpush1.bf16.msra.mxu0 %v2211
        %2288 = vmatprep.subr.bf16.mxu0 0
        %2289 = vmatpush1.bf16.msra.mxu0 %v2212
        %2290 = vmatprep.subr.bf16.mxu0 0
        %2291 = vmatpush1.bf16.msra.mxu0 %v2213
        %2292 = vmatprep.subr.bf16.mxu0 0
        %2293 = vmatpush1.bf16.msra.mxu0 %v2214
        %2294 = vmatprep.subr.bf16.mxu0 0
        %2295 = vmatpush1.bf16.msra.mxu0 %v2215
        %2296 = vmatprep.subr.bf16.mxu0 0
        %2297 = vmatpush1.bf16.msra.mxu0 %v2216
        %2298 = vmatprep.subr.bf16.mxu0 0
        %2299 = vmatpush1.bf16.msra.mxu0 %v2217
        %2300 = vmatprep.mubr.bf16.mxu0 %v2015
        %2301 = vmatmul.mubr.bf16.gmra.mrb[0].mxu0 %v2014
        %v2302 = vpop.f32.mrb[0].mxu0
        %v2303 = vadd.f32 0.0, %v2302
        %v2304 = vpop.f32.mrb[0].mxu0
        %v2305 = vpop.f32.mrb[0].mxu0
        %v2306 = vadd.f32 0.0, %v2305
        %v2307 = vpop.f32.mrb[0].mxu0
        %2308 = vmatprep.mubr.bf16.mxu0 %v2019
        %2309 = vmatmul.mubr.bf16.gmra.mrb[0].mxu0 %v2018
        %v2310 = vpop.f32.mrb[0].mxu0
        %v2311 = vadd.f32 0.0, %v2310
        %v2312 = vpop.f32.mrb[0].mxu0
        %v2313 = vpop.f32.mrb[0].mxu0
        %v2314 = vadd.f32 0.0, %v2313
        %v2315 = vpop.f32.mrb[0].mxu0
        %2316 = vdwg.mxu0
        %2317 = vmatprep.subr.bf16.mxu0 0
        %2318 = vmatpush1.bf16.msra.mxu0 %v2218
        %2319 = vmatprep.subr.bf16.mxu0 0
        %2320 = vmatpush1.bf16.msra.mxu0 %v2219
        %2321 = vmatprep.subr.bf16.mxu0 0
        %2322 = vmatpush1.bf16.msra.mxu0 %v2220
        %2323 = vmatprep.subr.bf16.mxu0 0
        %2324 = vmatpush1.bf16.msra.mxu0 %v2221
        %2325 = vmatprep.subr.bf16.mxu0 0
        %2326 = vmatpush1.bf16.msra.mxu0 %v2222
        %2327 = vmatprep.subr.bf16.mxu0 0
        %2328 = vmatpush1.bf16.msra.mxu0 %v2223
        %2329 = vmatprep.subr.bf16.mxu0 0
        %2330 = vmatpush1.bf16.msra.mxu0 %v2224
        %2331 = vmatprep.subr.bf16.mxu0 0
        %2332 = vmatpush1.bf16.msra.mxu0 %v2225
        %2333 = vmatprep.subr.bf16.mxu0 0
        %2334 = vmatpush1.bf16.msra.mxu0 %v2226
        %2335 = vmatprep.subr.bf16.mxu0 0
        %2336 = vmatpush1.bf16.msra.mxu0 %v2227
        %2337 = vmatprep.subr.bf16.mxu0 0
        %2338 = vmatpush1.bf16.msra.mxu0 %v2228
        %2339 = vmatprep.subr.bf16.mxu0 0
        %2340 = vmatpush1.bf16.msra.mxu0 %v2229
        %2341 = vmatprep.subr.bf16.mxu0 0
        %2342 = vmatpush1.bf16.msra.mxu0 %v2230
        %2343 = vmatprep.subr.bf16.mxu0 0
        %2344 = vmatpush1.bf16.msra.mxu0 %v2231
        %2345 = vmatprep.subr.bf16.mxu0 0
        %2346 = vmatpush1.bf16.msra.mxu0 0
        %2347 = vmatprep.subr.bf16.mxu0 0
        %2348 = vmatpush1.bf16.msra.mxu0 0
        %2349 = vmatprep.mubr.bf16.mxu0 %v2263
        %2350 = vmatmul.mubr.bf16.gmra.mrb[0].mxu0 %v2016
        %v2351 = vpop.f32.mrb[0].mxu0
        %v2352 = vadd.f32 %v2303, %v2351
        %v2353 = vpop.f32.mrb[0].mxu0
        %v2354 = vpop.f32.mrb[0].mxu0
        %v2355 = vadd.f32 %v2306, %v2354
        %v2356 = vpop.f32.mrb[0].mxu0
        %2357 = vmatprep.mubr.bf16.mxu0 %v2266
        %2358 = vmatmul.mubr.bf16.gmra.mrb[0].mxu0 %v2020
        %v2359 = vpop.f32.mrb[0].mxu0
        %v2360 = vadd.f32 %v2311, %v2359
        %v2361 = vpop.f32.mrb[0].mxu0
        %v2362 = vpop.f32.mrb[0].mxu0
        %v2363 = vadd.f32 %v2314, %v2362
        %v2364 = vpop.f32.mrb[0].mxu0
        %2365 = vdwg.mxu0
        %v2366 = vld [vmem:[%s2] sm:$0xf]
        %v2367 = vld [vmem:[%s2 + $0x4] sm:$0xf]
        %v2368 = vld [vmem:[%s2 + $0x8] sm:$0xf]
        %v2369 = vld [vmem:[%s2 + $0xc] sm:$0xf]
        %v2370 = vld [vmem:[%s2 + $0x10] sm:$0xf]
        %v2371 = vld [vmem:[%s2 + $0x14] sm:$0xf]
        %v2372 = vld [vmem:[%s2 + $0x18] sm:$0xf]
        %v2373 = vld [vmem:[%s2 + $0x1c] sm:$0xf]
        %v2374 = vld [vmem:[%s2 + $0x20] sm:$0xf]
        %v2375 = vld [vmem:[%s2 + $0x24] sm:$0xf]
        %v2376 = vld [vmem:[%s2 + $0x28] sm:$0xf]
        %v2377 = vld [vmem:[%s2 + $0x2c] sm:$0xf]
        %v2378 = vld [vmem:[%s2 + $0x30] sm:$0xf]
        %v2379 = vld [vmem:[%s2 + $0x34] sm:$0xf]
        %v2380 = vld [vmem:[%s2 + $0x38] sm:$0xf]
        %v2381 = vld [vmem:[%s2 + $0x3c] sm:$0xf]
        %v2382 = vld [vmem:[%s2 + $0x40] sm:$0xf]
        %v2383 = vld [vmem:[%s2 + $0x44] sm:$0xf]
        %v2384 = vld [vmem:[%s2 + $0x48] sm:$0xf]
        %v2385 = vld [vmem:[%s2 + $0x4c] sm:$0xf]
        %v2386 = vld [vmem:[%s2 + $0x50] sm:$0xf]
        %v2387 = vld [vmem:[%s2 + $0x54] sm:$0xf]
        %v2388 = vld [vmem:[%s2 + $0x58] sm:$0xf]
        %v2389 = vld [vmem:[%s2 + $0x5c] sm:$0xf]
        %v2390 = vld [vmem:[%s2 + $0x60] sm:$0xf]
        %v2391 = vld [vmem:[%s2 + $0x64] sm:$0xf]
        %v2392 = vld [vmem:[%s2 + $0x68] sm:$0xf]
        %v2393 = vld [vmem:[%s2 + $0x6c] sm:$0xf]
        %v2394 = vld [vmem:[%s2 + $0x70] sm:$0xf]
        %v2395 = vld [vmem:[%s2 + $0x74] sm:$0xf]
        %v2396 = vld [vmem:[%s2 + $0x78] sm:$0xf]
        %v2397 = vld [vmem:[%s2 + $0x7c] sm:$0xf]
        %v2398 = vld [vmem:[%s2 + $0x80] sm:$0xf]
        %v2399 = vld [vmem:[%s2 + $0x84] sm:$0xf]
        %v2400 = vld [vmem:[%s2 + $0x88] sm:$0xf]
        %v2401 = vld [vmem:[%s2 + $0x8c] sm:$0xf]
        %v2402 = vld [vmem:[%s2 + $0x90] sm:$0xf]
        %v2403 = vld [vmem:[%s2 + $0x94] sm:$0xf]
        %v2404 = vld [vmem:[%s2 + $0x98] sm:$0xf]
        %v2405 = vld [vmem:[%s2 + $0x9c] sm:$0xf]
        %v2406 = vld [vmem:[%s2 + $0xa0] sm:$0xf]
        %v2407 = vld [vmem:[%s2 + $0xa4] sm:$0xf]
        %v2408 = vld [vmem:[%s2 + $0xa8] sm:$0xf]
        %v2409 = vld [vmem:[%s2 + $0xac] sm:$0xf]
        %v2410 = vld [vmem:[%s2 + $0xb0] sm:$0xf]
        %v2411 = vld [vmem:[%s2 + $0xb4] sm:$0xf]
        %v2412 = vld [vmem:[%s2 + $0xb8] sm:$0xf]
        %v2413 = vld [vmem:[%s2 + $0xbc] sm:$0xf]
        %v2414 = vld [vmem:[%s2 + $0xc0] sm:$0xf]
        %v2415 = vld [vmem:[%s2 + $0xc4] sm:$0xf]
        %v2416 = vld [vmem:[%s2 + $0xc8] sm:$0xf]
        %v2417 = vld [vmem:[%s2 + $0xcc] sm:$0xf]
        %v2418 = vld [vmem:[%s2 + $0xd0] sm:$0xf]
        %v2419 = vld [vmem:[%s2 + $0xd4] sm:$0xf]
        %v2420 = vld [vmem:[%s2 + $0xd8] sm:$0xf]
        %v2421 = vld [vmem:[%s2 + $0xdc] sm:$0xf]
        %v2422 = vld [vmem:[%s2 + $0xe0] sm:$0xf]
        %v2423 = vld [vmem:[%s2 + $0xe4] sm:$0xf]
        %v2424 = vld [vmem:[%s2 + $0xe8] sm:$0xf]
        %v2425 = vld [vmem:[%s2 + $0xec] sm:$0xf]
        %v2486 = vunpack.c.l.b16 %v2366
        %v2487 = vunpack.c.l.b16 %v2367
        %v2488 = vunpack.c.l.b16 %v2368
        %v2489 = vunpack.c.l.b16 %v2369
        %v2490 = vunpack.c.l.b16 %v2370
        %v2491 = vunpack.c.l.b16 %v2371
        %v2492 = vunpack.c.l.b16 %v2372
        %v2493 = vunpack.c.l.b16 %v2373
        %v2494 = vunpack.c.l.b16 %v2374
        %v2495 = vunpack.c.l.b16 %v2375
        %v2496 = vunpack.c.l.b16 %v2376
        %v2497 = vunpack.c.l.b16 %v2377
        %v2498 = vunpack.c.l.b16 %v2378
        %v2499 = vunpack.c.l.b16 %v2379
        %v2500 = vunpack.c.l.b16 %v2380
        %v2501 = vunpack.c.l.b16 %v2381
        %v2502 = vunpack.c.l.b16 %v2382
        %v2503 = vunpack.c.l.b16 %v2383
        %v2504 = vunpack.c.l.b16 %v2384
        %v2505 = vunpack.c.l.b16 %v2385
        %v2506 = vunpack.c.l.b16 %v2386
        %v2507 = vunpack.c.l.b16 %v2387
        %v2508 = vunpack.c.l.b16 %v2388
        %v2509 = vunpack.c.l.b16 %v2389
        %v2510 = vunpack.c.l.b16 %v2390
        %v2511 = vunpack.c.l.b16 %v2391
        %v2512 = vunpack.c.l.b16 %v2392
        %v2513 = vunpack.c.l.b16 %v2393
        %v2514 = vunpack.c.l.b16 %v2394
        %v2515 = vunpack.c.l.b16 %v2395
        %v2516 = vunpack.c.l.b16 %v2396
        %v2517 = vunpack.c.l.b16 %v2397
        %v2518 = vunpack.c.l.b16 %v2398
        %v2519 = vunpack.c.l.b16 %v2399
        %v2520 = vunpack.c.l.b16 %v2400
        %v2521 = vunpack.c.l.b16 %v2401
        %v2522 = vunpack.c.l.b16 %v2402
        %v2523 = vunpack.c.l.b16 %v2403
        %v2524 = vunpack.c.l.b16 %v2404
        %v2525 = vunpack.c.l.b16 %v2405
        %v2526 = vunpack.c.l.b16 %v2406
        %v2527 = vunpack.c.l.b16 %v2407
        %v2528 = vunpack.c.l.b16 %v2408
        %v2529 = vunpack.c.l.b16 %v2409
        %v2530 = vunpack.c.l.b16 %v2410
        %v2531 = vunpack.c.l.b16 %v2411
        %v2532 = vunpack.c.l.b16 %v2412
        %v2533 = vunpack.c.l.b16 %v2413
        %v2534 = vunpack.c.l.b16 %v2414
        %v2535 = vunpack.c.l.b16 %v2415
        %v2536 = vunpack.c.l.b16 %v2416
        %v2537 = vunpack.c.l.b16 %v2417
        %v2538 = vunpack.c.l.b16 %v2418
        %v2539 = vunpack.c.l.b16 %v2419
        %v2540 = vunpack.c.l.b16 %v2420
        %v2541 = vunpack.c.l.b16 %v2421
        %v2542 = vunpack.c.l.b16 %v2422
        %v2543 = vunpack.c.l.b16 %v2423
        %v2544 = vunpack.c.l.b16 %v2424
        %v2545 = vunpack.c.l.b16 %v2425
        %v2546 = vpack.c.b16 %v2487, %v2486
        %v2547 = vpack.c.b16 %v2489, %v2488
        %v2548 = vpack.c.b16 %v2491, %v2490
        %v2549 = vpack.c.b16 %v2493, %v2492
        %v2550 = vpack.c.b16 %v2495, %v2494
        %v2551 = vpack.c.b16 %v2497, %v2496
        %v2552 = vpack.c.b16 %v2499, %v2498
        %v2553 = vpack.c.b16 %v2501, %v2500
        %v2554 = vpack.c.b16 %v2503, %v2502
        %v2555 = vpack.c.b16 %v2505, %v2504
        %v2556 = vpack.c.b16 %v2507, %v2506
        %v2557 = vpack.c.b16 %v2509, %v2508
        %v2558 = vpack.c.b16 %v2511, %v2510
        %v2559 = vpack.c.b16 %v2513, %v2512
        %v2560 = vpack.c.b16 %v2515, %v2514
        %v2561 = vpack.c.b16 %v2517, %v2516
        %v2562 = vpack.c.b16 %v2519, %v2518
        %v2563 = vpack.c.b16 %v2521, %v2520
        %v2564 = vpack.c.b16 %v2523, %v2522
        %v2565 = vpack.c.b16 %v2525, %v2524
        %v2566 = vpack.c.b16 %v2527, %v2526
        %v2567 = vpack.c.b16 %v2529, %v2528
        %v2568 = vpack.c.b16 %v2531, %v2530
        %v2569 = vpack.c.b16 %v2533, %v2532
        %v2570 = vpack.c.b16 %v2535, %v2534
        %v2571 = vpack.c.b16 %v2537, %v2536
        %v2572 = vpack.c.b16 %v2539, %v2538
        %v2573 = vpack.c.b16 %v2541, %v2540
        %v2574 = vpack.c.b16 %v2543, %v2542
        %v2575 = vpack.c.b16 %v2545, %v2544
        %2606 = vmatprep.subr.bf16.mxu0 0
        %2607 = vmatpush1.bf16.msra.mxu0 %v2546
        %2608 = vmatprep.subr.bf16.mxu0 0
        %2609 = vmatpush1.bf16.msra.mxu0 %v2547
        %2610 = vmatprep.subr.bf16.mxu0 0
        %2611 = vmatpush1.bf16.msra.mxu0 %v2548
        %2612 = vmatprep.subr.bf16.mxu0 0
        %2613 = vmatpush1.bf16.msra.mxu0 %v2549
        %2614 = vmatprep.subr.bf16.mxu0 0
        %2615 = vmatpush1.bf16.msra.mxu0 %v2550
        %2616 = vmatprep.subr.bf16.mxu0 0
        %2617 = vmatpush1.bf16.msra.mxu0 %v2551
        %2618 = vmatprep.subr.bf16.mxu0 0
        %2619 = vmatpush1.bf16.msra.mxu0 %v2552
        %2620 = vmatprep.subr.bf16.mxu0 0
        %2621 = vmatpush1.bf16.msra.mxu0 %v2553
        %2622 = vmatprep.subr.bf16.mxu0 0
        %2623 = vmatpush1.bf16.msra.mxu0 %v2554
        %2624 = vmatprep.subr.bf16.mxu0 0
        %2625 = vmatpush1.bf16.msra.mxu0 %v2555
        %2626 = vmatprep.subr.bf16.mxu0 0
        %2627 = vmatpush1.bf16.msra.mxu0 %v2556
        %2628 = vmatprep.subr.bf16.mxu0 0
        %2629 = vmatpush1.bf16.msra.mxu0 %v2557
        %2630 = vmatprep.subr.bf16.mxu0 0
        %2631 = vmatpush1.bf16.msra.mxu0 %v2558
        %2632 = vmatprep.subr.bf16.mxu0 0
        %2633 = vmatpush1.bf16.msra.mxu0 %v2559
        %2634 = vmatprep.subr.bf16.mxu0 0
        %2635 = vmatpush1.bf16.msra.mxu0 %v2560
        %2636 = vmatprep.subr.bf16.mxu0 0
        %2637 = vmatpush1.bf16.msra.mxu0 %v2561
        %2638 = vmatprep.mubr.bf16.mxu0 %v2015
        %2639 = vmatmul.mubr.bf16.gmra.mrb[0].mxu0 %v2014
        %v2640 = vpop.f32.mrb[0].mxu0
        %v2641 = vadd.f32 0.0, %v2640
        %v2642 = vpop.f32.mrb[0].mxu0
        %v2643 = vpop.f32.mrb[0].mxu0
        %v2644 = vadd.f32 0.0, %v2643
        %v2645 = vpop.f32.mrb[0].mxu0
        %2646 = vmatprep.mubr.bf16.mxu0 %v2019
        %2647 = vmatmul.mubr.bf16.gmra.mrb[0].mxu0 %v2018
        %v2648 = vpop.f32.mrb[0].mxu0
        %v2649 = vadd.f32 0.0, %v2648
        %v2650 = vpop.f32.mrb[0].mxu0
        %v2651 = vpop.f32.mrb[0].mxu0
        %v2652 = vadd.f32 0.0, %v2651
        %v2653 = vpop.f32.mrb[0].mxu0
        %2654 = vdwg.mxu0
        %2655 = vmatprep.subr.bf16.mxu0 0
        %2656 = vmatpush1.bf16.msra.mxu0 %v2562
        %2657 = vmatprep.subr.bf16.mxu0 0
        %2658 = vmatpush1.bf16.msra.mxu0 %v2563
        %2659 = vmatprep.subr.bf16.mxu0 0
        %2660 = vmatpush1.bf16.msra.mxu0 %v2564
        %2661 = vmatprep.subr.bf16.mxu0 0
        %2662 = vmatpush1.bf16.msra.mxu0 %v2565
        %2663 = vmatprep.subr.bf16.mxu0 0
        %2664 = vmatpush1.bf16.msra.mxu0 %v2566
        %2665 = vmatprep.subr.bf16.mxu0 0
        %2666 = vmatpush1.bf16.msra.mxu0 %v2567
        %2667 = vmatprep.subr.bf16.mxu0 0
        %2668 = vmatpush1.bf16.msra.mxu0 %v2568
        %2669 = vmatprep.subr.bf16.mxu0 0
        %2670 = vmatpush1.bf16.msra.mxu0 %v2569
        %2671 = vmatprep.subr.bf16.mxu0 0
        %2672 = vmatpush1.bf16.msra.mxu0 %v2570
        %2673 = vmatprep.subr.bf16.mxu0 0
        %2674 = vmatpush1.bf16.msra.mxu0 %v2571
        %2675 = vmatprep.subr.bf16.mxu0 0
        %2676 = vmatpush1.bf16.msra.mxu0 %v2572
        %2677 = vmatprep.subr.bf16.mxu0 0
        %2678 = vmatpush1.bf16.msra.mxu0 %v2573
        %2679 = vmatprep.subr.bf16.mxu0 0
        %2680 = vmatpush1.bf16.msra.mxu0 %v2574
        %2681 = vmatprep.subr.bf16.mxu0 0
        %2682 = vmatpush1.bf16.msra.mxu0 %v2575
        %2683 = vmatprep.subr.bf16.mxu0 0
        %2684 = vmatpush1.bf16.msra.mxu0 0
        %2685 = vmatprep.subr.bf16.mxu0 0
        %2686 = vmatpush1.bf16.msra.mxu0 0
        %2687 = vmatprep.mubr.bf16.mxu0 %v2263
        %2688 = vmatmul.mubr.bf16.gmra.mrb[0].mxu0 %v2016
        %v2689 = vpop.f32.mrb[0].mxu0
        %v2690 = vadd.f32 %v2641, %v2689
        %v2691 = vpop.f32.mrb[0].mxu0
        %v2692 = vpop.f32.mrb[0].mxu0
        %v2693 = vadd.f32 %v2644, %v2692
        %v2694 = vpop.f32.mrb[0].mxu0
        %2695 = vmatprep.mubr.bf16.mxu0 %v2266
        %2696 = vmatmul.mubr.bf16.gmra.mrb[0].mxu0 %v2020
        %v2697 = vpop.f32.mrb[0].mxu0
        %v2698 = vadd.f32 %v2649, %v2697
        %v2699 = vpop.f32.mrb[0].mxu0
        %v2700 = vpop.f32.mrb[0].mxu0
        %v2701 = vadd.f32 %v2652, %v2700
        %v2702 = vpop.f32.mrb[0].mxu0
        %2703 = vdwg.mxu0
        %v2704 = vmax.f32 %v2352, %v2690
        %v2705 = vmax.f32 %v2355, %v2693
        %v2706 = vmax.f32 %v2360, %v2698
        %v2707 = vmax.f32 %v2363, %v2701
        %v2708 = vld [vmem:[%s3] sm:$0x1]
        %v2710 = vlaneseq
        %v2711 = vshrl.u32 %v2710, 7
        %v2712 = vsub.s32 0, %v2711
        %v2713 = vrot.slane %v2708, %v2712
        %v2715 = vadd.f32 %v2704, %v2713
        %v2716 = vadd.f32 %v2705, %v2713
        %v2717 = vadd.f32 %v2706, %v2713
        %v2718 = vadd.f32 %v2707, %v2713
        %v2719 = vmax.f32 %v2715, 0.0
        %v2720 = vmax.f32 %v2716, 0.0
        %v2721 = vmax.f32 %v2717, 0.0
        %v2722 = vmax.f32 %v2718, 0.0
        %2723 = vst.msk [vmem:[#allocation2] sm:$0xff] %vm1237, %v2719
        %2724 = vst.msk [vmem:[#allocation2 + $0x8] sm:$0xff] %vm1237, %v2720
        %2725 = vst.msk [vmem:[#allocation2 + $0x10] sm:$0xff] %vm1237, %v2721
        %2726 = vst.msk [vmem:[#allocation2 + $0x18] sm:$0xf] %vm1241, %v2722
        %v2727 = vld [vmem:[#allocation2] ss:$2 sm:$0xff]
        %v2728 = vld [vmem:[%s1244] ss:$2 sm:$0x3f]
        %v2729 = vld [vmem:[%s1246] ss:$2 sm:$0xff]
        %v2730 = vld [vmem:[%s1248] ss:$2 sm:$0x3f]
        %v2731 = vmax.f32 %v2727, %v2729
        %v2732 = vmax.f32 %v2728, %v2730
        %2733 = vst.msk [vmem:[#allocation3] sm:$0xff] %vm1237, %v2731
        %2734 = vst.msk [vmem:[#allocation3 + $0x8] sm:$0x3f] %vm1253, %v2732
        %v2735 = vld [vmem:[#allocation3] sm:$0xff]
        %v2736 = vld [vmem:[#allocation3 + $0x8] sm:$0x3]
        %v2737 = vld [vmem:[#allocation3 + $0x1] sm:$0xff]
        %v2738 = vld [vmem:[#allocation3 + $0x9] sm:$0x3]
        %v2739 = vld [vmem:[#allocation3 + $0x2] sm:$0xff]
        %v2740 = vld [vmem:[#allocation3 + $0xa] sm:$0x3]
        %v2741 = vld [vmem:[#allocation3 + $0x3] sm:$0xff]
        %v2742 = vld [vmem:[#allocation3 + $0xb] sm:$0x3]
        %v2743 = vld [vmem:[#allocation3 + $0x4] sm:$0xff]
        %v2744 = vld [vmem:[#allocation3 + $0xc] sm:$0x3]
        %2747 = vrot.lane.b32.xlu0 %v2737, 84
        %v2748 = vpop.permute.xlu0 %2747
        %2749 = vrot.lane.b32.xlu0 %v2738, 84
        %v2750 = vpop.permute.xlu0 %2749
        %2755 = vrot.lane.b32.xlu0 %v2739, 40
        %v2756 = vpop.permute.xlu0 %2755
        %2757 = vrot.lane.b32.xlu0 %v2740, 40
        %v2758 = vpop.permute.xlu0 %2757
        %2763 = vrot.lane.b32.xlu0 %v2741, 124
        %v2764 = vpop.permute.xlu0 %2763
        %2765 = vrot.lane.b32.xlu0 %v2742, 124
        %v2766 = vpop.permute.xlu0 %2765
        %2771 = vrot.lane.b32.xlu0 %v2743, 80
        %v2772 = vpop.permute.xlu0 %2771
        %2773 = vrot.lane.b32.xlu0 %v2744, 80
        %v2774 = vpop.permute.xlu0 %2773
        %v2777 = vsel %vm1237, %v2735, %v2748
        %v2778 = vsel %vm1237, %v2736, %v2750
        %v2779 = vsel %vm1299, %v2748, %v2756
        %v2780 = vsel %vm1299, %v2750, %v2758
        %v2781 = vsel %vm1302, %v2779, %v2764
        %v2782 = vsel %vm1302, %v2780, %v2766
        %v2783 = vsel %vm1305, %v2764, %v2772
        %v2784 = vsel %vm1305, %v2766, %v2774
        %v2785 = vpack.c.bf16 %v2778, %v2777
        %v2786 = vpack.c.bf16 %v2782, %v2781
        %v2787 = vpack.c.bf16 %v2784, %v2783
        %v2788 = vpack.c.bf16 %v2774, %v2772
        %v2789 = vld [vmem:[%s4] sm:$0xf]
        %v2790 = vld [vmem:[%s4 + $0x4] sm:$0xf]
        %v2791 = vld [vmem:[%s4 + $0x8] sm:$0xf]
        %v2792 = vld [vmem:[%s4 + $0xc] sm:$0xf]
        %v2793 = vld [vmem:[%s4 + $0x10] sm:$0xf]
        %v2794 = vld [vmem:[%s4 + $0x14] sm:$0xf]
        %v2795 = vld [vmem:[%s4 + $0x18] sm:$0xf]
        %v2796 = vld [vmem:[%s4 + $0x1c] sm:$0xf]
        %v2797 = vld [vmem:[%s4 + $0x20] sm:$0xf]
        %v2798 = vld [vmem:[%s4 + $0x24] sm:$0xf]
        %v2799 = vld [vmem:[%s4 + $0x28] sm:$0xf]
        %v2800 = vld [vmem:[%s4 + $0x2c] sm:$0xf]
        %v2801 = vld [vmem:[%s4 + $0x30] sm:$0xf]
        %v2802 = vld [vmem:[%s4 + $0x34] sm:$0xf]
        %v2803 = vld [vmem:[%s4 + $0x38] sm:$0xf]
        %v2804 = vld [vmem:[%s4 + $0x3c] sm:$0xf]
        %v2805 = vld [vmem:[%s4 + $0x40] sm:$0xf]
        %v2806 = vld [vmem:[%s4 + $0x44] sm:$0xf]
        %v2807 = vld [vmem:[%s4 + $0x48] sm:$0xf]
        %v2808 = vld [vmem:[%s4 + $0x4c] sm:$0xf]
        %v2809 = vld [vmem:[%s4 + $0x50] sm:$0xf]
        %v2810 = vld [vmem:[%s4 + $0x54] sm:$0xf]
        %v2811 = vld [vmem:[%s4 + $0x58] sm:$0xf]
        %v2812 = vld [vmem:[%s4 + $0x5c] sm:$0xf]
        %v2813 = vld [vmem:[%s4 + $0x60] sm:$0xf]
        %v2814 = vld [vmem:[%s4 + $0x64] sm:$0xf]
        %v2815 = vld [vmem:[%s4 + $0x68] sm:$0xf]
        %v2816 = vld [vmem:[%s4 + $0x6c] sm:$0xf]
        %v2817 = vld [vmem:[%s4 + $0x70] sm:$0xf]
        %v2818 = vld [vmem:[%s4 + $0x74] sm:$0xf]
        %v2819 = vld [vmem:[%s4 + $0x78] sm:$0xf]
        %v2820 = vld [vmem:[%s4 + $0x7c] sm:$0xf]
        %v2821 = vld [vmem:[%s4 + $0x80] sm:$0xf]
        %v2822 = vld [vmem:[%s4 + $0x84] sm:$0xf]
        %v2823 = vld [vmem:[%s4 + $0x88] sm:$0xf]
        %v2824 = vld [vmem:[%s4 + $0x8c] sm:$0xf]
        %v2825 = vld [vmem:[%s4 + $0x90] sm:$0xf]
        %v2826 = vld [vmem:[%s4 + $0x94] sm:$0xf]
        %v2827 = vld [vmem:[%s4 + $0x98] sm:$0xf]
        %v2828 = vld [vmem:[%s4 + $0x9c] sm:$0xf]
        %v2829 = vld [vmem:[%s4 + $0xa0] sm:$0xf]
        %v2830 = vld [vmem:[%s4 + $0xa4] sm:$0xf]
        %v2831 = vld [vmem:[%s4 + $0xa8] sm:$0xf]
        %v2832 = vld [vmem:[%s4 + $0xac] sm:$0xf]
        %v2833 = vld [vmem:[%s4 + $0xb0] sm:$0xf]
        %v2834 = vld [vmem:[%s4 + $0xb4] sm:$0xf]
        %v2835 = vld [vmem:[%s4 + $0xb8] sm:$0xf]
        %v2836 = vld [vmem:[%s4 + $0xbc] sm:$0xf]
        %v2837 = vld [vmem:[%s4 + $0xc0] sm:$0xf]
        %v2838 = vld [vmem:[%s4 + $0xc4] sm:$0xf]
        %v2839 = vld [vmem:[%s4 + $0xc8] sm:$0xf]
        %v2840 = vld [vmem:[%s4 + $0xcc] sm:$0xf]
        %v2841 = vld [vmem:[%s4 + $0xd0] sm:$0x3]
        %v2895 = vunpack.c.l.b16 %v2789
        %v2896 = vunpack.c.l.b16 %v2790
        %v2897 = vunpack.c.l.b16 %v2791
        %v2898 = vunpack.c.l.b16 %v2792
        %v2899 = vunpack.c.l.b16 %v2793
        %v2900 = vunpack.c.l.b16 %v2794
        %v2901 = vunpack.c.l.b16 %v2795
        %v2902 = vunpack.c.l.b16 %v2796
        %v2903 = vunpack.c.l.b16 %v2797
        %v2904 = vunpack.c.l.b16 %v2798
        %v2905 = vunpack.c.l.b16 %v2799
        %v2906 = vunpack.c.l.b16 %v2800
        %v2907 = vunpack.c.l.b16 %v2801
        %v2908 = vunpack.c.l.b16 %v2802
        %v2909 = vunpack.c.l.b16 %v2803
        %v2910 = vunpack.c.l.b16 %v2804
        %v2911 = vunpack.c.l.b16 %v2805
        %v2912 = vunpack.c.l.b16 %v2806
        %v2913 = vunpack.c.l.b16 %v2807
        %v2914 = vunpack.c.l.b16 %v2808
        %v2915 = vunpack.c.l.b16 %v2809
        %v2916 = vunpack.c.l.b16 %v2810
        %v2917 = vunpack.c.l.b16 %v2811
        %v2918 = vunpack.c.l.b16 %v2812
        %v2919 = vunpack.c.l.b16 %v2813
        %v2920 = vunpack.c.l.b16 %v2814
        %v2921 = vunpack.c.l.b16 %v2815
        %v2922 = vunpack.c.l.b16 %v2816
        %v2923 = vunpack.c.l.b16 %v2817
        %v2924 = vunpack.c.l.b16 %v2818
        %v2925 = vunpack.c.l.b16 %v2819
        %v2926 = vunpack.c.l.b16 %v2820
        %v2927 = vunpack.c.l.b16 %v2821
        %v2928 = vunpack.c.l.b16 %v2822
        %v2929 = vunpack.c.l.b16 %v2823
        %v2930 = vunpack.c.l.b16 %v2824
        %v2931 = vunpack.c.l.b16 %v2825
        %v2932 = vunpack.c.l.b16 %v2826
        %v2933 = vunpack.c.l.b16 %v2827
        %v2934 = vunpack.c.l.b16 %v2828
        %v2935 = vunpack.c.l.b16 %v2829
        %v2936 = vunpack.c.l.b16 %v2830
        %v2937 = vunpack.c.l.b16 %v2831
        %v2938 = vunpack.c.l.b16 %v2832
        %v2939 = vunpack.c.l.b16 %v2833
        %v2940 = vunpack.c.l.b16 %v2834
        %v2941 = vunpack.c.l.b16 %v2835
        %v2942 = vunpack.c.l.b16 %v2836
        %v2943 = vunpack.c.l.b16 %v2837
        %v2944 = vunpack.c.l.b16 %v2838
        %v2945 = vunpack.c.l.b16 %v2839
        %v2946 = vunpack.c.l.b16 %v2840
        %v2947 = vunpack.c.l.b16 %v2841
        %v2948 = vpack.c.b16 %v2896, %v2895
        %v2949 = vpack.c.b16 %v2898, %v2897
        %v2950 = vpack.c.b16 %v2900, %v2899
        %v2951 = vpack.c.b16 %v2902, %v2901
        %v2952 = vpack.c.b16 %v2904, %v2903
        %v2953 = vpack.c.b16 %v2906, %v2905
        %v2954 = vpack.c.b16 %v2908, %v2907
        %v2955 = vpack.c.b16 %v2910, %v2909
        %v2956 = vpack.c.b16 %v2912, %v2911
        %v2957 = vpack.c.b16 %v2914, %v2913
        %v2958 = vpack.c.b16 %v2916, %v2915
        %v2959 = vpack.c.b16 %v2918, %v2917
        %v2960 = vpack.c.b16 %v2920, %v2919
        %v2961 = vpack.c.b16 %v2922, %v2921
        %v2962 = vpack.c.b16 %v2924, %v2923
        %v2963 = vpack.c.b16 %v2926, %v2925
        %v2964 = vpack.c.b16 %v2928, %v2927
        %v2965 = vpack.c.b16 %v2930, %v2929
        %v2966 = vpack.c.b16 %v2932, %v2931
        %v2967 = vpack.c.b16 %v2934, %v2933
        %v2968 = vpack.c.b16 %v2936, %v2935
        %v2969 = vpack.c.b16 %v2938, %v2937
        %v2970 = vpack.c.b16 %v2940, %v2939
        %v2971 = vpack.c.b16 %v2942, %v2941
        %v2972 = vpack.c.b16 %v2944, %v2943
        %v2973 = vpack.c.b16 %v2946, %v2945
        %v2974 = vpack.c.b16 %v2947, %v2947
        %v3002 = vsel %vm1524, %v2788, 0
        %v3005 = vsel %vm1528, %v2974, 0
        %3007 = vmatprep.subr.bf16.mxu0 0
        %3008 = vmatpush1.bf16.msra.mxu0 %v2948
        %3009 = vmatprep.subr.bf16.mxu0 0
        %3010 = vmatpush1.bf16.msra.mxu0 %v2949
        %3011 = vmatprep.subr.bf16.mxu0 0
        %3012 = vmatpush1.bf16.msra.mxu0 %v2950
        %3013 = vmatprep.subr.bf16.mxu0 0
        %3014 = vmatpush1.bf16.msra.mxu0 %v2951
        %3015 = vmatprep.subr.bf16.mxu0 0
        %3016 = vmatpush1.bf16.msra.mxu0 %v2952
        %3017 = vmatprep.subr.bf16.mxu0 0
        %3018 = vmatpush1.bf16.msra.mxu0 %v2953
        %3019 = vmatprep.subr.bf16.mxu0 0
        %3020 = vmatpush1.bf16.msra.mxu0 %v2954
        %3021 = vmatprep.subr.bf16.mxu0 0
        %3022 = vmatpush1.bf16.msra.mxu0 %v2955
        %3023 = vmatprep.subr.bf16.mxu0 0
        %3024 = vmatpush1.bf16.msra.mxu0 %v2956
        %3025 = vmatprep.subr.bf16.mxu0 0
        %3026 = vmatpush1.bf16.msra.mxu0 %v2957
        %3027 = vmatprep.subr.bf16.mxu0 0
        %3028 = vmatpush1.bf16.msra.mxu0 %v2958
        %3029 = vmatprep.subr.bf16.mxu0 0
        %3030 = vmatpush1.bf16.msra.mxu0 %v2959
        %3031 = vmatprep.subr.bf16.mxu0 0
        %3032 = vmatpush1.bf16.msra.mxu0 %v2960
        %3033 = vmatprep.subr.bf16.mxu0 0
        %3034 = vmatpush1.bf16.msra.mxu0 %v2961
        %3035 = vmatprep.subr.bf16.mxu0 0
        %3036 = vmatpush1.bf16.msra.mxu0 %v2962
        %3037 = vmatprep.subr.bf16.mxu0 0
        %3038 = vmatpush1.bf16.msra.mxu0 %v2963
        %3039 = vmatprep.mubr.bf16.mxu0 %v2786
        %3040 = vmatmul.mubr.bf16.gmra.mrb[0].mxu0 %v2785
        %v3041 = vpop.f32.mrb[0].mxu0
        %v3042 = vadd.f32 0.0, %v3041
        %v3043 = vpop.f32.mrb[0].mxu0
        %v3044 = vpop.f32.mrb[0].mxu0
        %v3045 = vadd.f32 0.0, %v3044
        %v3046 = vpop.f32.mrb[0].mxu0
        %3047 = vdwg.mxu0
        %3048 = vmatprep.subr.bf16.mxu0 0
        %3049 = vmatpush1.bf16.msra.mxu0 %v2964
        %3050 = vmatprep.subr.bf16.mxu0 0
        %3051 = vmatpush1.bf16.msra.mxu0 %v2965
        %3052 = vmatprep.subr.bf16.mxu0 0
        %3053 = vmatpush1.bf16.msra.mxu0 %v2966
        %3054 = vmatprep.subr.bf16.mxu0 0
        %3055 = vmatpush1.bf16.msra.mxu0 %v2967
        %3056 = vmatprep.subr.bf16.mxu0 0
        %3057 = vmatpush1.bf16.msra.mxu0 %v2968
        %3058 = vmatprep.subr.bf16.mxu0 0
        %3059 = vmatpush1.bf16.msra.mxu0 %v2969
        %3060 = vmatprep.subr.bf16.mxu0 0
        %3061 = vmatpush1.bf16.msra.mxu0 %v2970
        %3062 = vmatprep.subr.bf16.mxu0 0
        %3063 = vmatpush1.bf16.msra.mxu0 %v2971
        %3064 = vmatprep.subr.bf16.mxu0 0
        %3065 = vmatpush1.bf16.msra.mxu0 %v2972
        %3066 = vmatprep.subr.bf16.mxu0 0
        %3067 = vmatpush1.bf16.msra.mxu0 %v2973
        %3068 = vmatprep.subr.bf16.mxu0 0
        %3069 = vmatpush1.bf16.msra.mxu0 %v3005
        %3070 = vmatprep.subr.bf16.mxu0 0
        %3071 = vmatpush1.bf16.msra.mxu0 0
        %3072 = vmatprep.subr.bf16.mxu0 0
        %3073 = vmatpush1.bf16.msra.mxu0 0
        %3074 = vmatprep.subr.bf16.mxu0 0
        %3075 = vmatpush1.bf16.msra.mxu0 0
        %3076 = vmatprep.subr.bf16.mxu0 0
        %3077 = vmatpush1.bf16.msra.mxu0 0
        %3078 = vmatprep.subr.bf16.mxu0 0
        %3079 = vmatpush1.bf16.msra.mxu0 0
        %3080 = vmatprep.mubr.bf16.mxu0 %v3002
        %3081 = vmatmul.mubr.bf16.gmra.mrb[0].mxu0 %v2787
        %v3082 = vpop.f32.mrb[0].mxu0
        %v3083 = vadd.f32 %v3042, %v3082
        %v3084 = vpop.f32.mrb[0].mxu0
        %v3085 = vpop.f32.mrb[0].mxu0
        %v3086 = vadd.f32 %v3045, %v3085
        %v3087 = vpop.f32.mrb[0].mxu0
        %3088 = vdwg.mxu0
        %v3089 = vld [vmem:[%s5] sm:$0xf]
        %v3090 = vld [vmem:[%s5 + $0x4] sm:$0xf]
        %v3091 = vld [vmem:[%s5 + $0x8] sm:$0xf]
        %v3092 = vld [vmem:[%s5 + $0xc] sm:$0xf]
        %v3093 = vld [vmem:[%s5 + $0x10] sm:$0xf]
        %v3094 = vld [vmem:[%s5 + $0x14] sm:$0xf]
        %v3095 = vld [vmem:[%s5 + $0x18] sm:$0xf]
        %v3096 = vld [vmem:[%s5 + $0x1c] sm:$0xf]
        %v3097 = vld [vmem:[%s5 + $0x20] sm:$0xf]
        %v3098 = vld [vmem:[%s5 + $0x24] sm:$0xf]
        %v3099 = vld [vmem:[%s5 + $0x28] sm:$0xf]
        %v3100 = vld [vmem:[%s5 + $0x2c] sm:$0xf]
        %v3101 = vld [vmem:[%s5 + $0x30] sm:$0xf]
        %v3102 = vld [vmem:[%s5 + $0x34] sm:$0xf]
        %v3103 = vld [vmem:[%s5 + $0x38] sm:$0xf]
        %v3104 = vld [vmem:[%s5 + $0x3c] sm:$0xf]
        %v3105 = vld [vmem:[%s5 + $0x40] sm:$0xf]
        %v3106 = vld [vmem:[%s5 + $0x44] sm:$0xf]
        %v3107 = vld [vmem:[%s5 + $0x48] sm:$0xf]
        %v3108 = vld [vmem:[%s5 + $0x4c] sm:$0xf]
        %v3109 = vld [vmem:[%s5 + $0x50] sm:$0xf]
        %v3110 = vld [vmem:[%s5 + $0x54] sm:$0xf]
        %v3111 = vld [vmem:[%s5 + $0x58] sm:$0xf]
        %v3112 = vld [vmem:[%s5 + $0x5c] sm:$0xf]
        %v3113 = vld [vmem:[%s5 + $0x60] sm:$0xf]
        %v3114 = vld [vmem:[%s5 + $0x64] sm:$0xf]
        %v3115 = vld [vmem:[%s5 + $0x68] sm:$0xf]
        %v3116 = vld [vmem:[%s5 + $0x6c] sm:$0xf]
        %v3117 = vld [vmem:[%s5 + $0x70] sm:$0xf]
        %v3118 = vld [vmem:[%s5 + $0x74] sm:$0xf]
        %v3119 = vld [vmem:[%s5 + $0x78] sm:$0xf]
        %v3120 = vld [vmem:[%s5 + $0x7c] sm:$0xf]
        %v3121 = vld [vmem:[%s5 + $0x80] sm:$0xf]
        %v3122 = vld [vmem:[%s5 + $0x84] sm:$0xf]
        %v3123 = vld [vmem:[%s5 + $0x88] sm:$0xf]
        %v3124 = vld [vmem:[%s5 + $0x8c] sm:$0xf]
        %v3125 = vld [vmem:[%s5 + $0x90] sm:$0xf]
        %v3126 = vld [vmem:[%s5 + $0x94] sm:$0xf]
        %v3127 = vld [vmem:[%s5 + $0x98] sm:$0xf]
        %v3128 = vld [vmem:[%s5 + $0x9c] sm:$0xf]
        %v3129 = vld [vmem:[%s5 + $0xa0] sm:$0xf]
        %v3130 = vld [vmem:[%s5 + $0xa4] sm:$0xf]
        %v3131 = vld [vmem:[%s5 + $0xa8] sm:$0xf]
        %v3132 = vld [vmem:[%s5 + $0xac] sm:$0xf]
        %v3133 = vld [vmem:[%s5 + $0xb0] sm:$0xf]
        %v3134 = vld [vmem:[%s5 + $0xb4] sm:$0xf]
        %v3135 = vld [vmem:[%s5 + $0xb8] sm:$0xf]
        %v3136 = vld [vmem:[%s5 + $0xbc] sm:$0xf]
        %v3137 = vld [vmem:[%s5 + $0xc0] sm:$0xf]
        %v3138 = vld [vmem:[%s5 + $0xc4] sm:$0xf]
        %v3139 = vld [vmem:[%s5 + $0xc8] sm:$0xf]
        %v3140 = vld [vmem:[%s5 + $0xcc] sm:$0xf]
        %v3141 = vld [vmem:[%s5 + $0xd0] sm:$0x3]
        %v3195 = vunpack.c.l.b16 %v3089
        %v3196 = vunpack.c.l.b16 %v3090
        %v3197 = vunpack.c.l.b16 %v3091
        %v3198 = vunpack.c.l.b16 %v3092
        %v3199 = vunpack.c.l.b16 %v3093
        %v3200 = vunpack.c.l.b16 %v3094
        %v3201 = vunpack.c.l.b16 %v3095
        %v3202 = vunpack.c.l.b16 %v3096
        %v3203 = vunpack.c.l.b16 %v3097
        %v3204 = vunpack.c.l.b16 %v3098
        %v3205 = vunpack.c.l.b16 %v3099
        %v3206 = vunpack.c.l.b16 %v3100
        %v3207 = vunpack.c.l.b16 %v3101
        %v3208 = vunpack.c.l.b16 %v3102
        %v3209 = vunpack.c.l.b16 %v3103
        %v3210 = vunpack.c.l.b16 %v3104
        %v3211 = vunpack.c.l.b16 %v3105
        %v3212 = vunpack.c.l.b16 %v3106
        %v3213 = vunpack.c.l.b16 %v3107
        %v3214 = vunpack.c.l.b16 %v3108
        %v3215 = vunpack.c.l.b16 %v3109
        %v3216 = vunpack.c.l.b16 %v3110
        %v3217 = vunpack.c.l.b16 %v3111
        %v3218 = vunpack.c.l.b16 %v3112
        %v3219 = vunpack.c.l.b16 %v3113
        %v3220 = vunpack.c.l.b16 %v3114
        %v3221 = vunpack.c.l.b16 %v3115
        %v3222 = vunpack.c.l.b16 %v3116
        %v3223 = vunpack.c.l.b16 %v3117
        %v3224 = vunpack.c.l.b16 %v3118
        %v3225 = vunpack.c.l.b16 %v3119
        %v3226 = vunpack.c.l.b16 %v3120
        %v3227 = vunpack.c.l.b16 %v3121
        %v3228 = vunpack.c.l.b16 %v3122
        %v3229 = vunpack.c.l.b16 %v3123
        %v3230 = vunpack.c.l.b16 %v3124
        %v3231 = vunpack.c.l.b16 %v3125
        %v3232 = vunpack.c.l.b16 %v3126
        %v3233 = vunpack.c.l.b16 %v3127
        %v3234 = vunpack.c.l.b16 %v3128
        %v3235 = vunpack.c.l.b16 %v3129
        %v3236 = vunpack.c.l.b16 %v3130
        %v3237 = vunpack.c.l.b16 %v3131
        %v3238 = vunpack.c.l.b16 %v3132
        %v3239 = vunpack.c.l.b16 %v3133
        %v3240 = vunpack.c.l.b16 %v3134
        %v3241 = vunpack.c.l.b16 %v3135
        %v3242 = vunpack.c.l.b16 %v3136
        %v3243 = vunpack.c.l.b16 %v3137
        %v3244 = vunpack.c.l.b16 %v3138
        %v3245 = vunpack.c.l.b16 %v3139
        %v3246 = vunpack.c.l.b16 %v3140
        %v3247 = vunpack.c.l.b16 %v3141
        %v3248 = vpack.c.b16 %v3196, %v3195
        %v3249 = vpack.c.b16 %v3198, %v3197
        %v3250 = vpack.c.b16 %v3200, %v3199
        %v3251 = vpack.c.b16 %v3202, %v3201
        %v3252 = vpack.c.b16 %v3204, %v3203
        %v3253 = vpack.c.b16 %v3206, %v3205
        %v3254 = vpack.c.b16 %v3208, %v3207
        %v3255 = vpack.c.b16 %v3210, %v3209
        %v3256 = vpack.c.b16 %v3212, %v3211
        %v3257 = vpack.c.b16 %v3214, %v3213
        %v3258 = vpack.c.b16 %v3216, %v3215
        %v3259 = vpack.c.b16 %v3218, %v3217
        %v3260 = vpack.c.b16 %v3220, %v3219
        %v3261 = vpack.c.b16 %v3222, %v3221
        %v3262 = vpack.c.b16 %v3224, %v3223
        %v3263 = vpack.c.b16 %v3226, %v3225
        %v3264 = vpack.c.b16 %v3228, %v3227
        %v3265 = vpack.c.b16 %v3230, %v3229
        %v3266 = vpack.c.b16 %v3232, %v3231
        %v3267 = vpack.c.b16 %v3234, %v3233
        %v3268 = vpack.c.b16 %v3236, %v3235
        %v3269 = vpack.c.b16 %v3238, %v3237
        %v3270 = vpack.c.b16 %v3240, %v3239
        %v3271 = vpack.c.b16 %v3242, %v3241
        %v3272 = vpack.c.b16 %v3244, %v3243
        %v3273 = vpack.c.b16 %v3246, %v3245
        %v3274 = vpack.c.b16 %v3247, %v3247
        %v3302 = vsel %vm1528, %v3274, 0
        %3304 = vmatprep.subr.bf16.mxu0 0
        %3305 = vmatpush1.bf16.msra.mxu0 %v3248
        %3306 = vmatprep.subr.bf16.mxu0 0
        %3307 = vmatpush1.bf16.msra.mxu0 %v3249
        %3308 = vmatprep.subr.bf16.mxu0 0
        %3309 = vmatpush1.bf16.msra.mxu0 %v3250
        %3310 = vmatprep.subr.bf16.mxu0 0
        %3311 = vmatpush1.bf16.msra.mxu0 %v3251
        %3312 = vmatprep.subr.bf16.mxu0 0
        %3313 = vmatpush1.bf16.msra.mxu0 %v3252
        %3314 = vmatprep.subr.bf16.mxu0 0
        %3315 = vmatpush1.bf16.msra.mxu0 %v3253
        %3316 = vmatprep.subr.bf16.mxu0 0
        %3317 = vmatpush1.bf16.msra.mxu0 %v3254
        %3318 = vmatprep.subr.bf16.mxu0 0
        %3319 = vmatpush1.bf16.msra.mxu0 %v3255
        %3320 = vmatprep.subr.bf16.mxu0 0
        %3321 = vmatpush1.bf16.msra.mxu0 %v3256
        %3322 = vmatprep.subr.bf16.mxu0 0
        %3323 = vmatpush1.bf16.msra.mxu0 %v3257
        %3324 = vmatprep.subr.bf16.mxu0 0
        %3325 = vmatpush1.bf16.msra.mxu0 %v3258
        %3326 = vmatprep.subr.bf16.mxu0 0
        %3327 = vmatpush1.bf16.msra.mxu0 %v3259
        %3328 = vmatprep.subr.bf16.mxu0 0
        %3329 = vmatpush1.bf16.msra.mxu0 %v3260
        %3330 = vmatprep.subr.bf16.mxu0 0
        %3331 = vmatpush1.bf16.msra.mxu0 %v3261
        %3332 = vmatprep.subr.bf16.mxu0 0
        %3333 = vmatpush1.bf16.msra.mxu0 %v3262
        %3334 = vmatprep.subr.bf16.mxu0 0
        %3335 = vmatpush1.bf16.msra.mxu0 %v3263
        %3336 = vmatprep.mubr.bf16.mxu0 %v2786
        %3337 = vmatmul.mubr.bf16.gmra.mrb[0].mxu0 %v2785
        %v3338 = vpop.f32.mrb[0].mxu0
        %v3339 = vadd.f32 0.0, %v3338
        %v3340 = vpop.f32.mrb[0].mxu0
        %v3341 = vpop.f32.mrb[0].mxu0
        %v3342 = vadd.f32 0.0, %v3341
        %v3343 = vpop.f32.mrb[0].mxu0
        %3344 = vdwg.mxu0
        %3345 = vmatprep.subr.bf16.mxu0 0
        %3346 = vmatpush1.bf16.msra.mxu0 %v3264
        %3347 = vmatprep.subr.bf16.mxu0 0
        %3348 = vmatpush1.bf16.msra.mxu0 %v3265
        %3349 = vmatprep.subr.bf16.mxu0 0
        %3350 = vmatpush1.bf16.msra.mxu0 %v3266
        %3351 = vmatprep.subr.bf16.mxu0 0
        %3352 = vmatpush1.bf16.msra.mxu0 %v3267
        %3353 = vmatprep.subr.bf16.mxu0 0
        %3354 = vmatpush1.bf16.msra.mxu0 %v3268
        %3355 = vmatprep.subr.bf16.mxu0 0
        %3356 = vmatpush1.bf16.msra.mxu0 %v3269
        %3357 = vmatprep.subr.bf16.mxu0 0
        %3358 = vmatpush1.bf16.msra.mxu0 %v3270
        %3359 = vmatprep.subr.bf16.mxu0 0
        %3360 = vmatpush1.bf16.msra.mxu0 %v3271
        %3361 = vmatprep.subr.bf16.mxu0 0
        %3362 = vmatpush1.bf16.msra.mxu0 %v3272
        %3363 = vmatprep.subr.bf16.mxu0 0
        %3364 = vmatpush1.bf16.msra.mxu0 %v3273
        %3365 = vmatprep.subr.bf16.mxu0 0
        %3366 = vmatpush1.bf16.msra.mxu0 %v3302
        %3367 = vmatprep.subr.bf16.mxu0 0
        %3368 = vmatpush1.bf16.msra.mxu0 0
        %3369 = vmatprep.subr.bf16.mxu0 0
        %3370 = vmatpush1.bf16.msra.mxu0 0
        %3371 = vmatprep.subr.bf16.mxu0 0
        %3372 = vmatpush1.bf16.msra.mxu0 0
        %3373 = vmatprep.subr.bf16.mxu0 0
        %3374 = vmatpush1.bf16.msra.mxu0 0
        %3375 = vmatprep.subr.bf16.mxu0 0
        %3376 = vmatpush1.bf16.msra.mxu0 0
        %3377 = vmatprep.mubr.bf16.mxu0 %v3002
        %3378 = vmatmul.mubr.bf16.gmra.mrb[0].mxu0 %v2787
        %v3379 = vpop.f32.mrb[0].mxu0
        %v3380 = vadd.f32 %v3339, %v3379
        %v3381 = vpop.f32.mrb[0].mxu0
        %v3382 = vpop.f32.mrb[0].mxu0
        %v3383 = vadd.f32 %v3342, %v3382
        %v3384 = vpop.f32.mrb[0].mxu0
        %3385 = vdwg.mxu0
        %v3386 = vmax.f32 %v3083, %v3380
        %v3387 = vmax.f32 %v3086, %v3383
        %v3388 = vld [vmem:[%s6] sm:$0x1]
        %v3390 = vlaneseq
        %v3391 = vshrl.u32 %v3390, 7
        %v3392 = vsub.s32 0, %v3391
        %v3393 = vrot.slane %v3388, %v3392
        %v3395 = vadd.f32 %v3386, %v3393
        %v3396 = vadd.f32 %v3387, %v3393
        %v3397 = vmax.f32 %v3395, 0.0
        %v3398 = vmax.f32 %v3396, 0.0
        %3399 = vst.msk [vmem:[#allocation4] sm:$0xff] %vm1305, %v3397
        %3400 = vst.msk [vmem:[#allocation4 + $0x8] sm:$0x3] %vm1925, %v3398
        %v3401 = vld [vmem:[#allocation4] ss:$2 sm:$0x1f]
        %v3402 = vld [vmem:[%s1928] ss:$2 sm:$0x1f]
        %v3403 = vmax.f32 %v3401, %v3402
        %s3404 = scalar_lea.vmem [#allocation5], 8
        %3405 = vst.msk [vmem:[%s3404] sm:$0x1f] %vm1931, %v3403
        %s3406 = scalar_lea.vmem %s442, 64
        %v3407 = vld [vmem:[%s3406] sm:$0xff]
        %v3408 = vld [vmem:[%s3406 + $0x8] sm:$0xff]
        %v3409 = vld [vmem:[%s3406 + $0x10] sm:$0xff]
        %v3410 = vld [vmem:[%s3406 + $0x18] sm:$0xf]
        %v3411 = vld [vmem:[%s3406 + $0x1] sm:$0xff]
        %v3412 = vld [vmem:[%s3406 + $0x9] sm:$0xff]
        %v3413 = vld [vmem:[%s3406 + $0x11] sm:$0xff]
        %v3414 = vld [vmem:[%s3406 + $0x19] sm:$0xf]
        %v3415 = vld [vmem:[%s3406 + $0x2] sm:$0xff]
        %v3416 = vld [vmem:[%s3406 + $0xa] sm:$0xff]
        %v3417 = vld [vmem:[%s3406 + $0x12] sm:$0xff]
        %v3418 = vld [vmem:[%s3406 + $0x1a] sm:$0xf]
        %v3419 = vld [vmem:[%s3406 + $0x3] sm:$0xff]
        %v3420 = vld [vmem:[%s3406 + $0xb] sm:$0xff]
        %v3421 = vld [vmem:[%s3406 + $0x13] sm:$0xff]
        %v3422 = vld [vmem:[%s3406 + $0x1b] sm:$0xf]
        %v3423 = vld [vmem:[%s3406 + $0x4] sm:$0xff]
        %v3424 = vld [vmem:[%s3406 + $0xc] sm:$0xff]
        %v3425 = vld [vmem:[%s3406 + $0x14] sm:$0xff]
        %v3426 = vld [vmem:[%s3406 + $0x1c] sm:$0xf]
        %3431 = vrot.lane.b32.xlu0 %v3411, 96
        %v3432 = vpop.permute.xlu0 %3431
        %3433 = vrot.lane.b32.xlu0 %v3412, 96
        %v3434 = vpop.permute.xlu0 %3433
        %3435 = vrot.lane.b32.xlu0 %v3413, 96
        %v3436 = vpop.permute.xlu0 %3435
        %3437 = vrot.lane.b32.xlu0 %v3414, 96
        %v3438 = vpop.permute.xlu0 %3437
        %3447 = vrot.lane.b32.xlu0 %v3415, 64
        %v3448 = vpop.permute.xlu0 %3447
        %3449 = vrot.lane.b32.xlu0 %v3416, 64
        %v3450 = vpop.permute.xlu0 %3449
        %3451 = vrot.lane.b32.xlu0 %v3417, 64
        %v3452 = vpop.permute.xlu0 %3451
        %3453 = vrot.lane.b32.xlu0 %v3418, 64
        %v3454 = vpop.permute.xlu0 %3453
        %3463 = vrot.lane.b32.xlu0 %v3419, 32
        %v3464 = vpop.permute.xlu0 %3463
        %3465 = vrot.lane.b32.xlu0 %v3420, 32
        %v3466 = vpop.permute.xlu0 %3465
        %3467 = vrot.lane.b32.xlu0 %v3421, 32
        %v3468 = vpop.permute.xlu0 %3467
        %3469 = vrot.lane.b32.xlu0 %v3422, 32
        %v3470 = vpop.permute.xlu0 %3469
        %v3475 = vsel %vm513, %v3407, %v3432
        %v3476 = vsel %vm513, %v3408, %v3434
        %v3477 = vsel %vm513, %v3409, %v3436
        %v3478 = vsel %vm513, %v3410, %v3438
        %v3479 = vsel %vm518, %v3432, %v3448
        %v3480 = vsel %vm518, %v3434, %v3450
        %v3481 = vsel %vm518, %v3436, %v3452
        %v3482 = vsel %vm518, %v3438, %v3454
        %v3483 = vsel %vm523, %v3448, %v3464
        %v3484 = vsel %vm523, %v3450, %v3466
        %v3485 = vsel %vm523, %v3452, %v3468
        %v3486 = vsel %vm523, %v3454, %v3470
        %v3487 = vpack.c.bf16 %v3476, %v3475
        %v3488 = vpack.c.bf16 %v3480, %v3479
        %v3489 = vpack.c.bf16 %v3484, %v3483
        %v3490 = vpack.c.bf16 %v3424, %v3423
        %v3491 = vpack.c.bf16 %v3478, %v3477
        %v3492 = vpack.c.bf16 %v3482, %v3481
        %v3493 = vpack.c.bf16 %v3486, %v3485
        %v3494 = vpack.c.bf16 %v3426, %v3425
        %v3495 = vld [vmem:[%s1] sm:$0xf]
        %v3496 = vld [vmem:[%s1 + $0x4] sm:$0xf]
        %v3497 = vld [vmem:[%s1 + $0x8] sm:$0xf]
        %v3498 = vld [vmem:[%s1 + $0xc] sm:$0xf]
        %v3499 = vld [vmem:[%s1 + $0x10] sm:$0xf]
        %v3500 = vld [vmem:[%s1 + $0x14] sm:$0xf]
        %v3501 = vld [vmem:[%s1 + $0x18] sm:$0xf]
        %v3502 = vld [vmem:[%s1 + $0x1c] sm:$0xf]
        %v3503 = vld [vmem:[%s1 + $0x20] sm:$0xf]
        %v3504 = vld [vmem:[%s1 + $0x24] sm:$0xf]
        %v3505 = vld [vmem:[%s1 + $0x28] sm:$0xf]
        %v3506 = vld [vmem:[%s1 + $0x2c] sm:$0xf]
        %v3507 = vld [vmem:[%s1 + $0x30] sm:$0xf]
        %v3508 = vld [vmem:[%s1 + $0x34] sm:$0xf]
        %v3509 = vld [vmem:[%s1 + $0x38] sm:$0xf]
        %v3510 = vld [vmem:[%s1 + $0x3c] sm:$0xf]
        %v3511 = vld [vmem:[%s1 + $0x40] sm:$0xf]
        %v3512 = vld [vmem:[%s1 + $0x44] sm:$0xf]
        %v3513 = vld [vmem:[%s1 + $0x48] sm:$0xf]
        %v3514 = vld [vmem:[%s1 + $0x4c] sm:$0xf]
        %v3515 = vld [vmem:[%s1 + $0x50] sm:$0xf]
        %v3516 = vld [vmem:[%s1 + $0x54] sm:$0xf]
        %v3517 = vld [vmem:[%s1 + $0x58] sm:$0xf]
        %v3518 = vld [vmem:[%s1 + $0x5c] sm:$0xf]
        %v3519 = vld [vmem:[%s1 + $0x60] sm:$0xf]
        %v3520 = vld [vmem:[%s1 + $0x64] sm:$0xf]
        %v3521 = vld [vmem:[%s1 + $0x68] sm:$0xf]
        %v3522 = vld [vmem:[%s1 + $0x6c] sm:$0xf]
        %v3523 = vld [vmem:[%s1 + $0x70] sm:$0xf]
        %v3524 = vld [vmem:[%s1 + $0x74] sm:$0xf]
        %v3525 = vld [vmem:[%s1 + $0x78] sm:$0xf]
        %v3526 = vld [vmem:[%s1 + $0x7c] sm:$0xf]
        %v3527 = vld [vmem:[%s1 + $0x80] sm:$0xf]
        %v3528 = vld [vmem:[%s1 + $0x84] sm:$0xf]
        %v3529 = vld [vmem:[%s1 + $0x88] sm:$0xf]
        %v3530 = vld [vmem:[%s1 + $0x8c] sm:$0xf]
        %v3531 = vld [vmem:[%s1 + $0x90] sm:$0xf]
        %v3532 = vld [vmem:[%s1 + $0x94] sm:$0xf]
        %v3533 = vld [vmem:[%s1 + $0x98] sm:$0xf]
        %v3534 = vld [vmem:[%s1 + $0x9c] sm:$0xf]
        %v3535 = vld [vmem:[%s1 + $0xa0] sm:$0xf]
        %v3536 = vld [vmem:[%s1 + $0xa4] sm:$0xf]
        %v3537 = vld [vmem:[%s1 + $0xa8] sm:$0xf]
        %v3538 = vld [vmem:[%s1 + $0xac] sm:$0xf]
        %v3539 = vld [vmem:[%s1 + $0xb0] sm:$0xf]
        %v3540 = vld [vmem:[%s1 + $0xb4] sm:$0xf]
        %v3541 = vld [vmem:[%s1 + $0xb8] sm:$0xf]
        %v3542 = vld [vmem:[%s1 + $0xbc] sm:$0xf]
        %v3543 = vld [vmem:[%s1 + $0xc0] sm:$0xf]
        %v3544 = vld [vmem:[%s1 + $0xc4] sm:$0xf]
        %v3545 = vld [vmem:[%s1 + $0xc8] sm:$0xf]
        %v3546 = vld [vmem:[%s1 + $0xcc] sm:$0xf]
        %v3547 = vld [vmem:[%s1 + $0xd0] sm:$0xf]
        %v3548 = vld [vmem:[%s1 + $0xd4] sm:$0xf]
        %v3549 = vld [vmem:[%s1 + $0xd8] sm:$0xf]
        %v3550 = vld [vmem:[%s1 + $0xdc] sm:$0xf]
        %v3551 = vld [vmem:[%s1 + $0xe0] sm:$0xf]
        %v3552 = vld [vmem:[%s1 + $0xe4] sm:$0xf]
        %v3553 = vld [vmem:[%s1 + $0xe8] sm:$0xf]
        %v3554 = vld [vmem:[%s1 + $0xec] sm:$0xf]
        %v3615 = vunpack.c.l.b16 %v3495
        %v3616 = vunpack.c.l.b16 %v3496
        %v3617 = vunpack.c.l.b16 %v3497
        %v3618 = vunpack.c.l.b16 %v3498
        %v3619 = vunpack.c.l.b16 %v3499
        %v3620 = vunpack.c.l.b16 %v3500
        %v3621 = vunpack.c.l.b16 %v3501
        %v3622 = vunpack.c.l.b16 %v3502
        %v3623 = vunpack.c.l.b16 %v3503
        %v3624 = vunpack.c.l.b16 %v3504
        %v3625 = vunpack.c.l.b16 %v3505
        %v3626 = vunpack.c.l.b16 %v3506
        %v3627 = vunpack.c.l.b16 %v3507
        %v3628 = vunpack.c.l.b16 %v3508
        %v3629 = vunpack.c.l.b16 %v3509
        %v3630 = vunpack.c.l.b16 %v3510
        %v3631 = vunpack.c.l.b16 %v3511
        %v3632 = vunpack.c.l.b16 %v3512
        %v3633 = vunpack.c.l.b16 %v3513
        %v3634 = vunpack.c.l.b16 %v3514
        %v3635 = vunpack.c.l.b16 %v3515
        %v3636 = vunpack.c.l.b16 %v3516
        %v3637 = vunpack.c.l.b16 %v3517
        %v3638 = vunpack.c.l.b16 %v3518
        %v3639 = vunpack.c.l.b16 %v3519
        %v3640 = vunpack.c.l.b16 %v3520
        %v3641 = vunpack.c.l.b16 %v3521
        %v3642 = vunpack.c.l.b16 %v3522
        %v3643 = vunpack.c.l.b16 %v3523
        %v3644 = vunpack.c.l.b16 %v3524
        %v3645 = vunpack.c.l.b16 %v3525
        %v3646 = vunpack.c.l.b16 %v3526
        %v3647 = vunpack.c.l.b16 %v3527
        %v3648 = vunpack.c.l.b16 %v3528
        %v3649 = vunpack.c.l.b16 %v3529
        %v3650 = vunpack.c.l.b16 %v3530
        %v3651 = vunpack.c.l.b16 %v3531
        %v3652 = vunpack.c.l.b16 %v3532
        %v3653 = vunpack.c.l.b16 %v3533
        %v3654 = vunpack.c.l.b16 %v3534
        %v3655 = vunpack.c.l.b16 %v3535
        %v3656 = vunpack.c.l.b16 %v3536
        %v3657 = vunpack.c.l.b16 %v3537
        %v3658 = vunpack.c.l.b16 %v3538
        %v3659 = vunpack.c.l.b16 %v3539
        %v3660 = vunpack.c.l.b16 %v3540
        %v3661 = vunpack.c.l.b16 %v3541
        %v3662 = vunpack.c.l.b16 %v3542
        %v3663 = vunpack.c.l.b16 %v3543
        %v3664 = vunpack.c.l.b16 %v3544
        %v3665 = vunpack.c.l.b16 %v3545
        %v3666 = vunpack.c.l.b16 %v3546
        %v3667 = vunpack.c.l.b16 %v3547
        %v3668 = vunpack.c.l.b16 %v3548
        %v3669 = vunpack.c.l.b16 %v3549
        %v3670 = vunpack.c.l.b16 %v3550
        %v3671 = vunpack.c.l.b16 %v3551
        %v3672 = vunpack.c.l.b16 %v3552
        %v3673 = vunpack.c.l.b16 %v3553
        %v3674 = vunpack.c.l.b16 %v3554
        %v3675 = vpack.c.b16 %v3616, %v3615
        %v3676 = vpack.c.b16 %v3618, %v3617
        %v3677 = vpack.c.b16 %v3620, %v3619
        %v3678 = vpack.c.b16 %v3622, %v3621
        %v3679 = vpack.c.b16 %v3624, %v3623
        %v3680 = vpack.c.b16 %v3626, %v3625
        %v3681 = vpack.c.b16 %v3628, %v3627
        %v3682 = vpack.c.b16 %v3630, %v3629
        %v3683 = vpack.c.b16 %v3632, %v3631
        %v3684 = vpack.c.b16 %v3634, %v3633
        %v3685 = vpack.c.b16 %v3636, %v3635
        %v3686 = vpack.c.b16 %v3638, %v3637
        %v3687 = vpack.c.b16 %v3640, %v3639
        %v3688 = vpack.c.b16 %v3642, %v3641
        %v3689 = vpack.c.b16 %v3644, %v3643
        %v3690 = vpack.c.b16 %v3646, %v3645
        %v3691 = vpack.c.b16 %v3648, %v3647
        %v3692 = vpack.c.b16 %v3650, %v3649
        %v3693 = vpack.c.b16 %v3652, %v3651
        %v3694 = vpack.c.b16 %v3654, %v3653
        %v3695 = vpack.c.b16 %v3656, %v3655
        %v3696 = vpack.c.b16 %v3658, %v3657
        %v3697 = vpack.c.b16 %v3660, %v3659
        %v3698 = vpack.c.b16 %v3662, %v3661
        %v3699 = vpack.c.b16 %v3664, %v3663
        %v3700 = vpack.c.b16 %v3666, %v3665
        %v3701 = vpack.c.b16 %v3668, %v3667
        %v3702 = vpack.c.b16 %v3670, %v3669
        %v3703 = vpack.c.b16 %v3672, %v3671
        %v3704 = vpack.c.b16 %v3674, %v3673
        %v3736 = vsel %vm513, %v3490, 0
        %v3739 = vsel %vm513, %v3494, 0
        %3741 = vmatprep.subr.bf16.mxu0 0
        %3742 = vmatpush1.bf16.msra.mxu0 %v3675
        %3743 = vmatprep.subr.bf16.mxu0 0
        %3744 = vmatpush1.bf16.msra.mxu0 %v3676
        %3745 = vmatprep.subr.bf16.mxu0 0
        %3746 = vmatpush1.bf16.msra.mxu0 %v3677
        %3747 = vmatprep.subr.bf16.mxu0 0
        %3748 = vmatpush1.bf16.msra.mxu0 %v3678
        %3749 = vmatprep.subr.bf16.mxu0 0
        %3750 = vmatpush1.bf16.msra.mxu0 %v3679
        %3751 = vmatprep.subr.bf16.mxu0 0
        %3752 = vmatpush1.bf16.msra.mxu0 %v3680
        %3753 = vmatprep.subr.bf16.mxu0 0
        %3754 = vmatpush1.bf16.msra.mxu0 %v3681
        %3755 = vmatprep.subr.bf16.mxu0 0
        %3756 = vmatpush1.bf16.msra.mxu0 %v3682
        %3757 = vmatprep.subr.bf16.mxu0 0
        %3758 = vmatpush1.bf16.msra.mxu0 %v3683
        %3759 = vmatprep.subr.bf16.mxu0 0
        %3760 = vmatpush1.bf16.msra.mxu0 %v3684
        %3761 = vmatprep.subr.bf16.mxu0 0
        %3762 = vmatpush1.bf16.msra.mxu0 %v3685
        %3763 = vmatprep.subr.bf16.mxu0 0
        %3764 = vmatpush1.bf16.msra.mxu0 %v3686
        %3765 = vmatprep.subr.bf16.mxu0 0
        %3766 = vmatpush1.bf16.msra.mxu0 %v3687
        %3767 = vmatprep.subr.bf16.mxu0 0
        %3768 = vmatpush1.bf16.msra.mxu0 %v3688
        %3769 = vmatprep.subr.bf16.mxu0 0
        %3770 = vmatpush1.bf16.msra.mxu0 %v3689
        %3771 = vmatprep.subr.bf16.mxu0 0
        %3772 = vmatpush1.bf16.msra.mxu0 %v3690
        %3773 = vmatprep.mubr.bf16.mxu0 %v3488
        %3774 = vmatmul.mubr.bf16.gmra.mrb[0].mxu0 %v3487
        %v3775 = vpop.f32.mrb[0].mxu0
        %v3776 = vadd.f32 0.0, %v3775
        %v3777 = vpop.f32.mrb[0].mxu0
        %v3778 = vpop.f32.mrb[0].mxu0
        %v3779 = vadd.f32 0.0, %v3778
        %v3780 = vpop.f32.mrb[0].mxu0
        %3781 = vmatprep.mubr.bf16.mxu0 %v3492
        %3782 = vmatmul.mubr.bf16.gmra.mrb[0].mxu0 %v3491
        %v3783 = vpop.f32.mrb[0].mxu0
        %v3784 = vadd.f32 0.0, %v3783
        %v3785 = vpop.f32.mrb[0].mxu0
        %v3786 = vpop.f32.mrb[0].mxu0
        %v3787 = vadd.f32 0.0, %v3786
        %v3788 = vpop.f32.mrb[0].mxu0
        %3789 = vdwg.mxu0
        %3790 = vmatprep.subr.bf16.mxu0 0
        %3791 = vmatpush1.bf16.msra.mxu0 %v3691
        %3792 = vmatprep.subr.bf16.mxu0 0
        %3793 = vmatpush1.bf16.msra.mxu0 %v3692
        %3794 = vmatprep.subr.bf16.mxu0 0
        %3795 = vmatpush1.bf16.msra.mxu0 %v3693
        %3796 = vmatprep.subr.bf16.mxu0 0
        %3797 = vmatpush1.bf16.msra.mxu0 %v3694
        %3798 = vmatprep.subr.bf16.mxu0 0
        %3799 = vmatpush1.bf16.msra.mxu0 %v3695
        %3800 = vmatprep.subr.bf16.mxu0 0
        %3801 = vmatpush1.bf16.msra.mxu0 %v3696
        %3802 = vmatprep.subr.bf16.mxu0 0
        %3803 = vmatpush1.bf16.msra.mxu0 %v3697
        %3804 = vmatprep.subr.bf16.mxu0 0
        %3805 = vmatpush1.bf16.msra.mxu0 %v3698
        %3806 = vmatprep.subr.bf16.mxu0 0
        %3807 = vmatpush1.bf16.msra.mxu0 %v3699
        %3808 = vmatprep.subr.bf16.mxu0 0
        %3809 = vmatpush1.bf16.msra.mxu0 %v3700
        %3810 = vmatprep.subr.bf16.mxu0 0
        %3811 = vmatpush1.bf16.msra.mxu0 %v3701
        %3812 = vmatprep.subr.bf16.mxu0 0
        %3813 = vmatpush1.bf16.msra.mxu0 %v3702
        %3814 = vmatprep.subr.bf16.mxu0 0
        %3815 = vmatpush1.bf16.msra.mxu0 %v3703
        %3816 = vmatprep.subr.bf16.mxu0 0
        %3817 = vmatpush1.bf16.msra.mxu0 %v3704
        %3818 = vmatprep.subr.bf16.mxu0 0
        %3819 = vmatpush1.bf16.msra.mxu0 0
        %3820 = vmatprep.subr.bf16.mxu0 0
        %3821 = vmatpush1.bf16.msra.mxu0 0
        %3822 = vmatprep.mubr.bf16.mxu0 %v3736
        %3823 = vmatmul.mubr.bf16.gmra.mrb[0].mxu0 %v3489
        %v3824 = vpop.f32.mrb[0].mxu0
        %v3825 = vadd.f32 %v3776, %v3824
        %v3826 = vpop.f32.mrb[0].mxu0
        %v3827 = vpop.f32.mrb[0].mxu0
        %v3828 = vadd.f32 %v3779, %v3827
        %v3829 = vpop.f32.mrb[0].mxu0
        %3830 = vmatprep.mubr.bf16.mxu0 %v3739
        %3831 = vmatmul.mubr.bf16.gmra.mrb[0].mxu0 %v3493
        %v3832 = vpop.f32.mrb[0].mxu0
        %v3833 = vadd.f32 %v3784, %v3832
        %v3834 = vpop.f32.mrb[0].mxu0
        %v3835 = vpop.f32.mrb[0].mxu0
        %v3836 = vadd.f32 %v3787, %v3835
        %v3837 = vpop.f32.mrb[0].mxu0
        %3838 = vdwg.mxu0
        %v3839 = vld [vmem:[%s2] sm:$0xf]
        %v3840 = vld [vmem:[%s2 + $0x4] sm:$0xf]
        %v3841 = vld [vmem:[%s2 + $0x8] sm:$0xf]
        %v3842 = vld [vmem:[%s2 + $0xc] sm:$0xf]
        %v3843 = vld [vmem:[%s2 + $0x10] sm:$0xf]
        %v3844 = vld [vmem:[%s2 + $0x14] sm:$0xf]
        %v3845 = vld [vmem:[%s2 + $0x18] sm:$0xf]
        %v3846 = vld [vmem:[%s2 + $0x1c] sm:$0xf]
        %v3847 = vld [vmem:[%s2 + $0x20] sm:$0xf]
        %v3848 = vld [vmem:[%s2 + $0x24] sm:$0xf]
        %v3849 = vld [vmem:[%s2 + $0x28] sm:$0xf]
        %v3850 = vld [vmem:[%s2 + $0x2c] sm:$0xf]
        %v3851 = vld [vmem:[%s2 + $0x30] sm:$0xf]
        %v3852 = vld [vmem:[%s2 + $0x34] sm:$0xf]
        %v3853 = vld [vmem:[%s2 + $0x38] sm:$0xf]
        %v3854 = vld [vmem:[%s2 + $0x3c] sm:$0xf]
        %v3855 = vld [vmem:[%s2 + $0x40] sm:$0xf]
        %v3856 = vld [vmem:[%s2 + $0x44] sm:$0xf]
        %v3857 = vld [vmem:[%s2 + $0x48] sm:$0xf]
        %v3858 = vld [vmem:[%s2 + $0x4c] sm:$0xf]
        %v3859 = vld [vmem:[%s2 + $0x50] sm:$0xf]
        %v3860 = vld [vmem:[%s2 + $0x54] sm:$0xf]
        %v3861 = vld [vmem:[%s2 + $0x58] sm:$0xf]
        %v3862 = vld [vmem:[%s2 + $0x5c] sm:$0xf]
        %v3863 = vld [vmem:[%s2 + $0x60] sm:$0xf]
        %v3864 = vld [vmem:[%s2 + $0x64] sm:$0xf]
        %v3865 = vld [vmem:[%s2 + $0x68] sm:$0xf]
        %v3866 = vld [vmem:[%s2 + $0x6c] sm:$0xf]
        %v3867 = vld [vmem:[%s2 + $0x70] sm:$0xf]
        %v3868 = vld [vmem:[%s2 + $0x74] sm:$0xf]
        %v3869 = vld [vmem:[%s2 + $0x78] sm:$0xf]
        %v3870 = vld [vmem:[%s2 + $0x7c] sm:$0xf]
        %v3871 = vld [vmem:[%s2 + $0x80] sm:$0xf]
        %v3872 = vld [vmem:[%s2 + $0x84] sm:$0xf]
        %v3873 = vld [vmem:[%s2 + $0x88] sm:$0xf]
        %v3874 = vld [vmem:[%s2 + $0x8c] sm:$0xf]
        %v3875 = vld [vmem:[%s2 + $0x90] sm:$0xf]
        %v3876 = vld [vmem:[%s2 + $0x94] sm:$0xf]
        %v3877 = vld [vmem:[%s2 + $0x98] sm:$0xf]
        %v3878 = vld [vmem:[%s2 + $0x9c] sm:$0xf]
        %v3879 = vld [vmem:[%s2 + $0xa0] sm:$0xf]
        %v3880 = vld [vmem:[%s2 + $0xa4] sm:$0xf]
        %v3881 = vld [vmem:[%s2 + $0xa8] sm:$0xf]
        %v3882 = vld [vmem:[%s2 + $0xac] sm:$0xf]
        %v3883 = vld [vmem:[%s2 + $0xb0] sm:$0xf]
        %v3884 = vld [vmem:[%s2 + $0xb4] sm:$0xf]
        %v3885 = vld [vmem:[%s2 + $0xb8] sm:$0xf]
        %v3886 = vld [vmem:[%s2 + $0xbc] sm:$0xf]
        %v3887 = vld [vmem:[%s2 + $0xc0] sm:$0xf]
        %v3888 = vld [vmem:[%s2 + $0xc4] sm:$0xf]
        %v3889 = vld [vmem:[%s2 + $0xc8] sm:$0xf]
        %v3890 = vld [vmem:[%s2 + $0xcc] sm:$0xf]
        %v3891 = vld [vmem:[%s2 + $0xd0] sm:$0xf]
        %v3892 = vld [vmem:[%s2 + $0xd4] sm:$0xf]
        %v3893 = vld [vmem:[%s2 + $0xd8] sm:$0xf]
        %v3894 = vld [vmem:[%s2 + $0xdc] sm:$0xf]
        %v3895 = vld [vmem:[%s2 + $0xe0] sm:$0xf]
        %v3896 = vld [vmem:[%s2 + $0xe4] sm:$0xf]
        %v3897 = vld [vmem:[%s2 + $0xe8] sm:$0xf]
        %v3898 = vld [vmem:[%s2 + $0xec] sm:$0xf]
        %v3959 = vunpack.c.l.b16 %v3839
        %v3960 = vunpack.c.l.b16 %v3840
        %v3961 = vunpack.c.l.b16 %v3841
        %v3962 = vunpack.c.l.b16 %v3842
        %v3963 = vunpack.c.l.b16 %v3843
        %v3964 = vunpack.c.l.b16 %v3844
        %v3965 = vunpack.c.l.b16 %v3845
        %v3966 = vunpack.c.l.b16 %v3846
        %v3967 = vunpack.c.l.b16 %v3847
        %v3968 = vunpack.c.l.b16 %v3848
        %v3969 = vunpack.c.l.b16 %v3849
        %v3970 = vunpack.c.l.b16 %v3850
        %v3971 = vunpack.c.l.b16 %v3851
        %v3972 = vunpack.c.l.b16 %v3852
        %v3973 = vunpack.c.l.b16 %v3853
        %v3974 = vunpack.c.l.b16 %v3854
        %v3975 = vunpack.c.l.b16 %v3855
        %v3976 = vunpack.c.l.b16 %v3856
        %v3977 = vunpack.c.l.b16 %v3857
        %v3978 = vunpack.c.l.b16 %v3858
        %v3979 = vunpack.c.l.b16 %v3859
        %v3980 = vunpack.c.l.b16 %v3860
        %v3981 = vunpack.c.l.b16 %v3861
        %v3982 = vunpack.c.l.b16 %v3862
        %v3983 = vunpack.c.l.b16 %v3863
        %v3984 = vunpack.c.l.b16 %v3864
        %v3985 = vunpack.c.l.b16 %v3865
        %v3986 = vunpack.c.l.b16 %v3866
        %v3987 = vunpack.c.l.b16 %v3867
        %v3988 = vunpack.c.l.b16 %v3868
        %v3989 = vunpack.c.l.b16 %v3869
        %v3990 = vunpack.c.l.b16 %v3870
        %v3991 = vunpack.c.l.b16 %v3871
        %v3992 = vunpack.c.l.b16 %v3872
        %v3993 = vunpack.c.l.b16 %v3873
        %v3994 = vunpack.c.l.b16 %v3874
        %v3995 = vunpack.c.l.b16 %v3875
        %v3996 = vunpack.c.l.b16 %v3876
        %v3997 = vunpack.c.l.b16 %v3877
        %v3998 = vunpack.c.l.b16 %v3878
        %v3999 = vunpack.c.l.b16 %v3879
        %v4000 = vunpack.c.l.b16 %v3880
        %v4001 = vunpack.c.l.b16 %v3881
        %v4002 = vunpack.c.l.b16 %v3882
        %v4003 = vunpack.c.l.b16 %v3883
        %v4004 = vunpack.c.l.b16 %v3884
        %v4005 = vunpack.c.l.b16 %v3885
        %v4006 = vunpack.c.l.b16 %v3886
        %v4007 = vunpack.c.l.b16 %v3887
        %v4008 = vunpack.c.l.b16 %v3888
        %v4009 = vunpack.c.l.b16 %v3889
        %v4010 = vunpack.c.l.b16 %v3890
        %v4011 = vunpack.c.l.b16 %v3891
        %v4012 = vunpack.c.l.b16 %v3892
        %v4013 = vunpack.c.l.b16 %v3893
        %v4014 = vunpack.c.l.b16 %v3894
        %v4015 = vunpack.c.l.b16 %v3895
        %v4016 = vunpack.c.l.b16 %v3896
        %v4017 = vunpack.c.l.b16 %v3897
        %v4018 = vunpack.c.l.b16 %v3898
        %v4019 = vpack.c.b16 %v3960, %v3959
        %v4020 = vpack.c.b16 %v3962, %v3961
        %v4021 = vpack.c.b16 %v3964, %v3963
        %v4022 = vpack.c.b16 %v3966, %v3965
        %v4023 = vpack.c.b16 %v3968, %v3967
        %v4024 = vpack.c.b16 %v3970, %v3969
        %v4025 = vpack.c.b16 %v3972, %v3971
        %v4026 = vpack.c.b16 %v3974, %v3973
        %v4027 = vpack.c.b16 %v3976, %v3975
        %v4028 = vpack.c.b16 %v3978, %v3977
        %v4029 = vpack.c.b16 %v3980, %v3979
        %v4030 = vpack.c.b16 %v3982, %v3981
        %v4031 = vpack.c.b16 %v3984, %v3983
        %v4032 = vpack.c.b16 %v3986, %v3985
        %v4033 = vpack.c.b16 %v3988, %v3987
        %v4034 = vpack.c.b16 %v3990, %v3989
        %v4035 = vpack.c.b16 %v3992, %v3991
        %v4036 = vpack.c.b16 %v3994, %v3993
        %v4037 = vpack.c.b16 %v3996, %v3995
        %v4038 = vpack.c.b16 %v3998, %v3997
        %v4039 = vpack.c.b16 %v4000, %v3999
        %v4040 = vpack.c.b16 %v4002, %v4001
        %v4041 = vpack.c.b16 %v4004, %v4003
        %v4042 = vpack.c.b16 %v4006, %v4005
        %v4043 = vpack.c.b16 %v4008, %v4007
        %v4044 = vpack.c.b16 %v4010, %v4009
        %v4045 = vpack.c.b16 %v4012, %v4011
        %v4046 = vpack.c.b16 %v4014, %v4013
        %v4047 = vpack.c.b16 %v4016, %v4015
        %v4048 = vpack.c.b16 %v4018, %v4017
        %4079 = vmatprep.subr.bf16.mxu0 0
        %4080 = vmatpush1.bf16.msra.mxu0 %v4019
        %4081 = vmatprep.subr.bf16.mxu0 0
        %4082 = vmatpush1.bf16.msra.mxu0 %v4020
        %4083 = vmatprep.subr.bf16.mxu0 0
        %4084 = vmatpush1.bf16.msra.mxu0 %v4021
        %4085 = vmatprep.subr.bf16.mxu0 0
        %4086 = vmatpush1.bf16.msra.mxu0 %v4022
        %4087 = vmatprep.subr.bf16.mxu0 0
        %4088 = vmatpush1.bf16.msra.mxu0 %v4023
        %4089 = vmatprep.subr.bf16.mxu0 0
        %4090 = vmatpush1.bf16.msra.mxu0 %v4024
        %4091 = vmatprep.subr.bf16.mxu0 0
        %4092 = vmatpush1.bf16.msra.mxu0 %v4025
        %4093 = vmatprep.subr.bf16.mxu0 0
        %4094 = vmatpush1.bf16.msra.mxu0 %v4026
        %4095 = vmatprep.subr.bf16.mxu0 0
        %4096 = vmatpush1.bf16.msra.mxu0 %v4027
        %4097 = vmatprep.subr.bf16.mxu0 0
        %4098 = vmatpush1.bf16.msra.mxu0 %v4028
        %4099 = vmatprep.subr.bf16.mxu0 0
        %4100 = vmatpush1.bf16.msra.mxu0 %v4029
        %4101 = vmatprep.subr.bf16.mxu0 0
        %4102 = vmatpush1.bf16.msra.mxu0 %v4030
        %4103 = vmatprep.subr.bf16.mxu0 0
        %4104 = vmatpush1.bf16.msra.mxu0 %v4031
        %4105 = vmatprep.subr.bf16.mxu0 0
        %4106 = vmatpush1.bf16.msra.mxu0 %v4032
        %4107 = vmatprep.subr.bf16.mxu0 0
        %4108 = vmatpush1.bf16.msra.mxu0 %v4033
        %4109 = vmatprep.subr.bf16.mxu0 0
        %4110 = vmatpush1.bf16.msra.mxu0 %v4034
        %4111 = vmatprep.mubr.bf16.mxu0 %v3488
        %4112 = vmatmul.mubr.bf16.gmra.mrb[0].mxu0 %v3487
        %v4113 = vpop.f32.mrb[0].mxu0
        %v4114 = vadd.f32 0.0, %v4113
        %v4115 = vpop.f32.mrb[0].mxu0
        %v4116 = vpop.f32.mrb[0].mxu0
        %v4117 = vadd.f32 0.0, %v4116
        %v4118 = vpop.f32.mrb[0].mxu0
        %4119 = vmatprep.mubr.bf16.mxu0 %v3492
        %4120 = vmatmul.mubr.bf16.gmra.mrb[0].mxu0 %v3491
        %v4121 = vpop.f32.mrb[0].mxu0
        %v4122 = vadd.f32 0.0, %v4121
        %v4123 = vpop.f32.mrb[0].mxu0
        %v4124 = vpop.f32.mrb[0].mxu0
        %v4125 = vadd.f32 0.0, %v4124
        %v4126 = vpop.f32.mrb[0].mxu0
        %4127 = vdwg.mxu0
        %4128 = vmatprep.subr.bf16.mxu0 0
        %4129 = vmatpush1.bf16.msra.mxu0 %v4035
        %4130 = vmatprep.subr.bf16.mxu0 0
        %4131 = vmatpush1.bf16.msra.mxu0 %v4036
        %4132 = vmatprep.subr.bf16.mxu0 0
        %4133 = vmatpush1.bf16.msra.mxu0 %v4037
        %4134 = vmatprep.subr.bf16.mxu0 0
        %4135 = vmatpush1.bf16.msra.mxu0 %v4038
        %4136 = vmatprep.subr.bf16.mxu0 0
        %4137 = vmatpush1.bf16.msra.mxu0 %v4039
        %4138 = vmatprep.subr.bf16.mxu0 0
        %4139 = vmatpush1.bf16.msra.mxu0 %v4040
        %4140 = vmatprep.subr.bf16.mxu0 0
        %4141 = vmatpush1.bf16.msra.mxu0 %v4041
        %4142 = vmatprep.subr.bf16.mxu0 0
        %4143 = vmatpush1.bf16.msra.mxu0 %v4042
        %4144 = vmatprep.subr.bf16.mxu0 0
        %4145 = vmatpush1.bf16.msra.mxu0 %v4043
        %4146 = vmatprep.subr.bf16.mxu0 0
        %4147 = vmatpush1.bf16.msra.mxu0 %v4044
        %4148 = vmatprep.subr.bf16.mxu0 0
        %4149 = vmatpush1.bf16.msra.mxu0 %v4045
        %4150 = vmatprep.subr.bf16.mxu0 0
        %4151 = vmatpush1.bf16.msra.mxu0 %v4046
        %4152 = vmatprep.subr.bf16.mxu0 0
        %4153 = vmatpush1.bf16.msra.mxu0 %v4047
        %4154 = vmatprep.subr.bf16.mxu0 0
        %4155 = vmatpush1.bf16.msra.mxu0 %v4048
        %4156 = vmatprep.subr.bf16.mxu0 0
        %4157 = vmatpush1.bf16.msra.mxu0 0
        %4158 = vmatprep.subr.bf16.mxu0 0
        %4159 = vmatpush1.bf16.msra.mxu0 0
        %4160 = vmatprep.mubr.bf16.mxu0 %v3736
        %4161 = vmatmul.mubr.bf16.gmra.mrb[0].mxu0 %v3489
        %v4162 = vpop.f32.mrb[0].mxu0
        %v4163 = vadd.f32 %v4114, %v4162
        %v4164 = vpop.f32.mrb[0].mxu0
        %v4165 = vpop.f32.mrb[0].mxu0
        %v4166 = vadd.f32 %v4117, %v4165
        %v4167 = vpop.f32.mrb[0].mxu0
        %4168 = vmatprep.mubr.bf16.mxu0 %v3739
        %4169 = vmatmul.mubr.bf16.gmra.mrb[0].mxu0 %v3493
        %v4170 = vpop.f32.mrb[0].mxu0
        %v4171 = vadd.f32 %v4122, %v4170
        %v4172 = vpop.f32.mrb[0].mxu0
        %v4173 = vpop.f32.mrb[0].mxu0
        %v4174 = vadd.f32 %v4125, %v4173
        %v4175 = vpop.f32.mrb[0].mxu0
        %4176 = vdwg.mxu0
        %v4177 = vmax.f32 %v3825, %v4163
        %v4178 = vmax.f32 %v3828, %v4166
        %v4179 = vmax.f32 %v3833, %v4171
        %v4180 = vmax.f32 %v3836, %v4174
        %v4181 = vld [vmem:[%s3] sm:$0x1]
        %v4183 = vlaneseq
        %v4184 = vshrl.u32 %v4183, 7
        %v4185 = vsub.s32 0, %v4184
        %v4186 = vrot.slane %v4181, %v4185
        %v4188 = vadd.f32 %v4177, %v4186
        %v4189 = vadd.f32 %v4178, %v4186
        %v4190 = vadd.f32 %v4179, %v4186
        %v4191 = vadd.f32 %v4180, %v4186
        %v4192 = vmax.f32 %v4188, 0.0
        %v4193 = vmax.f32 %v4189, 0.0
        %v4194 = vmax.f32 %v4190, 0.0
        %v4195 = vmax.f32 %v4191, 0.0
        %4196 = vst.msk [vmem:[#allocation2] sm:$0xff] %vm1237, %v4192
        %4197 = vst.msk [vmem:[#allocation2 + $0x8] sm:$0xff] %vm1237, %v4193
        %4198 = vst.msk [vmem:[#allocation2 + $0x10] sm:$0xff] %vm1237, %v4194
        %4199 = vst.msk [vmem:[#allocation2 + $0x18] sm:$0xf] %vm1241, %v4195
        %v4200 = vld [vmem:[#allocation2] ss:$2 sm:$0xff]
        %v4201 = vld [vmem:[%s1244] ss:$2 sm:$0x3f]
        %v4202 = vld [vmem:[%s1246] ss:$2 sm:$0xff]
        %v4203 = vld [vmem:[%s1248] ss:$2 sm:$0x3f]
        %v4204 = vmax.f32 %v4200, %v4202
        %v4205 = vmax.f32 %v4201, %v4203
        %4206 = vst.msk [vmem:[#allocation3] sm:$0xff] %vm1237, %v4204
        %4207 = vst.msk [vmem:[#allocation3 + $0x8] sm:$0x3f] %vm1253, %v4205
        %v4208 = vld [vmem:[#allocation3] sm:$0xff]
        %v4209 = vld [vmem:[#allocation3 + $0x8] sm:$0x3]
        %v4210 = vld [vmem:[#allocation3 + $0x1] sm:$0xff]
        %v4211 = vld [vmem:[#allocation3 + $0x9] sm:$0x3]
        %v4212 = vld [vmem:[#allocation3 + $0x2] sm:$0xff]
        %v4213 = vld [vmem:[#allocation3 + $0xa] sm:$0x3]
        %v4214 = vld [vmem:[#allocation3 + $0x3] sm:$0xff]
        %v4215 = vld [vmem:[#allocation3 + $0xb] sm:$0x3]
        %v4216 = vld [vmem:[#allocation3 + $0x4] sm:$0xff]
        %v4217 = vld [vmem:[#allocation3 + $0xc] sm:$0x3]
        %4220 = vrot.lane.b32.xlu0 %v4210, 84
        %v4221 = vpop.permute.xlu0 %4220
        %4222 = vrot.lane.b32.xlu0 %v4211, 84
        %v4223 = vpop.permute.xlu0 %4222
        %4228 = vrot.lane.b32.xlu0 %v4212, 40
        %v4229 = vpop.permute.xlu0 %4228
        %4230 = vrot.lane.b32.xlu0 %v4213, 40
        %v4231 = vpop.permute.xlu0 %4230
        %4236 = vrot.lane.b32.xlu0 %v4214, 124
        %v4237 = vpop.permute.xlu0 %4236
        %4238 = vrot.lane.b32.xlu0 %v4215, 124
        %v4239 = vpop.permute.xlu0 %4238
        %4244 = vrot.lane.b32.xlu0 %v4216, 80
        %v4245 = vpop.permute.xlu0 %4244
        %4246 = vrot.lane.b32.xlu0 %v4217, 80
        %v4247 = vpop.permute.xlu0 %4246
        %v4250 = vsel %vm1237, %v4208, %v4221
        %v4251 = vsel %vm1237, %v4209, %v4223
        %v4252 = vsel %vm1299, %v4221, %v4229
        %v4253 = vsel %vm1299, %v4223, %v4231
        %v4254 = vsel %vm1302, %v4252, %v4237
        %v4255 = vsel %vm1302, %v4253, %v4239
        %v4256 = vsel %vm1305, %v4237, %v4245
        %v4257 = vsel %vm1305, %v4239, %v4247
        %v4258 = vpack.c.bf16 %v4251, %v4250
        %v4259 = vpack.c.bf16 %v4255, %v4254
        %v4260 = vpack.c.bf16 %v4257, %v4256
        %v4261 = vpack.c.bf16 %v4247, %v4245
        %v4262 = vld [vmem:[%s4] sm:$0xf]
        %v4263 = vld [vmem:[%s4 + $0x4] sm:$0xf]
        %v4264 = vld [vmem:[%s4 + $0x8] sm:$0xf]
        %v4265 = vld [vmem:[%s4 + $0xc] sm:$0xf]
        %v4266 = vld [vmem:[%s4 + $0x10] sm:$0xf]
        %v4267 = vld [vmem:[%s4 + $0x14] sm:$0xf]
        %v4268 = vld [vmem:[%s4 + $0x18] sm:$0xf]
        %v4269 = vld [vmem:[%s4 + $0x1c] sm:$0xf]
        %v4270 = vld [vmem:[%s4 + $0x20] sm:$0xf]
        %v4271 = vld [vmem:[%s4 + $0x24] sm:$0xf]
        %v4272 = vld [vmem:[%s4 + $0x28] sm:$0xf]
        %v4273 = vld [vmem:[%s4 + $0x2c] sm:$0xf]
        %v4274 = vld [vmem:[%s4 + $0x30] sm:$0xf]
        %v4275 = vld [vmem:[%s4 + $0x34] sm:$0xf]
        %v4276 = vld [vmem:[%s4 + $0x38] sm:$0xf]
        %v4277 = vld [vmem:[%s4 + $0x3c] sm:$0xf]
        %v4278 = vld [vmem:[%s4 + $0x40] sm:$0xf]
        %v4279 = vld [vmem:[%s4 + $0x44] sm:$0xf]
        %v4280 = vld [vmem:[%s4 + $0x48] sm:$0xf]
        %v4281 = vld [vmem:[%s4 + $0x4c] sm:$0xf]
        %v4282 = vld [vmem:[%s4 + $0x50] sm:$0xf]
        %v4283 = vld [vmem:[%s4 + $0x54] sm:$0xf]
        %v4284 = vld [vmem:[%s4 + $0x58] sm:$0xf]
        %v4285 = vld [vmem:[%s4 + $0x5c] sm:$0xf]
        %v4286 = vld [vmem:[%s4 + $0x60] sm:$0xf]
        %v4287 = vld [vmem:[%s4 + $0x64] sm:$0xf]
        %v4288 = vld [vmem:[%s4 + $0x68] sm:$0xf]
        %v4289 = vld [vmem:[%s4 + $0x6c] sm:$0xf]
        %v4290 = vld [vmem:[%s4 + $0x70] sm:$0xf]
        %v4291 = vld [vmem:[%s4 + $0x74] sm:$0xf]
        %v4292 = vld [vmem:[%s4 + $0x78] sm:$0xf]
        %v4293 = vld [vmem:[%s4 + $0x7c] sm:$0xf]
        %v4294 = vld [vmem:[%s4 + $0x80] sm:$0xf]
        %v4295 = vld [vmem:[%s4 + $0x84] sm:$0xf]
        %v4296 = vld [vmem:[%s4 + $0x88] sm:$0xf]
        %v4297 = vld [vmem:[%s4 + $0x8c] sm:$0xf]
        %v4298 = vld [vmem:[%s4 + $0x90] sm:$0xf]
        %v4299 = vld [vmem:[%s4 + $0x94] sm:$0xf]
        %v4300 = vld [vmem:[%s4 + $0x98] sm:$0xf]
        %v4301 = vld [vmem:[%s4 + $0x9c] sm:$0xf]
        %v4302 = vld [vmem:[%s4 + $0xa0] sm:$0xf]
        %v4303 = vld [vmem:[%s4 + $0xa4] sm:$0xf]
        %v4304 = vld [vmem:[%s4 + $0xa8] sm:$0xf]
        %v4305 = vld [vmem:[%s4 + $0xac] sm:$0xf]
        %v4306 = vld [vmem:[%s4 + $0xb0] sm:$0xf]
        %v4307 = vld [vmem:[%s4 + $0xb4] sm:$0xf]
        %v4308 = vld [vmem:[%s4 + $0xb8] sm:$0xf]
        %v4309 = vld [vmem:[%s4 + $0xbc] sm:$0xf]
        %v4310 = vld [vmem:[%s4 + $0xc0] sm:$0xf]
        %v4311 = vld [vmem:[%s4 + $0xc4] sm:$0xf]
        %v4312 = vld [vmem:[%s4 + $0xc8] sm:$0xf]
        %v4313 = vld [vmem:[%s4 + $0xcc] sm:$0xf]
        %v4314 = vld [vmem:[%s4 + $0xd0] sm:$0x3]
        %v4368 = vunpack.c.l.b16 %v4262
        %v4369 = vunpack.c.l.b16 %v4263
        %v4370 = vunpack.c.l.b16 %v4264
        %v4371 = vunpack.c.l.b16 %v4265
        %v4372 = vunpack.c.l.b16 %v4266
        %v4373 = vunpack.c.l.b16 %v4267
        %v4374 = vunpack.c.l.b16 %v4268
        %v4375 = vunpack.c.l.b16 %v4269
        %v4376 = vunpack.c.l.b16 %v4270
        %v4377 = vunpack.c.l.b16 %v4271
        %v4378 = vunpack.c.l.b16 %v4272
        %v4379 = vunpack.c.l.b16 %v4273
        %v4380 = vunpack.c.l.b16 %v4274
        %v4381 = vunpack.c.l.b16 %v4275
        %v4382 = vunpack.c.l.b16 %v4276
        %v4383 = vunpack.c.l.b16 %v4277
        %v4384 = vunpack.c.l.b16 %v4278
        %v4385 = vunpack.c.l.b16 %v4279
        %v4386 = vunpack.c.l.b16 %v4280
        %v4387 = vunpack.c.l.b16 %v4281
        %v4388 = vunpack.c.l.b16 %v4282
        %v4389 = vunpack.c.l.b16 %v4283
        %v4390 = vunpack.c.l.b16 %v4284
        %v4391 = vunpack.c.l.b16 %v4285
        %v4392 = vunpack.c.l.b16 %v4286
        %v4393 = vunpack.c.l.b16 %v4287
        %v4394 = vunpack.c.l.b16 %v4288
        %v4395 = vunpack.c.l.b16 %v4289
        %v4396 = vunpack.c.l.b16 %v4290
        %v4397 = vunpack.c.l.b16 %v4291
        %v4398 = vunpack.c.l.b16 %v4292
        %v4399 = vunpack.c.l.b16 %v4293
        %v4400 = vunpack.c.l.b16 %v4294
        %v4401 = vunpack.c.l.b16 %v4295
        %v4402 = vunpack.c.l.b16 %v4296
        %v4403 = vunpack.c.l.b16 %v4297
        %v4404 = vunpack.c.l.b16 %v4298
        %v4405 = vunpack.c.l.b16 %v4299
        %v4406 = vunpack.c.l.b16 %v4300
        %v4407 = vunpack.c.l.b16 %v4301
        %v4408 = vunpack.c.l.b16 %v4302
        %v4409 = vunpack.c.l.b16 %v4303
        %v4410 = vunpack.c.l.b16 %v4304
        %v4411 = vunpack.c.l.b16 %v4305
        %v4412 = vunpack.c.l.b16 %v4306
        %v4413 = vunpack.c.l.b16 %v4307
        %v4414 = vunpack.c.l.b16 %v4308
        %v4415 = vunpack.c.l.b16 %v4309
        %v4416 = vunpack.c.l.b16 %v4310
        %v4417 = vunpack.c.l.b16 %v4311
        %v4418 = vunpack.c.l.b16 %v4312
        %v4419 = vunpack.c.l.b16 %v4313
        %v4420 = vunpack.c.l.b16 %v4314
        %v4421 = vpack.c.b16 %v4369, %v4368
        %v4422 = vpack.c.b16 %v4371, %v4370
        %v4423 = vpack.c.b16 %v4373, %v4372
        %v4424 = vpack.c.b16 %v4375, %v4374
        %v4425 = vpack.c.b16 %v4377, %v4376
        %v4426 = vpack.c.b16 %v4379, %v4378
        %v4427 = vpack.c.b16 %v4381, %v4380
        %v4428 = vpack.c.b16 %v4383, %v4382
        %v4429 = vpack.c.b16 %v4385, %v4384
        %v4430 = vpack.c.b16 %v4387, %v4386
        %v4431 = vpack.c.b16 %v4389, %v4388
        %v4432 = vpack.c.b16 %v4391, %v4390
        %v4433 = vpack.c.b16 %v4393, %v4392
        %v4434 = vpack.c.b16 %v4395, %v4394
        %v4435 = vpack.c.b16 %v4397, %v4396
        %v4436 = vpack.c.b16 %v4399, %v4398
        %v4437 = vpack.c.b16 %v4401, %v4400
        %v4438 = vpack.c.b16 %v4403, %v4402
        %v4439 = vpack.c.b16 %v4405, %v4404
        %v4440 = vpack.c.b16 %v4407, %v4406
        %v4441 = vpack.c.b16 %v4409, %v4408
        %v4442 = vpack.c.b16 %v4411, %v4410
        %v4443 = vpack.c.b16 %v4413, %v4412
        %v4444 = vpack.c.b16 %v4415, %v4414
        %v4445 = vpack.c.b16 %v4417, %v4416
        %v4446 = vpack.c.b16 %v4419, %v4418
        %v4447 = vpack.c.b16 %v4420, %v4420
        %v4475 = vsel %vm1524, %v4261, 0
        %v4478 = vsel %vm1528, %v4447, 0
        %4480 = vmatprep.subr.bf16.mxu0 0
        %4481 = vmatpush1.bf16.msra.mxu0 %v4421
        %4482 = vmatprep.subr.bf16.mxu0 0
        %4483 = vmatpush1.bf16.msra.mxu0 %v4422
        %4484 = vmatprep.subr.bf16.mxu0 0
        %4485 = vmatpush1.bf16.msra.mxu0 %v4423
        %4486 = vmatprep.subr.bf16.mxu0 0
        %4487 = vmatpush1.bf16.msra.mxu0 %v4424
        %4488 = vmatprep.subr.bf16.mxu0 0
        %4489 = vmatpush1.bf16.msra.mxu0 %v4425
        %4490 = vmatprep.subr.bf16.mxu0 0
        %4491 = vmatpush1.bf16.msra.mxu0 %v4426
        %4492 = vmatprep.subr.bf16.mxu0 0
        %4493 = vmatpush1.bf16.msra.mxu0 %v4427
        %4494 = vmatprep.subr.bf16.mxu0 0
        %4495 = vmatpush1.bf16.msra.mxu0 %v4428
        %4496 = vmatprep.subr.bf16.mxu0 0
        %4497 = vmatpush1.bf16.msra.mxu0 %v4429
        %4498 = vmatprep.subr.bf16.mxu0 0
        %4499 = vmatpush1.bf16.msra.mxu0 %v4430
        %4500 = vmatprep.subr.bf16.mxu0 0
        %4501 = vmatpush1.bf16.msra.mxu0 %v4431
        %4502 = vmatprep.subr.bf16.mxu0 0
        %4503 = vmatpush1.bf16.msra.mxu0 %v4432
        %4504 = vmatprep.subr.bf16.mxu0 0
        %4505 = vmatpush1.bf16.msra.mxu0 %v4433
        %4506 = vmatprep.subr.bf16.mxu0 0
        %4507 = vmatpush1.bf16.msra.mxu0 %v4434
        %4508 = vmatprep.subr.bf16.mxu0 0
        %4509 = vmatpush1.bf16.msra.mxu0 %v4435
        %4510 = vmatprep.subr.bf16.mxu0 0
        %4511 = vmatpush1.bf16.msra.mxu0 %v4436
        %4512 = vmatprep.mubr.bf16.mxu0 %v4259
        %4513 = vmatmul.mubr.bf16.gmra.mrb[0].mxu0 %v4258
        %v4514 = vpop.f32.mrb[0].mxu0
        %v4515 = vadd.f32 0.0, %v4514
        %v4516 = vpop.f32.mrb[0].mxu0
        %v4517 = vpop.f32.mrb[0].mxu0
        %v4518 = vadd.f32 0.0, %v4517
        %v4519 = vpop.f32.mrb[0].mxu0
        %4520 = vdwg.mxu0
        %4521 = vmatprep.subr.bf16.mxu0 0
        %4522 = vmatpush1.bf16.msra.mxu0 %v4437
        %4523 = vmatprep.subr.bf16.mxu0 0
        %4524 = vmatpush1.bf16.msra.mxu0 %v4438
        %4525 = vmatprep.subr.bf16.mxu0 0
        %4526 = vmatpush1.bf16.msra.mxu0 %v4439
        %4527 = vmatprep.subr.bf16.mxu0 0
        %4528 = vmatpush1.bf16.msra.mxu0 %v4440
        %4529 = vmatprep.subr.bf16.mxu0 0
        %4530 = vmatpush1.bf16.msra.mxu0 %v4441
        %4531 = vmatprep.subr.bf16.mxu0 0
        %4532 = vmatpush1.bf16.msra.mxu0 %v4442
        %4533 = vmatprep.subr.bf16.mxu0 0
        %4534 = vmatpush1.bf16.msra.mxu0 %v4443
        %4535 = vmatprep.subr.bf16.mxu0 0
        %4536 = vmatpush1.bf16.msra.mxu0 %v4444
        %4537 = vmatprep.subr.bf16.mxu0 0
        %4538 = vmatpush1.bf16.msra.mxu0 %v4445
        %4539 = vmatprep.subr.bf16.mxu0 0
        %4540 = vmatpush1.bf16.msra.mxu0 %v4446
        %4541 = vmatprep.subr.bf16.mxu0 0
        %4542 = vmatpush1.bf16.msra.mxu0 %v4478
        %4543 = vmatprep.subr.bf16.mxu0 0
        %4544 = vmatpush1.bf16.msra.mxu0 0
        %4545 = vmatprep.subr.bf16.mxu0 0
        %4546 = vmatpush1.bf16.msra.mxu0 0
        %4547 = vmatprep.subr.bf16.mxu0 0
        %4548 = vmatpush1.bf16.msra.mxu0 0
        %4549 = vmatprep.subr.bf16.mxu0 0
        %4550 = vmatpush1.bf16.msra.mxu0 0
        %4551 = vmatprep.subr.bf16.mxu0 0
        %4552 = vmatpush1.bf16.msra.mxu0 0
        %4553 = vmatprep.mubr.bf16.mxu0 %v4475
        %4554 = vmatmul.mubr.bf16.gmra.mrb[0].mxu0 %v4260
        %v4555 = vpop.f32.mrb[0].mxu0
        %v4556 = vadd.f32 %v4515, %v4555
        %v4557 = vpop.f32.mrb[0].mxu0
        %v4558 = vpop.f32.mrb[0].mxu0
        %v4559 = vadd.f32 %v4518, %v4558
        %v4560 = vpop.f32.mrb[0].mxu0
        %4561 = vdwg.mxu0
        %v4562 = vld [vmem:[%s5] sm:$0xf]
        %v4563 = vld [vmem:[%s5 + $0x4] sm:$0xf]
        %v4564 = vld [vmem:[%s5 + $0x8] sm:$0xf]
        %v4565 = vld [vmem:[%s5 + $0xc] sm:$0xf]
        %v4566 = vld [vmem:[%s5 + $0x10] sm:$0xf]
        %v4567 = vld [vmem:[%s5 + $0x14] sm:$0xf]
        %v4568 = vld [vmem:[%s5 + $0x18] sm:$0xf]
        %v4569 = vld [vmem:[%s5 + $0x1c] sm:$0xf]
        %v4570 = vld [vmem:[%s5 + $0x20] sm:$0xf]
        %v4571 = vld [vmem:[%s5 + $0x24] sm:$0xf]
        %v4572 = vld [vmem:[%s5 + $0x28] sm:$0xf]
        %v4573 = vld [vmem:[%s5 + $0x2c] sm:$0xf]
        %v4574 = vld [vmem:[%s5 + $0x30] sm:$0xf]
        %v4575 = vld [vmem:[%s5 + $0x34] sm:$0xf]
        %v4576 = vld [vmem:[%s5 + $0x38] sm:$0xf]
        %v4577 = vld [vmem:[%s5 + $0x3c] sm:$0xf]
        %v4578 = vld [vmem:[%s5 + $0x40] sm:$0xf]
        %v4579 = vld [vmem:[%s5 + $0x44] sm:$0xf]
        %v4580 = vld [vmem:[%s5 + $0x48] sm:$0xf]
        %v4581 = vld [vmem:[%s5 + $0x4c] sm:$0xf]
        %v4582 = vld [vmem:[%s5 + $0x50] sm:$0xf]
        %v4583 = vld [vmem:[%s5 + $0x54] sm:$0xf]
        %v4584 = vld [vmem:[%s5 + $0x58] sm:$0xf]
        %v4585 = vld [vmem:[%s5 + $0x5c] sm:$0xf]
        %v4586 = vld [vmem:[%s5 + $0x60] sm:$0xf]
        %v4587 = vld [vmem:[%s5 + $0x64] sm:$0xf]
        %v4588 = vld [vmem:[%s5 + $0x68] sm:$0xf]
        %v4589 = vld [vmem:[%s5 + $0x6c] sm:$0xf]
        %v4590 = vld [vmem:[%s5 + $0x70] sm:$0xf]
        %v4591 = vld [vmem:[%s5 + $0x74] sm:$0xf]
        %v4592 = vld [vmem:[%s5 + $0x78] sm:$0xf]
        %v4593 = vld [vmem:[%s5 + $0x7c] sm:$0xf]
        %v4594 = vld [vmem:[%s5 + $0x80] sm:$0xf]
        %v4595 = vld [vmem:[%s5 + $0x84] sm:$0xf]
        %v4596 = vld [vmem:[%s5 + $0x88] sm:$0xf]
        %v4597 = vld [vmem:[%s5 + $0x8c] sm:$0xf]
        %v4598 = vld [vmem:[%s5 + $0x90] sm:$0xf]
        %v4599 = vld [vmem:[%s5 + $0x94] sm:$0xf]
        %v4600 = vld [vmem:[%s5 + $0x98] sm:$0xf]
        %v4601 = vld [vmem:[%s5 + $0x9c] sm:$0xf]
        %v4602 = vld [vmem:[%s5 + $0xa0] sm:$0xf]
        %v4603 = vld [vmem:[%s5 + $0xa4] sm:$0xf]
        %v4604 = vld [vmem:[%s5 + $0xa8] sm:$0xf]
        %v4605 = vld [vmem:[%s5 + $0xac] sm:$0xf]
        %v4606 = vld [vmem:[%s5 + $0xb0] sm:$0xf]
        %v4607 = vld [vmem:[%s5 + $0xb4] sm:$0xf]
        %v4608 = vld [vmem:[%s5 + $0xb8] sm:$0xf]
        %v4609 = vld [vmem:[%s5 + $0xbc] sm:$0xf]
        %v4610 = vld [vmem:[%s5 + $0xc0] sm:$0xf]
        %v4611 = vld [vmem:[%s5 + $0xc4] sm:$0xf]
        %v4612 = vld [vmem:[%s5 + $0xc8] sm:$0xf]
        %v4613 = vld [vmem:[%s5 + $0xcc] sm:$0xf]
        %v4614 = vld [vmem:[%s5 + $0xd0] sm:$0x3]
        %v4668 = vunpack.c.l.b16 %v4562
        %v4669 = vunpack.c.l.b16 %v4563
        %v4670 = vunpack.c.l.b16 %v4564
        %v4671 = vunpack.c.l.b16 %v4565
        %v4672 = vunpack.c.l.b16 %v4566
        %v4673 = vunpack.c.l.b16 %v4567
        %v4674 = vunpack.c.l.b16 %v4568
        %v4675 = vunpack.c.l.b16 %v4569
        %v4676 = vunpack.c.l.b16 %v4570
        %v4677 = vunpack.c.l.b16 %v4571
        %v4678 = vunpack.c.l.b16 %v4572
        %v4679 = vunpack.c.l.b16 %v4573
        %v4680 = vunpack.c.l.b16 %v4574
        %v4681 = vunpack.c.l.b16 %v4575
        %v4682 = vunpack.c.l.b16 %v4576
        %v4683 = vunpack.c.l.b16 %v4577
        %v4684 = vunpack.c.l.b16 %v4578
        %v4685 = vunpack.c.l.b16 %v4579
        %v4686 = vunpack.c.l.b16 %v4580
        %v4687 = vunpack.c.l.b16 %v4581
        %v4688 = vunpack.c.l.b16 %v4582
        %v4689 = vunpack.c.l.b16 %v4583
        %v4690 = vunpack.c.l.b16 %v4584
        %v4691 = vunpack.c.l.b16 %v4585
        %v4692 = vunpack.c.l.b16 %v4586
        %v4693 = vunpack.c.l.b16 %v4587
        %v4694 = vunpack.c.l.b16 %v4588
        %v4695 = vunpack.c.l.b16 %v4589
        %v4696 = vunpack.c.l.b16 %v4590
        %v4697 = vunpack.c.l.b16 %v4591
        %v4698 = vunpack.c.l.b16 %v4592
        %v4699 = vunpack.c.l.b16 %v4593
        %v4700 = vunpack.c.l.b16 %v4594
        %v4701 = vunpack.c.l.b16 %v4595
        %v4702 = vunpack.c.l.b16 %v4596
        %v4703 = vunpack.c.l.b16 %v4597
        %v4704 = vunpack.c.l.b16 %v4598
        %v4705 = vunpack.c.l.b16 %v4599
        %v4706 = vunpack.c.l.b16 %v4600
        %v4707 = vunpack.c.l.b16 %v4601
        %v4708 = vunpack.c.l.b16 %v4602
        %v4709 = vunpack.c.l.b16 %v4603
        %v4710 = vunpack.c.l.b16 %v4604
        %v4711 = vunpack.c.l.b16 %v4605
        %v4712 = vunpack.c.l.b16 %v4606
        %v4713 = vunpack.c.l.b16 %v4607
        %v4714 = vunpack.c.l.b16 %v4608
        %v4715 = vunpack.c.l.b16 %v4609
        %v4716 = vunpack.c.l.b16 %v4610
        %v4717 = vunpack.c.l.b16 %v4611
        %v4718 = vunpack.c.l.b16 %v4612
        %v4719 = vunpack.c.l.b16 %v4613
        %v4720 = vunpack.c.l.b16 %v4614
        %v4721 = vpack.c.b16 %v4669, %v4668
        %v4722 = vpack.c.b16 %v4671, %v4670
        %v4723 = vpack.c.b16 %v4673, %v4672
        %v4724 = vpack.c.b16 %v4675, %v4674
        %v4725 = vpack.c.b16 %v4677, %v4676
        %v4726 = vpack.c.b16 %v4679, %v4678
        %v4727 = vpack.c.b16 %v4681, %v4680
        %v4728 = vpack.c.b16 %v4683, %v4682
        %v4729 = vpack.c.b16 %v4685, %v4684
        %v4730 = vpack.c.b16 %v4687, %v4686
        %v4731 = vpack.c.b16 %v4689, %v4688
        %v4732 = vpack.c.b16 %v4691, %v4690
        %v4733 = vpack.c.b16 %v4693, %v4692
        %v4734 = vpack.c.b16 %v4695, %v4694
        %v4735 = vpack.c.b16 %v4697, %v4696
        %v4736 = vpack.c.b16 %v4699, %v4698
        %v4737 = vpack.c.b16 %v4701, %v4700
        %v4738 = vpack.c.b16 %v4703, %v4702
        %v4739 = vpack.c.b16 %v4705, %v4704
        %v4740 = vpack.c.b16 %v4707, %v4706
        %v4741 = vpack.c.b16 %v4709, %v4708
        %v4742 = vpack.c.b16 %v4711, %v4710
        %v4743 = vpack.c.b16 %v4713, %v4712
        %v4744 = vpack.c.b16 %v4715, %v4714
        %v4745 = vpack.c.b16 %v4717, %v4716
        %v4746 = vpack.c.b16 %v4719, %v4718
        %v4747 = vpack.c.b16 %v4720, %v4720
        %v4775 = vsel %vm1528, %v4747, 0
        %4777 = vmatprep.subr.bf16.mxu0 0
        %4778 = vmatpush1.bf16.msra.mxu0 %v4721
        %4779 = vmatprep.subr.bf16.mxu0 0
        %4780 = vmatpush1.bf16.msra.mxu0 %v4722
        %4781 = vmatprep.subr.bf16.mxu0 0
        %4782 = vmatpush1.bf16.msra.mxu0 %v4723
        %4783 = vmatprep.subr.bf16.mxu0 0
        %4784 = vmatpush1.bf16.msra.mxu0 %v4724
        %4785 = vmatprep.subr.bf16.mxu0 0
        %4786 = vmatpush1.bf16.msra.mxu0 %v4725
        %4787 = vmatprep.subr.bf16.mxu0 0
        %4788 = vmatpush1.bf16.msra.mxu0 %v4726
        %4789 = vmatprep.subr.bf16.mxu0 0
        %4790 = vmatpush1.bf16.msra.mxu0 %v4727
        %4791 = vmatprep.subr.bf16.mxu0 0
        %4792 = vmatpush1.bf16.msra.mxu0 %v4728
        %4793 = vmatprep.subr.bf16.mxu0 0
        %4794 = vmatpush1.bf16.msra.mxu0 %v4729
        %4795 = vmatprep.subr.bf16.mxu0 0
        %4796 = vmatpush1.bf16.msra.mxu0 %v4730
        %4797 = vmatprep.subr.bf16.mxu0 0
        %4798 = vmatpush1.bf16.msra.mxu0 %v4731
        %4799 = vmatprep.subr.bf16.mxu0 0
        %4800 = vmatpush1.bf16.msra.mxu0 %v4732
        %4801 = vmatprep.subr.bf16.mxu0 0
        %4802 = vmatpush1.bf16.msra.mxu0 %v4733
        %4803 = vmatprep.subr.bf16.mxu0 0
        %4804 = vmatpush1.bf16.msra.mxu0 %v4734
        %4805 = vmatprep.subr.bf16.mxu0 0
        %4806 = vmatpush1.bf16.msra.mxu0 %v4735
        %4807 = vmatprep.subr.bf16.mxu0 0
        %4808 = vmatpush1.bf16.msra.mxu0 %v4736
        %4809 = vmatprep.mubr.bf16.mxu0 %v4259
        %4810 = vmatmul.mubr.bf16.gmra.mrb[0].mxu0 %v4258
        %v4811 = vpop.f32.mrb[0].mxu0
        %v4812 = vadd.f32 0.0, %v4811
        %v4813 = vpop.f32.mrb[0].mxu0
        %v4814 = vpop.f32.mrb[0].mxu0
        %v4815 = vadd.f32 0.0, %v4814
        %v4816 = vpop.f32.mrb[0].mxu0
        %4817 = vdwg.mxu0
        %4818 = vmatprep.subr.bf16.mxu0 0
        %4819 = vmatpush1.bf16.msra.mxu0 %v4737
        %4820 = vmatprep.subr.bf16.mxu0 0
        %4821 = vmatpush1.bf16.msra.mxu0 %v4738
        %4822 = vmatprep.subr.bf16.mxu0 0
        %4823 = vmatpush1.bf16.msra.mxu0 %v4739
        %4824 = vmatprep.subr.bf16.mxu0 0
        %4825 = vmatpush1.bf16.msra.mxu0 %v4740
        %4826 = vmatprep.subr.bf16.mxu0 0
        %4827 = vmatpush1.bf16.msra.mxu0 %v4741
        %4828 = vmatprep.subr.bf16.mxu0 0
        %4829 = vmatpush1.bf16.msra.mxu0 %v4742
        %4830 = vmatprep.subr.bf16.mxu0 0
        %4831 = vmatpush1.bf16.msra.mxu0 %v4743
        %4832 = vmatprep.subr.bf16.mxu0 0
        %4833 = vmatpush1.bf16.msra.mxu0 %v4744
        %4834 = vmatprep.subr.bf16.mxu0 0
        %4835 = vmatpush1.bf16.msra.mxu0 %v4745
        %4836 = vmatprep.subr.bf16.mxu0 0
        %4837 = vmatpush1.bf16.msra.mxu0 %v4746
        %4838 = vmatprep.subr.bf16.mxu0 0
        %4839 = vmatpush1.bf16.msra.mxu0 %v4775
        %4840 = vmatprep.subr.bf16.mxu0 0
        %4841 = vmatpush1.bf16.msra.mxu0 0
        %4842 = vmatprep.subr.bf16.mxu0 0
        %4843 = vmatpush1.bf16.msra.mxu0 0
        %4844 = vmatprep.subr.bf16.mxu0 0
        %4845 = vmatpush1.bf16.msra.mxu0 0
        %4846 = vmatprep.subr.bf16.mxu0 0
        %4847 = vmatpush1.bf16.msra.mxu0 0
        %4848 = vmatprep.subr.bf16.mxu0 0
        %4849 = vmatpush1.bf16.msra.mxu0 0
        %4850 = vmatprep.mubr.bf16.mxu0 %v4475
        %4851 = vmatmul.mubr.bf16.gmra.mrb[0].mxu0 %v4260
        %v4852 = vpop.f32.mrb[0].mxu0
        %v4853 = vadd.f32 %v4812, %v4852
        %v4854 = vpop.f32.mrb[0].mxu0
        %v4855 = vpop.f32.mrb[0].mxu0
        %v4856 = vadd.f32 %v4815, %v4855
        %v4857 = vpop.f32.mrb[0].mxu0
        %4858 = vdwg.mxu0
        %v4859 = vmax.f32 %v4556, %v4853
        %v4860 = vmax.f32 %v4559, %v4856
        %v4861 = vld [vmem:[%s6] sm:$0x1]
        %v4863 = vlaneseq
        %v4864 = vshrl.u32 %v4863, 7
        %v4865 = vsub.s32 0, %v4864
        %v4866 = vrot.slane %v4861, %v4865
        %v4868 = vadd.f32 %v4859, %v4866
        %v4869 = vadd.f32 %v4860, %v4866
        %v4870 = vmax.f32 %v4868, 0.0
        %v4871 = vmax.f32 %v4869, 0.0
        %4872 = vst.msk [vmem:[#allocation4] sm:$0xff] %vm1305, %v4870
        %4873 = vst.msk [vmem:[#allocation4 + $0x8] sm:$0x3] %vm1925, %v4871
        %v4874 = vld [vmem:[#allocation4] ss:$2 sm:$0x1f]
        %v4875 = vld [vmem:[%s1928] ss:$2 sm:$0x1f]
        %v4876 = vmax.f32 %v4874, %v4875
        %s4877 = scalar_lea.vmem [#allocation5], 16
        %4878 = vst.msk [vmem:[%s4877] sm:$0x1f] %vm1931, %v4876
        %s4879 = scalar_lea.vmem %s442, 96
        %v4880 = vld [vmem:[%s4879] sm:$0xff]
        %v4881 = vld [vmem:[%s4879 + $0x8] sm:$0xff]
        %v4882 = vld [vmem:[%s4879 + $0x10] sm:$0xff]
        %v4883 = vld [vmem:[%s4879 + $0x18] sm:$0xf]
        %v4884 = vld [vmem:[%s4879 + $0x1] sm:$0xff]
        %v4885 = vld [vmem:[%s4879 + $0x9] sm:$0xff]
        %v4886 = vld [vmem:[%s4879 + $0x11] sm:$0xff]
        %v4887 = vld [vmem:[%s4879 + $0x19] sm:$0xf]
        %v4888 = vld [vmem:[%s4879 + $0x2] sm:$0xff]
        %v4889 = vld [vmem:[%s4879 + $0xa] sm:$0xff]
        %v4890 = vld [vmem:[%s4879 + $0x12] sm:$0xff]
        %v4891 = vld [vmem:[%s4879 + $0x1a] sm:$0xf]
        %v4892 = vld [vmem:[%s4879 + $0x3] sm:$0xff]
        %v4893 = vld [vmem:[%s4879 + $0xb] sm:$0xff]
        %v4894 = vld [vmem:[%s4879 + $0x13] sm:$0xff]
        %v4895 = vld [vmem:[%s4879 + $0x1b] sm:$0xf]
        %v4896 = vld [vmem:[%s4879 + $0x4] sm:$0xff]
        %v4897 = vld [vmem:[%s4879 + $0xc] sm:$0xff]
        %v4898 = vld [vmem:[%s4879 + $0x14] sm:$0xff]
        %v4899 = vld [vmem:[%s4879 + $0x1c] sm:$0xf]
        %4904 = vrot.lane.b32.xlu0 %v4884, 96
        %v4905 = vpop.permute.xlu0 %4904
        %4906 = vrot.lane.b32.xlu0 %v4885, 96
        %v4907 = vpop.permute.xlu0 %4906
        %4908 = vrot.lane.b32.xlu0 %v4886, 96
        %v4909 = vpop.permute.xlu0 %4908
        %4910 = vrot.lane.b32.xlu0 %v4887, 96
        %v4911 = vpop.permute.xlu0 %4910
        %4920 = vrot.lane.b32.xlu0 %v4888, 64
        %v4921 = vpop.permute.xlu0 %4920
        %4922 = vrot.lane.b32.xlu0 %v4889, 64
        %v4923 = vpop.permute.xlu0 %4922
        %4924 = vrot.lane.b32.xlu0 %v4890, 64
        %v4925 = vpop.permute.xlu0 %4924
        %4926 = vrot.lane.b32.xlu0 %v4891, 64
        %v4927 = vpop.permute.xlu0 %4926
        %4936 = vrot.lane.b32.xlu0 %v4892, 32
        %v4937 = vpop.permute.xlu0 %4936
        %4938 = vrot.lane.b32.xlu0 %v4893, 32
        %v4939 = vpop.permute.xlu0 %4938
        %4940 = vrot.lane.b32.xlu0 %v4894, 32
        %v4941 = vpop.permute.xlu0 %4940
        %4942 = vrot.lane.b32.xlu0 %v4895, 32
        %v4943 = vpop.permute.xlu0 %4942
        %v4948 = vsel %vm513, %v4880, %v4905
        %v4949 = vsel %vm513, %v4881, %v4907
        %v4950 = vsel %vm513, %v4882, %v4909
        %v4951 = vsel %vm513, %v4883, %v4911
        %v4952 = vsel %vm518, %v4905, %v4921
        %v4953 = vsel %vm518, %v4907, %v4923
        %v4954 = vsel %vm518, %v4909, %v4925
        %v4955 = vsel %vm518, %v4911, %v4927
        %v4956 = vsel %vm523, %v4921, %v4937
        %v4957 = vsel %vm523, %v4923, %v4939
        %v4958 = vsel %vm523, %v4925, %v4941
        %v4959 = vsel %vm523, %v4927, %v4943
        %v4960 = vpack.c.bf16 %v4949, %v4948
        %v4961 = vpack.c.bf16 %v4953, %v4952
        %v4962 = vpack.c.bf16 %v4957, %v4956
        %v4963 = vpack.c.bf16 %v4897, %v4896
        %v4964 = vpack.c.bf16 %v4951, %v4950
        %v4965 = vpack.c.bf16 %v4955, %v4954
        %v4966 = vpack.c.bf16 %v4959, %v4958
        %v4967 = vpack.c.bf16 %v4899, %v4898
        %v4968 = vld [vmem:[%s1] sm:$0xf]
        %v4969 = vld [vmem:[%s1 + $0x4] sm:$0xf]
        %v4970 = vld [vmem:[%s1 + $0x8] sm:$0xf]
        %v4971 = vld [vmem:[%s1 + $0xc] sm:$0xf]
        %v4972 = vld [vmem:[%s1 + $0x10] sm:$0xf]
        %v4973 = vld [vmem:[%s1 + $0x14] sm:$0xf]
        %v4974 = vld [vmem:[%s1 + $0x18] sm:$0xf]
        %v4975 = vld [vmem:[%s1 + $0x1c] sm:$0xf]
        %v4976 = vld [vmem:[%s1 + $0x20] sm:$0xf]
        %v4977 = vld [vmem:[%s1 + $0x24] sm:$0xf]
        %v4978 = vld [vmem:[%s1 + $0x28] sm:$0xf]
        %v4979 = vld [vmem:[%s1 + $0x2c] sm:$0xf]
        %v4980 = vld [vmem:[%s1 + $0x30] sm:$0xf]
        %v4981 = vld [vmem:[%s1 + $0x34] sm:$0xf]
        %v4982 = vld [vmem:[%s1 + $0x38] sm:$0xf]
        %v4983 = vld [vmem:[%s1 + $0x3c] sm:$0xf]
        %v4984 = vld [vmem:[%s1 + $0x40] sm:$0xf]
        %v4985 = vld [vmem:[%s1 + $0x44] sm:$0xf]
        %v4986 = vld [vmem:[%s1 + $0x48] sm:$0xf]
        %v4987 = vld [vmem:[%s1 + $0x4c] sm:$0xf]
        %v4988 = vld [vmem:[%s1 + $0x50] sm:$0xf]
        %v4989 = vld [vmem:[%s1 + $0x54] sm:$0xf]
        %v4990 = vld [vmem:[%s1 + $0x58] sm:$0xf]
        %v4991 = vld [vmem:[%s1 + $0x5c] sm:$0xf]
        %v4992 = vld [vmem:[%s1 + $0x60] sm:$0xf]
        %v4993 = vld [vmem:[%s1 + $0x64] sm:$0xf]
        %v4994 = vld [vmem:[%s1 + $0x68] sm:$0xf]
        %v4995 = vld [vmem:[%s1 + $0x6c] sm:$0xf]
        %v4996 = vld [vmem:[%s1 + $0x70] sm:$0xf]
        %v4997 = vld [vmem:[%s1 + $0x74] sm:$0xf]
        %v4998 = vld [vmem:[%s1 + $0x78] sm:$0xf]
        %v4999 = vld [vmem:[%s1 + $0x7c] sm:$0xf]
        %v5000 = vld [vmem:[%s1 + $0x80] sm:$0xf]
        %v5001 = vld [vmem:[%s1 + $0x84] sm:$0xf]
        %v5002 = vld [vmem:[%s1 + $0x88] sm:$0xf]
        %v5003 = vld [vmem:[%s1 + $0x8c] sm:$0xf]
        %v5004 = vld [vmem:[%s1 + $0x90] sm:$0xf]
        %v5005 = vld [vmem:[%s1 + $0x94] sm:$0xf]
        %v5006 = vld [vmem:[%s1 + $0x98] sm:$0xf]
        %v5007 = vld [vmem:[%s1 + $0x9c] sm:$0xf]
        %v5008 = vld [vmem:[%s1 + $0xa0] sm:$0xf]
        %v5009 = vld [vmem:[%s1 + $0xa4] sm:$0xf]
        %v5010 = vld [vmem:[%s1 + $0xa8] sm:$0xf]
        %v5011 = vld [vmem:[%s1 + $0xac] sm:$0xf]
        %v5012 = vld [vmem:[%s1 + $0xb0] sm:$0xf]
        %v5013 = vld [vmem:[%s1 + $0xb4] sm:$0xf]
        %v5014 = vld [vmem:[%s1 + $0xb8] sm:$0xf]
        %v5015 = vld [vmem:[%s1 + $0xbc] sm:$0xf]
        %v5016 = vld [vmem:[%s1 + $0xc0] sm:$0xf]
        %v5017 = vld [vmem:[%s1 + $0xc4] sm:$0xf]
        %v5018 = vld [vmem:[%s1 + $0xc8] sm:$0xf]
        %v5019 = vld [vmem:[%s1 + $0xcc] sm:$0xf]
        %v5020 = vld [vmem:[%s1 + $0xd0] sm:$0xf]
        %v5021 = vld [vmem:[%s1 + $0xd4] sm:$0xf]
        %v5022 = vld [vmem:[%s1 + $0xd8] sm:$0xf]
        %v5023 = vld [vmem:[%s1 + $0xdc] sm:$0xf]
        %v5024 = vld [vmem:[%s1 + $0xe0] sm:$0xf]
        %v5025 = vld [vmem:[%s1 + $0xe4] sm:$0xf]
        %v5026 = vld [vmem:[%s1 + $0xe8] sm:$0xf]
        %v5027 = vld [vmem:[%s1 + $0xec] sm:$0xf]
        %v5088 = vunpack.c.l.b16 %v4968
        %v5089 = vunpack.c.l.b16 %v4969
        %v5090 = vunpack.c.l.b16 %v4970
        %v5091 = vunpack.c.l.b16 %v4971
        %v5092 = vunpack.c.l.b16 %v4972
        %v5093 = vunpack.c.l.b16 %v4973
        %v5094 = vunpack.c.l.b16 %v4974
        %v5095 = vunpack.c.l.b16 %v4975
        %v5096 = vunpack.c.l.b16 %v4976
        %v5097 = vunpack.c.l.b16 %v4977
        %v5098 = vunpack.c.l.b16 %v4978
        %v5099 = vunpack.c.l.b16 %v4979
        %v5100 = vunpack.c.l.b16 %v4980
        %v5101 = vunpack.c.l.b16 %v4981
        %v5102 = vunpack.c.l.b16 %v4982
        %v5103 = vunpack.c.l.b16 %v4983
        %v5104 = vunpack.c.l.b16 %v4984
        %v5105 = vunpack.c.l.b16 %v4985
        %v5106 = vunpack.c.l.b16 %v4986
        %v5107 = vunpack.c.l.b16 %v4987
        %v5108 = vunpack.c.l.b16 %v4988
        %v5109 = vunpack.c.l.b16 %v4989
        %v5110 = vunpack.c.l.b16 %v4990
        %v5111 = vunpack.c.l.b16 %v4991
        %v5112 = vunpack.c.l.b16 %v4992
        %v5113 = vunpack.c.l.b16 %v4993
        %v5114 = vunpack.c.l.b16 %v4994
        %v5115 = vunpack.c.l.b16 %v4995
        %v5116 = vunpack.c.l.b16 %v4996
        %v5117 = vunpack.c.l.b16 %v4997
        %v5118 = vunpack.c.l.b16 %v4998
        %v5119 = vunpack.c.l.b16 %v4999
        %v5120 = vunpack.c.l.b16 %v5000
        %v5121 = vunpack.c.l.b16 %v5001
        %v5122 = vunpack.c.l.b16 %v5002
        %v5123 = vunpack.c.l.b16 %v5003
        %v5124 = vunpack.c.l.b16 %v5004
        %v5125 = vunpack.c.l.b16 %v5005
        %v5126 = vunpack.c.l.b16 %v5006
        %v5127 = vunpack.c.l.b16 %v5007
        %v5128 = vunpack.c.l.b16 %v5008
        %v5129 = vunpack.c.l.b16 %v5009
        %v5130 = vunpack.c.l.b16 %v5010
        %v5131 = vunpack.c.l.b16 %v5011
        %v5132 = vunpack.c.l.b16 %v5012
        %v5133 = vunpack.c.l.b16 %v5013
        %v5134 = vunpack.c.l.b16 %v5014
        %v5135 = vunpack.c.l.b16 %v5015
        %v5136 = vunpack.c.l.b16 %v5016
        %v5137 = vunpack.c.l.b16 %v5017
        %v5138 = vunpack.c.l.b16 %v5018
        %v5139 = vunpack.c.l.b16 %v5019
        %v5140 = vunpack.c.l.b16 %v5020
        %v5141 = vunpack.c.l.b16 %v5021
        %v5142 = vunpack.c.l.b16 %v5022
        %v5143 = vunpack.c.l.b16 %v5023
        %v5144 = vunpack.c.l.b16 %v5024
        %v5145 = vunpack.c.l.b16 %v5025
        %v5146 = vunpack.c.l.b16 %v5026
        %v5147 = vunpack.c.l.b16 %v5027
        %v5148 = vpack.c.b16 %v5089, %v5088
        %v5149 = vpack.c.b16 %v5091, %v5090
        %v5150 = vpack.c.b16 %v5093, %v5092
        %v5151 = vpack.c.b16 %v5095, %v5094
        %v5152 = vpack.c.b16 %v5097, %v5096
        %v5153 = vpack.c.b16 %v5099, %v5098
        %v5154 = vpack.c.b16 %v5101, %v5100
        %v5155 = vpack.c.b16 %v5103, %v5102
        %v5156 = vpack.c.b16 %v5105, %v5104
        %v5157 = vpack.c.b16 %v5107, %v5106
        %v5158 = vpack.c.b16 %v5109, %v5108
        %v5159 = vpack.c.b16 %v5111, %v5110
        %v5160 = vpack.c.b16 %v5113, %v5112
        %v5161 = vpack.c.b16 %v5115, %v5114
        %v5162 = vpack.c.b16 %v5117, %v5116
        %v5163 = vpack.c.b16 %v5119, %v5118
        %v5164 = vpack.c.b16 %v5121, %v5120
        %v5165 = vpack.c.b16 %v5123, %v5122
        %v5166 = vpack.c.b16 %v5125, %v5124
        %v5167 = vpack.c.b16 %v5127, %v5126
        %v5168 = vpack.c.b16 %v5129, %v5128
        %v5169 = vpack.c.b16 %v5131, %v5130
        %v5170 = vpack.c.b16 %v5133, %v5132
        %v5171 = vpack.c.b16 %v5135, %v5134
        %v5172 = vpack.c.b16 %v5137, %v5136
        %v5173 = vpack.c.b16 %v5139, %v5138
        %v5174 = vpack.c.b16 %v5141, %v5140
        %v5175 = vpack.c.b16 %v5143, %v5142
        %v5176 = vpack.c.b16 %v5145, %v5144
        %v5177 = vpack.c.b16 %v5147, %v5146
        %v5209 = vsel %vm513, %v4963, 0
        %v5212 = vsel %vm513, %v4967, 0
        %5214 = vmatprep.subr.bf16.mxu0 0
        %5215 = vmatpush1.bf16.msra.mxu0 %v5148
        %5216 = vmatprep.subr.bf16.mxu0 0
        %5217 = vmatpush1.bf16.msra.mxu0 %v5149
        %5218 = vmatprep.subr.bf16.mxu0 0
        %5219 = vmatpush1.bf16.msra.mxu0 %v5150
        %5220 = vmatprep.subr.bf16.mxu0 0
        %5221 = vmatpush1.bf16.msra.mxu0 %v5151
        %5222 = vmatprep.subr.bf16.mxu0 0
        %5223 = vmatpush1.bf16.msra.mxu0 %v5152
        %5224 = vmatprep.subr.bf16.mxu0 0
        %5225 = vmatpush1.bf16.msra.mxu0 %v5153
        %5226 = vmatprep.subr.bf16.mxu0 0
        %5227 = vmatpush1.bf16.msra.mxu0 %v5154
        %5228 = vmatprep.subr.bf16.mxu0 0
        %5229 = vmatpush1.bf16.msra.mxu0 %v5155
        %5230 = vmatprep.subr.bf16.mxu0 0
        %5231 = vmatpush1.bf16.msra.mxu0 %v5156
        %5232 = vmatprep.subr.bf16.mxu0 0
        %5233 = vmatpush1.bf16.msra.mxu0 %v5157
        %5234 = vmatprep.subr.bf16.mxu0 0
        %5235 = vmatpush1.bf16.msra.mxu0 %v5158
        %5236 = vmatprep.subr.bf16.mxu0 0
        %5237 = vmatpush1.bf16.msra.mxu0 %v5159
        %5238 = vmatprep.subr.bf16.mxu0 0
        %5239 = vmatpush1.bf16.msra.mxu0 %v5160
        %5240 = vmatprep.subr.bf16.mxu0 0
        %5241 = vmatpush1.bf16.msra.mxu0 %v5161
        %5242 = vmatprep.subr.bf16.mxu0 0
        %5243 = vmatpush1.bf16.msra.mxu0 %v5162
        %5244 = vmatprep.subr.bf16.mxu0 0
        %5245 = vmatpush1.bf16.msra.mxu0 %v5163
        %5246 = vmatprep.mubr.bf16.mxu0 %v4961
        %5247 = vmatmul.mubr.bf16.gmra.mrb[0].mxu0 %v4960
        %v5248 = vpop.f32.mrb[0].mxu0
        %v5249 = vadd.f32 0.0, %v5248
        %v5250 = vpop.f32.mrb[0].mxu0
        %v5251 = vpop.f32.mrb[0].mxu0
        %v5252 = vadd.f32 0.0, %v5251
        %v5253 = vpop.f32.mrb[0].mxu0
        %5254 = vmatprep.mubr.bf16.mxu0 %v4965
        %5255 = vmatmul.mubr.bf16.gmra.mrb[0].mxu0 %v4964
        %v5256 = vpop.f32.mrb[0].mxu0
        %v5257 = vadd.f32 0.0, %v5256
        %v5258 = vpop.f32.mrb[0].mxu0
        %v5259 = vpop.f32.mrb[0].mxu0
        %v5260 = vadd.f32 0.0, %v5259
        %v5261 = vpop.f32.mrb[0].mxu0
        %5262 = vdwg.mxu0
        %5263 = vmatprep.subr.bf16.mxu0 0
        %5264 = vmatpush1.bf16.msra.mxu0 %v5164
        %5265 = vmatprep.subr.bf16.mxu0 0
        %5266 = vmatpush1.bf16.msra.mxu0 %v5165
        %5267 = vmatprep.subr.bf16.mxu0 0
        %5268 = vmatpush1.bf16.msra.mxu0 %v5166
        %5269 = vmatprep.subr.bf16.mxu0 0
        %5270 = vmatpush1.bf16.msra.mxu0 %v5167
        %5271 = vmatprep.subr.bf16.mxu0 0
        %5272 = vmatpush1.bf16.msra.mxu0 %v5168
        %5273 = vmatprep.subr.bf16.mxu0 0
        %5274 = vmatpush1.bf16.msra.mxu0 %v5169
        %5275 = vmatprep.subr.bf16.mxu0 0
        %5276 = vmatpush1.bf16.msra.mxu0 %v5170
        %5277 = vmatprep.subr.bf16.mxu0 0
        %5278 = vmatpush1.bf16.msra.mxu0 %v5171
        %5279 = vmatprep.subr.bf16.mxu0 0
        %5280 = vmatpush1.bf16.msra.mxu0 %v5172
        %5281 = vmatprep.subr.bf16.mxu0 0
        %5282 = vmatpush1.bf16.msra.mxu0 %v5173
        %5283 = vmatprep.subr.bf16.mxu0 0
        %5284 = vmatpush1.bf16.msra.mxu0 %v5174
        %5285 = vmatprep.subr.bf16.mxu0 0
        %5286 = vmatpush1.bf16.msra.mxu0 %v5175
        %5287 = vmatprep.subr.bf16.mxu0 0
        %5288 = vmatpush1.bf16.msra.mxu0 %v5176
        %5289 = vmatprep.subr.bf16.mxu0 0
        %5290 = vmatpush1.bf16.msra.mxu0 %v5177
        %5291 = vmatprep.subr.bf16.mxu0 0
        %5292 = vmatpush1.bf16.msra.mxu0 0
        %5293 = vmatprep.subr.bf16.mxu0 0
        %5294 = vmatpush1.bf16.msra.mxu0 0
        %5295 = vmatprep.mubr.bf16.mxu0 %v5209
        %5296 = vmatmul.mubr.bf16.gmra.mrb[0].mxu0 %v4962
        %v5297 = vpop.f32.mrb[0].mxu0
        %v5298 = vadd.f32 %v5249, %v5297
        %v5299 = vpop.f32.mrb[0].mxu0
        %v5300 = vpop.f32.mrb[0].mxu0
        %v5301 = vadd.f32 %v5252, %v5300
        %v5302 = vpop.f32.mrb[0].mxu0
        %5303 = vmatprep.mubr.bf16.mxu0 %v5212
        %5304 = vmatmul.mubr.bf16.gmra.mrb[0].mxu0 %v4966
        %v5305 = vpop.f32.mrb[0].mxu0
        %v5306 = vadd.f32 %v5257, %v5305
        %v5307 = vpop.f32.mrb[0].mxu0
        %v5308 = vpop.f32.mrb[0].mxu0
        %v5309 = vadd.f32 %v5260, %v5308
        %v5310 = vpop.f32.mrb[0].mxu0
        %5311 = vdwg.mxu0
        %v5312 = vld [vmem:[%s2] sm:$0xf]
        %v5313 = vld [vmem:[%s2 + $0x4] sm:$0xf]
        %v5314 = vld [vmem:[%s2 + $0x8] sm:$0xf]
        %v5315 = vld [vmem:[%s2 + $0xc] sm:$0xf]
        %v5316 = vld [vmem:[%s2 + $0x10] sm:$0xf]
        %v5317 = vld [vmem:[%s2 + $0x14] sm:$0xf]
        %v5318 = vld [vmem:[%s2 + $0x18] sm:$0xf]
        %v5319 = vld [vmem:[%s2 + $0x1c] sm:$0xf]
        %v5320 = vld [vmem:[%s2 + $0x20] sm:$0xf]
        %v5321 = vld [vmem:[%s2 + $0x24] sm:$0xf]
        %v5322 = vld [vmem:[%s2 + $0x28] sm:$0xf]
        %v5323 = vld [vmem:[%s2 + $0x2c] sm:$0xf]
        %v5324 = vld [vmem:[%s2 + $0x30] sm:$0xf]
        %v5325 = vld [vmem:[%s2 + $0x34] sm:$0xf]
        %v5326 = vld [vmem:[%s2 + $0x38] sm:$0xf]
        %v5327 = vld [vmem:[%s2 + $0x3c] sm:$0xf]
        %v5328 = vld [vmem:[%s2 + $0x40] sm:$0xf]
        %v5329 = vld [vmem:[%s2 + $0x44] sm:$0xf]
        %v5330 = vld [vmem:[%s2 + $0x48] sm:$0xf]
        %v5331 = vld [vmem:[%s2 + $0x4c] sm:$0xf]
        %v5332 = vld [vmem:[%s2 + $0x50] sm:$0xf]
        %v5333 = vld [vmem:[%s2 + $0x54] sm:$0xf]
        %v5334 = vld [vmem:[%s2 + $0x58] sm:$0xf]
        %v5335 = vld [vmem:[%s2 + $0x5c] sm:$0xf]
        %v5336 = vld [vmem:[%s2 + $0x60] sm:$0xf]
        %v5337 = vld [vmem:[%s2 + $0x64] sm:$0xf]
        %v5338 = vld [vmem:[%s2 + $0x68] sm:$0xf]
        %v5339 = vld [vmem:[%s2 + $0x6c] sm:$0xf]
        %v5340 = vld [vmem:[%s2 + $0x70] sm:$0xf]
        %v5341 = vld [vmem:[%s2 + $0x74] sm:$0xf]
        %v5342 = vld [vmem:[%s2 + $0x78] sm:$0xf]
        %v5343 = vld [vmem:[%s2 + $0x7c] sm:$0xf]
        %v5344 = vld [vmem:[%s2 + $0x80] sm:$0xf]
        %v5345 = vld [vmem:[%s2 + $0x84] sm:$0xf]
        %v5346 = vld [vmem:[%s2 + $0x88] sm:$0xf]
        %v5347 = vld [vmem:[%s2 + $0x8c] sm:$0xf]
        %v5348 = vld [vmem:[%s2 + $0x90] sm:$0xf]
        %v5349 = vld [vmem:[%s2 + $0x94] sm:$0xf]
        %v5350 = vld [vmem:[%s2 + $0x98] sm:$0xf]
        %v5351 = vld [vmem:[%s2 + $0x9c] sm:$0xf]
        %v5352 = vld [vmem:[%s2 + $0xa0] sm:$0xf]
        %v5353 = vld [vmem:[%s2 + $0xa4] sm:$0xf]
        %v5354 = vld [vmem:[%s2 + $0xa8] sm:$0xf]
        %v5355 = vld [vmem:[%s2 + $0xac] sm:$0xf]
        %v5356 = vld [vmem:[%s2 + $0xb0] sm:$0xf]
        %v5357 = vld [vmem:[%s2 + $0xb4] sm:$0xf]
        %v5358 = vld [vmem:[%s2 + $0xb8] sm:$0xf]
        %v5359 = vld [vmem:[%s2 + $0xbc] sm:$0xf]
        %v5360 = vld [vmem:[%s2 + $0xc0] sm:$0xf]
        %v5361 = vld [vmem:[%s2 + $0xc4] sm:$0xf]
        %v5362 = vld [vmem:[%s2 + $0xc8] sm:$0xf]
        %v5363 = vld [vmem:[%s2 + $0xcc] sm:$0xf]
        %v5364 = vld [vmem:[%s2 + $0xd0] sm:$0xf]
        %v5365 = vld [vmem:[%s2 + $0xd4] sm:$0xf]
        %v5366 = vld [vmem:[%s2 + $0xd8] sm:$0xf]
        %v5367 = vld [vmem:[%s2 + $0xdc] sm:$0xf]
        %v5368 = vld [vmem:[%s2 + $0xe0] sm:$0xf]
        %v5369 = vld [vmem:[%s2 + $0xe4] sm:$0xf]
        %v5370 = vld [vmem:[%s2 + $0xe8] sm:$0xf]
        %v5371 = vld [vmem:[%s2 + $0xec] sm:$0xf]
        %v5432 = vunpack.c.l.b16 %v5312
        %v5433 = vunpack.c.l.b16 %v5313
        %v5434 = vunpack.c.l.b16 %v5314
        %v5435 = vunpack.c.l.b16 %v5315
        %v5436 = vunpack.c.l.b16 %v5316
        %v5437 = vunpack.c.l.b16 %v5317
        %v5438 = vunpack.c.l.b16 %v5318
        %v5439 = vunpack.c.l.b16 %v5319
        %v5440 = vunpack.c.l.b16 %v5320
        %v5441 = vunpack.c.l.b16 %v5321
        %v5442 = vunpack.c.l.b16 %v5322
        %v5443 = vunpack.c.l.b16 %v5323
        %v5444 = vunpack.c.l.b16 %v5324
        %v5445 = vunpack.c.l.b16 %v5325
        %v5446 = vunpack.c.l.b16 %v5326
        %v5447 = vunpack.c.l.b16 %v5327
        %v5448 = vunpack.c.l.b16 %v5328
        %v5449 = vunpack.c.l.b16 %v5329
        %v5450 = vunpack.c.l.b16 %v5330
        %v5451 = vunpack.c.l.b16 %v5331
        %v5452 = vunpack.c.l.b16 %v5332
        %v5453 = vunpack.c.l.b16 %v5333
        %v5454 = vunpack.c.l.b16 %v5334
        %v5455 = vunpack.c.l.b16 %v5335
        %v5456 = vunpack.c.l.b16 %v5336
        %v5457 = vunpack.c.l.b16 %v5337
        %v5458 = vunpack.c.l.b16 %v5338
        %v5459 = vunpack.c.l.b16 %v5339
        %v5460 = vunpack.c.l.b16 %v5340
        %v5461 = vunpack.c.l.b16 %v5341
        %v5462 = vunpack.c.l.b16 %v5342
        %v5463 = vunpack.c.l.b16 %v5343
        %v5464 = vunpack.c.l.b16 %v5344
        %v5465 = vunpack.c.l.b16 %v5345
        %v5466 = vunpack.c.l.b16 %v5346
        %v5467 = vunpack.c.l.b16 %v5347
        %v5468 = vunpack.c.l.b16 %v5348
        %v5469 = vunpack.c.l.b16 %v5349
        %v5470 = vunpack.c.l.b16 %v5350
        %v5471 = vunpack.c.l.b16 %v5351
        %v5472 = vunpack.c.l.b16 %v5352
        %v5473 = vunpack.c.l.b16 %v5353
        %v5474 = vunpack.c.l.b16 %v5354
        %v5475 = vunpack.c.l.b16 %v5355
        %v5476 = vunpack.c.l.b16 %v5356
        %v5477 = vunpack.c.l.b16 %v5357
        %v5478 = vunpack.c.l.b16 %v5358
        %v5479 = vunpack.c.l.b16 %v5359
        %v5480 = vunpack.c.l.b16 %v5360
        %v5481 = vunpack.c.l.b16 %v5361
        %v5482 = vunpack.c.l.b16 %v5362
        %v5483 = vunpack.c.l.b16 %v5363
        %v5484 = vunpack.c.l.b16 %v5364
        %v5485 = vunpack.c.l.b16 %v5365
        %v5486 = vunpack.c.l.b16 %v5366
        %v5487 = vunpack.c.l.b16 %v5367
        %v5488 = vunpack.c.l.b16 %v5368
        %v5489 = vunpack.c.l.b16 %v5369
        %v5490 = vunpack.c.l.b16 %v5370
        %v5491 = vunpack.c.l.b16 %v5371
        %v5492 = vpack.c.b16 %v5433, %v5432
        %v5493 = vpack.c.b16 %v5435, %v5434
        %v5494 = vpack.c.b16 %v5437, %v5436
        %v5495 = vpack.c.b16 %v5439, %v5438
        %v5496 = vpack.c.b16 %v5441, %v5440
        %v5497 = vpack.c.b16 %v5443, %v5442
        %v5498 = vpack.c.b16 %v5445, %v5444
        %v5499 = vpack.c.b16 %v5447, %v5446
        %v5500 = vpack.c.b16 %v5449, %v5448
        %v5501 = vpack.c.b16 %v5451, %v5450
        %v5502 = vpack.c.b16 %v5453, %v5452
        %v5503 = vpack.c.b16 %v5455, %v5454
        %v5504 = vpack.c.b16 %v5457, %v5456
        %v5505 = vpack.c.b16 %v5459, %v5458
        %v5506 = vpack.c.b16 %v5461, %v5460
        %v5507 = vpack.c.b16 %v5463, %v5462
        %v5508 = vpack.c.b16 %v5465, %v5464
        %v5509 = vpack.c.b16 %v5467, %v5466
        %v5510 = vpack.c.b16 %v5469, %v5468
        %v5511 = vpack.c.b16 %v5471, %v5470
        %v5512 = vpack.c.b16 %v5473, %v5472
        %v5513 = vpack.c.b16 %v5475, %v5474
        %v5514 = vpack.c.b16 %v5477, %v5476
        %v5515 = vpack.c.b16 %v5479, %v5478
        %v5516 = vpack.c.b16 %v5481, %v5480
        %v5517 = vpack.c.b16 %v5483, %v5482
        %v5518 = vpack.c.b16 %v5485, %v5484
        %v5519 = vpack.c.b16 %v5487, %v5486
        %v5520 = vpack.c.b16 %v5489, %v5488
        %v5521 = vpack.c.b16 %v5491, %v5490
        %5552 = vmatprep.subr.bf16.mxu0 0
        %5553 = vmatpush1.bf16.msra.mxu0 %v5492
        %5554 = vmatprep.subr.bf16.mxu0 0
        %5555 = vmatpush1.bf16.msra.mxu0 %v5493
        %5556 = vmatprep.subr.bf16.mxu0 0
        %5557 = vmatpush1.bf16.msra.mxu0 %v5494
        %5558 = vmatprep.subr.bf16.mxu0 0
        %5559 = vmatpush1.bf16.msra.mxu0 %v5495
        %5560 = vmatprep.subr.bf16.mxu0 0
        %5561 = vmatpush1.bf16.msra.mxu0 %v5496
        %5562 = vmatprep.subr.bf16.mxu0 0
        %5563 = vmatpush1.bf16.msra.mxu0 %v5497
        %5564 = vmatprep.subr.bf16.mxu0 0
        %5565 = vmatpush1.bf16.msra.mxu0 %v5498
        %5566 = vmatprep.subr.bf16.mxu0 0
        %5567 = vmatpush1.bf16.msra.mxu0 %v5499
        %5568 = vmatprep.subr.bf16.mxu0 0
        %5569 = vmatpush1.bf16.msra.mxu0 %v5500
        %5570 = vmatprep.subr.bf16.mxu0 0
        %5571 = vmatpush1.bf16.msra.mxu0 %v5501
        %5572 = vmatprep.subr.bf16.mxu0 0
        %5573 = vmatpush1.bf16.msra.mxu0 %v5502
        %5574 = vmatprep.subr.bf16.mxu0 0
        %5575 = vmatpush1.bf16.msra.mxu0 %v5503
        %5576 = vmatprep.subr.bf16.mxu0 0
        %5577 = vmatpush1.bf16.msra.mxu0 %v5504
        %5578 = vmatprep.subr.bf16.mxu0 0
        %5579 = vmatpush1.bf16.msra.mxu0 %v5505
        %5580 = vmatprep.subr.bf16.mxu0 0
        %5581 = vmatpush1.bf16.msra.mxu0 %v5506
        %5582 = vmatprep.subr.bf16.mxu0 0
        %5583 = vmatpush1.bf16.msra.mxu0 %v5507
        %5584 = vmatprep.mubr.bf16.mxu0 %v4961
        %5585 = vmatmul.mubr.bf16.gmra.mrb[0].mxu0 %v4960
        %v5586 = vpop.f32.mrb[0].mxu0
        %v5587 = vadd.f32 0.0, %v5586
        %v5588 = vpop.f32.mrb[0].mxu0
        %v5589 = vpop.f32.mrb[0].mxu0
        %v5590 = vadd.f32 0.0, %v5589
        %v5591 = vpop.f32.mrb[0].mxu0
        %5592 = vmatprep.mubr.bf16.mxu0 %v4965
        %5593 = vmatmul.mubr.bf16.gmra.mrb[0].mxu0 %v4964
        %v5594 = vpop.f32.mrb[0].mxu0
        %v5595 = vadd.f32 0.0, %v5594
        %v5596 = vpop.f32.mrb[0].mxu0
        %v5597 = vpop.f32.mrb[0].mxu0
        %v5598 = vadd.f32 0.0, %v5597
        %v5599 = vpop.f32.mrb[0].mxu0
        %5600 = vdwg.mxu0
        %5601 = vmatprep.subr.bf16.mxu0 0
        %5602 = vmatpush1.bf16.msra.mxu0 %v5508
        %5603 = vmatprep.subr.bf16.mxu0 0
        %5604 = vmatpush1.bf16.msra.mxu0 %v5509
        %5605 = vmatprep.subr.bf16.mxu0 0
        %5606 = vmatpush1.bf16.msra.mxu0 %v5510
        %5607 = vmatprep.subr.bf16.mxu0 0
        %5608 = vmatpush1.bf16.msra.mxu0 %v5511
        %5609 = vmatprep.subr.bf16.mxu0 0
        %5610 = vmatpush1.bf16.msra.mxu0 %v5512
        %5611 = vmatprep.subr.bf16.mxu0 0
        %5612 = vmatpush1.bf16.msra.mxu0 %v5513
        %5613 = vmatprep.subr.bf16.mxu0 0
        %5614 = vmatpush1.bf16.msra.mxu0 %v5514
        %5615 = vmatprep.subr.bf16.mxu0 0
        %5616 = vmatpush1.bf16.msra.mxu0 %v5515
        %5617 = vmatprep.subr.bf16.mxu0 0
        %5618 = vmatpush1.bf16.msra.mxu0 %v5516
        %5619 = vmatprep.subr.bf16.mxu0 0
        %5620 = vmatpush1.bf16.msra.mxu0 %v5517
        %5621 = vmatprep.subr.bf16.mxu0 0
        %5622 = vmatpush1.bf16.msra.mxu0 %v5518
        %5623 = vmatprep.subr.bf16.mxu0 0
        %5624 = vmatpush1.bf16.msra.mxu0 %v5519
        %5625 = vmatprep.subr.bf16.mxu0 0
        %5626 = vmatpush1.bf16.msra.mxu0 %v5520
        %5627 = vmatprep.subr.bf16.mxu0 0
        %5628 = vmatpush1.bf16.msra.mxu0 %v5521
        %5629 = vmatprep.subr.bf16.mxu0 0
        %5630 = vmatpush1.bf16.msra.mxu0 0
        %5631 = vmatprep.subr.bf16.mxu0 0
        %5632 = vmatpush1.bf16.msra.mxu0 0
        %5633 = vmatprep.mubr.bf16.mxu0 %v5209
        %5634 = vmatmul.mubr.bf16.gmra.mrb[0].mxu0 %v4962
        %v5635 = vpop.f32.mrb[0].mxu0
        %v5636 = vadd.f32 %v5587, %v5635
        %v5637 = vpop.f32.mrb[0].mxu0
        %v5638 = vpop.f32.mrb[0].mxu0
        %v5639 = vadd.f32 %v5590, %v5638
        %v5640 = vpop.f32.mrb[0].mxu0
        %5641 = vmatprep.mubr.bf16.mxu0 %v5212
        %5642 = vmatmul.mubr.bf16.gmra.mrb[0].mxu0 %v4966
        %v5643 = vpop.f32.mrb[0].mxu0
        %v5644 = vadd.f32 %v5595, %v5643
        %v5645 = vpop.f32.mrb[0].mxu0
        %v5646 = vpop.f32.mrb[0].mxu0
        %v5647 = vadd.f32 %v5598, %v5646
        %v5648 = vpop.f32.mrb[0].mxu0
        %5649 = vdwg.mxu0
        %v5650 = vmax.f32 %v5298, %v5636
        %v5651 = vmax.f32 %v5301, %v5639
        %v5652 = vmax.f32 %v5306, %v5644
        %v5653 = vmax.f32 %v5309, %v5647
        %v5654 = vld [vmem:[%s3] sm:$0x1]
        %v5656 = vlaneseq
        %v5657 = vshrl.u32 %v5656, 7
        %v5658 = vsub.s32 0, %v5657
        %v5659 = vrot.slane %v5654, %v5658
        %v5661 = vadd.f32 %v5650, %v5659
        %v5662 = vadd.f32 %v5651, %v5659
        %v5663 = vadd.f32 %v5652, %v5659
        %v5664 = vadd.f32 %v5653, %v5659
        %v5665 = vmax.f32 %v5661, 0.0
        %v5666 = vmax.f32 %v5662, 0.0
        %v5667 = vmax.f32 %v5663, 0.0
        %v5668 = vmax.f32 %v5664, 0.0
        %5669 = vst.msk [vmem:[#allocation2] sm:$0xff] %vm1237, %v5665
        %5670 = vst.msk [vmem:[#allocation2 + $0x8] sm:$0xff] %vm1237, %v5666
        %5671 = vst.msk [vmem:[#allocation2 + $0x10] sm:$0xff] %vm1237, %v5667
        %5672 = vst.msk [vmem:[#allocation2 + $0x18] sm:$0xf] %vm1241, %v5668
        %v5673 = vld [vmem:[#allocation2] ss:$2 sm:$0xff]
        %v5674 = vld [vmem:[%s1244] ss:$2 sm:$0x3f]
        %v5675 = vld [vmem:[%s1246] ss:$2 sm:$0xff]
        %v5676 = vld [vmem:[%s1248] ss:$2 sm:$0x3f]
        %v5677 = vmax.f32 %v5673, %v5675
        %v5678 = vmax.f32 %v5674, %v5676
        %5679 = vst.msk [vmem:[#allocation3] sm:$0xff] %vm1237, %v5677
        %5680 = vst.msk [vmem:[#allocation3 + $0x8] sm:$0x3f] %vm1253, %v5678
        %v5681 = vld [vmem:[#allocation3] sm:$0xff]
        %v5682 = vld [vmem:[#allocation3 + $0x8] sm:$0x3]
        %v5683 = vld [vmem:[#allocation3 + $0x1] sm:$0xff]
        %v5684 = vld [vmem:[#allocation3 + $0x9] sm:$0x3]
        %v5685 = vld [vmem:[#allocation3 + $0x2] sm:$0xff]
        %v5686 = vld [vmem:[#allocation3 + $0xa] sm:$0x3]
        %v5687 = vld [vmem:[#allocation3 + $0x3] sm:$0xff]
        %v5688 = vld [vmem:[#allocation3 + $0xb] sm:$0x3]
        %v5689 = vld [vmem:[#allocation3 + $0x4] sm:$0xff]
        %v5690 = vld [vmem:[#allocation3 + $0xc] sm:$0x3]
        %5693 = vrot.lane.b32.xlu0 %v5683, 84
        %v5694 = vpop.permute.xlu0 %5693
        %5695 = vrot.lane.b32.xlu0 %v5684, 84
        %v5696 = vpop.permute.xlu0 %5695
        %5701 = vrot.lane.b32.xlu0 %v5685, 40
        %v5702 = vpop.permute.xlu0 %5701
        %5703 = vrot.lane.b32.xlu0 %v5686, 40
        %v5704 = vpop.permute.xlu0 %5703
        %5709 = vrot.lane.b32.xlu0 %v5687, 124
        %v5710 = vpop.permute.xlu0 %5709
        %5711 = vrot.lane.b32.xlu0 %v5688, 124
        %v5712 = vpop.permute.xlu0 %5711
        %5717 = vrot.lane.b32.xlu0 %v5689, 80
        %v5718 = vpop.permute.xlu0 %5717
        %5719 = vrot.lane.b32.xlu0 %v5690, 80
        %v5720 = vpop.permute.xlu0 %5719
        %v5723 = vsel %vm1237, %v5681, %v5694
        %v5724 = vsel %vm1237, %v5682, %v5696
        %v5725 = vsel %vm1299, %v5694, %v5702
        %v5726 = vsel %vm1299, %v5696, %v5704
        %v5727 = vsel %vm1302, %v5725, %v5710
        %v5728 = vsel %vm1302, %v5726, %v5712
        %v5729 = vsel %vm1305, %v5710, %v5718
        %v5730 = vsel %vm1305, %v5712, %v5720
        %v5731 = vpack.c.bf16 %v5724, %v5723
        %v5732 = vpack.c.bf16 %v5728, %v5727
        %v5733 = vpack.c.bf16 %v5730, %v5729
        %v5734 = vpack.c.bf16 %v5720, %v5718
        %v5735 = vld [vmem:[%s4] sm:$0xf]
        %v5736 = vld [vmem:[%s4 + $0x4] sm:$0xf]
        %v5737 = vld [vmem:[%s4 + $0x8] sm:$0xf]
        %v5738 = vld [vmem:[%s4 + $0xc] sm:$0xf]
        %v5739 = vld [vmem:[%s4 + $0x10] sm:$0xf]
        %v5740 = vld [vmem:[%s4 + $0x14] sm:$0xf]
        %v5741 = vld [vmem:[%s4 + $0x18] sm:$0xf]
        %v5742 = vld [vmem:[%s4 + $0x1c] sm:$0xf]
        %v5743 = vld [vmem:[%s4 + $0x20] sm:$0xf]
        %v5744 = vld [vmem:[%s4 + $0x24] sm:$0xf]
        %v5745 = vld [vmem:[%s4 + $0x28] sm:$0xf]
        %v5746 = vld [vmem:[%s4 + $0x2c] sm:$0xf]
        %v5747 = vld [vmem:[%s4 + $0x30] sm:$0xf]
        %v5748 = vld [vmem:[%s4 + $0x34] sm:$0xf]
        %v5749 = vld [vmem:[%s4 + $0x38] sm:$0xf]
        %v5750 = vld [vmem:[%s4 + $0x3c] sm:$0xf]
        %v5751 = vld [vmem:[%s4 + $0x40] sm:$0xf]
        %v5752 = vld [vmem:[%s4 + $0x44] sm:$0xf]
        %v5753 = vld [vmem:[%s4 + $0x48] sm:$0xf]
        %v5754 = vld [vmem:[%s4 + $0x4c] sm:$0xf]
        %v5755 = vld [vmem:[%s4 + $0x50] sm:$0xf]
        %v5756 = vld [vmem:[%s4 + $0x54] sm:$0xf]
        %v5757 = vld [vmem:[%s4 + $0x58] sm:$0xf]
        %v5758 = vld [vmem:[%s4 + $0x5c] sm:$0xf]
        %v5759 = vld [vmem:[%s4 + $0x60] sm:$0xf]
        %v5760 = vld [vmem:[%s4 + $0x64] sm:$0xf]
        %v5761 = vld [vmem:[%s4 + $0x68] sm:$0xf]
        %v5762 = vld [vmem:[%s4 + $0x6c] sm:$0xf]
        %v5763 = vld [vmem:[%s4 + $0x70] sm:$0xf]
        %v5764 = vld [vmem:[%s4 + $0x74] sm:$0xf]
        %v5765 = vld [vmem:[%s4 + $0x78] sm:$0xf]
        %v5766 = vld [vmem:[%s4 + $0x7c] sm:$0xf]
        %v5767 = vld [vmem:[%s4 + $0x80] sm:$0xf]
        %v5768 = vld [vmem:[%s4 + $0x84] sm:$0xf]
        %v5769 = vld [vmem:[%s4 + $0x88] sm:$0xf]
        %v5770 = vld [vmem:[%s4 + $0x8c] sm:$0xf]
        %v5771 = vld [vmem:[%s4 + $0x90] sm:$0xf]
        %v5772 = vld [vmem:[%s4 + $0x94] sm:$0xf]
        %v5773 = vld [vmem:[%s4 + $0x98] sm:$0xf]
        %v5774 = vld [vmem:[%s4 + $0x9c] sm:$0xf]
        %v5775 = vld [vmem:[%s4 + $0xa0] sm:$0xf]
        %v5776 = vld [vmem:[%s4 + $0xa4] sm:$0xf]
        %v5777 = vld [vmem:[%s4 + $0xa8] sm:$0xf]
        %v5778 = vld [vmem:[%s4 + $0xac] sm:$0xf]
        %v5779 = vld [vmem:[%s4 + $0xb0] sm:$0xf]
        %v5780 = vld [vmem:[%s4 + $0xb4] sm:$0xf]
        %v5781 = vld [vmem:[%s4 + $0xb8] sm:$0xf]
        %v5782 = vld [vmem:[%s4 + $0xbc] sm:$0xf]
        %v5783 = vld [vmem:[%s4 + $0xc0] sm:$0xf]
        %v5784 = vld [vmem:[%s4 + $0xc4] sm:$0xf]
        %v5785 = vld [vmem:[%s4 + $0xc8] sm:$0xf]
        %v5786 = vld [vmem:[%s4 + $0xcc] sm:$0xf]
        %v5787 = vld [vmem:[%s4 + $0xd0] sm:$0x3]
        %v5841 = vunpack.c.l.b16 %v5735
        %v5842 = vunpack.c.l.b16 %v5736
        %v5843 = vunpack.c.l.b16 %v5737
        %v5844 = vunpack.c.l.b16 %v5738
        %v5845 = vunpack.c.l.b16 %v5739
        %v5846 = vunpack.c.l.b16 %v5740
        %v5847 = vunpack.c.l.b16 %v5741
        %v5848 = vunpack.c.l.b16 %v5742
        %v5849 = vunpack.c.l.b16 %v5743
        %v5850 = vunpack.c.l.b16 %v5744
        %v5851 = vunpack.c.l.b16 %v5745
        %v5852 = vunpack.c.l.b16 %v5746
        %v5853 = vunpack.c.l.b16 %v5747
        %v5854 = vunpack.c.l.b16 %v5748
        %v5855 = vunpack.c.l.b16 %v5749
        %v5856 = vunpack.c.l.b16 %v5750
        %v5857 = vunpack.c.l.b16 %v5751
        %v5858 = vunpack.c.l.b16 %v5752
        %v5859 = vunpack.c.l.b16 %v5753
        %v5860 = vunpack.c.l.b16 %v5754
        %v5861 = vunpack.c.l.b16 %v5755
        %v5862 = vunpack.c.l.b16 %v5756
        %v5863 = vunpack.c.l.b16 %v5757
        %v5864 = vunpack.c.l.b16 %v5758
        %v5865 = vunpack.c.l.b16 %v5759
        %v5866 = vunpack.c.l.b16 %v5760
        %v5867 = vunpack.c.l.b16 %v5761
        %v5868 = vunpack.c.l.b16 %v5762
        %v5869 = vunpack.c.l.b16 %v5763
        %v5870 = vunpack.c.l.b16 %v5764
        %v5871 = vunpack.c.l.b16 %v5765
        %v5872 = vunpack.c.l.b16 %v5766
        %v5873 = vunpack.c.l.b16 %v5767
        %v5874 = vunpack.c.l.b16 %v5768
        %v5875 = vunpack.c.l.b16 %v5769
        %v5876 = vunpack.c.l.b16 %v5770
        %v5877 = vunpack.c.l.b16 %v5771
        %v5878 = vunpack.c.l.b16 %v5772
        %v5879 = vunpack.c.l.b16 %v5773
        %v5880 = vunpack.c.l.b16 %v5774
        %v5881 = vunpack.c.l.b16 %v5775
        %v5882 = vunpack.c.l.b16 %v5776
        %v5883 = vunpack.c.l.b16 %v5777
        %v5884 = vunpack.c.l.b16 %v5778
        %v5885 = vunpack.c.l.b16 %v5779
        %v5886 = vunpack.c.l.b16 %v5780
        %v5887 = vunpack.c.l.b16 %v5781
        %v5888 = vunpack.c.l.b16 %v5782
        %v5889 = vunpack.c.l.b16 %v5783
        %v5890 = vunpack.c.l.b16 %v5784
        %v5891 = vunpack.c.l.b16 %v5785
        %v5892 = vunpack.c.l.b16 %v5786
        %v5893 = vunpack.c.l.b16 %v5787
        %v5894 = vpack.c.b16 %v5842, %v5841
        %v5895 = vpack.c.b16 %v5844, %v5843
        %v5896 = vpack.c.b16 %v5846, %v5845
        %v5897 = vpack.c.b16 %v5848, %v5847
        %v5898 = vpack.c.b16 %v5850, %v5849
        %v5899 = vpack.c.b16 %v5852, %v5851
        %v5900 = vpack.c.b16 %v5854, %v5853
        %v5901 = vpack.c.b16 %v5856, %v5855
        %v5902 = vpack.c.b16 %v5858, %v5857
        %v5903 = vpack.c.b16 %v5860, %v5859
        %v5904 = vpack.c.b16 %v5862, %v5861
        %v5905 = vpack.c.b16 %v5864, %v5863
        %v5906 = vpack.c.b16 %v5866, %v5865
        %v5907 = vpack.c.b16 %v5868, %v5867
        %v5908 = vpack.c.b16 %v5870, %v5869
        %v5909 = vpack.c.b16 %v5872, %v5871
        %v5910 = vpack.c.b16 %v5874, %v5873
        %v5911 = vpack.c.b16 %v5876, %v5875
        %v5912 = vpack.c.b16 %v5878, %v5877
        %v5913 = vpack.c.b16 %v5880, %v5879
        %v5914 = vpack.c.b16 %v5882, %v5881
        %v5915 = vpack.c.b16 %v5884, %v5883
        %v5916 = vpack.c.b16 %v5886, %v5885
        %v5917 = vpack.c.b16 %v5888, %v5887
        %v5918 = vpack.c.b16 %v5890, %v5889
        %v5919 = vpack.c.b16 %v5892, %v5891
        %v5920 = vpack.c.b16 %v5893, %v5893
        %v5948 = vsel %vm1524, %v5734, 0
        %v5951 = vsel %vm1528, %v5920, 0
        %5953 = vmatprep.subr.bf16.mxu0 0
        %5954 = vmatpush1.bf16.msra.mxu0 %v5894
        %5955 = vmatprep.subr.bf16.mxu0 0
        %5956 = vmatpush1.bf16.msra.mxu0 %v5895
        %5957 = vmatprep.subr.bf16.mxu0 0
        %5958 = vmatpush1.bf16.msra.mxu0 %v5896
        %5959 = vmatprep.subr.bf16.mxu0 0
        %5960 = vmatpush1.bf16.msra.mxu0 %v5897
        %5961 = vmatprep.subr.bf16.mxu0 0
        %5962 = vmatpush1.bf16.msra.mxu0 %v5898
        %5963 = vmatprep.subr.bf16.mxu0 0
        %5964 = vmatpush1.bf16.msra.mxu0 %v5899
        %5965 = vmatprep.subr.bf16.mxu0 0
        %5966 = vmatpush1.bf16.msra.mxu0 %v5900
        %5967 = vmatprep.subr.bf16.mxu0 0
        %5968 = vmatpush1.bf16.msra.mxu0 %v5901
        %5969 = vmatprep.subr.bf16.mxu0 0
        %5970 = vmatpush1.bf16.msra.mxu0 %v5902
        %5971 = vmatprep.subr.bf16.mxu0 0
        %5972 = vmatpush1.bf16.msra.mxu0 %v5903
        %5973 = vmatprep.subr.bf16.mxu0 0
        %5974 = vmatpush1.bf16.msra.mxu0 %v5904
        %5975 = vmatprep.subr.bf16.mxu0 0
        %5976 = vmatpush1.bf16.msra.mxu0 %v5905
        %5977 = vmatprep.subr.bf16.mxu0 0
        %5978 = vmatpush1.bf16.msra.mxu0 %v5906
        %5979 = vmatprep.subr.bf16.mxu0 0
        %5980 = vmatpush1.bf16.msra.mxu0 %v5907
        %5981 = vmatprep.subr.bf16.mxu0 0
        %5982 = vmatpush1.bf16.msra.mxu0 %v5908
        %5983 = vmatprep.subr.bf16.mxu0 0
        %5984 = vmatpush1.bf16.msra.mxu0 %v5909
        %5985 = vmatprep.mubr.bf16.mxu0 %v5732
        %5986 = vmatmul.mubr.bf16.gmra.mrb[0].mxu0 %v5731
        %v5987 = vpop.f32.mrb[0].mxu0
        %v5988 = vadd.f32 0.0, %v5987
        %v5989 = vpop.f32.mrb[0].mxu0
        %v5990 = vpop.f32.mrb[0].mxu0
        %v5991 = vadd.f32 0.0, %v5990
        %v5992 = vpop.f32.mrb[0].mxu0
        %5993 = vdwg.mxu0
        %5994 = vmatprep.subr.bf16.mxu0 0
        %5995 = vmatpush1.bf16.msra.mxu0 %v5910
        %5996 = vmatprep.subr.bf16.mxu0 0
        %5997 = vmatpush1.bf16.msra.mxu0 %v5911
        %5998 = vmatprep.subr.bf16.mxu0 0
        %5999 = vmatpush1.bf16.msra.mxu0 %v5912
        %6000 = vmatprep.subr.bf16.mxu0 0
        %6001 = vmatpush1.bf16.msra.mxu0 %v5913
        %6002 = vmatprep.subr.bf16.mxu0 0
        %6003 = vmatpush1.bf16.msra.mxu0 %v5914
        %6004 = vmatprep.subr.bf16.mxu0 0
        %6005 = vmatpush1.bf16.msra.mxu0 %v5915
        %6006 = vmatprep.subr.bf16.mxu0 0
        %6007 = vmatpush1.bf16.msra.mxu0 %v5916
        %6008 = vmatprep.subr.bf16.mxu0 0
        %6009 = vmatpush1.bf16.msra.mxu0 %v5917
        %6010 = vmatprep.subr.bf16.mxu0 0
        %6011 = vmatpush1.bf16.msra.mxu0 %v5918
        %6012 = vmatprep.subr.bf16.mxu0 0
        %6013 = vmatpush1.bf16.msra.mxu0 %v5919
        %6014 = vmatprep.subr.bf16.mxu0 0
        %6015 = vmatpush1.bf16.msra.mxu0 %v5951
        %6016 = vmatprep.subr.bf16.mxu0 0
        %6017 = vmatpush1.bf16.msra.mxu0 0
        %6018 = vmatprep.subr.bf16.mxu0 0
        %6019 = vmatpush1.bf16.msra.mxu0 0
        %6020 = vmatprep.subr.bf16.mxu0 0
        %6021 = vmatpush1.bf16.msra.mxu0 0
        %6022 = vmatprep.subr.bf16.mxu0 0
        %6023 = vmatpush1.bf16.msra.mxu0 0
        %6024 = vmatprep.subr.bf16.mxu0 0
        %6025 = vmatpush1.bf16.msra.mxu0 0
        %6026 = vmatprep.mubr.bf16.mxu0 %v5948
        %6027 = vmatmul.mubr.bf16.gmra.mrb[0].mxu0 %v5733
        %v6028 = vpop.f32.mrb[0].mxu0
        %v6029 = vadd.f32 %v5988, %v6028
        %v6030 = vpop.f32.mrb[0].mxu0
        %v6031 = vpop.f32.mrb[0].mxu0
        %v6032 = vadd.f32 %v5991, %v6031
        %v6033 = vpop.f32.mrb[0].mxu0
        %6034 = vdwg.mxu0
        %v6035 = vld [vmem:[%s5] sm:$0xf]
        %v6036 = vld [vmem:[%s5 + $0x4] sm:$0xf]
        %v6037 = vld [vmem:[%s5 + $0x8] sm:$0xf]
        %v6038 = vld [vmem:[%s5 + $0xc] sm:$0xf]
        %v6039 = vld [vmem:[%s5 + $0x10] sm:$0xf]
        %v6040 = vld [vmem:[%s5 + $0x14] sm:$0xf]
        %v6041 = vld [vmem:[%s5 + $0x18] sm:$0xf]
        %v6042 = vld [vmem:[%s5 + $0x1c] sm:$0xf]
        %v6043 = vld [vmem:[%s5 + $0x20] sm:$0xf]
        %v6044 = vld [vmem:[%s5 + $0x24] sm:$0xf]
        %v6045 = vld [vmem:[%s5 + $0x28] sm:$0xf]
        %v6046 = vld [vmem:[%s5 + $0x2c] sm:$0xf]
        %v6047 = vld [vmem:[%s5 + $0x30] sm:$0xf]
        %v6048 = vld [vmem:[%s5 + $0x34] sm:$0xf]
        %v6049 = vld [vmem:[%s5 + $0x38] sm:$0xf]
        %v6050 = vld [vmem:[%s5 + $0x3c] sm:$0xf]
        %v6051 = vld [vmem:[%s5 + $0x40] sm:$0xf]
        %v6052 = vld [vmem:[%s5 + $0x44] sm:$0xf]
        %v6053 = vld [vmem:[%s5 + $0x48] sm:$0xf]
        %v6054 = vld [vmem:[%s5 + $0x4c] sm:$0xf]
        %v6055 = vld [vmem:[%s5 + $0x50] sm:$0xf]
        %v6056 = vld [vmem:[%s5 + $0x54] sm:$0xf]
        %v6057 = vld [vmem:[%s5 + $0x58] sm:$0xf]
        %v6058 = vld [vmem:[%s5 + $0x5c] sm:$0xf]
        %v6059 = vld [vmem:[%s5 + $0x60] sm:$0xf]
        %v6060 = vld [vmem:[%s5 + $0x64] sm:$0xf]
        %v6061 = vld [vmem:[%s5 + $0x68] sm:$0xf]
        %v6062 = vld [vmem:[%s5 + $0x6c] sm:$0xf]
        %v6063 = vld [vmem:[%s5 + $0x70] sm:$0xf]
        %v6064 = vld [vmem:[%s5 + $0x74] sm:$0xf]
        %v6065 = vld [vmem:[%s5 + $0x78] sm:$0xf]
        %v6066 = vld [vmem:[%s5 + $0x7c] sm:$0xf]
        %v6067 = vld [vmem:[%s5 + $0x80] sm:$0xf]
        %v6068 = vld [vmem:[%s5 + $0x84] sm:$0xf]
        %v6069 = vld [vmem:[%s5 + $0x88] sm:$0xf]
        %v6070 = vld [vmem:[%s5 + $0x8c] sm:$0xf]
        %v6071 = vld [vmem:[%s5 + $0x90] sm:$0xf]
        %v6072 = vld [vmem:[%s5 + $0x94] sm:$0xf]
        %v6073 = vld [vmem:[%s5 + $0x98] sm:$0xf]
        %v6074 = vld [vmem:[%s5 + $0x9c] sm:$0xf]
        %v6075 = vld [vmem:[%s5 + $0xa0] sm:$0xf]
        %v6076 = vld [vmem:[%s5 + $0xa4] sm:$0xf]
        %v6077 = vld [vmem:[%s5 + $0xa8] sm:$0xf]
        %v6078 = vld [vmem:[%s5 + $0xac] sm:$0xf]
        %v6079 = vld [vmem:[%s5 + $0xb0] sm:$0xf]
        %v6080 = vld [vmem:[%s5 + $0xb4] sm:$0xf]
        %v6081 = vld [vmem:[%s5 + $0xb8] sm:$0xf]
        %v6082 = vld [vmem:[%s5 + $0xbc] sm:$0xf]
        %v6083 = vld [vmem:[%s5 + $0xc0] sm:$0xf]
        %v6084 = vld [vmem:[%s5 + $0xc4] sm:$0xf]
        %v6085 = vld [vmem:[%s5 + $0xc8] sm:$0xf]
        %v6086 = vld [vmem:[%s5 + $0xcc] sm:$0xf]
        %v6087 = vld [vmem:[%s5 + $0xd0] sm:$0x3]
        %v6141 = vunpack.c.l.b16 %v6035
        %v6142 = vunpack.c.l.b16 %v6036
        %v6143 = vunpack.c.l.b16 %v6037
        %v6144 = vunpack.c.l.b16 %v6038
        %v6145 = vunpack.c.l.b16 %v6039
        %v6146 = vunpack.c.l.b16 %v6040
        %v6147 = vunpack.c.l.b16 %v6041
        %v6148 = vunpack.c.l.b16 %v6042
        %v6149 = vunpack.c.l.b16 %v6043
        %v6150 = vunpack.c.l.b16 %v6044
        %v6151 = vunpack.c.l.b16 %v6045
        %v6152 = vunpack.c.l.b16 %v6046
        %v6153 = vunpack.c.l.b16 %v6047
        %v6154 = vunpack.c.l.b16 %v6048
        %v6155 = vunpack.c.l.b16 %v6049
        %v6156 = vunpack.c.l.b16 %v6050
        %v6157 = vunpack.c.l.b16 %v6051
        %v6158 = vunpack.c.l.b16 %v6052
        %v6159 = vunpack.c.l.b16 %v6053
        %v6160 = vunpack.c.l.b16 %v6054
        %v6161 = vunpack.c.l.b16 %v6055
        %v6162 = vunpack.c.l.b16 %v6056
        %v6163 = vunpack.c.l.b16 %v6057
        %v6164 = vunpack.c.l.b16 %v6058
        %v6165 = vunpack.c.l.b16 %v6059
        %v6166 = vunpack.c.l.b16 %v6060
        %v6167 = vunpack.c.l.b16 %v6061
        %v6168 = vunpack.c.l.b16 %v6062
        %v6169 = vunpack.c.l.b16 %v6063
        %v6170 = vunpack.c.l.b16 %v6064
        %v6171 = vunpack.c.l.b16 %v6065
        %v6172 = vunpack.c.l.b16 %v6066
        %v6173 = vunpack.c.l.b16 %v6067
        %v6174 = vunpack.c.l.b16 %v6068
        %v6175 = vunpack.c.l.b16 %v6069
        %v6176 = vunpack.c.l.b16 %v6070
        %v6177 = vunpack.c.l.b16 %v6071
        %v6178 = vunpack.c.l.b16 %v6072
        %v6179 = vunpack.c.l.b16 %v6073
        %v6180 = vunpack.c.l.b16 %v6074
        %v6181 = vunpack.c.l.b16 %v6075
        %v6182 = vunpack.c.l.b16 %v6076
        %v6183 = vunpack.c.l.b16 %v6077
        %v6184 = vunpack.c.l.b16 %v6078
        %v6185 = vunpack.c.l.b16 %v6079
        %v6186 = vunpack.c.l.b16 %v6080
        %v6187 = vunpack.c.l.b16 %v6081
        %v6188 = vunpack.c.l.b16 %v6082
        %v6189 = vunpack.c.l.b16 %v6083
        %v6190 = vunpack.c.l.b16 %v6084
        %v6191 = vunpack.c.l.b16 %v6085
        %v6192 = vunpack.c.l.b16 %v6086
        %v6193 = vunpack.c.l.b16 %v6087
        %v6194 = vpack.c.b16 %v6142, %v6141
        %v6195 = vpack.c.b16 %v6144, %v6143
        %v6196 = vpack.c.b16 %v6146, %v6145
        %v6197 = vpack.c.b16 %v6148, %v6147
        %v6198 = vpack.c.b16 %v6150, %v6149
        %v6199 = vpack.c.b16 %v6152, %v6151
        %v6200 = vpack.c.b16 %v6154, %v6153
        %v6201 = vpack.c.b16 %v6156, %v6155
        %v6202 = vpack.c.b16 %v6158, %v6157
        %v6203 = vpack.c.b16 %v6160, %v6159
        %v6204 = vpack.c.b16 %v6162, %v6161
        %v6205 = vpack.c.b16 %v6164, %v6163
        %v6206 = vpack.c.b16 %v6166, %v6165
        %v6207 = vpack.c.b16 %v6168, %v6167
        %v6208 = vpack.c.b16 %v6170, %v6169
        %v6209 = vpack.c.b16 %v6172, %v6171
        %v6210 = vpack.c.b16 %v6174, %v6173
        %v6211 = vpack.c.b16 %v6176, %v6175
        %v6212 = vpack.c.b16 %v6178, %v6177
        %v6213 = vpack.c.b16 %v6180, %v6179
        %v6214 = vpack.c.b16 %v6182, %v6181
        %v6215 = vpack.c.b16 %v6184, %v6183
        %v6216 = vpack.c.b16 %v6186, %v6185
        %v6217 = vpack.c.b16 %v6188, %v6187
        %v6218 = vpack.c.b16 %v6190, %v6189
        %v6219 = vpack.c.b16 %v6192, %v6191
        %v6220 = vpack.c.b16 %v6193, %v6193
        %v6248 = vsel %vm1528, %v6220, 0
        %6250 = vmatprep.subr.bf16.mxu0 0
        %6251 = vmatpush1.bf16.msra.mxu0 %v6194
        %6252 = vmatprep.subr.bf16.mxu0 0
        %6253 = vmatpush1.bf16.msra.mxu0 %v6195
        %6254 = vmatprep.subr.bf16.mxu0 0
        %6255 = vmatpush1.bf16.msra.mxu0 %v6196
        %6256 = vmatprep.subr.bf16.mxu0 0
        %6257 = vmatpush1.bf16.msra.mxu0 %v6197
        %6258 = vmatprep.subr.bf16.mxu0 0
        %6259 = vmatpush1.bf16.msra.mxu0 %v6198
        %6260 = vmatprep.subr.bf16.mxu0 0
        %6261 = vmatpush1.bf16.msra.mxu0 %v6199
        %6262 = vmatprep.subr.bf16.mxu0 0
        %6263 = vmatpush1.bf16.msra.mxu0 %v6200
        %6264 = vmatprep.subr.bf16.mxu0 0
        %6265 = vmatpush1.bf16.msra.mxu0 %v6201
        %6266 = vmatprep.subr.bf16.mxu0 0
        %6267 = vmatpush1.bf16.msra.mxu0 %v6202
        %6268 = vmatprep.subr.bf16.mxu0 0
        %6269 = vmatpush1.bf16.msra.mxu0 %v6203
        %6270 = vmatprep.subr.bf16.mxu0 0
        %6271 = vmatpush1.bf16.msra.mxu0 %v6204
        %6272 = vmatprep.subr.bf16.mxu0 0
        %6273 = vmatpush1.bf16.msra.mxu0 %v6205
        %6274 = vmatprep.subr.bf16.mxu0 0
        %6275 = vmatpush1.bf16.msra.mxu0 %v6206
        %6276 = vmatprep.subr.bf16.mxu0 0
        %6277 = vmatpush1.bf16.msra.mxu0 %v6207
        %6278 = vmatprep.subr.bf16.mxu0 0
        %6279 = vmatpush1.bf16.msra.mxu0 %v6208
        %6280 = vmatprep.subr.bf16.mxu0 0
        %6281 = vmatpush1.bf16.msra.mxu0 %v6209
        %6282 = vmatprep.mubr.bf16.mxu0 %v5732
        %6283 = vmatmul.mubr.bf16.gmra.mrb[0].mxu0 %v5731
        %v6284 = vpop.f32.mrb[0].mxu0
        %v6285 = vadd.f32 0.0, %v6284
        %v6286 = vpop.f32.mrb[0].mxu0
        %v6287 = vpop.f32.mrb[0].mxu0
        %v6288 = vadd.f32 0.0, %v6287
        %v6289 = vpop.f32.mrb[0].mxu0
        %6290 = vdwg.mxu0
        %6291 = vmatprep.subr.bf16.mxu0 0
        %6292 = vmatpush1.bf16.msra.mxu0 %v6210
        %6293 = vmatprep.subr.bf16.mxu0 0
        %6294 = vmatpush1.bf16.msra.mxu0 %v6211
        %6295 = vmatprep.subr.bf16.mxu0 0
        %6296 = vmatpush1.bf16.msra.mxu0 %v6212
        %6297 = vmatprep.subr.bf16.mxu0 0
        %6298 = vmatpush1.bf16.msra.mxu0 %v6213
        %6299 = vmatprep.subr.bf16.mxu0 0
        %6300 = vmatpush1.bf16.msra.mxu0 %v6214
        %6301 = vmatprep.subr.bf16.mxu0 0
        %6302 = vmatpush1.bf16.msra.mxu0 %v6215
        %6303 = vmatprep.subr.bf16.mxu0 0
        %6304 = vmatpush1.bf16.msra.mxu0 %v6216
        %6305 = vmatprep.subr.bf16.mxu0 0
        %6306 = vmatpush1.bf16.msra.mxu0 %v6217
        %6307 = vmatprep.subr.bf16.mxu0 0
        %6308 = vmatpush1.bf16.msra.mxu0 %v6218
        %6309 = vmatprep.subr.bf16.mxu0 0
        %6310 = vmatpush1.bf16.msra.mxu0 %v6219
        %6311 = vmatprep.subr.bf16.mxu0 0
        %6312 = vmatpush1.bf16.msra.mxu0 %v6248
        %6313 = vmatprep.subr.bf16.mxu0 0
        %6314 = vmatpush1.bf16.msra.mxu0 0
        %6315 = vmatprep.subr.bf16.mxu0 0
        %6316 = vmatpush1.bf16.msra.mxu0 0
        %6317 = vmatprep.subr.bf16.mxu0 0
        %6318 = vmatpush1.bf16.msra.mxu0 0
        %6319 = vmatprep.subr.bf16.mxu0 0
        %6320 = vmatpush1.bf16.msra.mxu0 0
        %6321 = vmatprep.subr.bf16.mxu0 0
        %6322 = vmatpush1.bf16.msra.mxu0 0
        %6323 = vmatprep.mubr.bf16.mxu0 %v5948
        %6324 = vmatmul.mubr.bf16.gmra.mrb[0].mxu0 %v5733
        %v6325 = vpop.f32.mrb[0].mxu0
        %v6326 = vadd.f32 %v6285, %v6325
        %v6327 = vpop.f32.mrb[0].mxu0
        %v6328 = vpop.f32.mrb[0].mxu0
        %v6329 = vadd.f32 %v6288, %v6328
        %v6330 = vpop.f32.mrb[0].mxu0
        %6331 = vdwg.mxu0
        %v6332 = vmax.f32 %v6029, %v6326
        %v6333 = vmax.f32 %v6032, %v6329
        %v6334 = vld [vmem:[%s6] sm:$0x1]
        %v6336 = vlaneseq
        %v6337 = vshrl.u32 %v6336, 7
        %v6338 = vsub.s32 0, %v6337
        %v6339 = vrot.slane %v6334, %v6338
        %v6341 = vadd.f32 %v6332, %v6339
        %v6342 = vadd.f32 %v6333, %v6339
        %v6343 = vmax.f32 %v6341, 0.0
        %v6344 = vmax.f32 %v6342, 0.0
        %6345 = vst.msk [vmem:[#allocation4] sm:$0xff] %vm1305, %v6343
        %6346 = vst.msk [vmem:[#allocation4 + $0x8] sm:$0x3] %vm1925, %v6344
        %v6347 = vld [vmem:[#allocation4] ss:$2 sm:$0x1f]
        %v6348 = vld [vmem:[%s1928] ss:$2 sm:$0x1f]
        %v6349 = vmax.f32 %v6347, %v6348
        %s6350 = scalar_lea.vmem [#allocation5], 24
        %6351 = vst.msk [vmem:[%s6350] sm:$0x1f] %vm1931, %v6349
        %v6352 = vld [vmem:[#allocation5] sm:$0x1]
        %v6353 = vld [vmem:[#allocation5 + $0x8] sm:$0x1]
        %v6354 = vld [vmem:[#allocation5 + $0x10] sm:$0x1]
        %v6355 = vld [vmem:[#allocation5 + $0x18] sm:$0x1]
        %v6356 = vld [vmem:[#allocation5 + $0x1] sm:$0x1]
        %v6357 = vld [vmem:[#allocation5 + $0x9] sm:$0x1]
        %v6358 = vld [vmem:[#allocation5 + $0x11] sm:$0x1]
        %v6359 = vld [vmem:[#allocation5 + $0x19] sm:$0x1]
        %v6360 = vld [vmem:[#allocation5 + $0x2] sm:$0x1]
        %v6361 = vld [vmem:[#allocation5 + $0xa] sm:$0x1]
        %v6362 = vld [vmem:[#allocation5 + $0x12] sm:$0x1]
        %v6363 = vld [vmem:[#allocation5 + $0x1a] sm:$0x1]
        %v6364 = vld [vmem:[#allocation5 + $0x3] sm:$0x1]
        %v6365 = vld [vmem:[#allocation5 + $0xb] sm:$0x1]
        %v6366 = vld [vmem:[#allocation5 + $0x13] sm:$0x1]
        %v6367 = vld [vmem:[#allocation5 + $0x1b] sm:$0x1]
        %v6368 = vld [vmem:[#allocation5 + $0x4] sm:$0x1]
        %v6369 = vld [vmem:[#allocation5 + $0xc] sm:$0x1]
        %v6370 = vld [vmem:[#allocation5 + $0x14] sm:$0x1]
        %v6371 = vld [vmem:[#allocation5 + $0x1c] sm:$0x1]
        %v6376 = vrot.slane %v6353, 7
        %vm6377 = vcmask 1041409
        %v6378 = vsel %vm6377, %v6376, %v6352
        %v6379 = vrot.slane %v6354, 6
        %vm6380 = vcmask 1042434
        %v6381 = vsel %vm6380, %v6379, %v6378
        %v6382 = vrot.slane %v6355, 5
        %vm6383 = vcmask 1043459
        %v6384 = vsel %vm6383, %v6382, %v6381
        %v6390 = vrot.slane %v6357, 7
        %v6391 = vsel %vm6377, %v6390, %v6356
        %v6392 = vrot.slane %v6358, 6
        %v6393 = vsel %vm6380, %v6392, %v6391
        %v6394 = vrot.slane %v6359, 5
        %v6395 = vsel %vm6383, %v6394, %v6393
        %6396 = vrot.lane.b32.xlu0 %v6395, 80
        %v6397 = vpop.permute.xlu0 %6396
        %v6403 = vrot.slane %v6361, 7
        %v6404 = vsel %vm6377, %v6403, %v6360
        %v6405 = vrot.slane %v6362, 6
        %v6406 = vsel %vm6380, %v6405, %v6404
        %v6407 = vrot.slane %v6363, 5
        %v6408 = vsel %vm6383, %v6407, %v6406
        %6409 = vrot.lane.b32.xlu0 %v6408, 32
        %v6410 = vpop.permute.xlu0 %6409
        %v6416 = vrot.slane %v6365, 7
        %v6417 = vsel %vm6377, %v6416, %v6364
        %v6418 = vrot.slane %v6366, 6
        %v6419 = vsel %vm6380, %v6418, %v6417
        %v6420 = vrot.slane %v6367, 5
        %v6421 = vsel %vm6383, %v6420, %v6419
        %6422 = vrot.lane.b32.xlu0 %v6421, 112
        %v6423 = vpop.permute.xlu0 %6422
        %v6429 = vrot.slane %v6369, 7
        %v6430 = vsel %vm6377, %v6429, %v6368
        %v6431 = vrot.slane %v6370, 6
        %v6432 = vsel %vm6380, %v6431, %v6430
        %v6433 = vrot.slane %v6371, 5
        %v6434 = vsel %vm6383, %v6433, %v6432
        %6435 = vrot.lane.b32.xlu0 %v6434, 64
        %v6436 = vpop.permute.xlu0 %6435
        %v6438 = vsel %vm1305, %v6384, %v6397
        %v6439 = vsel %vm523, %v6397, %v6410
        %vm6440 = vcmask 916480
        %v6441 = vsel %vm6440, %v6439, %v6423
        %v6442 = vsel %vm518, %v6423, %v6436
        %v6443 = vpack.c.bf16 %v6438, %v6438
        %v6444 = vpack.c.bf16 %v6441, %v6441
        %v6445 = vpack.c.bf16 %v6442, %v6442
        %v6446 = vpack.c.bf16 %v6436, %v6436
        %v6447 = vld [vmem:[%s7] sm:$0xf]
        %v6448 = vld [vmem:[%s7 + $0x4] sm:$0xf]
        %v6449 = vld [vmem:[%s7 + $0x8] sm:$0xf]
        %v6450 = vld [vmem:[%s7 + $0xc] sm:$0xf]
        %v6451 = vld [vmem:[%s7 + $0x10] sm:$0xf]
        %v6452 = vld [vmem:[%s7 + $0x14] sm:$0xf]
        %v6453 = vld [vmem:[%s7 + $0x18] sm:$0xf]
        %v6454 = vld [vmem:[%s7 + $0x1c] sm:$0xf]
        %v6455 = vld [vmem:[%s7 + $0x20] sm:$0xf]
        %v6456 = vld [vmem:[%s7 + $0x24] sm:$0xf]
        %v6457 = vld [vmem:[%s7 + $0x28] sm:$0xf]
        %v6458 = vld [vmem:[%s7 + $0x2c] sm:$0xf]
        %v6459 = vld [vmem:[%s7 + $0x30] sm:$0xf]
        %v6460 = vld [vmem:[%s7 + $0x34] sm:$0xf]
        %v6461 = vld [vmem:[%s7 + $0x38] sm:$0xf]
        %v6462 = vld [vmem:[%s7 + $0x3c] sm:$0xf]
        %v6463 = vld [vmem:[%s7 + $0x40] sm:$0xf]
        %v6464 = vld [vmem:[%s7 + $0x44] sm:$0xf]
        %v6465 = vld [vmem:[%s7 + $0x48] sm:$0xf]
        %v6466 = vld [vmem:[%s7 + $0x4c] sm:$0xf]
        %v6467 = vld [vmem:[%s7 + $0x50] sm:$0xf]
        %v6468 = vld [vmem:[%s7 + $0x54] sm:$0xf]
        %v6469 = vld [vmem:[%s7 + $0x58] sm:$0xf]
        %v6470 = vld [vmem:[%s7 + $0x5c] sm:$0xf]
        %v6471 = vld [vmem:[%s7 + $0x60] sm:$0xf]
        %v6472 = vld [vmem:[%s7 + $0x64] sm:$0xf]
        %v6473 = vld [vmem:[%s7 + $0x68] sm:$0xf]
        %v6474 = vld [vmem:[%s7 + $0x6c] sm:$0xf]
        %v6475 = vld [vmem:[%s7 + $0x70] sm:$0xf]
        %v6476 = vld [vmem:[%s7 + $0x74] sm:$0xf]
        %v6477 = vld [vmem:[%s7 + $0x78] sm:$0xf]
        %v6478 = vld [vmem:[%s7 + $0x7c] sm:$0xf]
        %v6479 = vld [vmem:[%s7 + $0x80] sm:$0xf]
        %v6480 = vld [vmem:[%s7 + $0x84] sm:$0xf]
        %v6481 = vld [vmem:[%s7 + $0x88] sm:$0xf]
        %v6482 = vld [vmem:[%s7 + $0x8c] sm:$0xf]
        %v6483 = vld [vmem:[%s7 + $0x90] sm:$0xf]
        %v6484 = vld [vmem:[%s7 + $0x94] sm:$0xf]
        %v6485 = vld [vmem:[%s7 + $0x98] sm:$0xf]
        %v6486 = vld [vmem:[%s7 + $0x9c] sm:$0xf]
        %v6487 = vld [vmem:[%s7 + $0xa0] sm:$0xf]
        %v6488 = vld [vmem:[%s7 + $0xa4] sm:$0xf]
        %v6489 = vld [vmem:[%s7 + $0xa8] sm:$0xf]
        %v6490 = vld [vmem:[%s7 + $0xac] sm:$0xf]
        %v6491 = vld [vmem:[%s7 + $0xb0] sm:$0xf]
        %v6492 = vld [vmem:[%s7 + $0xb4] sm:$0xf]
        %v6493 = vld [vmem:[%s7 + $0xb8] sm:$0xf]
        %v6494 = vld [vmem:[%s7 + $0xbc] sm:$0xf]
        %v6495 = vld [vmem:[%s7 + $0xc0] sm:$0xf]
        %v6496 = vld [vmem:[%s7 + $0xc4] sm:$0xf]
        %v6497 = vld [vmem:[%s8] sm:$0x1]
        %v6499 = vlaneseq
        %v6500 = vshrl.u32 %v6499, 7
        %v6501 = vsub.s32 0, %v6500
        %v6502 = vrot.slane %v6497, %v6501
        %v6554 = vunpack.c.l.b16 %v6447
        %v6555 = vunpack.c.l.b16 %v6448
        %v6556 = vunpack.c.l.b16 %v6449
        %v6557 = vunpack.c.l.b16 %v6450
        %v6558 = vunpack.c.l.b16 %v6451
        %v6559 = vunpack.c.l.b16 %v6452
        %v6560 = vunpack.c.l.b16 %v6453
        %v6561 = vunpack.c.l.b16 %v6454
        %v6562 = vunpack.c.l.b16 %v6455
        %v6563 = vunpack.c.l.b16 %v6456
        %v6564 = vunpack.c.l.b16 %v6457
        %v6565 = vunpack.c.l.b16 %v6458
        %v6566 = vunpack.c.l.b16 %v6459
        %v6567 = vunpack.c.l.b16 %v6460
        %v6568 = vunpack.c.l.b16 %v6461
        %v6569 = vunpack.c.l.b16 %v6462
        %v6570 = vunpack.c.l.b16 %v6463
        %v6571 = vunpack.c.l.b16 %v6464
        %v6572 = vunpack.c.l.b16 %v6465
        %v6573 = vunpack.c.l.b16 %v6466
        %v6574 = vunpack.c.l.b16 %v6467
        %v6575 = vunpack.c.l.b16 %v6468
        %v6576 = vunpack.c.l.b16 %v6469
        %v6577 = vunpack.c.l.b16 %v6470
        %v6578 = vunpack.c.l.b16 %v6471
        %v6579 = vunpack.c.l.b16 %v6472
        %v6580 = vunpack.c.l.b16 %v6473
        %v6581 = vunpack.c.l.b16 %v6474
        %v6582 = vunpack.c.l.b16 %v6475
        %v6583 = vunpack.c.l.b16 %v6476
        %v6584 = vunpack.c.l.b16 %v6477
        %v6585 = vunpack.c.l.b16 %v6478
        %v6586 = vunpack.c.l.b16 %v6479
        %v6587 = vunpack.c.l.b16 %v6480
        %v6588 = vunpack.c.l.b16 %v6481
        %v6589 = vunpack.c.l.b16 %v6482
        %v6590 = vunpack.c.l.b16 %v6483
        %v6591 = vunpack.c.l.b16 %v6484
        %v6592 = vunpack.c.l.b16 %v6485
        %v6593 = vunpack.c.l.b16 %v6486
        %v6594 = vunpack.c.l.b16 %v6487
        %v6595 = vunpack.c.l.b16 %v6488
        %v6596 = vunpack.c.l.b16 %v6489
        %v6597 = vunpack.c.l.b16 %v6490
        %v6598 = vunpack.c.l.b16 %v6491
        %v6599 = vunpack.c.l.b16 %v6492
        %v6600 = vunpack.c.l.b16 %v6493
        %v6601 = vunpack.c.l.b16 %v6494
        %v6602 = vunpack.c.l.b16 %v6495
        %v6603 = vunpack.c.l.b16 %v6496
        %v6604 = vpack.c.b16 %v6555, %v6554
        %v6605 = vpack.c.b16 %v6557, %v6556
        %v6606 = vpack.c.b16 %v6559, %v6558
        %v6607 = vpack.c.b16 %v6561, %v6560
        %v6608 = vpack.c.b16 %v6563, %v6562
        %v6609 = vpack.c.b16 %v6565, %v6564
        %v6610 = vpack.c.b16 %v6567, %v6566
        %v6611 = vpack.c.b16 %v6569, %v6568
        %v6612 = vpack.c.b16 %v6571, %v6570
        %v6613 = vpack.c.b16 %v6573, %v6572
        %v6614 = vpack.c.b16 %v6575, %v6574
        %v6615 = vpack.c.b16 %v6577, %v6576
        %v6616 = vpack.c.b16 %v6579, %v6578
        %v6617 = vpack.c.b16 %v6581, %v6580
        %v6618 = vpack.c.b16 %v6583, %v6582
        %v6619 = vpack.c.b16 %v6585, %v6584
        %v6620 = vpack.c.b16 %v6587, %v6586
        %v6621 = vpack.c.b16 %v6589, %v6588
        %v6622 = vpack.c.b16 %v6591, %v6590
        %v6623 = vpack.c.b16 %v6593, %v6592
        %v6624 = vpack.c.b16 %v6595, %v6594
        %v6625 = vpack.c.b16 %v6597, %v6596
        %v6626 = vpack.c.b16 %v6599, %v6598
        %v6627 = vpack.c.b16 %v6601, %v6600
        %v6628 = vpack.c.b16 %v6603, %v6602
        %vm6654 = vcmask 130048
        %v6656 = vsel %vm6654, %v6446, 0
        %6658 = vmatprep.subr.bf16.mxu0 0
        %6659 = vmatpush1.bf16.msra.mxu0 %v6604
        %6660 = vmatprep.subr.bf16.mxu0 0
        %6661 = vmatpush1.bf16.msra.mxu0 %v6605
        %6662 = vmatprep.subr.bf16.mxu0 0
        %6663 = vmatpush1.bf16.msra.mxu0 %v6606
        %6664 = vmatprep.subr.bf16.mxu0 0
        %6665 = vmatpush1.bf16.msra.mxu0 %v6607
        %6666 = vmatprep.subr.bf16.mxu0 0
        %6667 = vmatpush1.bf16.msra.mxu0 %v6608
        %6668 = vmatprep.subr.bf16.mxu0 0
        %6669 = vmatpush1.bf16.msra.mxu0 %v6609
        %6670 = vmatprep.subr.bf16.mxu0 0
        %6671 = vmatpush1.bf16.msra.mxu0 %v6610
        %6672 = vmatprep.subr.bf16.mxu0 0
        %6673 = vmatpush1.bf16.msra.mxu0 %v6611
        %6674 = vmatprep.subr.bf16.mxu0 0
        %6675 = vmatpush1.bf16.msra.mxu0 %v6612
        %6676 = vmatprep.subr.bf16.mxu0 0
        %6677 = vmatpush1.bf16.msra.mxu0 %v6613
        %6678 = vmatprep.subr.bf16.mxu0 0
        %6679 = vmatpush1.bf16.msra.mxu0 %v6614
        %6680 = vmatprep.subr.bf16.mxu0 0
        %6681 = vmatpush1.bf16.msra.mxu0 %v6615
        %6682 = vmatprep.subr.bf16.mxu0 0
        %6683 = vmatpush1.bf16.msra.mxu0 %v6616
        %6684 = vmatprep.subr.bf16.mxu0 0
        %6685 = vmatpush1.bf16.msra.mxu0 %v6617
        %6686 = vmatprep.subr.bf16.mxu0 0
        %6687 = vmatpush1.bf16.msra.mxu0 %v6618
        %6688 = vmatprep.subr.bf16.mxu0 0
        %6689 = vmatpush1.bf16.msra.mxu0 %v6619
        %6690 = vmatprep.mubr.bf16.mxu0 %v6444
        %6691 = vmatmul.mubr.bf16.gmra.mrb[0].mxu0 %v6443
        %v6692 = vpop.f32.mrb[0].mxu0
        %v6693 = vadd.f32 %v6502, %v6692
        %v6694 = vpop.f32.mrb[0].mxu0
        %v6695 = vpop.f32.mrb[0].mxu0
        %v6696 = vpop.f32.mrb[0].mxu0
        %6697 = vdwg.mxu0
        %6698 = vmatprep.subr.bf16.mxu0 0
        %6699 = vmatpush1.bf16.msra.mxu0 %v6620
        %6700 = vmatprep.subr.bf16.mxu0 0
        %6701 = vmatpush1.bf16.msra.mxu0 %v6621
        %6702 = vmatprep.subr.bf16.mxu0 0
        %6703 = vmatpush1.bf16.msra.mxu0 %v6622
        %6704 = vmatprep.subr.bf16.mxu0 0
        %6705 = vmatpush1.bf16.msra.mxu0 %v6623
        %6706 = vmatprep.subr.bf16.mxu0 0
        %6707 = vmatpush1.bf16.msra.mxu0 %v6624
        %6708 = vmatprep.subr.bf16.mxu0 0
        %6709 = vmatpush1.bf16.msra.mxu0 %v6625
        %6710 = vmatprep.subr.bf16.mxu0 0
        %6711 = vmatpush1.bf16.msra.mxu0 %v6626
        %6712 = vmatprep.subr.bf16.mxu0 0
        %6713 = vmatpush1.bf16.msra.mxu0 %v6627
        %6714 = vmatprep.subr.bf16.mxu0 0
        %6715 = vmatpush1.bf16.msra.mxu0 %v6628
        %6716 = vmatprep.subr.bf16.mxu0 0
        %6717 = vmatpush1.bf16.msra.mxu0 0
        %6718 = vmatprep.subr.bf16.mxu0 0
        %6719 = vmatpush1.bf16.msra.mxu0 0
        %6720 = vmatprep.subr.bf16.mxu0 0
        %6721 = vmatpush1.bf16.msra.mxu0 0
        %6722 = vmatprep.subr.bf16.mxu0 0
        %6723 = vmatpush1.bf16.msra.mxu0 0
        %6724 = vmatprep.subr.bf16.mxu0 0
        %6725 = vmatpush1.bf16.msra.mxu0 0
        %6726 = vmatprep.subr.bf16.mxu0 0
        %6727 = vmatpush1.bf16.msra.mxu0 0
        %6728 = vmatprep.subr.bf16.mxu0 0
        %6729 = vmatpush1.bf16.msra.mxu0 0
        %6730 = vmatprep.mubr.bf16.mxu0 %v6656
        %6731 = vmatmul.mubr.bf16.gmra.mrb[0].mxu0 %v6445
        %v6732 = vpop.f32.mrb[0].mxu0
        %v6733 = vadd.f32 %v6693, %v6732
        %v6734 = vpop.f32.mrb[0].mxu0
        %v6735 = vpop.f32.mrb[0].mxu0
        %v6736 = vpop.f32.mrb[0].mxu0
        %6737 = vdwg.mxu0
        %v6738 = vmax.f32 %v6733, 0.0
        %v6739 = vpack.c.bf16 %v6738, %v6738
        %v6740 = vld [vmem:[%s9] sm:$0xf]
        %v6741 = vld [vmem:[%s9 + $0x4] sm:$0xf]
        %v6742 = vld [vmem:[%s9 + $0x8] sm:$0xf]
        %v6743 = vld [vmem:[%s9 + $0xc] sm:$0xf]
        %v6744 = vld [vmem:[%s9 + $0x10] sm:$0xf]
        %v6745 = vld [vmem:[%s9 + $0x14] sm:$0xf]
        %v6746 = vld [vmem:[%s9 + $0x18] sm:$0xf]
        %v6747 = vld [vmem:[%s9 + $0x1c] sm:$0xf]
        %v6748 = vld [vmem:[%s9 + $0x20] sm:$0xf]
        %v6749 = vld [vmem:[%s9 + $0x24] sm:$0xf]
        %v6750 = vld [vmem:[%s9 + $0x28] sm:$0xf]
        %v6751 = vld [vmem:[%s9 + $0x2c] sm:$0xf]
        %v6752 = vld [vmem:[%s9 + $0x30] sm:$0xf]
        %v6753 = vld [vmem:[%s9 + $0x34] sm:$0xf]
        %v6754 = vld [vmem:[%s9 + $0x38] sm:$0xf]
        %v6755 = vld [vmem:[%s10] sm:$0x1]
        %v6757 = vlaneseq
        %v6758 = vshrl.u32 %v6757, 7
        %v6759 = vsub.s32 0, %v6758
        %v6760 = vrot.slane %v6755, %v6759
        %v6777 = vunpack.c.l.b16 %v6740
        %v6778 = vunpack.c.l.b16 %v6741
        %v6779 = vunpack.c.l.b16 %v6742
        %v6780 = vunpack.c.l.b16 %v6743
        %v6781 = vunpack.c.l.b16 %v6744
        %v6782 = vunpack.c.l.b16 %v6745
        %v6783 = vunpack.c.l.b16 %v6746
        %v6784 = vunpack.c.l.b16 %v6747
        %v6785 = vunpack.c.l.b16 %v6748
        %v6786 = vunpack.c.l.b16 %v6749
        %v6787 = vunpack.c.l.b16 %v6750
        %v6788 = vunpack.c.l.b16 %v6751
        %v6789 = vunpack.c.l.b16 %v6752
        %v6790 = vunpack.c.l.b16 %v6753
        %v6791 = vunpack.c.l.b16 %v6754
        %v6792 = vpack.c.b16 %v6778, %v6777
        %v6793 = vpack.c.b16 %v6780, %v6779
        %v6794 = vpack.c.b16 %v6782, %v6781
        %v6795 = vpack.c.b16 %v6784, %v6783
        %v6796 = vpack.c.b16 %v6786, %v6785
        %v6797 = vpack.c.b16 %v6788, %v6787
        %v6798 = vpack.c.b16 %v6790, %v6789
        %v6799 = vpack.c.b16 %v6791, %v6791
        %vm6807 = vcmask 982016
        %v6809 = vsel %vm6807, %v6739, 0
        %vm6811 = vcmask 1043456
        %v6813 = vsel %vm6811, %v6799, 0
        %6815 = vmatprep.subr.bf16.mxu0 0
        %6816 = vmatpush1.bf16.msra.mxu0 %v6792
        %6817 = vmatprep.subr.bf16.mxu0 0
        %6818 = vmatpush1.bf16.msra.mxu0 %v6793
        %6819 = vmatprep.subr.bf16.mxu0 0
        %6820 = vmatpush1.bf16.msra.mxu0 %v6794
        %6821 = vmatprep.subr.bf16.mxu0 0
        %6822 = vmatpush1.bf16.msra.mxu0 %v6795
        %6823 = vmatprep.subr.bf16.mxu0 0
        %6824 = vmatpush1.bf16.msra.mxu0 %v6796
        %6825 = vmatprep.subr.bf16.mxu0 0
        %6826 = vmatpush1.bf16.msra.mxu0 %v6797
        %6827 = vmatprep.subr.bf16.mxu0 0
        %6828 = vmatpush1.bf16.msra.mxu0 %v6798
        %6829 = vmatprep.subr.bf16.mxu0 0
        %6830 = vmatpush1.bf16.msra.mxu0 %v6813
        %6831 = vmatprep.subr.bf16.mxu0 0
        %6832 = vmatpush1.bf16.msra.mxu0 0
        %6833 = vmatprep.subr.bf16.mxu0 0
        %6834 = vmatpush1.bf16.msra.mxu0 0
        %6835 = vmatprep.subr.bf16.mxu0 0
        %6836 = vmatpush1.bf16.msra.mxu0 0
        %6837 = vmatprep.subr.bf16.mxu0 0
        %6838 = vmatpush1.bf16.msra.mxu0 0
        %6839 = vmatprep.subr.bf16.mxu0 0
        %6840 = vmatpush1.bf16.msra.mxu0 0
        %6841 = vmatprep.subr.bf16.mxu0 0
        %6842 = vmatpush1.bf16.msra.mxu0 0
        %6843 = vmatprep.subr.bf16.mxu0 0
        %6844 = vmatpush1.bf16.msra.mxu0 0
        %6845 = vmatprep.subr.bf16.mxu0 0
        %6846 = vmatpush1.bf16.msra.mxu0 0
        %6847 = vmatprep.mubr.bf16.mxu0 0
        %6848 = vmatmul.mubr.bf16.gmra.mrb[0].mxu0 %v6809
        %v6849 = vpop.f32.mrb[0].mxu0
        %v6850 = vadd.f32 %v6760, %v6849
        %v6851 = vpop.f32.mrb[0].mxu0
        %v6852 = vpop.f32.mrb[0].mxu0
        %v6853 = vpop.f32.mrb[0].mxu0
        %6854 = vdwg.mxu0
        %v6855 = vmax.f32 %v6850, 0.0
        %v6856 = vpack.c.bf16 %v6855, %v6855
        %v6857 = vld [vmem:[%s11] sm:$0xf]
        %v6858 = vld [vmem:[%s11 + $0x4] sm:$0xf]
        %v6859 = vld [vmem:[%s11 + $0x8] sm:$0xf]
        %v6860 = vld [vmem:[%s11 + $0xc] sm:$0xf]
        %v6861 = vld [vmem:[%s11 + $0x10] sm:$0xf]
        %v6862 = vld [vmem:[%s11 + $0x14] sm:$0xf]
        %v6863 = vld [vmem:[%s11 + $0x18] sm:$0xf]
        %v6864 = vld [vmem:[%s11 + $0x1c] sm:$0xf]
        %v6865 = vld [vmem:[%s11 + $0x20] sm:$0xf]
        %v6866 = vld [vmem:[%s11 + $0x24] sm:$0xf]
        %v6867 = vld [vmem:[%s11 + $0x28] sm:$0x3]
        %v6868 = vld [vmem:[%s12] sm:$0x1]
        %v6870 = vlaneseq
        %v6871 = vshrl.u32 %v6870, 7
        %v6872 = vsub.s32 0, %v6871
        %v6873 = vrot.slane %v6868, %v6872
        %v6886 = vunpack.c.l.b16 %v6857
        %v6887 = vunpack.c.l.b16 %v6858
        %v6888 = vunpack.c.l.b16 %v6859
        %v6889 = vunpack.c.l.b16 %v6860
        %v6890 = vunpack.c.l.b16 %v6861
        %v6891 = vunpack.c.l.b16 %v6862
        %v6892 = vunpack.c.l.b16 %v6863
        %v6893 = vunpack.c.l.b16 %v6864
        %v6894 = vunpack.c.l.b16 %v6865
        %v6895 = vunpack.c.l.b16 %v6866
        %v6896 = vunpack.c.l.b16 %v6867
        %v6897 = vpack.c.b16 %v6887, %v6886
        %v6898 = vpack.c.b16 %v6889, %v6888
        %v6899 = vpack.c.b16 %v6891, %v6890
        %v6900 = vpack.c.b16 %v6893, %v6892
        %v6901 = vpack.c.b16 %v6895, %v6894
        %v6902 = vpack.c.b16 %v6896, %v6896
        %v6909 = vsel %vm1237, %v6856, 0
        %v6912 = vsel %vm1528, %v6902, 0
        %6914 = vmatprep.subr.bf16.mxu0 0
        %6915 = vmatpush1.bf16.msra.mxu0 %v6897
        %6916 = vmatprep.subr.bf16.mxu0 0
        %6917 = vmatpush1.bf16.msra.mxu0 %v6898
        %6918 = vmatprep.subr.bf16.mxu0 0
        %6919 = vmatpush1.bf16.msra.mxu0 %v6899
        %6920 = vmatprep.subr.bf16.mxu0 0
        %6921 = vmatpush1.bf16.msra.mxu0 %v6900
        %6922 = vmatprep.subr.bf16.mxu0 0
        %6923 = vmatpush1.bf16.msra.mxu0 %v6901
        %6924 = vmatprep.subr.bf16.mxu0 0
        %6925 = vmatpush1.bf16.msra.mxu0 %v6912
        %6926 = vmatprep.subr.bf16.mxu0 0
        %6927 = vmatpush1.bf16.msra.mxu0 0
        %6928 = vmatprep.subr.bf16.mxu0 0
        %6929 = vmatpush1.bf16.msra.mxu0 0
        %6930 = vmatprep.subr.bf16.mxu0 0
        %6931 = vmatpush1.bf16.msra.mxu0 0
        %6932 = vmatprep.subr.bf16.mxu0 0
        %6933 = vmatpush1.bf16.msra.mxu0 0
        %6934 = vmatprep.subr.bf16.mxu0 0
        %6935 = vmatpush1.bf16.msra.mxu0 0
        %6936 = vmatprep.subr.bf16.mxu0 0
        %6937 = vmatpush1.bf16.msra.mxu0 0
        %6938 = vmatprep.subr.bf16.mxu0 0
        %6939 = vmatpush1.bf16.msra.mxu0 0
        %6940 = vmatprep.subr.bf16.mxu0 0
        %6941 = vmatpush1.bf16.msra.mxu0 0
        %6942 = vmatprep.subr.bf16.mxu0 0
        %6943 = vmatpush1.bf16.msra.mxu0 0
        %6944 = vmatprep.subr.bf16.mxu0 0
        %6945 = vmatpush1.bf16.msra.mxu0 0
        %6946 = vmatprep.mubr.bf16.mxu0 0
        %6947 = vmatmul.mubr.bf16.gmra.mrb[0].mxu0 %v6909
        %v6948 = vpop.f32.mrb[0].mxu0
        %v6949 = vadd.f32 %v6873, %v6948
        %v6950 = vpop.f32.mrb[0].mxu0
        %v6951 = vpop.f32.mrb[0].mxu0
        %v6952 = vpop.f32.mrb[0].mxu0
        %6953 = vdwg.mxu0
        %vm6954 = vcmask 76800
        %6955 = vst.msk [vmem:[%s436] sm:$0xf] %vm6954, %v6949
        %s6956 = sand.u32 %s313, 1
        %s6957 = scalar_lea.sflag [#allocation7], %s6956
        %s6958 = sand.u32 %s313, 1
        %s6959 = smul.addr %s6958, 4
        %s6960 = scalar_lea.vmem [#allocation6], %s6959
        // Predicated region
        $region73: #{net_forward.1} parent=71 // pred_check
          %p6961 = pneg %p323
        $region74: #{net_forward.1} parent=71 // pred_check_branch
          %6963 = sbr.rel (%p6961) target = $region76
        $region75: #{net_forward.1} parent=71 // pred_region
          %s6965 = ssub.s32 64, 64
          %6966 = vsyncadd %s6957, %s6965
          %s6967 = smul.addr %s27, 64
          %s6968 = scalar_lea.hbm %s13, %s6967
          %s6970 = sshll.u32 %s6960, 4
          %s6971 = int_to_ptr.vmem [resolvable:$true] %s6970
          %6973 = dma.vmem_to_hbm [thread:$0]  %s6971, 64, %s6968, %s6957
        $region76: #{net_forward.1} parent=71 // pred_fallthru
          _
      $region72: #{net_forward.1} parent=5 // pred_fallthru
        _
      %p6974 = scmp.le.s32.totalorder 2, %s22
      // Predicated region
      $region77: #{net_forward.1} parent=5 // pred_check
        %p6975 = pneg %p6974
      $region78: #{net_forward.1} parent=5 // pred_check_branch
        %6977 = sbr.rel (%p6975) target = $region80
      $region79: #{net_forward.1} parent=5 // pred_region
        %s6978 = ssub.s32 %s22, 2
        // Predicated region
        $region81: #{net_forward.1} parent=79 // pred_check
          %p6979 = pneg %p329
        $region82: #{net_forward.1} parent=79 // pred_check_branch
          %6981 = sbr.rel (%p6979) target = $region84
        $region83: #{net_forward.1} parent=79 // pred_region
          %s6982 = sand.u32 %s314, 1
          %s6983 = scalar_lea.sflag [#allocation7], %s6982
          %s6984 = sand.u32 %s314, 1
          %s6985 = smul.addr %s6984, 4
          %s6986 = scalar_lea.vmem [#allocation6], %s6985
          %6987 = dma.done %s6983, 64
        $region84: #{net_forward.1} parent=79 // pred_fallthru
          _
      $region80: #{net_forward.1} parent=5 // pred_fallthru
        _
    $region6: #{net_forward.1} parent=1 // loop_footer
      %s26 = sadd.s32 1, %s22
    $region7: #{net_forward.1} parent=1 // loop_footer_branch
      %21 = sbr.rel target = $region3
    $region8: #{net_forward.1} parent=1 // loop_exit
      _
    %6988 = vsyncpa [#allocation7], 1
    %s6989 = scalar_lea.sflag [#allocation7], 1
    %6990 = vsyncpa %s6989, 1

</llo_original>
